<compile_context>
chip_gen: v7x
topology: tpu7x:2x2x1
jax: 0.10.0
libtpu: 0.0.40
codegen_flags: <defaults>
</compile_context>

<pallas_src>
import math

import jax
import jax.numpy as jnp
from jax import lax
from jax.experimental import pallas as pl
from jax.experimental.pallas import tpu as pltpu

# ------------------ small config consistent with the torch module -----------
NODE_DIM  = 10   # raw node feature dim (torch default 23)
EMBED_DIM = 32   # node/edge embed dim (torch default 128)
REL_POS   = 8    # rel_pos_dim (torch default 64)
N_LAYERS  = 2    # structure-update layers (torch default 8)
HEADS     = 4    # IPA heads (torch default 12)
HEAD_DIM  = 8    # IPA head dim (torch default 16)
N_QPOINTS = 4
N_VPOINTS = 4    # (torch default 8, configurable via kwargs)
SEQ_LEN   = 16
Q_TILE    = 8    # query-row tile (multiple of 8); grid is sharded across TCs
EPS_VEC   = 1e-8
INV_SQRT3 = 3.0 ** -0.5

# MXU inputs cast to bf16 (f32 accumulation); element-wise math stays f32.
MXU_DTYPE = jnp.bfloat16

# Safe on v5e/v6e/v7x at these shapes; re-derive per generation for prod tiles.
VMEM_LIMIT_BYTES = 32 * 1024 * 1024


def _cparams():
    return pltpu.CompilerParams(dimension_semantics=("parallel",),
                                vmem_limit_bytes=VMEM_LIMIT_BYTES)


def _mxu(x):
    return x.astype(MXU_DTYPE)


# ----------------------------- Pallas: row-tiled Linear ----------------------
def _row_linear_kernel(x_ref, w_ref, b_ref, o_ref):
    o_ref[...] = (jnp.dot(_mxu(x_ref[...]), _mxu(w_ref[...]),
                          preferred_element_type=jnp.float32)
                  + b_ref[...]).astype(o_ref.dtype)


def pallas_linear(x, w, b=None, *, tile=Q_TILE):
    """x: [M, K] f32, w: [K, F] f32, b: [F] or None -> [M, F] f32."""
    M, K = x.shape
    F = w.shape[1]
    if b is None:
        b = jnp.zeros((F,), jnp.float32)
    return pl.pallas_call(
        _row_linear_kernel,
        out_shape=jax.ShapeDtypeStruct((M, F), jnp.float32),
        grid=(M // tile,),
        in_specs=[pl.BlockSpec((tile, K), lambda i: (i, 0)),
                  pl.BlockSpec((K, F), lambda i: (0, 0)),
                  pl.BlockSpec((1, F), lambda i: (0, 0))],
        out_specs=pl.BlockSpec((tile, F), lambda i: (i, 0)),
        compiler_params=_cparams(),
    )(x, w, b.reshape(1, F))


# --------------------- Pallas: fused IPA attention kernel --------------------
def _ipa_attention_kernel(relbT_ref, dist_ref, sq_ref, sk_ref, sv_ref,
                          gq_ref, gk_ref, gv_ref,
                          wrelT_ref, wdist_ref, coef_ref,
                          main_ref, vout_ref):
    relbT = relbT_ref[...]                      # [TI, Em1, N]  bf16 (constant)
    dist = dist_ref[...]                        # [TI, N]       f32
    TI, Em1, N = relbT.shape
    H = sq_ref.shape[0]
    Dh = sq_ref.shape[2]
    E = Em1 + 1

    # contract minor dims, batch leading dim ("NT"-style batched matmul)
    nt = (((2,), (2,)), ((0,), (0,)))

    # --- scalar attention logits: [H, TI, N] ---------------------------------
    sl = lax.dot_general(_mxu(sq_ref[...]), _mxu(sk_ref[...]), nt,
                         preferred_element_type=jnp.float32)
    sl = sl * (float(Dh) ** -0.5)

    # --- summed point distances: one batched contraction over H*Pq -----------
    # Kept f32: the ||q||^2 + ||k||^2 - 2 q.k expansion is cancellation
    # sensitive (noted in the review).
    gq = gq_ref[...]                            # [H*Pq, TI, 3]
    gk = gk_ref[...]                            # [H*Pq, N, 3]
    cross = lax.dot_general(gq, gk, nt, preferred_element_type=jnp.float32)
    q2 = jnp.sum(gq * gq, axis=-1)[:, :, None]
    k2 = jnp.sum(gk * gk, axis=-1)[:, None, :]
    d = jnp.sqrt(jnp.maximum(q2 + k2 - 2.0 * cross, 0.0) + EPS_VEC)
    HPq = gq.shape[0]
    dsum = jnp.sum(d.reshape(H, HPq // H, TI, N), axis=1)     # [H, TI, N]

    # --- edge attention bias (fused projection) -------------------------------
    w_b = jnp.broadcast_to(_mxu(wrelT_ref[...])[None], (TI, H, Em1))
    eb_ihn = lax.dot_general(w_b, relbT, (((2,), (1,)), ((0,), (0,))),
                             preferred_element_type=jnp.float32)   # [TI, H, N]
    eb = jnp.transpose(eb_ihn, (1, 0, 2))                          # [H, TI, N]
    eb = eb + wdist_ref[...] * dist[None, :, :]   # rank-1 dist-channel term

    # --- softmax over keys (point_weight used raw, as in torch) ---------------
    logits = INV_SQRT3 * (sl + eb) - coef_ref[...] * dsum
    logits = logits - jnp.max(logits, axis=-1, keepdims=True)
    p = jnp.exp(logits)
    att = p * pl.reciprocal(jnp.sum(p, axis=-1, keepdims=True), approx=True)
    att16 = _mxu(att)                                              # [H, TI, N]

    # --- value aggregation (MXU, batched over heads) --------------------------
    bha = (((2,), (1,)), ((0,), (0,)))
    so = lax.dot_general(att16, _mxu(sv_ref[...]), bha,
                         preferred_element_type=jnp.float32)       # [H, TI, Dh]
    vo = lax.dot_general(att16, _mxu(gv_ref[...]), bha,
                         preferred_element_type=jnp.float32)       # [H, TI, 3Pv]

    # --- edge output (MXU, batched over query rows) ----------------------------
    att_ihj = _mxu(jnp.transpose(att, (1, 0, 2)))                  # [TI, H, N]
    e_rel = lax.dot_general(att_ihj, relbT, nt,
                            preferred_element_type=jnp.float32)    # [TI, H, Em1]
    e_dist = jnp.sum(att * dist[None, :, :], axis=-1, keepdims=True)  # [H, TI, 1]

    # --- assemble the lane-dense combined (edge | scalar) slab -----------------
    for h in range(H):
        main_ref[:, h * E:h * E + 1] = e_dist[h]
        main_ref[:, h * E + 1:(h + 1) * E] = e_rel[:, h, :]
        main_ref[:, H * E + h * Dh:H * E + (h + 1) * Dh] = so[h]
    vout_ref[...] = vo


def ipa_attention(relbT16, dist, sq, sk, sv, gq, gk, gv, w_relT, w_dist, coef,
                  *, tile=Q_TILE):
    N = dist.shape[0]
    H, _, Dh = sq.shape
    HPq = gq.shape[0]
    Pv3 = gv.shape[2]
    Em1 = relbT16.shape[1]
    E = Em1 + 1
    Dm = H * E + H * Dh
    return pl.pallas_call(
        _ipa_attention_kernel,
        out_shape=(jax.ShapeDtypeStruct((N, Dm), jnp.float32),
                   jax.ShapeDtypeStruct((H, N, Pv3), jnp.float32)),
        grid=(N // tile,),
        in_specs=[
            pl.BlockSpec((tile, Em1, N), lambda i: (i, 0, 0)),   # relbT (bf16)
            pl.BlockSpec((tile, N), lambda i: (i, 0)),           # origin dists
            pl.BlockSpec((H, tile, Dh), lambda i: (0, i, 0)),    # scalar q
            pl.BlockSpec((H, N, Dh), lambda i: (0, 0, 0)),       # scalar k
            pl.BlockSpec((H, N, Dh), lambda i: (0, 0, 0)),       # scalar v
            pl.BlockSpec((HPq, tile, 3), lambda i: (0, i, 0)),   # global q pts
            pl.BlockSpec((HPq, N, 3), lambda i: (0, 0, 0)),      # global k pts
            pl.BlockSpec((H, N, Pv3), lambda i: (0, 0, 0)),      # global v pts
            pl.BlockSpec((H, Em1), lambda i: (0, 0)),            # edge-bias W
            pl.BlockSpec((H, 1, 1), lambda i: (0, 0, 0)),        # dist-chan W
            pl.BlockSpec((H, 1, 1), lambda i: (0, 0, 0)),        # point coef
        ],
        out_specs=(pl.BlockSpec((tile, Dm), lambda i: (i, 0)),
                   pl.BlockSpec((H, tile, Pv3), lambda i: (0, i, 0))),
        compiler_params=_cparams(),
    )(relbT16, dist, sq, sk, sv, gq, gk, gv, w_relT, w_dist, coef)


# ------------- Pallas: fused layer tail (final linear + LNs + MLP + BB) ------
def _layer_tail_kernel(node_ref, comb_ref, vecp_ref,
                       fwm_ref, fwv_ref, fb_ref, g1_ref, bt1_ref,
                       rw1_ref, rb1_ref, rw2_ref, rb2_ref, rw3_ref, rb3_ref,
                       g2_ref, bt2_ref, bbw_ref, bbb_ref,
                       s_ref, corr_ref):
    def mm(x, w_ref, b_ref):
        return jnp.dot(_mxu(x), _mxu(w_ref[...]),
                       preferred_element_type=jnp.float32) + b_ref[...]

    def ln(x, g_ref, b_ref):
        mu = jnp.mean(x, axis=-1, keepdims=True)
        var = jnp.mean((x - mu) ** 2, axis=-1, keepdims=True)
        return (x - mu) * lax.rsqrt(var + 1e-5) * g_ref[...] + b_ref[...]

    # IPA final linear (weight split edge|scalar vs vector rows) + residual add
    s = (node_ref[...] + mm(comb_ref[...], fwm_ref, fb_ref)
         + jnp.dot(_mxu(vecp_ref[...]), _mxu(fwv_ref[...]),
                   preferred_element_type=jnp.float32))
    s = ln(s, g1_ref, bt1_ref)                     # norm1 (dropout p=0)
    h = jax.nn.relu(mm(s, rw1_ref, rb1_ref))
    h = jax.nn.relu(mm(h, rw2_ref, rb2_ref))
    s = s + mm(h, rw3_ref, rb3_ref)
    s = ln(s, g2_ref, bt2_ref)                     # norm2
    s_ref[...] = s.astype(s_ref.dtype)
    corr_ref[...] = mm(s, bbw_ref, bbb_ref).astype(corr_ref.dtype)


# ---------------------- Pallas: fused torsion-angle MLPs ----------------------
def _torsion_kernel(x_ref,
                    w11, b11, w12, b12, w13, b13,
                    w21, b21, w22, b22, w23, b23,
                    fw, fb, o_ref):
    def mm(x, w_ref, b_ref):
        return jnp.dot(_mxu(x), _mxu(w_ref[...]),
                       preferred_element_type=jnp.float32) + b_ref[...]

    x = x_ref[...]
    h = jax.nn.relu(mm(x, w11, b11))
    h = jax.nn.relu(mm(h, w12, b12))
    x = x + mm(h, w13, b13)
    h = jax.nn.relu(mm(x, w21, b21))
    h = jax.nn.relu(mm(h, w22, b22))
    x = x + mm(h, w23, b23)
    o_ref[...] = mm(jax.nn.relu(x), fw, fb).astype(o_ref.dtype)


# ----------------------------- rigid body helpers ----------------------------
def rigid_identity(n):
    rot = jnp.tile(jnp.eye(3, dtype=jnp.float32)[None], (n, 1, 1))
    trans = jnp.zeros((n, 3), jnp.float32)
    return rot, trans


def rigid_apply_points(rigid, pts):
    rot, trans = rigid
    return jnp.einsum('nab,hnpb->hnpa', rot, pts) + trans[None, :, None, :]


def rigid_inv_apply_points(rigid, pts):
    rot, trans = rigid
    return jnp.einsum('nab,hnpa->hnpb', rot, pts - trans[None, :, None, :])


def rigid_compose(r1, r2):
    rot1, t1 = r1
    rot2, t2 = r2
    return (jnp.einsum('nab,nbc->nac', rot1, rot2),
            jnp.einsum('nab,nb->na', rot1, t2) + t1)


def backbone_rigid_from_corr(corr):
    rot3, t = corr[:, :3], corr[:, 3:]
    norm = jnp.sqrt(1.0 + jnp.sum(rot3 * rot3, axis=-1, keepdims=True))
    bcd = rot3 / norm
    a = 1.0 / norm[:, 0]
    b, c, d = bcd[:, 0], bcd[:, 1], bcd[:, 2]
    r0 = jnp.stack([a * a + b * b - c * c - d * d, 2 * b * c - 2 * a * d,
                    2 * b * d + 2 * a * c], -1)
    r1 = jnp.stack([2 * b * c + 2 * a * d, a * a - b * b + c * c - d * d,
                    2 * c * d - 2 * a * b], -1)
    r2 = jnp.stack([2 * b * d - 2 * a * c, 2 * c * d + 2 * a * b,
                    a * a - b * b - c * c + d * d], -1)
    return jnp.stack([r0, r1, r2], axis=-2), t


# -------------------------- module-level forward pieces -----------------------
def structure_update(lp, nf, relbT16, dist, rigid, *, tile=Q_TILE):
    N, D = nf.shape
    ipa = lp['ipa']
    H, Dh, Pq, Pv, E = HEADS, HEAD_DIM, N_QPOINTS, N_VPOINTS, EMBED_DIM
    d_s = 3 * H * Dh
    d_v = 2 * 3 * Pq * H

    # one concatenated projection (scalar qkv | vector qk | vector v), no bias
    proj = pallas_linear(nf, ipa['proj_w'], None, tile=tile)

    sq, sk, sv = jnp.split(proj[:, :d_s], 3, axis=-1)
    to_hnd = lambda t: t.reshape(N, H, Dh).transpose(1, 0, 2)
    sq, sk, sv = map(to_hnd, (sq, sk, sv))                       # [H, N, Dh]

    vq, vk = jnp.split(proj[:, d_s:d_s + d_v], 2, axis=-1)
    to_hnpd = lambda t, P: t.reshape(N, H, P, 3).transpose(1, 0, 2, 3)
    vq, vk = to_hnpd(vq, Pq), to_hnpd(vk, Pq)
    vv = to_hnpd(proj[:, d_s + d_v:], Pv)

    gq = rigid_apply_points(rigid, vq).transpose(0, 2, 1, 3).reshape(H * Pq, N, 3)
    gk = rigid_apply_points(rigid, vk).transpose(0, 2, 1, 3).reshape(H * Pq, N, 3)
    gv = rigid_apply_points(rigid, vv).reshape(H, N, Pv * 3)

    w_eb = ipa['edge_bias_w']                   # [E, H]; row 0 = dist channel
    w_relT = w_eb[1:, :].T                      # [H, E-1]
    w_dist = w_eb[0, :].reshape(H, 1, 1)
    wc = (2.0 / Pq) ** 0.5 / 6.0
    # torch uses the raw point_weight parameter (no softplus)
    coef = (INV_SQRT3 * wc * ipa['point_weight']).reshape(H, 1, 1)

    main, vout = ipa_attention(relbT16, dist, sq, sk, sv, gq, gk, gv,
                               w_relT, w_dist, coef, tile=tile)

    # vector half of the combined features (tiny tensors; inverse rigid in XLA)
    local = rigid_inv_apply_points(rigid, vout.reshape(H, N, Pv, 3))
    vnorm = jnp.sqrt(jnp.sum(local * local, axis=-1) + EPS_VEC)
    vec4 = jnp.concatenate([vnorm[..., None], local], axis=-1)   # [H, N, Pv, 4]
    vecp = vec4.transpose(1, 0, 2, 3).reshape(N, H * Pv * 4)

    res = lp['residual']
    fw = ipa['final_w']
    Dm = H * E + H * Dh
    row_args = (nf, main, vecp)
    w_args = (fw[:Dm], fw[Dm:], ipa['final_b'].reshape(1, D),
              lp['ln1_g'].reshape(1, D), lp['ln1_b'].reshape(1, D),
              res['w1'], res['b1'].reshape(1, -1),
              res['w2'], res['b2'].reshape(1, -1),
              res['w3'], res['b3'].reshape(1, -1),
              lp['ln2_g'].reshape(1, D), lp['ln2_b'].reshape(1, D),
              lp['backbone']['w'], lp['backbone']['b'].reshape(1, 6))
    in_specs = ([pl.BlockSpec((tile, a.shape[1]), lambda i: (i, 0))
                 for a in row_args] +
                [pl.BlockSpec(a.shape, lambda i: (0, 0)) for a in w_args])

    s, corr = pl.pallas_call(
        _layer_tail_kernel,
        out_shape=(jax.ShapeDtypeStruct((N, D), jnp.float32),
                   jax.ShapeDtypeStruct((N, 6), jnp.float32)),
        grid=(N // tile,),
        in_specs=in_specs,
        out_specs=(pl.BlockSpec((tile, D), lambda i: (i, 0)),
                   pl.BlockSpec((tile, 6), lambda i: (i, 0))),
        compiler_params=_cparams(),
    )(*row_args, *w_args)

    delta = backbone_rigid_from_corr(corr)                       # update_mask=None
    return s, rigid_compose(rigid, delta)


def torsion_angles(tp, nf0, s, *, tile=Q_TILE):
    full = jnp.concatenate([nf0, s], axis=-1)
    N, D2 = full.shape
    r1, r2 = tp['residual1'], tp['residual2']
    w_args = (r1['w1'], r1['b1'].reshape(1, -1), r1['w2'], r1['b2'].reshape(1, -1),
              r1['w3'], r1['b3'].reshape(1, -1),
              r2['w1'], r2['b1'].reshape(1, -1), r2['w2'], r2['b2'].reshape(1, -1),
              r2['w3'], r2['b3'].reshape(1, -1),
              tp['final_w'], tp['final_b'].reshape(1, -1))
    in_specs = ([pl.BlockSpec((tile, D2), lambda i: (i, 0))] +
                [pl.BlockSpec(a.shape, lambda i: (0, 0)) for a in w_args])
    t = pl.pallas_call(
        _torsion_kernel,
        out_shape=jax.ShapeDtypeStruct((N, 10), jnp.float32),
        grid=(N // tile,),
        in_specs=in_specs,
        out_specs=pl.BlockSpec((tile, 10), lambda i: (i, 0)),
        compiler_params=_cparams(),
    )(full, *w_args)
    t = t.reshape(N, 5, 2)
    norm = jnp.sqrt(jnp.sum(t * t, axis=-1, keepdims=True))
    # torch divides by the raw norm; clamp only guards an exact-zero 0/0.
    return t / jnp.maximum(norm, 1e-12), norm


def structure_module_forward(params, node_features):
    N = node_features.shape[0]
    # TODO(synk): for N not a multiple of Q_TILE, pad the residue axis and mask
    # attention over the padded keys; not needed at these shapes.
    rigid = rigid_identity(N)

    # rel-pos embedding = table gather (no one-hot matmul); stored once,
    # transposed to [i, channel, j] and cast to bf16 for the attention kernel.
    rel = jnp.arange(N)[None, :] - jnp.arange(N)[:, None]
    rel = jnp.clip(rel, -REL_POS, REL_POS) + REL_POS
    rel_emb = params['edge_embed_w'][rel] + params['edge_embed_b']   # [N,N,E-1]
    relbT16 = rel_emb.transpose(0, 2, 1).astype(jnp.bfloat16)        # [N,E-1,N]

    # initial node embedding; reused below for the torsion head (identical to
    # torch's second self.node_embed(node_features) call).
    nf0 = pallas_linear(node_features, params['node_embed_w'],
                        params['node_embed_b'])
    nf = nf0

    for lp in params['layers']:
        _, trans = rigid
        diff = trans[:, None, :] - trans[None, :, :]
        dist = jnp.sqrt(jnp.sum(diff * diff, axis=-1) + EPS_VEC)     # [N, N]
        nf, rigid = structure_update(lp, nf, relbT16, dist, rigid)

    torsions, _ = torsion_angles(params['torsion'], nf0, nf)
    # TODO(synk): global_frames_from_bb_frame_and_torsion_angles and
    # all_atoms_from_global_reference_frames need residue-specific rigid-group
    # geometry tables not contained in the provided source, so the final
    # all-atom placement / clash NaN-masking is not reproduced here.
    return nf, torsions, rigid


# ------------------------------- parameter init -------------------------------
def _linear_params(key, fan_in, fan_out, bias=True):
    kw, kb = jax.random.split(key)
    bound = 1.0 / math.sqrt(fan_in)
    out = {'w': jax.random.uniform(kw, (fan_in, fan_out), jnp.float32,
                                   -bound, bound)}
    if bias:
        out['b'] = jax.random.uniform(kb, (fan_out,), jnp.float32,
                                      -bound, bound)
    return out


def _mlp3_params(key, d_in, d_hidden, d_out):
    k1, k2, k3 = jax.random.split(key, 3)
    p1 = _linear_params(k1, d_in, d_hidden)
    p2 = _linear_params(k2, d_hidden, d_hidden)
    p3 = _linear_params(k3, d_hidden, d_out)
    return {'w1': p1['w'], 'b1': p1['b'],
            'w2': p2['w'], 'b2': p2['b'],
            'w3': p3['w'], 'b3': p3['b']}


def init_params(key):
    keys = jax.random.split(key, 3 + N_LAYERS)
    ne = _linear_params(keys[0], NODE_DIM, EMBED_DIM)
    ee = _linear_params(keys[1], 2 * REL_POS + 1, EMBED_DIM - 1)
    D, E, H, Dh = EMBED_DIM, EMBED_DIM, HEADS, HEAD_DIM
    after_cat = H * E + H * Dh + H * N_VPOINTS * 4
    layers = []
    for l in range(N_LAYERS):
        k = jax.random.split(keys[2 + l], 8)
        qkv_w = _linear_params(k[0], D, 3 * H * Dh, bias=False)['w']
        vqk_w = _linear_params(k[1], D, 2 * 3 * N_QPOINTS * H, bias=False)['w']
        vv_w = _linear_params(k[2], D, 3 * N_VPOINTS * H, bias=False)['w']
        eb_w = _linear_params(k[3], E, H, bias=False)['w']
        fl = _linear_params(k[4], after_cat, D)
        bb = _linear_params(k[5], D, 6)
        ipa = {
            # torch init: log(exp(1) - 1); used raw in the logits (as in torch)
            'point_weight': jnp.full((H,), math.log(math.e - 1.0), jnp.float32),
            # single concatenated projection weight [D, 3HDh + 6PqH + 3PvH]
            'proj_w': jnp.concatenate([qkv_w, vqk_w, vv_w], axis=1),
            # edge-bias weight [E, H]; row 0 is the origin-distance channel
            'edge_bias_w': eb_w,
            # NOTE: torch zero-inits final_linear / last residual layers; small
            # random weights are used so every branch actually contributes.
            'final_w': fl['w'] * 0.1,
            'final_b': fl['b'] * 0.1,
        }
        layers.append({
            'ipa': ipa,
            'ln1_g': jnp.ones((D,), jnp.float32),
            'ln1_b': jnp.zeros((D,), jnp.float32),
            'ln2_g': jnp.ones((D,), jnp.float32),
            'ln2_b': jnp.zeros((D,), jnp.float32),
            'residual': _mlp3_params(k[6], D, 2 * D, D),
            'backbone': {'w': bb['w'] * 0.1, 'b': bb['b'] * 0.1},
        })
    kt = jax.random.split(keys[2 + N_LAYERS], 3)
    tfin = _linear_params(kt[2], 2 * D, 10)
    torsion = {
        'residual1': _mlp3_params(kt[0], 2 * D, 2 * D, 2 * D),
        'residual2': _mlp3_params(kt[1], 2 * D, 2 * D, 2 * D),
        'final_w': tfin['w'], 'final_b': tfin['b'],
    }
    return {'node_embed_w': ne['w'], 'node_embed_b': ne['b'],
            'edge_embed_w': ee['w'], 'edge_embed_b': ee['b'],
            'layers': layers, 'torsion': torsion}


# ------------------------------------ main ------------------------------------
if __name__ == "__main__":
    assert SEQ_LEN % Q_TILE == 0
    key = jax.random.PRNGKey(0)
    kp, kx = jax.random.split(key)
    params = init_params(kp)
    node_features = jax.random.normal(kx, (SEQ_LEN, NODE_DIM), jnp.float32)

    fwd = jax.jit(structure_module_forward)
    nf, torsions, (rot, trans) = fwd(params, node_features)
    jax.block_until_ready((nf, torsions, rot, trans))

    assert nf.shape == (SEQ_LEN, EMBED_DIM)
    assert torsions.shape == (SEQ_LEN, 5, 2)
    assert rot.shape == (SEQ_LEN, 3, 3) and trans.shape == (SEQ_LEN, 3)
    for t in (nf, torsions, rot, trans):
        assert bool(jnp.all(jnp.isfinite(t)))
    print("KERNEL_OK")
</pallas_src>

<mosaic_0001>
module attributes {stable_mosaic.version = 11 : i64} {
  func.func @_row_linear_kernel(%arg0: i32, %arg1: memref<8x10xf32, #tpu.memory_space<vmem>>, %arg2: memref<10x32xf32, #tpu.memory_space<vmem>>, %arg3: memref<1x32xf32, #tpu.memory_space<vmem>>, %arg4: memref<8x32xf32, #tpu.memory_space<vmem>>) attributes {dimension_semantics = [#tpu.dimension_semantics<parallel>], iteration_bounds = array<i64: 2>, scalar_prefetch = 0 : i64, scratch_operands = 0 : i64, tpu.core_type = #tpu.core_type<tc>, window_params = [{transform_indices = @transform_0, window_bounds = array<i64: 8, 10>}, {pipeline_mode = #tpu.pipeline_mode<synchronous>, transform_indices = @transform_1, window_bounds = array<i64: 10, 32>}, {pipeline_mode = #tpu.pipeline_mode<synchronous>, transform_indices = @transform_2, window_bounds = array<i64: 1, 32>}, {transform_indices = @transform_3, window_bounds = array<i64: 8, 32>}]} {
    %c0 = arith.constant 0 : index
    %c0_0 = arith.constant 0 : index
    %0 = vector.load %arg1[%c0, %c0_0] : memref<8x10xf32, #tpu.memory_space<vmem>>, vector<8x10xf32>
    %1 = arith.truncf %0 : vector<8x10xf32> to vector<8x10xbf16>
    %c0_1 = arith.constant 0 : index
    %c0_2 = arith.constant 0 : index
    %2 = vector.load %arg2[%c0_1, %c0_2] : memref<10x32xf32, #tpu.memory_space<vmem>>, vector<10x32xf32>
    %3 = arith.truncf %2 : vector<10x32xf32> to vector<10x32xbf16>
    %cst = arith.constant dense<0.000000e+00> : vector<8x32xf32>
    %4 = tpu.matmul %1, %3, %cst {dimension_numbers = #tpu.dot_dimension_numbers<[1], [0], [0], [1], [0, 0, 1, 1], [], []>} : vector<8x10xbf16>, vector<10x32xbf16>, vector<8x32xf32> -> vector<8x32xf32>
    %c0_3 = arith.constant 0 : index
    %c0_4 = arith.constant 0 : index
    %5 = vector.load %arg3[%c0_3, %c0_4] : memref<1x32xf32, #tpu.memory_space<vmem>>, vector<1x32xf32>
    %6 = vector.broadcast %5 : vector<1x32xf32> to vector<8x32xf32>
    %7 = arith.addf %4, %6 : vector<8x32xf32>
    %c0_5 = arith.constant 0 : index
    %c0_6 = arith.constant 0 : index
    %8 = vector.load %arg4[%c0_5, %c0_6] : memref<8x32xf32, #tpu.memory_space<vmem>>, vector<8x32xf32>
    tpu.vector_store %arg4[%c0_5, %c0_6], %7 {strides = array<i32>} : memref<8x32xf32, #tpu.memory_space<vmem>>, vector<8x32xf32>,
    return
  }
  func.func @transform_0(%arg0: i32) -> (i32, i32) {
    %c0_i32 = arith.constant 0 : i32
    %c0_i32_0 = arith.constant 0 : i32
    return %arg0, %c0_i32 : i32, i32
  }
  func.func @transform_1(%arg0: i32) -> (i32, i32) {
    %c0_i32 = arith.constant 0 : i32
    %c0_i32_0 = arith.constant 0 : i32
    %c0_i32_1 = arith.constant 0 : i32
    return %c0_i32, %c0_i32_0 : i32, i32
  }
  func.func @transform_2(%arg0: i32) -> (i32, i32) {
    %c0_i32 = arith.constant 0 : i32
    %c0_i32_0 = arith.constant 0 : i32
    %c0_i32_1 = arith.constant 0 : i32
    return %c0_i32, %c0_i32_0 : i32, i32
  }
  func.func @transform_3(%arg0: i32) -> (i32, i32) {
    %c0_i32 = arith.constant 0 : i32
    %c0_i32_0 = arith.constant 0 : i32
    return %arg0, %c0_i32 : i32, i32
  }
}

module attributes {stable_mosaic.version = 11 : i64} {
  func.func @_row_linear_kernel(%arg0: i32, %arg1: memref<8x32xf32, #tpu.memory_space<vmem>>, %arg2: memref<32x240xf32, #tpu.memory_space<vmem>>, %arg3: memref<1x240xf32, #tpu.memory_space<vmem>>, %arg4: memref<8x240xf32, #tpu.memory_space<vmem>>) attributes {dimension_semantics = [#tpu.dimension_semantics<parallel>], iteration_bounds = array<i64: 2>, scalar_prefetch = 0 : i64, scratch_operands = 0 : i64, tpu.core_type = #tpu.core_type<tc>, window_params = [{transform_indices = @transform_0, window_bounds = array<i64: 8, 32>}, {pipeline_mode = #tpu.pipeline_mode<synchronous>, transform_indices = @transform_1, window_bounds = array<i64: 32, 240>}, {pipeline_mode = #tpu.pipeline_mode<synchronous>, transform_indices = @transform_2, window_bounds = array<i64: 1, 240>}, {transform_indices = @transform_3, window_bounds = array<i64: 8, 240>}]} {
    %c0 = arith.constant 0 : index
    %c0_0 = arith.constant 0 : index
    %0 = vector.load %arg1[%c0, %c0_0] : memref<8x32xf32, #tpu.memory_space<vmem>>, vector<8x32xf32>
    %1 = arith.truncf %0 : vector<8x32xf32> to vector<8x32xbf16>
    %c0_1 = arith.constant 0 : index
    %c0_2 = arith.constant 0 : index
    %2 = vector.load %arg2[%c0_1, %c0_2] : memref<32x240xf32, #tpu.memory_space<vmem>>, vector<32x240xf32>
    %3 = arith.truncf %2 : vector<32x240xf32> to vector<32x240xbf16>
    %cst = arith.constant dense<0.000000e+00> : vector<8x240xf32>
    %4 = tpu.matmul %1, %3, %cst {dimension_numbers = #tpu.dot_dimension_numbers<[1], [0], [0], [1], [0, 0, 1, 1], [], []>} : vector<8x32xbf16>, vector<32x240xbf16>, vector<8x240xf32> -> vector<8x240xf32>
    %c0_3 = arith.constant 0 : index
    %c0_4 = arith.constant 0 : index
    %5 = vector.load %arg3[%c0_3, %c0_4] : memref<1x240xf32, #tpu.memory_space<vmem>>, vector<1x240xf32>
    %6 = vector.broadcast %5 : vector<1x240xf32> to vector<8x240xf32>
    %7 = arith.addf %4, %6 : vector<8x240xf32>
    %c0_5 = arith.constant 0 : index
    %c0_6 = arith.constant 0 : index
    %8 = vector.load %arg4[%c0_5, %c0_6] : memref<8x240xf32, #tpu.memory_space<vmem>>, vector<8x240xf32>
    tpu.vector_store %arg4[%c0_5, %c0_6], %7 {strides = array<i32>} : memref<8x240xf32, #tpu.memory_space<vmem>>, vector<8x240xf32>,
    return
  }
  func.func @transform_0(%arg0: i32) -> (i32, i32) {
    %c0_i32 = arith.constant 0 : i32
    %c0_i32_0 = arith.constant 0 : i32
    return %arg0, %c0_i32 : i32, i32
  }
  func.func @transform_1(%arg0: i32) -> (i32, i32) {
    %c0_i32 = arith.constant 0 : i32
    %c0_i32_0 = arith.constant 0 : i32
    %c0_i32_1 = arith.constant 0 : i32
    return %c0_i32, %c0_i32_0 : i32, i32
  }
  func.func @transform_2(%arg0: i32) -> (i32, i32) {
    %c0_i32 = arith.constant 0 : i32
    %c0_i32_0 = arith.constant 0 : i32
    %c0_i32_1 = arith.constant 0 : i32
    return %c0_i32, %c0_i32_0 : i32, i32
  }
  func.func @transform_3(%arg0: i32) -> (i32, i32) {
    %c0_i32 = arith.constant 0 : i32
    %c0_i32_0 = arith.constant 0 : i32
    return %arg0, %c0_i32 : i32, i32
  }
}

module attributes {stable_mosaic.version = 11 : i64} {
  func.func @_ipa_attention_kernel(%arg0: i32, %arg1: memref<8x31x16xbf16, #tpu.memory_space<vmem>>, %arg2: memref<8x16xf32, #tpu.memory_space<vmem>>, %arg3: memref<4x8x8xf32, #tpu.memory_space<vmem>>, %arg4: memref<4x16x8xf32, #tpu.memory_space<vmem>>, %arg5: memref<4x16x8xf32, #tpu.memory_space<vmem>>, %arg6: memref<16x8x3xf32, #tpu.memory_space<vmem>>, %arg7: memref<16x16x3xf32, #tpu.memory_space<vmem>>, %arg8: memref<4x16x12xf32, #tpu.memory_space<vmem>>, %arg9: memref<4x31xf32, #tpu.memory_space<vmem>>, %arg10: memref<4x1x1xf32, #tpu.memory_space<vmem>>, %arg11: memref<4x1x1xf32, #tpu.memory_space<vmem>>, %arg12: memref<8x160xf32, #tpu.memory_space<vmem>>, %arg13: memref<4x8x12xf32, #tpu.memory_space<vmem>>) attributes {dimension_semantics = [#tpu.dimension_semantics<parallel>], iteration_bounds = array<i64: 2>, scalar_prefetch = 0 : i64, scratch_operands = 0 : i64, tpu.core_type = #tpu.core_type<tc>, window_params = [{transform_indices = @transform_0, window_bounds = array<i64: 8, 31, 16>}, {transform_indices = @transform_1, window_bounds = array<i64: 8, 16>}, {transform_indices = @transform_2, window_bounds = array<i64: 4, 8, 8>}, {pipeline_mode = #tpu.pipeline_mode<synchronous>, transform_indices = @transform_3, window_bounds = array<i64: 4, 16, 8>}, {pipeline_mode = #tpu.pipeline_mode<synchronous>, transform_indices = @transform_4, window_bounds = array<i64: 4, 16, 8>}, {transform_indices = @transform_5, window_bounds = array<i64: 16, 8, 3>}, {pipeline_mode = #tpu.pipeline_mode<synchronous>, transform_indices = @transform_6, window_bounds = array<i64: 16, 16, 3>}, {pipeline_mode = #tpu.pipeline_mode<synchronous>, transform_indices = @transform_7, window_bounds = array<i64: 4, 16, 12>}, {pipeline_mode = #tpu.pipeline_mode<synchronous>, transform_indices = @transform_8, window_bounds = array<i64: 4, 31>}, {pipeline_mode = #tpu.pipeline_mode<synchronous>, transform_indices = @transform_9, window_bounds = array<i64: 4, 1, 1>}, {pipeline_mode = #tpu.pipeline_mode<synchronous>, transform_indices = @transform_10, window_bounds = array<i64: 4, 1, 1>}, {transform_indices = @transform_11, window_bounds = array<i64: 8, 160>}, {transform_indices = @transform_12, window_bounds = array<i64: 4, 8, 12>}]} {
    %c0 = arith.constant 0 : index
    %c0_0 = arith.constant 0 : index
    %c0_1 = arith.constant 0 : index
    %0 = vector.load %arg1[%c0, %c0_0, %c0_1] : memref<8x31x16xbf16, #tpu.memory_space<vmem>>, vector<8x31x16xbf16>
    %c0_2 = arith.constant 0 : index
    %c0_3 = arith.constant 0 : index
    %1 = vector.load %arg2[%c0_2, %c0_3] : memref<8x16xf32, #tpu.memory_space<vmem>>, vector<8x16xf32>
    %c0_4 = arith.constant 0 : index
    %c0_5 = arith.constant 0 : index
    %c0_6 = arith.constant 0 : index
    %2 = vector.load %arg3[%c0_4, %c0_5, %c0_6] : memref<4x8x8xf32, #tpu.memory_space<vmem>>, vector<4x8x8xf32>
    %3 = arith.truncf %2 : vector<4x8x8xf32> to vector<4x8x8xbf16>
    %c0_7 = arith.constant 0 : index
    %c0_8 = arith.constant 0 : index
    %c0_9 = arith.constant 0 : index
    %4 = vector.load %arg4[%c0_7, %c0_8, %c0_9] : memref<4x16x8xf32, #tpu.memory_space<vmem>>, vector<4x16x8xf32>
    %5 = arith.truncf %4 : vector<4x16x8xf32> to vector<4x16x8xbf16>
    %cst = arith.constant dense<0.000000e+00> : vector<4x8x16xf32>
    %6 = tpu.matmul %3, %5, %cst {dimension_numbers = #tpu.dot_dimension_numbers<[2], [2], [1], [1], [0, 0, 0, 1, 1, 1], [0], [0]>} : vector<4x8x8xbf16>, vector<4x16x8xbf16>, vector<4x8x16xf32> -> vector<4x8x16xf32>
    %cst_10 = arith.constant 0.353553385 : f32
    %7 = vector.broadcast %cst_10 : f32 to vector<4x8x16xf32>
    %8 = arith.mulf %6, %7 : vector<4x8x16xf32>
    %c0_11 = arith.constant 0 : index
    %c0_12 = arith.constant 0 : index
    %c0_13 = arith.constant 0 : index
    %9 = vector.load %arg6[%c0_11, %c0_12, %c0_13] : memref<16x8x3xf32, #tpu.memory_space<vmem>>, vector<16x8x3xf32>
    %c0_14 = arith.constant 0 : index
    %c0_15 = arith.constant 0 : index
    %c0_16 = arith.constant 0 : index
    %10 = vector.load %arg7[%c0_14, %c0_15, %c0_16] : memref<16x16x3xf32, #tpu.memory_space<vmem>>, vector<16x16x3xf32>
    %cst_17 = arith.constant dense<0.000000e+00> : vector<16x8x16xf32>
    %11 = tpu.matmul %9, %10, %cst_17 {dimension_numbers = #tpu.dot_dimension_numbers<[2], [2], [1], [1], [0, 0, 0, 1, 1, 1], [0], [0]>} : vector<16x8x3xf32>, vector<16x16x3xf32>, vector<16x8x16xf32> -> vector<16x8x16xf32>
    %12 = arith.mulf %9, %9 : vector<16x8x3xf32>
    %cst_18 = arith.constant dense<0.000000e+00> : vector<16x8xf32>
    %13 = vector.multi_reduction <add>, %12, %cst_18 [2] : vector<16x8x3xf32> to vector<16x8xf32>
    %14 = vector.shape_cast %13 : vector<16x8xf32> to vector<16x8x1xf32>
    %15 = arith.mulf %10, %10 : vector<16x16x3xf32>
    %cst_19 = arith.constant dense<0.000000e+00> : vector<16x16xf32>
    %16 = vector.multi_reduction <add>, %15, %cst_19 [2] : vector<16x16x3xf32> to vector<16x16xf32>
    %17 = vector.shape_cast %16 : vector<16x16xf32> to vector<16x1x16xf32>
    %18 = vector.broadcast %14 : vector<16x8x1xf32> to vector<16x8x16xf32>
    %19 = vector.broadcast %17 : vector<16x1x16xf32> to vector<16x8x16xf32>
    %20 = arith.addf %18, %19 : vector<16x8x16xf32>
    %cst_20 = arith.constant 2.000000e+00 : f32
    %21 = vector.broadcast %cst_20 : f32 to vector<16x8x16xf32>
    %22 = arith.mulf %21, %11 : vector<16x8x16xf32>
    %23 = arith.subf %20, %22 : vector<16x8x16xf32>
    %cst_21 = arith.constant 0.000000e+00 : f32
    %24 = vector.broadcast %cst_21 : f32 to vector<16x8x16xf32>
    %25 = arith.maximumf %23, %24 : vector<16x8x16xf32>
    %cst_22 = arith.constant 9.99999993E-9 : f32
    %26 = vector.broadcast %cst_22 : f32 to vector<16x8x16xf32>
    %27 = arith.addf %25, %26 : vector<16x8x16xf32>
    %28 = math.sqrt %27 : vector<16x8x16xf32>
    %29 = vector.shape_cast %28 : vector<16x8x16xf32> to vector<4x4x8x16xf32>
    %cst_23 = arith.constant dense<0.000000e+00> : vector<4x8x16xf32>
    %30 = vector.multi_reduction <add>, %29, %cst_23 [1] : vector<4x4x8x16xf32> to vector<4x8x16xf32>
    %c0_24 = arith.constant 0 : index
    %c0_25 = arith.constant 0 : index
    %31 = vector.load %arg9[%c0_24, %c0_25] : memref<4x31xf32, #tpu.memory_space<vmem>>, vector<4x31xf32>
    %32 = arith.truncf %31 : vector<4x31xf32> to vector<4x31xbf16>
    %33 = vector.shape_cast %32 : vector<4x31xbf16> to vector<1x4x31xbf16>
    %34 = vector.shape_cast %33 : vector<1x4x31xbf16> to vector<1x4x31xbf16>
    %35 = vector.broadcast %34 : vector<1x4x31xbf16> to vector<8x4x31xbf16>
    %cst_26 = arith.constant dense<0.000000e+00> : vector<8x4x16xf32>
    %36 = tpu.matmul %35, %0, %cst_26 {dimension_numbers = #tpu.dot_dimension_numbers<[2], [1], [1], [2], [0, 0, 0, 1, 1, 2], [0], [0]>} : vector<8x4x31xbf16>, vector<8x31x16xbf16>, vector<8x4x16xf32> -> vector<8x4x16xf32>
    %37 = tpu.transpose %36, [1, 0, 2] : vector<8x4x16xf32> -> vector<4x8x16xf32>
    %c0_27 = arith.constant 0 : index
    %c0_28 = arith.constant 0 : index
    %c0_29 = arith.constant 0 : index
    %38 = vector.load %arg10[%c0_27, %c0_28, %c0_29] : memref<4x1x1xf32, #tpu.memory_space<vmem>>, vector<4x1x1xf32>
    %39 = vector.shape_cast %1 : vector<8x16xf32> to vector<1x8x16xf32>
    %40 = vector.broadcast %38 : vector<4x1x1xf32> to vector<4x8x16xf32>
    %41 = vector.broadcast %39 : vector<1x8x16xf32> to vector<4x8x16xf32>
    %42 = arith.mulf %40, %41 : vector<4x8x16xf32>
    %43 = arith.addf %37, %42 : vector<4x8x16xf32>
    %44 = arith.addf %8, %43 : vector<4x8x16xf32>
    %cst_30 = arith.constant 0.577350259 : f32
    %45 = vector.broadcast %cst_30 : f32 to vector<4x8x16xf32>
    %46 = arith.mulf %45, %44 : vector<4x8x16xf32>
    %c0_31 = arith.constant 0 : index
    %c0_32 = arith.constant 0 : index
    %c0_33 = arith.constant 0 : index
    %47 = vector.load %arg11[%c0_31, %c0_32, %c0_33] : memref<4x1x1xf32, #tpu.memory_space<vmem>>, vector<4x1x1xf32>
    %48 = vector.broadcast %47 : vector<4x1x1xf32> to vector<4x8x16xf32>
    %49 = arith.mulf %48, %30 : vector<4x8x16xf32>
    %50 = arith.subf %46, %49 : vector<4x8x16xf32>
    %cst_34 = arith.constant dense<0xFF800000> : vector<4x8xf32>
    %51 = vector.multi_reduction <maximumf>, %50, %cst_34 [2] : vector<4x8x16xf32> to vector<4x8xf32>
    %52 = vector.shape_cast %51 : vector<4x8xf32> to vector<4x8x1xf32>
    %53 = vector.broadcast %52 : vector<4x8x1xf32> to vector<4x8x16xf32>
    %54 = arith.subf %50, %53 : vector<4x8x16xf32>
    %55 = math.exp %54 : vector<4x8x16xf32>
    %cst_35 = arith.constant dense<0.000000e+00> : vector<4x8xf32>
    %56 = vector.multi_reduction <add>, %55, %cst_35 [2] : vector<4x8x16xf32> to vector<4x8xf32>
    %57 = vector.shape_cast %56 : vector<4x8xf32> to vector<4x8x1xf32>
    %58 = tpu.reciprocal %57 {approx = true} : vector<4x8x1xf32> -> vector<4x8x1xf32>
    %59 = vector.broadcast %58 : vector<4x8x1xf32> to vector<4x8x16xf32>
    %60 = arith.mulf %55, %59 : vector<4x8x16xf32>
    %61 = arith.truncf %60 : vector<4x8x16xf32> to vector<4x8x16xbf16>
    %c0_36 = arith.constant 0 : index
    %c0_37 = arith.constant 0 : index
    %c0_38 = arith.constant 0 : index
    %62 = vector.load %arg5[%c0_36, %c0_37, %c0_38] : memref<4x16x8xf32, #tpu.memory_space<vmem>>, vector<4x16x8xf32>
    %63 = arith.truncf %62 : vector<4x16x8xf32> to vector<4x16x8xbf16>
    %cst_39 = arith.constant dense<0.000000e+00> : vector<4x8x8xf32>
    %64 = tpu.matmul %61, %63, %cst_39 {dimension_numbers = #tpu.dot_dimension_numbers<[2], [1], [1], [2], [0, 0, 0, 1, 1, 2], [0], [0]>} : vector<4x8x16xbf16>, vector<4x16x8xbf16>, vector<4x8x8xf32> -> vector<4x8x8xf32>
    %c0_40 = arith.constant 0 : index
    %c0_41 = arith.constant 0 : index
    %c0_42 = arith.constant 0 : index
    %65 = vector.load %arg8[%c0_40, %c0_41, %c0_42] : memref<4x16x12xf32, #tpu.memory_space<vmem>>, vector<4x16x12xf32>
    %66 = arith.truncf %65 : vector<4x16x12xf32> to vector<4x16x12xbf16>
    %cst_43 = arith.constant dense<0.000000e+00> : vector<4x8x12xf32>
    %67 = tpu.matmul %61, %66, %cst_43 {dimension_numbers = #tpu.dot_dimension_numbers<[2], [1], [1], [2], [0, 0, 0, 1, 1, 2], [0], [0]>} : vector<4x8x16xbf16>, vector<4x16x12xbf16>, vector<4x8x12xf32> -> vector<4x8x12xf32>
    %68 = tpu.transpose %60, [1, 0, 2] : vector<4x8x16xf32> -> vector<8x4x16xf32>
    %69 = arith.truncf %68 : vector<8x4x16xf32> to vector<8x4x16xbf16>
    %cst_44 = arith.constant dense<0.000000e+00> : vector<8x4x31xf32>
    %70 = tpu.matmul %69, %0, %cst_44 {dimension_numbers = #tpu.dot_dimension_numbers<[2], [2], [1], [1], [0, 0, 0, 1, 1, 1], [0], [0]>} : vector<8x4x16xbf16>, vector<8x31x16xbf16>, vector<8x4x31xf32> -> vector<8x4x31xf32>
    %71 = vector.shape_cast %1 : vector<8x16xf32> to vector<1x8x16xf32>
    %72 = vector.broadcast %71 : vector<1x8x16xf32> to vector<4x8x16xf32>
    %73 = arith.mulf %60, %72 : vector<4x8x16xf32>
    %cst_45 = arith.constant dense<0.000000e+00> : vector<4x8xf32>
    %74 = vector.multi_reduction <add>, %73, %cst_45 [2] : vector<4x8x16xf32> to vector<4x8xf32>
    %75 = vector.shape_cast %74 : vector<4x8xf32> to vector<4x8x1xf32>
    %76 = vector.extract_strided_slice %75 {offsets = [0, 0, 0], sizes = [1, 8, 1], strides = [1, 1, 1]} : vector<4x8x1xf32> to vector<1x8x1xf32>
    %77 = vector.shape_cast %76 : vector<1x8x1xf32> to vector<8x1xf32>
    %c0_46 = arith.constant 0 : index
    %c0_47 = arith.constant 0 : index
    %78 = vector.load %arg12[%c0_46, %c0_47] : memref<8x160xf32, #tpu.memory_space<vmem>>, vector<8x1xf32>
    tpu.vector_store %arg12[%c0_46, %c0_47], %77 {strides = array<i32>} : memref<8x160xf32, #tpu.memory_space<vmem>>, vector<8x1xf32>,
    %79 = vector.extract_strided_slice %70 {offsets = [0, 0, 0], sizes = [8, 1, 31], strides = [1, 1, 1]} : vector<8x4x31xf32> to vector<8x1x31xf32>
    %80 = vector.shape_cast %79 : vector<8x1x31xf32> to vector<8x31xf32>
    %c0_48 = arith.constant 0 : index
    %c1 = arith.constant 1 : index
    %81 = vector.load %arg12[%c0_48, %c1] : memref<8x160xf32, #tpu.memory_space<vmem>>, vector<8x31xf32>
    tpu.vector_store %arg12[%c0_48, %c1], %80 {strides = array<i32>} : memref<8x160xf32, #tpu.memory_space<vmem>>, vector<8x31xf32>,
    %82 = vector.extract_strided_slice %64 {offsets = [0, 0, 0], sizes = [1, 8, 8], strides = [1, 1, 1]} : vector<4x8x8xf32> to vector<1x8x8xf32>
    %83 = vector.shape_cast %82 : vector<1x8x8xf32> to vector<8x8xf32>
    %c0_49 = arith.constant 0 : index
    %c128 = arith.constant 128 : index
    %84 = vector.load %arg12[%c0_49, %c128] : memref<8x160xf32, #tpu.memory_space<vmem>>, vector<8x8xf32>
    tpu.vector_store %arg12[%c0_49, %c128], %83 {strides = array<i32>} : memref<8x160xf32, #tpu.memory_space<vmem>>, vector<8x8xf32>,
    %85 = vector.extract_strided_slice %75 {offsets = [1, 0, 0], sizes = [1, 8, 1], strides = [1, 1, 1]} : vector<4x8x1xf32> to vector<1x8x1xf32>
    %86 = vector.shape_cast %85 : vector<1x8x1xf32> to vector<8x1xf32>
    %c0_50 = arith.constant 0 : index
    %c32 = arith.constant 32 : index
    %87 = vector.load %arg12[%c0_50, %c32] : memref<8x160xf32, #tpu.memory_space<vmem>>, vector<8x1xf32>
    tpu.vector_store %arg12[%c0_50, %c32], %86 {strides = array<i32>} : memref<8x160xf32, #tpu.memory_space<vmem>>, vector<8x1xf32>,
    %88 = vector.extract_strided_slice %70 {offsets = [0, 1, 0], sizes = [8, 1, 31], strides = [1, 1, 1]} : vector<8x4x31xf32> to vector<8x1x31xf32>
    %89 = vector.shape_cast %88 : vector<8x1x31xf32> to vector<8x31xf32>
    %c0_51 = arith.constant 0 : index
    %c33 = arith.constant 33 : index
    %90 = vector.load %arg12[%c0_51, %c33] : memref<8x160xf32, #tpu.memory_space<vmem>>, vector<8x31xf32>
    tpu.vector_store %arg12[%c0_51, %c33], %89 {strides = array<i32>} : memref<8x160xf32, #tpu.memory_space<vmem>>, vector<8x31xf32>,
    %91 = vector.extract_strided_slice %64 {offsets = [1, 0, 0], sizes = [1, 8, 8], strides = [1, 1, 1]} : vector<4x8x8xf32> to vector<1x8x8xf32>
    %92 = vector.shape_cast %91 : vector<1x8x8xf32> to vector<8x8xf32>
    %c0_52 = arith.constant 0 : index
    %c136 = arith.constant 136 : index
    %93 = vector.load %arg12[%c0_52, %c136] : memref<8x160xf32, #tpu.memory_space<vmem>>, vector<8x8xf32>
    tpu.vector_store %arg12[%c0_52, %c136], %92 {strides = array<i32>} : memref<8x160xf32, #tpu.memory_space<vmem>>, vector<8x8xf32>,
    %94 = vector.extract_strided_slice %75 {offsets = [2, 0, 0], sizes = [1, 8, 1], strides = [1, 1, 1]} : vector<4x8x1xf32> to vector<1x8x1xf32>
    %95 = vector.shape_cast %94 : vector<1x8x1xf32> to vector<8x1xf32>
    %c0_53 = arith.constant 0 : index
    %c64 = arith.constant 64 : index
    %96 = vector.load %arg12[%c0_53, %c64] : memref<8x160xf32, #tpu.memory_space<vmem>>, vector<8x1xf32>
    tpu.vector_store %arg12[%c0_53, %c64], %95 {strides = array<i32>} : memref<8x160xf32, #tpu.memory_space<vmem>>, vector<8x1xf32>,
    %97 = vector.extract_strided_slice %70 {offsets = [0, 2, 0], sizes = [8, 1, 31], strides = [1, 1, 1]} : vector<8x4x31xf32> to vector<8x1x31xf32>
    %98 = vector.shape_cast %97 : vector<8x1x31xf32> to vector<8x31xf32>
    %c0_54 = arith.constant 0 : index
    %c65 = arith.constant 65 : index
    %99 = vector.load %arg12[%c0_54, %c65] : memref<8x160xf32, #tpu.memory_space<vmem>>, vector<8x31xf32>
    tpu.vector_store %arg12[%c0_54, %c65], %98 {strides = array<i32>} : memref<8x160xf32, #tpu.memory_space<vmem>>, vector<8x31xf32>,
    %100 = vector.extract_strided_slice %64 {offsets = [2, 0, 0], sizes = [1, 8, 8], strides = [1, 1, 1]} : vector<4x8x8xf32> to vector<1x8x8xf32>
    %101 = vector.shape_cast %100 : vector<1x8x8xf32> to vector<8x8xf32>
    %c0_55 = arith.constant 0 : index
    %c144 = arith.constant 144 : index
    %102 = vector.load %arg12[%c0_55, %c144] : memref<8x160xf32, #tpu.memory_space<vmem>>, vector<8x8xf32>
    tpu.vector_store %arg12[%c0_55, %c144], %101 {strides = array<i32>} : memref<8x160xf32, #tpu.memory_space<vmem>>, vector<8x8xf32>,
    %103 = vector.extract_strided_slice %75 {offsets = [3, 0, 0], sizes = [1, 8, 1], strides = [1, 1, 1]} : vector<4x8x1xf32> to vector<1x8x1xf32>
    %104 = vector.shape_cast %103 : vector<1x8x1xf32> to vector<8x1xf32>
    %c0_56 = arith.constant 0 : index
    %c96 = arith.constant 96 : index
    %105 = vector.load %arg12[%c0_56, %c96] : memref<8x160xf32, #tpu.memory_space<vmem>>, vector<8x1xf32>
    tpu.vector_store %arg12[%c0_56, %c96], %104 {strides = array<i32>} : memref<8x160xf32, #tpu.memory_space<vmem>>, vector<8x1xf32>,
    %106 = vector.extract_strided_slice %70 {offsets = [0, 3, 0], sizes = [8, 1, 31], strides = [1, 1, 1]} : vector<8x4x31xf32> to vector<8x1x31xf32>
    %107 = vector.shape_cast %106 : vector<8x1x31xf32> to vector<8x31xf32>
    %c0_57 = arith.constant 0 : index
    %c97 = arith.constant 97 : index
    %108 = vector.load %arg12[%c0_57, %c97] : memref<8x160xf32, #tpu.memory_space<vmem>>, vector<8x31xf32>
    tpu.vector_store %arg12[%c0_57, %c97], %107 {strides = array<i32>} : memref<8x160xf32, #tpu.memory_space<vmem>>, vector<8x31xf32>,
    %109 = vector.extract_strided_slice %64 {offsets = [3, 0, 0], sizes = [1, 8, 8], strides = [1, 1, 1]} : vector<4x8x8xf32> to vector<1x8x8xf32>
    %110 = vector.shape_cast %109 : vector<1x8x8xf32> to vector<8x8xf32>
    %c0_58 = arith.constant 0 : index
    %c152 = arith.constant 152 : index
    %111 = vector.load %arg12[%c0_58, %c152] : memref<8x160xf32, #tpu.memory_space<vmem>>, vector<8x8xf32>
    tpu.vector_store %arg12[%c0_58, %c152], %110 {strides = array<i32>} : memref<8x160xf32, #tpu.memory_space<vmem>>, vector<8x8xf32>,
    %c0_59 = arith.constant 0 : index
    %c0_60 = arith.constant 0 : index
    %c0_61 = arith.constant 0 : index
    %112 = vector.load %arg13[%c0_59, %c0_60, %c0_61] : memref<4x8x12xf32, #tpu.memory_space<vmem>>, vector<4x8x12xf32>
    tpu.vector_store %arg13[%c0_59, %c0_60, %c0_61], %67 {strides = array<i32>} : memref<4x8x12xf32, #tpu.memory_space<vmem>>, vector<4x8x12xf32>,
    return
  }
  func.func @transform_0(%arg0: i32) -> (i32, i32, i32) {
    %c0_i32 = arith.constant 0 : i32
    %c0_i32_0 = arith.constant 0 : i32
    %c0_i32_1 = arith.constant 0 : i32
    return %arg0, %c0_i32, %c0_i32_0 : i32, i32, i32
  }
  func.func @transform_1(%arg0: i32) -> (i32, i32) {
    %c0_i32 = arith.constant 0 : i32
    %c0_i32_0 = arith.constant 0 : i32
    return %arg0, %c0_i32 : i32, i32
  }
  func.func @transform_2(%arg0: i32) -> (i32, i32, i32) {
    %c0_i32 = arith.constant 0 : i32
    %c0_i32_0 = arith.constant 0 : i32
    %c0_i32_1 = arith.constant 0 : i32
    return %c0_i32, %arg0, %c0_i32_0 : i32, i32, i32
  }
  func.func @transform_3(%arg0: i32) -> (i32, i32, i32) {
    %c0_i32 = arith.constant 0 : i32
    %c0_i32_0 = arith.constant 0 : i32
    %c0_i32_1 = arith.constant 0 : i32
    %c0_i32_2 = arith.constant 0 : i32
    return %c0_i32, %c0_i32_0, %c0_i32_1 : i32, i32, i32
  }
  func.func @transform_4(%arg0: i32) -> (i32, i32, i32) {
    %c0_i32 = arith.constant 0 : i32
    %c0_i32_0 = arith.constant 0 : i32
    %c0_i32_1 = arith.constant 0 : i32
    %c0_i32_2 = arith.constant 0 : i32
    return %c0_i32, %c0_i32_0, %c0_i32_1 : i32, i32, i32
  }
  func.func @transform_5(%arg0: i32) -> (i32, i32, i32) {
    %c0_i32 = arith.constant 0 : i32
    %c0_i32_0 = arith.constant 0 : i32
    %c0_i32_1 = arith.constant 0 : i32
    return %c0_i32, %arg0, %c0_i32_0 : i32, i32, i32
  }
  func.func @transform_6(%arg0: i32) -> (i32, i32, i32) {
    %c0_i32 = arith.constant 0 : i32
    %c0_i32_0 = arith.constant 0 : i32
    %c0_i32_1 = arith.constant 0 : i32
    %c0_i32_2 = arith.constant 0 : i32
    return %c0_i32, %c0_i32_0, %c0_i32_1 : i32, i32, i32
  }
  func.func @transform_7(%arg0: i32) -> (i32, i32, i32) {
    %c0_i32 = arith.constant 0 : i32
    %c0_i32_0 = arith.constant 0 : i32
    %c0_i32_1 = arith.constant 0 : i32
    %c0_i32_2 = arith.constant 0 : i32
    return %c0_i32, %c0_i32_0, %c0_i32_1 : i32, i32, i32
  }
  func.func @transform_8(%arg0: i32) -> (i32, i32) {
    %c0_i32 = arith.constant 0 : i32
    %c0_i32_0 = arith.constant 0 : i32
    %c0_i32_1 = arith.constant 0 : i32
    return %c0_i32, %c0_i32_0 : i32, i32
  }
  func.func @transform_9(%arg0: i32) -> (i32, i32, i32) {
    %c0_i32 = arith.constant 0 : i32
    %c0_i32_0 = arith.constant 0 : i32
    %c0_i32_1 = arith.constant 0 : i32
    %c0_i32_2 = arith.constant 0 : i32
    return %c0_i32, %c0_i32_0, %c0_i32_1 : i32, i32, i32
  }
  func.func @transform_10(%arg0: i32) -> (i32, i32, i32) {
    %c0_i32 = arith.constant 0 : i32
    %c0_i32_0 = arith.constant 0 : i32
    %c0_i32_1 = arith.constant 0 : i32
    %c0_i32_2 = arith.constant 0 : i32
    return %c0_i32, %c0_i32_0, %c0_i32_1 : i32, i32, i32
  }
  func.func @transform_11(%arg0: i32) -> (i32, i32) {
    %c0_i32 = arith.constant 0 : i32
    %c0_i32_0 = arith.constant 0 : i32
    return %arg0, %c0_i32 : i32, i32
  }
  func.func @transform_12(%arg0: i32) -> (i32, i32, i32) {
    %c0_i32 = arith.constant 0 : i32
    %c0_i32_0 = arith.constant 0 : i32
    %c0_i32_1 = arith.constant 0 : i32
    return %c0_i32, %arg0, %c0_i32_0 : i32, i32, i32
  }
}

module attributes {stable_mosaic.version = 11 : i64} {
  func.func @_layer_tail_kernel(%arg0: i32, %arg1: memref<8x32xf32, #tpu.memory_space<vmem>>, %arg2: memref<8x160xf32, #tpu.memory_space<vmem>>, %arg3: memref<8x64xf32, #tpu.memory_space<vmem>>, %arg4: memref<160x32xf32, #tpu.memory_space<vmem>>, %arg5: memref<64x32xf32, #tpu.memory_space<vmem>>, %arg6: memref<1x32xf32, #tpu.memory_space<vmem>>, %arg7: memref<1x32xf32, #tpu.memory_space<vmem>>, %arg8: memref<1x32xf32, #tpu.memory_space<vmem>>, %arg9: memref<32x64xf32, #tpu.memory_space<vmem>>, %arg10: memref<1x64xf32, #tpu.memory_space<vmem>>, %arg11: memref<64x64xf32, #tpu.memory_space<vmem>>, %arg12: memref<1x64xf32, #tpu.memory_space<vmem>>, %arg13: memref<64x32xf32, #tpu.memory_space<vmem>>, %arg14: memref<1x32xf32, #tpu.memory_space<vmem>>, %arg15: memref<1x32xf32, #tpu.memory_space<vmem>>, %arg16: memref<1x32xf32, #tpu.memory_space<vmem>>, %arg17: memref<32x6xf32, #tpu.memory_space<vmem>>, %arg18: memref<1x6xf32, #tpu.memory_space<vmem>>, %arg19: memref<8x32xf32, #tpu.memory_space<vmem>>, %arg20: memref<8x6xf32, #tpu.memory_space<vmem>>) attributes {dimension_semantics = [#tpu.dimension_semantics<parallel>], iteration_bounds = array<i64: 2>, scalar_prefetch = 0 : i64, scratch_operands = 0 : i64, tpu.core_type = #tpu.core_type<tc>, window_params = [{transform_indices = @transform_0, window_bounds = array<i64: 8, 32>}, {transform_indices = @transform_1, window_bounds = array<i64: 8, 160>}, {transform_indices = @transform_2, window_bounds = array<i64: 8, 64>}, {pipeline_mode = #tpu.pipeline_mode<synchronous>, transform_indices = @transform_3, window_bounds = array<i64: 160, 32>}, {pipeline_mode = #tpu.pipeline_mode<synchronous>, transform_indices = @transform_4, window_bounds = array<i64: 64, 32>}, {pipeline_mode = #tpu.pipeline_mode<synchronous>, transform_indices = @transform_5, window_bounds = array<i64: 1, 32>}, {pipeline_mode = #tpu.pipeline_mode<synchronous>, transform_indices = @transform_6, window_bounds = array<i64: 1, 32>}, {pipeline_mode = #tpu.pipeline_mode<synchronous>, transform_indices = @transform_7, window_bounds = array<i64: 1, 32>}, {pipeline_mode = #tpu.pipeline_mode<synchronous>, transform_indices = @transform_8, window_bounds = array<i64: 32, 64>}, {pipeline_mode = #tpu.pipeline_mode<synchronous>, transform_indices = @transform_9, window_bounds = array<i64: 1, 64>}, {pipeline_mode = #tpu.pipeline_mode<synchronous>, transform_indices = @transform_10, window_bounds = array<i64: 64, 64>}, {pipeline_mode = #tpu.pipeline_mode<synchronous>, transform_indices = @transform_11, window_bounds = array<i64: 1, 64>}, {pipeline_mode = #tpu.pipeline_mode<synchronous>, transform_indices = @transform_12, window_bounds = array<i64: 64, 32>}, {pipeline_mode = #tpu.pipeline_mode<synchronous>, transform_indices = @transform_13, window_bounds = array<i64: 1, 32>}, {pipeline_mode = #tpu.pipeline_mode<synchronous>, transform_indices = @transform_14, window_bounds = array<i64: 1, 32>}, {pipeline_mode = #tpu.pipeline_mode<synchronous>, transform_indices = @transform_15, window_bounds = array<i64: 1, 32>}, {pipeline_mode = #tpu.pipeline_mode<synchronous>, transform_indices = @transform_16, window_bounds = array<i64: 32, 6>}, {pipeline_mode = #tpu.pipeline_mode<synchronous>, transform_indices = @transform_17, window_bounds = array<i64: 1, 6>}, {transform_indices = @transform_18, window_bounds = array<i64: 8, 32>}, {transform_indices = @transform_19, window_bounds = array<i64: 8, 6>}]} {
    %c0 = arith.constant 0 : index
    %c0_0 = arith.constant 0 : index
    %0 = vector.load %arg1[%c0, %c0_0] : memref<8x32xf32, #tpu.memory_space<vmem>>, vector<8x32xf32>
    %c0_1 = arith.constant 0 : index
    %c0_2 = arith.constant 0 : index
    %1 = vector.load %arg2[%c0_1, %c0_2] : memref<8x160xf32, #tpu.memory_space<vmem>>, vector<8x160xf32>
    %2 = arith.truncf %1 : vector<8x160xf32> to vector<8x160xbf16>
    %c0_3 = arith.constant 0 : index
    %c0_4 = arith.constant 0 : index
    %3 = vector.load %arg4[%c0_3, %c0_4] : memref<160x32xf32, #tpu.memory_space<vmem>>, vector<160x32xf32>
    %4 = arith.truncf %3 : vector<160x32xf32> to vector<160x32xbf16>
    %cst = arith.constant dense<0.000000e+00> : vector<8x32xf32>
    %5 = tpu.matmul %2, %4, %cst {dimension_numbers = #tpu.dot_dimension_numbers<[1], [0], [0], [1], [0, 0, 1, 1], [], []>} : vector<8x160xbf16>, vector<160x32xbf16>, vector<8x32xf32> -> vector<8x32xf32>
    %c0_5 = arith.constant 0 : index
    %c0_6 = arith.constant 0 : index
    %6 = vector.load %arg6[%c0_5, %c0_6] : memref<1x32xf32, #tpu.memory_space<vmem>>, vector<1x32xf32>
    %7 = vector.broadcast %6 : vector<1x32xf32> to vector<8x32xf32>
    %8 = arith.addf %5, %7 : vector<8x32xf32>
    %9 = arith.addf %0, %8 : vector<8x32xf32>
    %c0_7 = arith.constant 0 : index
    %c0_8 = arith.constant 0 : index
    %10 = vector.load %arg3[%c0_7, %c0_8] : memref<8x64xf32, #tpu.memory_space<vmem>>, vector<8x64xf32>
    %11 = arith.truncf %10 : vector<8x64xf32> to vector<8x64xbf16>
    %c0_9 = arith.constant 0 : index
    %c0_10 = arith.constant 0 : index
    %12 = vector.load %arg5[%c0_9, %c0_10] : memref<64x32xf32, #tpu.memory_space<vmem>>, vector<64x32xf32>
    %13 = arith.truncf %12 : vector<64x32xf32> to vector<64x32xbf16>
    %cst_11 = arith.constant dense<0.000000e+00> : vector<8x32xf32>
    %14 = tpu.matmul %11, %13, %cst_11 {dimension_numbers = #tpu.dot_dimension_numbers<[1], [0], [0], [1], [0, 0, 1, 1], [], []>} : vector<8x64xbf16>, vector<64x32xbf16>, vector<8x32xf32> -> vector<8x32xf32>
    %15 = arith.addf %9, %14 : vector<8x32xf32>
    %cst_12 = arith.constant dense<0.000000e+00> : vector<8xf32>
    %16 = vector.multi_reduction <add>, %15, %cst_12 [1] : vector<8x32xf32> to vector<8xf32>
    %17 = vector.shape_cast %16 : vector<8xf32> to vector<8x1xf32>
    %cst_13 = arith.constant 3.200000e+01 : f32
    %18 = vector.broadcast %cst_13 : f32 to vector<8x1xf32>
    %19 = arith.divf %17, %18 : vector<8x1xf32>
    %20 = vector.broadcast %19 : vector<8x1xf32> to vector<8x32xf32>
    %21 = arith.subf %15, %20 : vector<8x32xf32>
    %22 = arith.mulf %21, %21 : vector<8x32xf32>
    %cst_14 = arith.constant dense<0.000000e+00> : vector<8xf32>
    %23 = vector.multi_reduction <add>, %22, %cst_14 [1] : vector<8x32xf32> to vector<8xf32>
    %24 = vector.shape_cast %23 : vector<8xf32> to vector<8x1xf32>
    %cst_15 = arith.constant 3.200000e+01 : f32
    %25 = vector.broadcast %cst_15 : f32 to vector<8x1xf32>
    %26 = arith.divf %24, %25 : vector<8x1xf32>
    %27 = vector.broadcast %19 : vector<8x1xf32> to vector<8x32xf32>
    %28 = arith.subf %15, %27 : vector<8x32xf32>
    %cst_16 = arith.constant 9.99999974E-6 : f32
    %29 = vector.broadcast %cst_16 : f32 to vector<8x1xf32>
    %30 = arith.addf %26, %29 : vector<8x1xf32>
    %31 = math.rsqrt %30 : vector<8x1xf32>
    %32 = vector.broadcast %31 : vector<8x1xf32> to vector<8x32xf32>
    %33 = arith.mulf %28, %32 : vector<8x32xf32>
    %c0_17 = arith.constant 0 : index
    %c0_18 = arith.constant 0 : index
    %34 = vector.load %arg7[%c0_17, %c0_18] : memref<1x32xf32, #tpu.memory_space<vmem>>, vector<1x32xf32>
    %35 = vector.broadcast %34 : vector<1x32xf32> to vector<8x32xf32>
    %36 = arith.mulf %33, %35 : vector<8x32xf32>
    %c0_19 = arith.constant 0 : index
    %c0_20 = arith.constant 0 : index
    %37 = vector.load %arg8[%c0_19, %c0_20] : memref<1x32xf32, #tpu.memory_space<vmem>>, vector<1x32xf32>
    %38 = vector.broadcast %37 : vector<1x32xf32> to vector<8x32xf32>
    %39 = arith.addf %36, %38 : vector<8x32xf32>
    %40 = arith.truncf %39 : vector<8x32xf32> to vector<8x32xbf16>
    %c0_21 = arith.constant 0 : index
    %c0_22 = arith.constant 0 : index
    %41 = vector.load %arg9[%c0_21, %c0_22] : memref<32x64xf32, #tpu.memory_space<vmem>>, vector<32x64xf32>
    %42 = arith.truncf %41 : vector<32x64xf32> to vector<32x64xbf16>
    %cst_23 = arith.constant dense<0.000000e+00> : vector<8x64xf32>
    %43 = tpu.matmul %40, %42, %cst_23 {dimension_numbers = #tpu.dot_dimension_numbers<[1], [0], [0], [1], [0, 0, 1, 1], [], []>} : vector<8x32xbf16>, vector<32x64xbf16>, vector<8x64xf32> -> vector<8x64xf32>
    %c0_24 = arith.constant 0 : index
    %c0_25 = arith.constant 0 : index
    %44 = vector.load %arg10[%c0_24, %c0_25] : memref<1x64xf32, #tpu.memory_space<vmem>>, vector<1x64xf32>
    %45 = vector.broadcast %44 : vector<1x64xf32> to vector<8x64xf32>
    %46 = arith.addf %43, %45 : vector<8x64xf32>
    %cst_26 = arith.constant 0.000000e+00 : f32
    %47 = vector.broadcast %cst_26 : f32 to vector<8x64xf32>
    %48 = arith.maximumf %46, %47 : vector<8x64xf32>
    %49 = arith.truncf %48 : vector<8x64xf32> to vector<8x64xbf16>
    %c0_27 = arith.constant 0 : index
    %c0_28 = arith.constant 0 : index
    %50 = vector.load %arg11[%c0_27, %c0_28] : memref<64x64xf32, #tpu.memory_space<vmem>>, vector<64x64xf32>
    %51 = arith.truncf %50 : vector<64x64xf32> to vector<64x64xbf16>
    %cst_29 = arith.constant dense<0.000000e+00> : vector<8x64xf32>
    %52 = tpu.matmul %49, %51, %cst_29 {dimension_numbers = #tpu.dot_dimension_numbers<[1], [0], [0], [1], [0, 0, 1, 1], [], []>} : vector<8x64xbf16>, vector<64x64xbf16>, vector<8x64xf32> -> vector<8x64xf32>
    %c0_30 = arith.constant 0 : index
    %c0_31 = arith.constant 0 : index
    %53 = vector.load %arg12[%c0_30, %c0_31] : memref<1x64xf32, #tpu.memory_space<vmem>>, vector<1x64xf32>
    %54 = vector.broadcast %53 : vector<1x64xf32> to vector<8x64xf32>
    %55 = arith.addf %52, %54 : vector<8x64xf32>
    %cst_32 = arith.constant 0.000000e+00 : f32
    %56 = vector.broadcast %cst_32 : f32 to vector<8x64xf32>
    %57 = arith.maximumf %55, %56 : vector<8x64xf32>
    %58 = arith.truncf %57 : vector<8x64xf32> to vector<8x64xbf16>
    %c0_33 = arith.constant 0 : index
    %c0_34 = arith.constant 0 : index
    %59 = vector.load %arg13[%c0_33, %c0_34] : memref<64x32xf32, #tpu.memory_space<vmem>>, vector<64x32xf32>
    %60 = arith.truncf %59 : vector<64x32xf32> to vector<64x32xbf16>
    %cst_35 = arith.constant dense<0.000000e+00> : vector<8x32xf32>
    %61 = tpu.matmul %58, %60, %cst_35 {dimension_numbers = #tpu.dot_dimension_numbers<[1], [0], [0], [1], [0, 0, 1, 1], [], []>} : vector<8x64xbf16>, vector<64x32xbf16>, vector<8x32xf32> -> vector<8x32xf32>
    %c0_36 = arith.constant 0 : index
    %c0_37 = arith.constant 0 : index
    %62 = vector.load %arg14[%c0_36, %c0_37] : memref<1x32xf32, #tpu.memory_space<vmem>>, vector<1x32xf32>
    %63 = vector.broadcast %62 : vector<1x32xf32> to vector<8x32xf32>
    %64 = arith.addf %61, %63 : vector<8x32xf32>
    %65 = arith.addf %39, %64 : vector<8x32xf32>
    %cst_38 = arith.constant dense<0.000000e+00> : vector<8xf32>
    %66 = vector.multi_reduction <add>, %65, %cst_38 [1] : vector<8x32xf32> to vector<8xf32>
    %67 = vector.shape_cast %66 : vector<8xf32> to vector<8x1xf32>
    %cst_39 = arith.constant 3.200000e+01 : f32
    %68 = vector.broadcast %cst_39 : f32 to vector<8x1xf32>
    %69 = arith.divf %67, %68 : vector<8x1xf32>
    %70 = vector.broadcast %69 : vector<8x1xf32> to vector<8x32xf32>
    %71 = arith.subf %65, %70 : vector<8x32xf32>
    %72 = arith.mulf %71, %71 : vector<8x32xf32>
    %cst_40 = arith.constant dense<0.000000e+00> : vector<8xf32>
    %73 = vector.multi_reduction <add>, %72, %cst_40 [1] : vector<8x32xf32> to vector<8xf32>
    %74 = vector.shape_cast %73 : vector<8xf32> to vector<8x1xf32>
    %cst_41 = arith.constant 3.200000e+01 : f32
    %75 = vector.broadcast %cst_41 : f32 to vector<8x1xf32>
    %76 = arith.divf %74, %75 : vector<8x1xf32>
    %77 = vector.broadcast %69 : vector<8x1xf32> to vector<8x32xf32>
    %78 = arith.subf %65, %77 : vector<8x32xf32>
    %cst_42 = arith.constant 9.99999974E-6 : f32
    %79 = vector.broadcast %cst_42 : f32 to vector<8x1xf32>
    %80 = arith.addf %76, %79 : vector<8x1xf32>
    %81 = math.rsqrt %80 : vector<8x1xf32>
    %82 = vector.broadcast %81 : vector<8x1xf32> to vector<8x32xf32>
    %83 = arith.mulf %78, %82 : vector<8x32xf32>
    %c0_43 = arith.constant 0 : index
    %c0_44 = arith.constant 0 : index
    %84 = vector.load %arg15[%c0_43, %c0_44] : memref<1x32xf32, #tpu.memory_space<vmem>>, vector<1x32xf32>
    %85 = vector.broadcast %84 : vector<1x32xf32> to vector<8x32xf32>
    %86 = arith.mulf %83, %85 : vector<8x32xf32>
    %c0_45 = arith.constant 0 : index
    %c0_46 = arith.constant 0 : index
    %87 = vector.load %arg16[%c0_45, %c0_46] : memref<1x32xf32, #tpu.memory_space<vmem>>, vector<1x32xf32>
    %88 = vector.broadcast %87 : vector<1x32xf32> to vector<8x32xf32>
    %89 = arith.addf %86, %88 : vector<8x32xf32>
    %c0_47 = arith.constant 0 : index
    %c0_48 = arith.constant 0 : index
    %90 = vector.load %arg19[%c0_47, %c0_48] : memref<8x32xf32, #tpu.memory_space<vmem>>, vector<8x32xf32>
    tpu.vector_store %arg19[%c0_47, %c0_48], %89 {strides = array<i32>} : memref<8x32xf32, #tpu.memory_space<vmem>>, vector<8x32xf32>,
    %91 = arith.truncf %89 : vector<8x32xf32> to vector<8x32xbf16>
    %c0_49 = arith.constant 0 : index
    %c0_50 = arith.constant 0 : index
    %92 = vector.load %arg17[%c0_49, %c0_50] : memref<32x6xf32, #tpu.memory_space<vmem>>, vector<32x6xf32>
    %93 = arith.truncf %92 : vector<32x6xf32> to vector<32x6xbf16>
    %cst_51 = arith.constant dense<0.000000e+00> : vector<8x6xf32>
    %94 = tpu.matmul %91, %93, %cst_51 {dimension_numbers = #tpu.dot_dimension_numbers<[1], [0], [0], [1], [0, 0, 1, 1], [], []>} : vector<8x32xbf16>, vector<32x6xbf16>, vector<8x6xf32> -> vector<8x6xf32>
    %c0_52 = arith.constant 0 : index
    %c0_53 = arith.constant 0 : index
    %95 = vector.load %arg18[%c0_52, %c0_53] : memref<1x6xf32, #tpu.memory_space<vmem>>, vector<1x6xf32>
    %96 = vector.broadcast %95 : vector<1x6xf32> to vector<8x6xf32>
    %97 = arith.addf %94, %96 : vector<8x6xf32>
    %c0_54 = arith.constant 0 : index
    %c0_55 = arith.constant 0 : index
    %98 = vector.load %arg20[%c0_54, %c0_55] : memref<8x6xf32, #tpu.memory_space<vmem>>, vector<8x6xf32>
    tpu.vector_store %arg20[%c0_54, %c0_55], %97 {strides = array<i32>} : memref<8x6xf32, #tpu.memory_space<vmem>>, vector<8x6xf32>,
    return
  }
  func.func @transform_0(%arg0: i32) -> (i32, i32) {
    %c0_i32 = arith.constant 0 : i32
    %c0_i32_0 = arith.constant 0 : i32
    return %arg0, %c0_i32 : i32, i32
  }
  func.func @transform_1(%arg0: i32) -> (i32, i32) {
    %c0_i32 = arith.constant 0 : i32
    %c0_i32_0 = arith.constant 0 : i32
    return %arg0, %c0_i32 : i32, i32
  }
  func.func @transform_2(%arg0: i32) -> (i32, i32) {
    %c0_i32 = arith.constant 0 : i32
    %c0_i32_0 = arith.constant 0 : i32
    return %arg0, %c0_i32 : i32, i32
  }
  func.func @transform_3(%arg0: i32) -> (i32, i32) {
    %c0_i32 = arith.constant 0 : i32
    %c0_i32_0 = arith.constant 0 : i32
    %c0_i32_1 = arith.constant 0 : i32
    return %c0_i32, %c0_i32_0 : i32, i32
  }
  func.func @transform_4(%arg0: i32) -> (i32, i32) {
    %c0_i32 = arith.constant 0 : i32
    %c0_i32_0 = arith.constant 0 : i32
    %c0_i32_1 = arith.constant 0 : i32
    return %c0_i32, %c0_i32_0 : i32, i32
  }
  func.func @transform_5(%arg0: i32) -> (i32, i32) {
    %c0_i32 = arith.constant 0 : i32
    %c0_i32_0 = arith.constant 0 : i32
    %c0_i32_1 = arith.constant 0 : i32
    return %c0_i32, %c0_i32_0 : i32, i32
  }
  func.func @transform_6(%arg0: i32) -> (i32, i32) {
    %c0_i32 = arith.constant 0 : i32
    %c0_i32_0 = arith.constant 0 : i32
    %c0_i32_1 = arith.constant 0 : i32
    return %c0_i32, %c0_i32_0 : i32, i32
  }
  func.func @transform_7(%arg0: i32) -> (i32, i32) {
    %c0_i32 = arith.constant 0 : i32
    %c0_i32_0 = arith.constant 0 : i32
    %c0_i32_1 = arith.constant 0 : i32
    return %c0_i32, %c0_i32_0 : i32, i32
  }
  func.func @transform_8(%arg0: i32) -> (i32, i32) {
    %c0_i32 = arith.constant 0 : i32
    %c0_i32_0 = arith.constant 0 : i32
    %c0_i32_1 = arith.constant 0 : i32
    return %c0_i32, %c0_i32_0 : i32, i32
  }
  func.func @transform_9(%arg0: i32) -> (i32, i32) {
    %c0_i32 = arith.constant 0 : i32
    %c0_i32_0 = arith.constant 0 : i32
    %c0_i32_1 = arith.constant 0 : i32
    return %c0_i32, %c0_i32_0 : i32, i32
  }
  func.func @transform_10(%arg0: i32) -> (i32, i32) {
    %c0_i32 = arith.constant 0 : i32
    %c0_i32_0 = arith.constant 0 : i32
    %c0_i32_1 = arith.constant 0 : i32
    return %c0_i32, %c0_i32_0 : i32, i32
  }
  func.func @transform_11(%arg0: i32) -> (i32, i32) {
    %c0_i32 = arith.constant 0 : i32
    %c0_i32_0 = arith.constant 0 : i32
    %c0_i32_1 = arith.constant 0 : i32
    return %c0_i32, %c0_i32_0 : i32, i32
  }
  func.func @transform_12(%arg0: i32) -> (i32, i32) {
    %c0_i32 = arith.constant 0 : i32
    %c0_i32_0 = arith.constant 0 : i32
    %c0_i32_1 = arith.constant 0 : i32
    return %c0_i32, %c0_i32_0 : i32, i32
  }
  func.func @transform_13(%arg0: i32) -> (i32, i32) {
    %c0_i32 = arith.constant 0 : i32
    %c0_i32_0 = arith.constant 0 : i32
    %c0_i32_1 = arith.constant 0 : i32
    return %c0_i32, %c0_i32_0 : i32, i32
  }
  func.func @transform_14(%arg0: i32) -> (i32, i32) {
    %c0_i32 = arith.constant 0 : i32
    %c0_i32_0 = arith.constant 0 : i32
    %c0_i32_1 = arith.constant 0 : i32
    return %c0_i32, %c0_i32_0 : i32, i32
  }
  func.func @transform_15(%arg0: i32) -> (i32, i32) {
    %c0_i32 = arith.constant 0 : i32
    %c0_i32_0 = arith.constant 0 : i32
    %c0_i32_1 = arith.constant 0 : i32
    return %c0_i32, %c0_i32_0 : i32, i32
  }
  func.func @transform_16(%arg0: i32) -> (i32, i32) {
    %c0_i32 = arith.constant 0 : i32
    %c0_i32_0 = arith.constant 0 : i32
    %c0_i32_1 = arith.constant 0 : i32
    return %c0_i32, %c0_i32_0 : i32, i32
  }
  func.func @transform_17(%arg0: i32) -> (i32, i32) {
    %c0_i32 = arith.constant 0 : i32
    %c0_i32_0 = arith.constant 0 : i32
    %c0_i32_1 = arith.constant 0 : i32
    return %c0_i32, %c0_i32_0 : i32, i32
  }
  func.func @transform_18(%arg0: i32) -> (i32, i32) {
    %c0_i32 = arith.constant 0 : i32
    %c0_i32_0 = arith.constant 0 : i32
    return %arg0, %c0_i32 : i32, i32
  }
  func.func @transform_19(%arg0: i32) -> (i32, i32) {
    %c0_i32 = arith.constant 0 : i32
    %c0_i32_0 = arith.constant 0 : i32
    return %arg0, %c0_i32 : i32, i32
  }
}

module attributes {stable_mosaic.version = 11 : i64} {
  func.func @_torsion_kernel(%arg0: i32, %arg1: memref<8x64xf32, #tpu.memory_space<vmem>>, %arg2: memref<64x64xf32, #tpu.memory_space<vmem>>, %arg3: memref<1x64xf32, #tpu.memory_space<vmem>>, %arg4: memref<64x64xf32, #tpu.memory_space<vmem>>, %arg5: memref<1x64xf32, #tpu.memory_space<vmem>>, %arg6: memref<64x64xf32, #tpu.memory_space<vmem>>, %arg7: memref<1x64xf32, #tpu.memory_space<vmem>>, %arg8: memref<64x64xf32, #tpu.memory_space<vmem>>, %arg9: memref<1x64xf32, #tpu.memory_space<vmem>>, %arg10: memref<64x64xf32, #tpu.memory_space<vmem>>, %arg11: memref<1x64xf32, #tpu.memory_space<vmem>>, %arg12: memref<64x64xf32, #tpu.memory_space<vmem>>, %arg13: memref<1x64xf32, #tpu.memory_space<vmem>>, %arg14: memref<64x10xf32, #tpu.memory_space<vmem>>, %arg15: memref<1x10xf32, #tpu.memory_space<vmem>>, %arg16: memref<8x10xf32, #tpu.memory_space<vmem>>) attributes {dimension_semantics = [#tpu.dimension_semantics<parallel>], iteration_bounds = array<i64: 2>, scalar_prefetch = 0 : i64, scratch_operands = 0 : i64, tpu.core_type = #tpu.core_type<tc>, window_params = [{transform_indices = @transform_0, window_bounds = array<i64: 8, 64>}, {pipeline_mode = #tpu.pipeline_mode<synchronous>, transform_indices = @transform_1, window_bounds = array<i64: 64, 64>}, {pipeline_mode = #tpu.pipeline_mode<synchronous>, transform_indices = @transform_2, window_bounds = array<i64: 1, 64>}, {pipeline_mode = #tpu.pipeline_mode<synchronous>, transform_indices = @transform_3, window_bounds = array<i64: 64, 64>}, {pipeline_mode = #tpu.pipeline_mode<synchronous>, transform_indices = @transform_4, window_bounds = array<i64: 1, 64>}, {pipeline_mode = #tpu.pipeline_mode<synchronous>, transform_indices = @transform_5, window_bounds = array<i64: 64, 64>}, {pipeline_mode = #tpu.pipeline_mode<synchronous>, transform_indices = @transform_6, window_bounds = array<i64: 1, 64>}, {pipeline_mode = #tpu.pipeline_mode<synchronous>, transform_indices = @transform_7, window_bounds = array<i64: 64, 64>}, {pipeline_mode = #tpu.pipeline_mode<synchronous>, transform_indices = @transform_8, window_bounds = array<i64: 1, 64>}, {pipeline_mode = #tpu.pipeline_mode<synchronous>, transform_indices = @transform_9, window_bounds = array<i64: 64, 64>}, {pipeline_mode = #tpu.pipeline_mode<synchronous>, transform_indices = @transform_10, window_bounds = array<i64: 1, 64>}, {pipeline_mode = #tpu.pipeline_mode<synchronous>, transform_indices = @transform_11, window_bounds = array<i64: 64, 64>}, {pipeline_mode = #tpu.pipeline_mode<synchronous>, transform_indices = @transform_12, window_bounds = array<i64: 1, 64>}, {pipeline_mode = #tpu.pipeline_mode<synchronous>, transform_indices = @transform_13, window_bounds = array<i64: 64, 10>}, {pipeline_mode = #tpu.pipeline_mode<synchronous>, transform_indices = @transform_14, window_bounds = array<i64: 1, 10>}, {transform_indices = @transform_15, window_bounds = array<i64: 8, 10>}]} {
    %c0 = arith.constant 0 : index
    %c0_0 = arith.constant 0 : index
    %0 = vector.load %arg1[%c0, %c0_0] : memref<8x64xf32, #tpu.memory_space<vmem>>, vector<8x64xf32>
    %1 = arith.truncf %0 : vector<8x64xf32> to vector<8x64xbf16>
    %c0_1 = arith.constant 0 : index
    %c0_2 = arith.constant 0 : index
    %2 = vector.load %arg2[%c0_1, %c0_2] : memref<64x64xf32, #tpu.memory_space<vmem>>, vector<64x64xf32>
    %3 = arith.truncf %2 : vector<64x64xf32> to vector<64x64xbf16>
    %cst = arith.constant dense<0.000000e+00> : vector<8x64xf32>
    %4 = tpu.matmul %1, %3, %cst {dimension_numbers = #tpu.dot_dimension_numbers<[1], [0], [0], [1], [0, 0, 1, 1], [], []>} : vector<8x64xbf16>, vector<64x64xbf16>, vector<8x64xf32> -> vector<8x64xf32>
    %c0_3 = arith.constant 0 : index
    %c0_4 = arith.constant 0 : index
    %5 = vector.load %arg3[%c0_3, %c0_4] : memref<1x64xf32, #tpu.memory_space<vmem>>, vector<1x64xf32>
    %6 = vector.broadcast %5 : vector<1x64xf32> to vector<8x64xf32>
    %7 = arith.addf %4, %6 : vector<8x64xf32>
    %cst_5 = arith.constant 0.000000e+00 : f32
    %8 = vector.broadcast %cst_5 : f32 to vector<8x64xf32>
    %9 = arith.maximumf %7, %8 : vector<8x64xf32>
    %10 = arith.truncf %9 : vector<8x64xf32> to vector<8x64xbf16>
    %c0_6 = arith.constant 0 : index
    %c0_7 = arith.constant 0 : index
    %11 = vector.load %arg4[%c0_6, %c0_7] : memref<64x64xf32, #tpu.memory_space<vmem>>, vector<64x64xf32>
    %12 = arith.truncf %11 : vector<64x64xf32> to vector<64x64xbf16>
    %cst_8 = arith.constant dense<0.000000e+00> : vector<8x64xf32>
    %13 = tpu.matmul %10, %12, %cst_8 {dimension_numbers = #tpu.dot_dimension_numbers<[1], [0], [0], [1], [0, 0, 1, 1], [], []>} : vector<8x64xbf16>, vector<64x64xbf16>, vector<8x64xf32> -> vector<8x64xf32>
    %c0_9 = arith.constant 0 : index
    %c0_10 = arith.constant 0 : index
    %14 = vector.load %arg5[%c0_9, %c0_10] : memref<1x64xf32, #tpu.memory_space<vmem>>, vector<1x64xf32>
    %15 = vector.broadcast %14 : vector<1x64xf32> to vector<8x64xf32>
    %16 = arith.addf %13, %15 : vector<8x64xf32>
    %cst_11 = arith.constant 0.000000e+00 : f32
    %17 = vector.broadcast %cst_11 : f32 to vector<8x64xf32>
    %18 = arith.maximumf %16, %17 : vector<8x64xf32>
    %19 = arith.truncf %18 : vector<8x64xf32> to vector<8x64xbf16>
    %c0_12 = arith.constant 0 : index
    %c0_13 = arith.constant 0 : index
    %20 = vector.load %arg6[%c0_12, %c0_13] : memref<64x64xf32, #tpu.memory_space<vmem>>, vector<64x64xf32>
    %21 = arith.truncf %20 : vector<64x64xf32> to vector<64x64xbf16>
    %cst_14 = arith.constant dense<0.000000e+00> : vector<8x64xf32>
    %22 = tpu.matmul %19, %21, %cst_14 {dimension_numbers = #tpu.dot_dimension_numbers<[1], [0], [0], [1], [0, 0, 1, 1], [], []>} : vector<8x64xbf16>, vector<64x64xbf16>, vector<8x64xf32> -> vector<8x64xf32>
    %c0_15 = arith.constant 0 : index
    %c0_16 = arith.constant 0 : index
    %23 = vector.load %arg7[%c0_15, %c0_16] : memref<1x64xf32, #tpu.memory_space<vmem>>, vector<1x64xf32>
    %24 = vector.broadcast %23 : vector<1x64xf32> to vector<8x64xf32>
    %25 = arith.addf %22, %24 : vector<8x64xf32>
    %26 = arith.addf %0, %25 : vector<8x64xf32>
    %27 = arith.truncf %26 : vector<8x64xf32> to vector<8x64xbf16>
    %c0_17 = arith.constant 0 : index
    %c0_18 = arith.constant 0 : index
    %28 = vector.load %arg8[%c0_17, %c0_18] : memref<64x64xf32, #tpu.memory_space<vmem>>, vector<64x64xf32>
    %29 = arith.truncf %28 : vector<64x64xf32> to vector<64x64xbf16>
    %cst_19 = arith.constant dense<0.000000e+00> : vector<8x64xf32>
    %30 = tpu.matmul %27, %29, %cst_19 {dimension_numbers = #tpu.dot_dimension_numbers<[1], [0], [0], [1], [0, 0, 1, 1], [], []>} : vector<8x64xbf16>, vector<64x64xbf16>, vector<8x64xf32> -> vector<8x64xf32>
    %c0_20 = arith.constant 0 : index
    %c0_21 = arith.constant 0 : index
    %31 = vector.load %arg9[%c0_20, %c0_21] : memref<1x64xf32, #tpu.memory_space<vmem>>, vector<1x64xf32>
    %32 = vector.broadcast %31 : vector<1x64xf32> to vector<8x64xf32>
    %33 = arith.addf %30, %32 : vector<8x64xf32>
    %cst_22 = arith.constant 0.000000e+00 : f32
    %34 = vector.broadcast %cst_22 : f32 to vector<8x64xf32>
    %35 = arith.maximumf %33, %34 : vector<8x64xf32>
    %36 = arith.truncf %35 : vector<8x64xf32> to vector<8x64xbf16>
    %c0_23 = arith.constant 0 : index
    %c0_24 = arith.constant 0 : index
    %37 = vector.load %arg10[%c0_23, %c0_24] : memref<64x64xf32, #tpu.memory_space<vmem>>, vector<64x64xf32>
    %38 = arith.truncf %37 : vector<64x64xf32> to vector<64x64xbf16>
    %cst_25 = arith.constant dense<0.000000e+00> : vector<8x64xf32>
    %39 = tpu.matmul %36, %38, %cst_25 {dimension_numbers = #tpu.dot_dimension_numbers<[1], [0], [0], [1], [0, 0, 1, 1], [], []>} : vector<8x64xbf16>, vector<64x64xbf16>, vector<8x64xf32> -> vector<8x64xf32>
    %c0_26 = arith.constant 0 : index
    %c0_27 = arith.constant 0 : index
    %40 = vector.load %arg11[%c0_26, %c0_27] : memref<1x64xf32, #tpu.memory_space<vmem>>, vector<1x64xf32>
    %41 = vector.broadcast %40 : vector<1x64xf32> to vector<8x64xf32>
    %42 = arith.addf %39, %41 : vector<8x64xf32>
    %cst_28 = arith.constant 0.000000e+00 : f32
    %43 = vector.broadcast %cst_28 : f32 to vector<8x64xf32>
    %44 = arith.maximumf %42, %43 : vector<8x64xf32>
    %45 = arith.truncf %44 : vector<8x64xf32> to vector<8x64xbf16>
    %c0_29 = arith.constant 0 : index
    %c0_30 = arith.constant 0 : index
    %46 = vector.load %arg12[%c0_29, %c0_30] : memref<64x64xf32, #tpu.memory_space<vmem>>, vector<64x64xf32>
    %47 = arith.truncf %46 : vector<64x64xf32> to vector<64x64xbf16>
    %cst_31 = arith.constant dense<0.000000e+00> : vector<8x64xf32>
    %48 = tpu.matmul %45, %47, %cst_31 {dimension_numbers = #tpu.dot_dimension_numbers<[1], [0], [0], [1], [0, 0, 1, 1], [], []>} : vector<8x64xbf16>, vector<64x64xbf16>, vector<8x64xf32> -> vector<8x64xf32>
    %c0_32 = arith.constant 0 : index
    %c0_33 = arith.constant 0 : index
    %49 = vector.load %arg13[%c0_32, %c0_33] : memref<1x64xf32, #tpu.memory_space<vmem>>, vector<1x64xf32>
    %50 = vector.broadcast %49 : vector<1x64xf32> to vector<8x64xf32>
    %51 = arith.addf %48, %50 : vector<8x64xf32>
    %52 = arith.addf %26, %51 : vector<8x64xf32>
    %cst_34 = arith.constant 0.000000e+00 : f32
    %53 = vector.broadcast %cst_34 : f32 to vector<8x64xf32>
    %54 = arith.maximumf %52, %53 : vector<8x64xf32>
    %55 = arith.truncf %54 : vector<8x64xf32> to vector<8x64xbf16>
    %c0_35 = arith.constant 0 : index
    %c0_36 = arith.constant 0 : index
    %56 = vector.load %arg14[%c0_35, %c0_36] : memref<64x10xf32, #tpu.memory_space<vmem>>, vector<64x10xf32>
    %57 = arith.truncf %56 : vector<64x10xf32> to vector<64x10xbf16>
    %cst_37 = arith.constant dense<0.000000e+00> : vector<8x10xf32>
    %58 = tpu.matmul %55, %57, %cst_37 {dimension_numbers = #tpu.dot_dimension_numbers<[1], [0], [0], [1], [0, 0, 1, 1], [], []>} : vector<8x64xbf16>, vector<64x10xbf16>, vector<8x10xf32> -> vector<8x10xf32>
    %c0_38 = arith.constant 0 : index
    %c0_39 = arith.constant 0 : index
    %59 = vector.load %arg15[%c0_38, %c0_39] : memref<1x10xf32, #tpu.memory_space<vmem>>, vector<1x10xf32>
    %60 = vector.broadcast %59 : vector<1x10xf32> to vector<8x10xf32>
    %61 = arith.addf %58, %60 : vector<8x10xf32>
    %c0_40 = arith.constant 0 : index
    %c0_41 = arith.constant 0 : index
    %62 = vector.load %arg16[%c0_40, %c0_41] : memref<8x10xf32, #tpu.memory_space<vmem>>, vector<8x10xf32>
    tpu.vector_store %arg16[%c0_40, %c0_41], %61 {strides = array<i32>} : memref<8x10xf32, #tpu.memory_space<vmem>>, vector<8x10xf32>,
    return
  }
  func.func @transform_0(%arg0: i32) -> (i32, i32) {
    %c0_i32 = arith.constant 0 : i32
    %c0_i32_0 = arith.constant 0 : i32
    return %arg0, %c0_i32 : i32, i32
  }
  func.func @transform_1(%arg0: i32) -> (i32, i32) {
    %c0_i32 = arith.constant 0 : i32
    %c0_i32_0 = arith.constant 0 : i32
    %c0_i32_1 = arith.constant 0 : i32
    return %c0_i32, %c0_i32_0 : i32, i32
  }
  func.func @transform_2(%arg0: i32) -> (i32, i32) {
    %c0_i32 = arith.constant 0 : i32
    %c0_i32_0 = arith.constant 0 : i32
    %c0_i32_1 = arith.constant 0 : i32
    return %c0_i32, %c0_i32_0 : i32, i32
  }
  func.func @transform_3(%arg0: i32) -> (i32, i32) {
    %c0_i32 = arith.constant 0 : i32
    %c0_i32_0 = arith.constant 0 : i32
    %c0_i32_1 = arith.constant 0 : i32
    return %c0_i32, %c0_i32_0 : i32, i32
  }
  func.func @transform_4(%arg0: i32) -> (i32, i32) {
    %c0_i32 = arith.constant 0 : i32
    %c0_i32_0 = arith.constant 0 : i32
    %c0_i32_1 = arith.constant 0 : i32
    return %c0_i32, %c0_i32_0 : i32, i32
  }
  func.func @transform_5(%arg0: i32) -> (i32, i32) {
    %c0_i32 = arith.constant 0 : i32
    %c0_i32_0 = arith.constant 0 : i32
    %c0_i32_1 = arith.constant 0 : i32
    return %c0_i32, %c0_i32_0 : i32, i32
  }
  func.func @transform_6(%arg0: i32) -> (i32, i32) {
    %c0_i32 = arith.constant 0 : i32
    %c0_i32_0 = arith.constant 0 : i32
    %c0_i32_1 = arith.constant 0 : i32
    return %c0_i32, %c0_i32_0 : i32, i32
  }
  func.func @transform_7(%arg0: i32) -> (i32, i32) {
    %c0_i32 = arith.constant 0 : i32
    %c0_i32_0 = arith.constant 0 : i32
    %c0_i32_1 = arith.constant 0 : i32
    return %c0_i32, %c0_i32_0 : i32, i32
  }
  func.func @transform_8(%arg0: i32) -> (i32, i32) {
    %c0_i32 = arith.constant 0 : i32
    %c0_i32_0 = arith.constant 0 : i32
    %c0_i32_1 = arith.constant 0 : i32
    return %c0_i32, %c0_i32_0 : i32, i32
  }
  func.func @transform_9(%arg0: i32) -> (i32, i32) {
    %c0_i32 = arith.constant 0 : i32
    %c0_i32_0 = arith.constant 0 : i32
    %c0_i32_1 = arith.constant 0 : i32
    return %c0_i32, %c0_i32_0 : i32, i32
  }
  func.func @transform_10(%arg0: i32) -> (i32, i32) {
    %c0_i32 = arith.constant 0 : i32
    %c0_i32_0 = arith.constant 0 : i32
    %c0_i32_1 = arith.constant 0 : i32
    return %c0_i32, %c0_i32_0 : i32, i32
  }
  func.func @transform_11(%arg0: i32) -> (i32, i32) {
    %c0_i32 = arith.constant 0 : i32
    %c0_i32_0 = arith.constant 0 : i32
    %c0_i32_1 = arith.constant 0 : i32
    return %c0_i32, %c0_i32_0 : i32, i32
  }
  func.func @transform_12(%arg0: i32) -> (i32, i32) {
    %c0_i32 = arith.constant 0 : i32
    %c0_i32_0 = arith.constant 0 : i32
    %c0_i32_1 = arith.constant 0 : i32
    return %c0_i32, %c0_i32_0 : i32, i32
  }
  func.func @transform_13(%arg0: i32) -> (i32, i32) {
    %c0_i32 = arith.constant 0 : i32
    %c0_i32_0 = arith.constant 0 : i32
    %c0_i32_1 = arith.constant 0 : i32
    return %c0_i32, %c0_i32_0 : i32, i32
  }
  func.func @transform_14(%arg0: i32) -> (i32, i32) {
    %c0_i32 = arith.constant 0 : i32
    %c0_i32_0 = arith.constant 0 : i32
    %c0_i32_1 = arith.constant 0 : i32
    return %c0_i32, %c0_i32_0 : i32, i32
  }
  func.func @transform_15(%arg0: i32) -> (i32, i32) {
    %c0_i32 = arith.constant 0 : i32
    %c0_i32_0 = arith.constant 0 : i32
    return %arg0, %c0_i32 : i32, i32
  }
}

</mosaic_0001>

<llo_original>
// kernel: structure_module_forward.8
$region0: #{structure_module_forward.8}
  #allocation0 [shape = 'u32[]', space=smem, size = 0x4, offset = 0x4, fixed_abs, tag = 'smem constant byte address 0x4 - core index']
  #allocation1 [shape = 'u32[144,128]{1,0:T(1,128)}', space=vmem, size = 0x12000, scoped, tag = 'internal scratch']
  %s0 = inlined_call_operand.vmem [shape: f32[16,10], index: 0, kind: input, shape index: {}]
  %s1 = inlined_call_operand.vmem [shape: f32[10,32], index: 1, kind: input, shape index: {}]
  %s2 = inlined_call_operand.vmem [shape: f32[1,32], index: 2, kind: input, shape index: {}]
  %s3 = inlined_call_operand.vmem [shape: f32[16,32], index: 3, kind: output, shape index: {}]
  %s4 = sld [smem:[#allocation0]]
  $region45: #{structure_module_forward.8} parent=0
    _
  %s6 = ssub.s32 1, %s4
  %s7 = scalar_select 0, %s6, %s4
  loop: start=0, step=1, limit=4
  $region2: #{structure_module_forward.8} parent=0 // loop_pre_header
    _
  $region3: #{structure_module_forward.8} parent=0 // loop_header
    %s9 = sphi 0, %s13
    %p10 = scmp.ge.s32.totalorder %s9, 4
    %s19 = sphi 0, %s21
    %s22 = sphi 0, %s19
    %s23 = sphi 0, %s22
    %s39 = sphi 0, %s23
    %s43 = sphi 0, %s43
    %s45 = sphi 0, %s43
    %s46 = sphi 0, %s45
    %s60 = sphi 0, %s46
    %s64 = sphi 0, %s64
    %s66 = sphi 0, %s64
    %s67 = sphi 0, %s66
    %s81 = sphi 0, %s67
    %s87 = sphi 0, %s89
    %s90 = sphi 0, %s87
    %s91 = sphi 0, %s90
    %s107 = sphi 0, %s91
  $region4: #{structure_module_forward.8} parent=0 // loop_header_branch
    %12 = sbr.rel (%p10) target = $region8
  $region5: #{structure_module_forward.8} parent=0 // loop_body
    %s14 = ssub.s32 %s9, 1
    %s15 = ssub.s32 %s9, 2
    %s16 = sadd.s32 %s9, 1
    %s17 = ssub.s32 %s9, %s16
    %p18 = scmp.eq.s32.totalorder %s17, 0
    %s20 = sadd.s32 %s19, 1
    %s21 = scalar_select %p18, %s19, %s20
    %p24 = pneg %p18
    %p25 = scmp.eq.s32.totalorder %s9, 1
    %p26 = por %p24, %p25
    %p27 = scmp.ne.s32.totalorder %s19, %s22
    %p28 = scmp.eq.s32.totalorder %s9, 0
    %p29 = por %p27, %p28
    %p30 = scmp.ne.s32.totalorder %s19, %s22
    %p31 = scmp.eq.s32.totalorder %s14, 1
    %p32 = por %p30, %p31
    %p33 = scmp.ne.s32.totalorder %s22, %s23
    %p34 = scmp.eq.s32.totalorder %s14, 0
    %p35 = por %p33, %p34
    %p36 = scmp.ne.s32.totalorder %s22, %s23
    %p37 = scmp.eq.s32.totalorder %s15, 1
    %p38 = por %p36, %p37
    %p40 = scmp.ne.s32.totalorder %s23, %s39
    %p41 = scmp.eq.s32.totalorder %s15, 0
    %p42 = por %p40, %p41
    %s44 = sadd.s32 %s43, 1
    %p47 = scmp.eq.s32.totalorder %s9, 1
    %p48 = scmp.ne.s32.totalorder %s43, %s45
    %p49 = scmp.eq.s32.totalorder %s9, 0
    %p50 = por %p48, %p49
    %p51 = scmp.ne.s32.totalorder %s43, %s45
    %p52 = scmp.eq.s32.totalorder %s14, 1
    %p53 = por %p51, %p52
    %p54 = scmp.ne.s32.totalorder %s45, %s46
    %p55 = scmp.eq.s32.totalorder %s14, 0
    %p56 = por %p54, %p55
    %p57 = scmp.ne.s32.totalorder %s45, %s46
    %p58 = scmp.eq.s32.totalorder %s15, 1
    %p59 = por %p57, %p58
    %p61 = scmp.ne.s32.totalorder %s46, %s60
    %p62 = scmp.eq.s32.totalorder %s15, 0
    %p63 = por %p61, %p62
    %s65 = sadd.s32 %s64, 1
    %p68 = scmp.eq.s32.totalorder %s9, 1
    %p69 = scmp.ne.s32.totalorder %s64, %s66
    %p70 = scmp.eq.s32.totalorder %s9, 0
    %p71 = por %p69, %p70
    %p72 = scmp.ne.s32.totalorder %s64, %s66
    %p73 = scmp.eq.s32.totalorder %s14, 1
    %p74 = por %p72, %p73
    %p75 = scmp.ne.s32.totalorder %s66, %s67
    %p76 = scmp.eq.s32.totalorder %s14, 0
    %p77 = por %p75, %p76
    %p78 = scmp.ne.s32.totalorder %s66, %s67
    %p79 = scmp.eq.s32.totalorder %s15, 1
    %p80 = por %p78, %p79
    %p82 = scmp.ne.s32.totalorder %s67, %s81
    %p83 = scmp.eq.s32.totalorder %s15, 0
    %p84 = por %p82, %p83
    %s85 = ssub.s32 %s9, %s16
    %p86 = scmp.eq.s32.totalorder %s85, 0
    %s88 = sadd.s32 %s87, 1
    %s89 = scalar_select %p86, %s87, %s88
    %p92 = pneg %p86
    %p93 = scmp.eq.s32.totalorder %s9, 1
    %p94 = por %p92, %p93
    %p95 = scmp.ne.s32.totalorder %s87, %s90
    %p96 = scmp.eq.s32.totalorder %s9, 0
    %p97 = por %p95, %p96
    %p98 = scmp.ne.s32.totalorder %s87, %s90
    %p99 = scmp.eq.s32.totalorder %s14, 1
    %p100 = por %p98, %p99
    %p101 = scmp.ne.s32.totalorder %s90, %s91
    %p102 = scmp.eq.s32.totalorder %s14, 0
    %p103 = por %p101, %p102
    %p104 = scmp.ne.s32.totalorder %s90, %s91
    %p105 = scmp.eq.s32.totalorder %s15, 1
    %p106 = por %p104, %p105
    %p108 = scmp.ne.s32.totalorder %s91, %s107
    %p109 = scmp.eq.s32.totalorder %s15, 0
    %p110 = por %p108, %p109
    %p111 = scmp.le.s32.totalorder 1, %s9
    %p112 = scmp.lt.s32.totalorder %s9, 3
    %p113 = pnand %p111, %p112
    %p114 = pneg %p113
    // Predicated region
    $region9: #{structure_module_forward.8} parent=5 // pred_check
      _
    $region10: #{structure_module_forward.8} parent=5 // pred_check_branch
      %116 = sbr.rel (%p113) target = $region12
    $region11: #{structure_module_forward.8} parent=5 // pred_region
      %s117 = ssub.s32 %s9, 1
      // Predicated region
      $region13: #{structure_module_forward.8} parent=11 // pred_check
        %p118 = pneg %p56
      $region14: #{structure_module_forward.8} parent=11 // pred_check_branch
        %120 = sbr.rel (%p118) target = $region16
      $region15: #{structure_module_forward.8} parent=11 // pred_region
        _
      $region16: #{structure_module_forward.8} parent=11 // pred_fallthru
        _
      // Predicated region
      $region17: #{structure_module_forward.8} parent=11 // pred_check
        %p121 = pneg %p77
      $region18: #{structure_module_forward.8} parent=11 // pred_check_branch
        %123 = sbr.rel (%p121) target = $region20
      $region19: #{structure_module_forward.8} parent=11 // pred_region
        _
      $region20: #{structure_module_forward.8} parent=11 // pred_fallthru
        _
    $region12: #{structure_module_forward.8} parent=5 // pred_fallthru
      _
    %p124 = scmp.lt.s32.totalorder %s9, 2
    // Predicated region
    $region21: #{structure_module_forward.8} parent=5 // pred_check
      %p125 = pneg %p124
    $region22: #{structure_module_forward.8} parent=5 // pred_check_branch
      %127 = sbr.rel (%p125) target = $region24
    $region23: #{structure_module_forward.8} parent=5 // pred_region
      // Predicated region
      $region25: #{structure_module_forward.8} parent=23 // pred_check
        %p128 = pneg %p29
      $region26: #{structure_module_forward.8} parent=23 // pred_check_branch
        %130 = sbr.rel (%p128) target = $region28
      $region27: #{structure_module_forward.8} parent=23 // pred_region
        %p131 = scmp.lt.s32.totalorder %s9, 1
        %s132 = scalar_select %p131, %s9, 1
        %s133 = smul.addr %s132, 8
        %s134 = scalar_lea.vmem %s0, %s133
      $region28: #{structure_module_forward.8} parent=23 // pred_fallthru
        _
    $region24: #{structure_module_forward.8} parent=5 // pred_fallthru
      _
    %p135 = scmp.le.s32.totalorder 1, %s9
    %p136 = scmp.lt.s32.totalorder %s9, 3
    %p137 = pnand %p135, %p136
    %p138 = pneg %p137
    // Predicated region
    $region29: #{structure_module_forward.8} parent=5 // pred_check
      _
    $region30: #{structure_module_forward.8} parent=5 // pred_check_branch
      %140 = sbr.rel (%p137) target = $region32
    $region31: #{structure_module_forward.8} parent=5 // pred_region
      %s141 = ssub.s32 %s9, 1
      %p142 = scmp.lt.s32.totalorder %s14, 1
      %s143 = scalar_select %p142, %s14, 1
      %s144 = smul.addr %s143, 8
      %s145 = scalar_lea.vmem %s0, %s144
      %p146 = pneg %p35
      %p147 = pneg %p32
      %p148 = pneg %p56
      %p149 = pneg %p53
      %p150 = pneg %p77
      %p151 = pneg %p74
      %p152 = pneg %p103
      %p153 = pneg %p100
      %p154 = scmp.lt.s32.totalorder %s14, 1
      %s155 = scalar_select %p154, %s14, 1
      %s156 = smul.addr %s155, 8
      %s157 = scalar_lea.vmem %s3, %s156
      %p158 = scmp.lt.s32.totalorder %s14, 1
      %s159 = scalar_select %p158, %s14, 1
      %s160 = smul.addr %s159, 8
      %s161 = scalar_lea.vmem %s0, %s160
      %p162 = scmp.lt.s32.totalorder %s14, 1
      %s163 = scalar_select %p162, %s14, 1
      %s164 = smul.addr %s163, 8
      %s165 = scalar_lea.vmem %s3, %s164
      %v167 = vld [vmem:[%s161] sm:$0xff]
      %v168 = vpack.c.bf16 %v167, %v167
      %v169 = vld [vmem:[%s1] sm:$0xff]
      %v170 = vld [vmem:[%s1 + $0x8] sm:$0x3]
      %v171 = vpack.c.bf16 %v170, %v169
      %v172 = vld [vmem:[%s2] sm:$0x1]
      %v174 = vlaneseq
      %v175 = vshrl.u32 %v174, 7
      %v176 = vsub.s32 0, %v175
      %v177 = vrot.slane %v172, %v176
      %vm179 = vcmask 80896
      %v181 = vsel %vm179, %v168, 0
      %vm183 = vcmask 1044480
      %v185 = vsel %vm183, %v171, 0
      %187 = vmatprep.subr.bf16.mxu0 0
      %188 = vmatpush1.bf16.msra.mxu0 %v185
      %189 = vmatprep.subr.bf16.mxu0 0
      %190 = vmatpush1.bf16.msra.mxu0 0
      %191 = vmatprep.subr.bf16.mxu0 0
      %192 = vmatpush1.bf16.msra.mxu0 0
      %193 = vmatprep.subr.bf16.mxu0 0
      %194 = vmatpush1.bf16.msra.mxu0 0
      %195 = vmatprep.subr.bf16.mxu0 0
      %196 = vmatpush1.bf16.msra.mxu0 0
      %197 = vmatprep.subr.bf16.mxu0 0
      %198 = vmatpush1.bf16.msra.mxu0 0
      %199 = vmatprep.subr.bf16.mxu0 0
      %200 = vmatpush1.bf16.msra.mxu0 0
      %201 = vmatprep.subr.bf16.mxu0 0
      %202 = vmatpush1.bf16.msra.mxu0 0
      %203 = vmatprep.subr.bf16.mxu0 0
      %204 = vmatpush1.bf16.msra.mxu0 0
      %205 = vmatprep.subr.bf16.mxu0 0
      %206 = vmatpush1.bf16.msra.mxu0 0
      %207 = vmatprep.subr.bf16.mxu0 0
      %208 = vmatpush1.bf16.msra.mxu0 0
      %209 = vmatprep.subr.bf16.mxu0 0
      %210 = vmatpush1.bf16.msra.mxu0 0
      %211 = vmatprep.subr.bf16.mxu0 0
      %212 = vmatpush1.bf16.msra.mxu0 0
      %213 = vmatprep.subr.bf16.mxu0 0
      %214 = vmatpush1.bf16.msra.mxu0 0
      %215 = vmatprep.subr.bf16.mxu0 0
      %216 = vmatpush1.bf16.msra.mxu0 0
      %217 = vmatprep.subr.bf16.mxu0 0
      %218 = vmatpush1.bf16.msra.mxu0 0
      %219 = vmatprep.mubr.bf16.mxu0 0
      %220 = vmatmul.mubr.bf16.gmra.mrb[0].mxu0 %v181
      %v221 = vpop.f32.mrb[0].mxu0
      %v222 = vadd.f32 %v177, %v221
      %v223 = vpop.f32.mrb[0].mxu0
      %v224 = vpop.f32.mrb[0].mxu0
      %v225 = vpop.f32.mrb[0].mxu0
      %226 = vdwg.mxu0
      %vm227 = vcmask 261120
      %228 = vst.msk [vmem:[%s165] sm:$0xff] %vm227, %v222
      %p229 = scmp.lt.s32.totalorder %s14, 1
      %s230 = scalar_select %p229, %s14, 1
      %s231 = smul.addr %s230, 8
      %s232 = scalar_lea.vmem %s3, %s231
      // Predicated region
      $region33: #{structure_module_forward.8} parent=31 // pred_check
        %p233 = pneg %p100
      $region34: #{structure_module_forward.8} parent=31 // pred_check_branch
        %235 = sbr.rel (%p233) target = $region36
      $region35: #{structure_module_forward.8} parent=31 // pred_region
        _
      $region36: #{structure_module_forward.8} parent=31 // pred_fallthru
        _
    $region32: #{structure_module_forward.8} parent=5 // pred_fallthru
      _
    %p236 = scmp.le.s32.totalorder 2, %s9
    // Predicated region
    $region37: #{structure_module_forward.8} parent=5 // pred_check
      %p237 = pneg %p236
    $region38: #{structure_module_forward.8} parent=5 // pred_check_branch
      %239 = sbr.rel (%p237) target = $region40
    $region39: #{structure_module_forward.8} parent=5 // pred_region
      %s240 = ssub.s32 %s9, 2
      // Predicated region
      $region41: #{structure_module_forward.8} parent=39 // pred_check
        %p241 = pneg %p106
      $region42: #{structure_module_forward.8} parent=39 // pred_check_branch
        %243 = sbr.rel (%p241) target = $region44
      $region43: #{structure_module_forward.8} parent=39 // pred_region
        %p244 = scmp.lt.s32.totalorder %s15, 1
        %s245 = scalar_select %p244, %s15, 1
        %s246 = smul.addr %s245, 8
        %s247 = scalar_lea.vmem %s3, %s246
      $region44: #{structure_module_forward.8} parent=39 // pred_fallthru
        _
    $region40: #{structure_module_forward.8} parent=5 // pred_fallthru
      _
  $region6: #{structure_module_forward.8} parent=0 // loop_footer
    %s13 = sadd.s32 1, %s9
  $region7: #{structure_module_forward.8} parent=0 // loop_footer_branch
    %8 = sbr.rel target = $region3
  $region8: #{structure_module_forward.8} parent=0 // loop_exit
    _

// kernel: structure_module_forward.9
$region0: #{structure_module_forward.9}
  #allocation0 [shape = 'u32[]', space=smem, size = 0x4, offset = 0x4, fixed_abs, tag = 'smem constant byte address 0x4 - core index']
  #allocation1 [shape = 'u32[144,128]{1,0:T(1,128)}', space=vmem, size = 0x12000, scoped, tag = 'internal scratch']
  %s0 = inlined_call_operand.vmem [shape: f32[16,32], index: 0, kind: input, shape index: {}]
  %s1 = inlined_call_operand.vmem [shape: f32[32,240], index: 1, kind: input, shape index: {}]
  %s2 = inlined_call_operand.vmem [shape: f32[1,240], index: 2, kind: input, shape index: {}]
  %s3 = inlined_call_operand.vmem [shape: f32[16,240], index: 3, kind: output, shape index: {}]
  %s4 = sld [smem:[#allocation0]]
  $region45: #{structure_module_forward.9} parent=0
    _
  %s6 = ssub.s32 1, %s4
  %s7 = scalar_select 0, %s6, %s4
  loop: start=0, step=1, limit=4
  $region2: #{structure_module_forward.9} parent=0 // loop_pre_header
    _
  $region3: #{structure_module_forward.9} parent=0 // loop_header
    %s9 = sphi 0, %s13
    %p10 = scmp.ge.s32.totalorder %s9, 4
    %s19 = sphi 0, %s21
    %s22 = sphi 0, %s19
    %s23 = sphi 0, %s22
    %s39 = sphi 0, %s23
    %s43 = sphi 0, %s43
    %s45 = sphi 0, %s43
    %s46 = sphi 0, %s45
    %s60 = sphi 0, %s46
    %s64 = sphi 0, %s64
    %s66 = sphi 0, %s64
    %s67 = sphi 0, %s66
    %s81 = sphi 0, %s67
    %s87 = sphi 0, %s89
    %s90 = sphi 0, %s87
    %s91 = sphi 0, %s90
    %s107 = sphi 0, %s91
  $region4: #{structure_module_forward.9} parent=0 // loop_header_branch
    %12 = sbr.rel (%p10) target = $region8
  $region5: #{structure_module_forward.9} parent=0 // loop_body
    %s14 = ssub.s32 %s9, 1
    %s15 = ssub.s32 %s9, 2
    %s16 = sadd.s32 %s9, 1
    %s17 = ssub.s32 %s9, %s16
    %p18 = scmp.eq.s32.totalorder %s17, 0
    %s20 = sadd.s32 %s19, 1
    %s21 = scalar_select %p18, %s19, %s20
    %p24 = pneg %p18
    %p25 = scmp.eq.s32.totalorder %s9, 1
    %p26 = por %p24, %p25
    %p27 = scmp.ne.s32.totalorder %s19, %s22
    %p28 = scmp.eq.s32.totalorder %s9, 0
    %p29 = por %p27, %p28
    %p30 = scmp.ne.s32.totalorder %s19, %s22
    %p31 = scmp.eq.s32.totalorder %s14, 1
    %p32 = por %p30, %p31
    %p33 = scmp.ne.s32.totalorder %s22, %s23
    %p34 = scmp.eq.s32.totalorder %s14, 0
    %p35 = por %p33, %p34
    %p36 = scmp.ne.s32.totalorder %s22, %s23
    %p37 = scmp.eq.s32.totalorder %s15, 1
    %p38 = por %p36, %p37
    %p40 = scmp.ne.s32.totalorder %s23, %s39
    %p41 = scmp.eq.s32.totalorder %s15, 0
    %p42 = por %p40, %p41
    %s44 = sadd.s32 %s43, 1
    %p47 = scmp.eq.s32.totalorder %s9, 1
    %p48 = scmp.ne.s32.totalorder %s43, %s45
    %p49 = scmp.eq.s32.totalorder %s9, 0
    %p50 = por %p48, %p49
    %p51 = scmp.ne.s32.totalorder %s43, %s45
    %p52 = scmp.eq.s32.totalorder %s14, 1
    %p53 = por %p51, %p52
    %p54 = scmp.ne.s32.totalorder %s45, %s46
    %p55 = scmp.eq.s32.totalorder %s14, 0
    %p56 = por %p54, %p55
    %p57 = scmp.ne.s32.totalorder %s45, %s46
    %p58 = scmp.eq.s32.totalorder %s15, 1
    %p59 = por %p57, %p58
    %p61 = scmp.ne.s32.totalorder %s46, %s60
    %p62 = scmp.eq.s32.totalorder %s15, 0
    %p63 = por %p61, %p62
    %s65 = sadd.s32 %s64, 1
    %p68 = scmp.eq.s32.totalorder %s9, 1
    %p69 = scmp.ne.s32.totalorder %s64, %s66
    %p70 = scmp.eq.s32.totalorder %s9, 0
    %p71 = por %p69, %p70
    %p72 = scmp.ne.s32.totalorder %s64, %s66
    %p73 = scmp.eq.s32.totalorder %s14, 1
    %p74 = por %p72, %p73
    %p75 = scmp.ne.s32.totalorder %s66, %s67
    %p76 = scmp.eq.s32.totalorder %s14, 0
    %p77 = por %p75, %p76
    %p78 = scmp.ne.s32.totalorder %s66, %s67
    %p79 = scmp.eq.s32.totalorder %s15, 1
    %p80 = por %p78, %p79
    %p82 = scmp.ne.s32.totalorder %s67, %s81
    %p83 = scmp.eq.s32.totalorder %s15, 0
    %p84 = por %p82, %p83
    %s85 = ssub.s32 %s9, %s16
    %p86 = scmp.eq.s32.totalorder %s85, 0
    %s88 = sadd.s32 %s87, 1
    %s89 = scalar_select %p86, %s87, %s88
    %p92 = pneg %p86
    %p93 = scmp.eq.s32.totalorder %s9, 1
    %p94 = por %p92, %p93
    %p95 = scmp.ne.s32.totalorder %s87, %s90
    %p96 = scmp.eq.s32.totalorder %s9, 0
    %p97 = por %p95, %p96
    %p98 = scmp.ne.s32.totalorder %s87, %s90
    %p99 = scmp.eq.s32.totalorder %s14, 1
    %p100 = por %p98, %p99
    %p101 = scmp.ne.s32.totalorder %s90, %s91
    %p102 = scmp.eq.s32.totalorder %s14, 0
    %p103 = por %p101, %p102
    %p104 = scmp.ne.s32.totalorder %s90, %s91
    %p105 = scmp.eq.s32.totalorder %s15, 1
    %p106 = por %p104, %p105
    %p108 = scmp.ne.s32.totalorder %s91, %s107
    %p109 = scmp.eq.s32.totalorder %s15, 0
    %p110 = por %p108, %p109
    %p111 = scmp.le.s32.totalorder 1, %s9
    %p112 = scmp.lt.s32.totalorder %s9, 3
    %p113 = pnand %p111, %p112
    %p114 = pneg %p113
    // Predicated region
    $region9: #{structure_module_forward.9} parent=5 // pred_check
      _
    $region10: #{structure_module_forward.9} parent=5 // pred_check_branch
      %116 = sbr.rel (%p113) target = $region12
    $region11: #{structure_module_forward.9} parent=5 // pred_region
      %s117 = ssub.s32 %s9, 1
      // Predicated region
      $region13: #{structure_module_forward.9} parent=11 // pred_check
        %p118 = pneg %p56
      $region14: #{structure_module_forward.9} parent=11 // pred_check_branch
        %120 = sbr.rel (%p118) target = $region16
      $region15: #{structure_module_forward.9} parent=11 // pred_region
        _
      $region16: #{structure_module_forward.9} parent=11 // pred_fallthru
        _
      // Predicated region
      $region17: #{structure_module_forward.9} parent=11 // pred_check
        %p121 = pneg %p77
      $region18: #{structure_module_forward.9} parent=11 // pred_check_branch
        %123 = sbr.rel (%p121) target = $region20
      $region19: #{structure_module_forward.9} parent=11 // pred_region
        _
      $region20: #{structure_module_forward.9} parent=11 // pred_fallthru
        _
    $region12: #{structure_module_forward.9} parent=5 // pred_fallthru
      _
    %p124 = scmp.lt.s32.totalorder %s9, 2
    // Predicated region
    $region21: #{structure_module_forward.9} parent=5 // pred_check
      %p125 = pneg %p124
    $region22: #{structure_module_forward.9} parent=5 // pred_check_branch
      %127 = sbr.rel (%p125) target = $region24
    $region23: #{structure_module_forward.9} parent=5 // pred_region
      // Predicated region
      $region25: #{structure_module_forward.9} parent=23 // pred_check
        %p128 = pneg %p29
      $region26: #{structure_module_forward.9} parent=23 // pred_check_branch
        %130 = sbr.rel (%p128) target = $region28
      $region27: #{structure_module_forward.9} parent=23 // pred_region
        %p131 = scmp.lt.s32.totalorder %s9, 1
        %s132 = scalar_select %p131, %s9, 1
        %s133 = smul.addr %s132, 8
        %s134 = scalar_lea.vmem %s0, %s133
      $region28: #{structure_module_forward.9} parent=23 // pred_fallthru
        _
    $region24: #{structure_module_forward.9} parent=5 // pred_fallthru
      _
    %p135 = scmp.le.s32.totalorder 1, %s9
    %p136 = scmp.lt.s32.totalorder %s9, 3
    %p137 = pnand %p135, %p136
    %p138 = pneg %p137
    // Predicated region
    $region29: #{structure_module_forward.9} parent=5 // pred_check
      _
    $region30: #{structure_module_forward.9} parent=5 // pred_check_branch
      %140 = sbr.rel (%p137) target = $region32
    $region31: #{structure_module_forward.9} parent=5 // pred_region
      %s141 = ssub.s32 %s9, 1
      %p142 = scmp.lt.s32.totalorder %s14, 1
      %s143 = scalar_select %p142, %s14, 1
      %s144 = smul.addr %s143, 8
      %s145 = scalar_lea.vmem %s0, %s144
      %p146 = pneg %p35
      %p147 = pneg %p32
      %p148 = pneg %p56
      %p149 = pneg %p53
      %p150 = pneg %p77
      %p151 = pneg %p74
      %p152 = pneg %p103
      %p153 = pneg %p100
      %p154 = scmp.lt.s32.totalorder %s14, 1
      %s155 = scalar_select %p154, %s14, 1
      %s156 = smul.addr %s155, 2
      %s157 = smul.addr %s156, 8
      %s158 = scalar_lea.vmem %s3, %s157
      %p159 = scmp.lt.s32.totalorder %s14, 1
      %s160 = scalar_select %p159, %s14, 1
      %s161 = smul.addr %s160, 8
      %s162 = scalar_lea.vmem %s0, %s161
      %p163 = scmp.lt.s32.totalorder %s14, 1
      %s164 = scalar_select %p163, %s14, 1
      %s165 = smul.addr %s164, 2
      %s166 = smul.addr %s165, 8
      %s167 = scalar_lea.vmem %s3, %s166
      %v169 = vld [vmem:[%s162] sm:$0xff]
      %v170 = vpack.c.bf16 %v169, %v169
      %v171 = vld [vmem:[%s1] sm:$0xff]
      %v172 = vld [vmem:[%s1 + $0x8] sm:$0xff]
      %v173 = vld [vmem:[%s1 + $0x10] sm:$0xff]
      %v174 = vld [vmem:[%s1 + $0x18] sm:$0xff]
      %v175 = vld [vmem:[%s1 + $0x20] sm:$0xff]
      %v176 = vld [vmem:[%s1 + $0x28] sm:$0xff]
      %v177 = vld [vmem:[%s1 + $0x30] sm:$0xff]
      %v178 = vld [vmem:[%s1 + $0x38] sm:$0xff]
      %v179 = vpack.c.bf16 %v173, %v171
      %v180 = vpack.c.bf16 %v174, %v172
      %v181 = vpack.c.bf16 %v177, %v175
      %v182 = vpack.c.bf16 %v178, %v176
      %v183 = vld [vmem:[%s2] sm:$0x3]
      %v185 = vlaneseq
      %v186 = vshrl.u32 %v185, 7
      %v187 = vsub.s32 0, %v186
      %v188 = vrot.slane %v183, %v187
      %v189 = vlaneseq
      %v190 = vshrl.u32 %v189, 7
      %v191 = vsub.s32 1, %v190
      %v192 = vrot.slane %v183, %v191
      %vm195 = vcmask 261120
      %v197 = vsel %vm195, %v170, 0
      %199 = vmatprep.subr.bf16.mxu0 %v180
      %200 = vmatpush1.bf16.msra.mxu0 %v179
      %201 = vmatprep.subr.bf16.mxu0 %v182
      %202 = vmatpush1.bf16.msra.mxu0 %v181
      %203 = vmatprep.subr.bf16.mxu0 0
      %204 = vmatpush1.bf16.msra.mxu0 0
      %205 = vmatprep.subr.bf16.mxu0 0
      %206 = vmatpush1.bf16.msra.mxu0 0
      %207 = vmatprep.subr.bf16.mxu0 0
      %208 = vmatpush1.bf16.msra.mxu0 0
      %209 = vmatprep.subr.bf16.mxu0 0
      %210 = vmatpush1.bf16.msra.mxu0 0
      %211 = vmatprep.subr.bf16.mxu0 0
      %212 = vmatpush1.bf16.msra.mxu0 0
      %213 = vmatprep.subr.bf16.mxu0 0
      %214 = vmatpush1.bf16.msra.mxu0 0
      %215 = vmatprep.subr.bf16.mxu0 0
      %216 = vmatpush1.bf16.msra.mxu0 0
      %217 = vmatprep.subr.bf16.mxu0 0
      %218 = vmatpush1.bf16.msra.mxu0 0
      %219 = vmatprep.subr.bf16.mxu0 0
      %220 = vmatpush1.bf16.msra.mxu0 0
      %221 = vmatprep.subr.bf16.mxu0 0
      %222 = vmatpush1.bf16.msra.mxu0 0
      %223 = vmatprep.subr.bf16.mxu0 0
      %224 = vmatpush1.bf16.msra.mxu0 0
      %225 = vmatprep.subr.bf16.mxu0 0
      %226 = vmatpush1.bf16.msra.mxu0 0
      %227 = vmatprep.subr.bf16.mxu0 0
      %228 = vmatpush1.bf16.msra.mxu0 0
      %229 = vmatprep.subr.bf16.mxu0 0
      %230 = vmatpush1.bf16.msra.mxu0 0
      %231 = vmatprep.mubr.bf16.mxu0 0
      %232 = vmatmul.mubr.bf16.gmra.mrb[0].mxu0 %v197
      %v233 = vpop.f32.mrb[0].mxu0
      %v234 = vadd.f32 %v188, %v233
      %v235 = vpop.f32.mrb[0].mxu0
      %v236 = vadd.f32 %v192, %v235
      %v237 = vpop.f32.mrb[0].mxu0
      %v238 = vpop.f32.mrb[0].mxu0
      %239 = vdwg.mxu0
      %240 = vst [vmem:[%s167] sm:$0xff] %v234
      %vm241 = vcmask 916480
      %242 = vst.msk [vmem:[%s167 + $0x8] sm:$0xff] %vm241, %v236
      %p243 = scmp.lt.s32.totalorder %s14, 1
      %s244 = scalar_select %p243, %s14, 1
      %s245 = smul.addr %s244, 2
      %s246 = smul.addr %s245, 8
      %s247 = scalar_lea.vmem %s3, %s246
      // Predicated region
      $region33: #{structure_module_forward.9} parent=31 // pred_check
        %p248 = pneg %p100
      $region34: #{structure_module_forward.9} parent=31 // pred_check_branch
        %250 = sbr.rel (%p248) target = $region36
      $region35: #{structure_module_forward.9} parent=31 // pred_region
        _
      $region36: #{structure_module_forward.9} parent=31 // pred_fallthru
        _
    $region32: #{structure_module_forward.9} parent=5 // pred_fallthru
      _
    %p251 = scmp.le.s32.totalorder 2, %s9
    // Predicated region
    $region37: #{structure_module_forward.9} parent=5 // pred_check
      %p252 = pneg %p251
    $region38: #{structure_module_forward.9} parent=5 // pred_check_branch
      %254 = sbr.rel (%p252) target = $region40
    $region39: #{structure_module_forward.9} parent=5 // pred_region
      %s255 = ssub.s32 %s9, 2
      // Predicated region
      $region41: #{structure_module_forward.9} parent=39 // pred_check
        %p256 = pneg %p106
      $region42: #{structure_module_forward.9} parent=39 // pred_check_branch
        %258 = sbr.rel (%p256) target = $region44
      $region43: #{structure_module_forward.9} parent=39 // pred_region
        %p259 = scmp.lt.s32.totalorder %s15, 1
        %s260 = scalar_select %p259, %s15, 1
        %s261 = smul.addr %s260, 2
        %s262 = smul.addr %s261, 8
        %s263 = scalar_lea.vmem %s3, %s262
      $region44: #{structure_module_forward.9} parent=39 // pred_fallthru
        _
    $region40: #{structure_module_forward.9} parent=5 // pred_fallthru
      _
  $region6: #{structure_module_forward.9} parent=0 // loop_footer
    %s13 = sadd.s32 1, %s9
  $region7: #{structure_module_forward.9} parent=0 // loop_footer_branch
    %8 = sbr.rel target = $region3
  $region8: #{structure_module_forward.9} parent=0 // loop_exit
    _

// kernel: structure_module_forward.11
$region0: #{structure_module_forward.11}
  #allocation0 [shape = 'u32[]', space=smem, size = 0x4, offset = 0x4, fixed_abs, tag = 'smem constant byte address 0x4 - core index']
  #allocation1 [shape = 'u32[144,128]{1,0:T(1,128)}', space=vmem, size = 0x12000, scoped, tag = 'internal scratch']
  %s0 = inlined_call_operand.vmem [shape: f32[16,32], index: 0, kind: input, shape index: {}]
  %s1 = inlined_call_operand.vmem [shape: f32[16,160], index: 1, kind: input, shape index: {}]
  %s2 = inlined_call_operand.vmem [shape: f32[16,64], index: 2, kind: input, shape index: {}]
  %s3 = inlined_call_operand.vmem [shape: f32[160,32], index: 3, kind: input, shape index: {}]
  %s4 = inlined_call_operand.vmem [shape: f32[64,32], index: 4, kind: input, shape index: {}]
  %s5 = inlined_call_operand.vmem [shape: f32[1,32], index: 5, kind: input, shape index: {}]
  %s6 = inlined_call_operand.vmem [shape: f32[1,32], index: 6, kind: input, shape index: {}]
  %s7 = inlined_call_operand.vmem [shape: f32[1,32], index: 7, kind: input, shape index: {}]
  %s8 = inlined_call_operand.vmem [shape: f32[32,64], index: 8, kind: input, shape index: {}]
  %s9 = inlined_call_operand.vmem [shape: f32[1,64], index: 9, kind: input, shape index: {}]
  %s10 = inlined_call_operand.vmem [shape: f32[64,64], index: 10, kind: input, shape index: {}]
  %s11 = inlined_call_operand.vmem [shape: f32[1,64], index: 11, kind: input, shape index: {}]
  %s12 = inlined_call_operand.vmem [shape: f32[64,32], index: 12, kind: input, shape index: {}]
  %s13 = inlined_call_operand.vmem [shape: f32[1,32], index: 13, kind: input, shape index: {}]
  %s14 = inlined_call_operand.vmem [shape: f32[1,32], index: 14, kind: input, shape index: {}]
  %s15 = inlined_call_operand.vmem [shape: f32[1,32], index: 15, kind: input, shape index: {}]
  %s16 = inlined_call_operand.vmem [shape: f32[32,6], index: 16, kind: input, shape index: {}]
  %s17 = inlined_call_operand.vmem [shape: f32[1,6], index: 17, kind: input, shape index: {}]
  %s18 = inlined_call_operand.vmem [shape: f32[16,32], index: 18, kind: output, shape index: {0}]
  %s19 = inlined_call_operand.vmem [shape: f32[16,6], index: 19, kind: output, shape index: {1}]
  %20 = xla_tuple %s18, %s19
  %s21 = sld [smem:[#allocation0]]
  $region113: #{structure_module_forward.11} parent=0
    _
  %s23 = ssub.s32 1, %s21
  %s24 = scalar_select 0, %s23, %s21
  loop: start=0, step=1, limit=4
  $region2: #{structure_module_forward.11} parent=0 // loop_pre_header
    _
  $region3: #{structure_module_forward.11} parent=0 // loop_header
    %s26 = sphi 0, %s30
    %p27 = scmp.ge.s32.totalorder %s26, 4
    %s36 = sphi 0, %s38
    %s39 = sphi 0, %s36
    %s40 = sphi 0, %s39
    %s56 = sphi 0, %s40
    %s62 = sphi 0, %s64
    %s65 = sphi 0, %s62
    %s66 = sphi 0, %s65
    %s82 = sphi 0, %s66
    %s88 = sphi 0, %s90
    %s91 = sphi 0, %s88
    %s92 = sphi 0, %s91
    %s108 = sphi 0, %s92
    %s112 = sphi 0, %s112
    %s114 = sphi 0, %s112
    %s115 = sphi 0, %s114
    %s129 = sphi 0, %s115
    %s133 = sphi 0, %s133
    %s135 = sphi 0, %s133
    %s136 = sphi 0, %s135
    %s150 = sphi 0, %s136
    %s154 = sphi 0, %s154
    %s156 = sphi 0, %s154
    %s157 = sphi 0, %s156
    %s171 = sphi 0, %s157
    %s175 = sphi 0, %s175
    %s177 = sphi 0, %s175
    %s178 = sphi 0, %s177
    %s192 = sphi 0, %s178
    %s196 = sphi 0, %s196
    %s198 = sphi 0, %s196
    %s199 = sphi 0, %s198
    %s213 = sphi 0, %s199
    %s217 = sphi 0, %s217
    %s219 = sphi 0, %s217
    %s220 = sphi 0, %s219
    %s234 = sphi 0, %s220
    %s238 = sphi 0, %s238
    %s240 = sphi 0, %s238
    %s241 = sphi 0, %s240
    %s255 = sphi 0, %s241
    %s259 = sphi 0, %s259
    %s261 = sphi 0, %s259
    %s262 = sphi 0, %s261
    %s276 = sphi 0, %s262
    %s280 = sphi 0, %s280
    %s282 = sphi 0, %s280
    %s283 = sphi 0, %s282
    %s297 = sphi 0, %s283
    %s301 = sphi 0, %s301
    %s303 = sphi 0, %s301
    %s304 = sphi 0, %s303
    %s318 = sphi 0, %s304
    %s322 = sphi 0, %s322
    %s324 = sphi 0, %s322
    %s325 = sphi 0, %s324
    %s339 = sphi 0, %s325
    %s343 = sphi 0, %s343
    %s345 = sphi 0, %s343
    %s346 = sphi 0, %s345
    %s360 = sphi 0, %s346
    %s364 = sphi 0, %s364
    %s366 = sphi 0, %s364
    %s367 = sphi 0, %s366
    %s381 = sphi 0, %s367
    %s385 = sphi 0, %s385
    %s387 = sphi 0, %s385
    %s388 = sphi 0, %s387
    %s402 = sphi 0, %s388
    %s406 = sphi 0, %s406
    %s408 = sphi 0, %s406
    %s409 = sphi 0, %s408
    %s423 = sphi 0, %s409
    %s429 = sphi 0, %s431
    %s432 = sphi 0, %s429
    %s433 = sphi 0, %s432
    %s449 = sphi 0, %s433
    %s455 = sphi 0, %s457
    %s458 = sphi 0, %s455
    %s459 = sphi 0, %s458
    %s475 = sphi 0, %s459
  $region4: #{structure_module_forward.11} parent=0 // loop_header_branch
    %29 = sbr.rel (%p27) target = $region8
  $region5: #{structure_module_forward.11} parent=0 // loop_body
    %s31 = ssub.s32 %s26, 1
    %s32 = ssub.s32 %s26, 2
    %s33 = sadd.s32 %s26, 1
    %s34 = ssub.s32 %s26, %s33
    %p35 = scmp.eq.s32.totalorder %s34, 0
    %s37 = sadd.s32 %s36, 1
    %s38 = scalar_select %p35, %s36, %s37
    %p41 = pneg %p35
    %p42 = scmp.eq.s32.totalorder %s26, 1
    %p43 = por %p41, %p42
    %p44 = scmp.ne.s32.totalorder %s36, %s39
    %p45 = scmp.eq.s32.totalorder %s26, 0
    %p46 = por %p44, %p45
    %p47 = scmp.ne.s32.totalorder %s36, %s39
    %p48 = scmp.eq.s32.totalorder %s31, 1
    %p49 = por %p47, %p48
    %p50 = scmp.ne.s32.totalorder %s39, %s40
    %p51 = scmp.eq.s32.totalorder %s31, 0
    %p52 = por %p50, %p51
    %p53 = scmp.ne.s32.totalorder %s39, %s40
    %p54 = scmp.eq.s32.totalorder %s32, 1
    %p55 = por %p53, %p54
    %p57 = scmp.ne.s32.totalorder %s40, %s56
    %p58 = scmp.eq.s32.totalorder %s32, 0
    %p59 = por %p57, %p58
    %s60 = ssub.s32 %s26, %s33
    %p61 = scmp.eq.s32.totalorder %s60, 0
    %s63 = sadd.s32 %s62, 1
    %s64 = scalar_select %p61, %s62, %s63
    %p67 = pneg %p61
    %p68 = scmp.eq.s32.totalorder %s26, 1
    %p69 = por %p67, %p68
    %p70 = scmp.ne.s32.totalorder %s62, %s65
    %p71 = scmp.eq.s32.totalorder %s26, 0
    %p72 = por %p70, %p71
    %p73 = scmp.ne.s32.totalorder %s62, %s65
    %p74 = scmp.eq.s32.totalorder %s31, 1
    %p75 = por %p73, %p74
    %p76 = scmp.ne.s32.totalorder %s65, %s66
    %p77 = scmp.eq.s32.totalorder %s31, 0
    %p78 = por %p76, %p77
    %p79 = scmp.ne.s32.totalorder %s65, %s66
    %p80 = scmp.eq.s32.totalorder %s32, 1
    %p81 = por %p79, %p80
    %p83 = scmp.ne.s32.totalorder %s66, %s82
    %p84 = scmp.eq.s32.totalorder %s32, 0
    %p85 = por %p83, %p84
    %s86 = ssub.s32 %s26, %s33
    %p87 = scmp.eq.s32.totalorder %s86, 0
    %s89 = sadd.s32 %s88, 1
    %s90 = scalar_select %p87, %s88, %s89
    %p93 = pneg %p87
    %p94 = scmp.eq.s32.totalorder %s26, 1
    %p95 = por %p93, %p94
    %p96 = scmp.ne.s32.totalorder %s88, %s91
    %p97 = scmp.eq.s32.totalorder %s26, 0
    %p98 = por %p96, %p97
    %p99 = scmp.ne.s32.totalorder %s88, %s91
    %p100 = scmp.eq.s32.totalorder %s31, 1
    %p101 = por %p99, %p100
    %p102 = scmp.ne.s32.totalorder %s91, %s92
    %p103 = scmp.eq.s32.totalorder %s31, 0
    %p104 = por %p102, %p103
    %p105 = scmp.ne.s32.totalorder %s91, %s92
    %p106 = scmp.eq.s32.totalorder %s32, 1
    %p107 = por %p105, %p106
    %p109 = scmp.ne.s32.totalorder %s92, %s108
    %p110 = scmp.eq.s32.totalorder %s32, 0
    %p111 = por %p109, %p110
    %s113 = sadd.s32 %s112, 1
    %p116 = scmp.eq.s32.totalorder %s26, 1
    %p117 = scmp.ne.s32.totalorder %s112, %s114
    %p118 = scmp.eq.s32.totalorder %s26, 0
    %p119 = por %p117, %p118
    %p120 = scmp.ne.s32.totalorder %s112, %s114
    %p121 = scmp.eq.s32.totalorder %s31, 1
    %p122 = por %p120, %p121
    %p123 = scmp.ne.s32.totalorder %s114, %s115
    %p124 = scmp.eq.s32.totalorder %s31, 0
    %p125 = por %p123, %p124
    %p126 = scmp.ne.s32.totalorder %s114, %s115
    %p127 = scmp.eq.s32.totalorder %s32, 1
    %p128 = por %p126, %p127
    %p130 = scmp.ne.s32.totalorder %s115, %s129
    %p131 = scmp.eq.s32.totalorder %s32, 0
    %p132 = por %p130, %p131
    %s134 = sadd.s32 %s133, 1
    %p137 = scmp.eq.s32.totalorder %s26, 1
    %p138 = scmp.ne.s32.totalorder %s133, %s135
    %p139 = scmp.eq.s32.totalorder %s26, 0
    %p140 = por %p138, %p139
    %p141 = scmp.ne.s32.totalorder %s133, %s135
    %p142 = scmp.eq.s32.totalorder %s31, 1
    %p143 = por %p141, %p142
    %p144 = scmp.ne.s32.totalorder %s135, %s136
    %p145 = scmp.eq.s32.totalorder %s31, 0
    %p146 = por %p144, %p145
    %p147 = scmp.ne.s32.totalorder %s135, %s136
    %p148 = scmp.eq.s32.totalorder %s32, 1
    %p149 = por %p147, %p148
    %p151 = scmp.ne.s32.totalorder %s136, %s150
    %p152 = scmp.eq.s32.totalorder %s32, 0
    %p153 = por %p151, %p152
    %s155 = sadd.s32 %s154, 1
    %p158 = scmp.eq.s32.totalorder %s26, 1
    %p159 = scmp.ne.s32.totalorder %s154, %s156
    %p160 = scmp.eq.s32.totalorder %s26, 0
    %p161 = por %p159, %p160
    %p162 = scmp.ne.s32.totalorder %s154, %s156
    %p163 = scmp.eq.s32.totalorder %s31, 1
    %p164 = por %p162, %p163
    %p165 = scmp.ne.s32.totalorder %s156, %s157
    %p166 = scmp.eq.s32.totalorder %s31, 0
    %p167 = por %p165, %p166
    %p168 = scmp.ne.s32.totalorder %s156, %s157
    %p169 = scmp.eq.s32.totalorder %s32, 1
    %p170 = por %p168, %p169
    %p172 = scmp.ne.s32.totalorder %s157, %s171
    %p173 = scmp.eq.s32.totalorder %s32, 0
    %p174 = por %p172, %p173
    %s176 = sadd.s32 %s175, 1
    %p179 = scmp.eq.s32.totalorder %s26, 1
    %p180 = scmp.ne.s32.totalorder %s175, %s177
    %p181 = scmp.eq.s32.totalorder %s26, 0
    %p182 = por %p180, %p181
    %p183 = scmp.ne.s32.totalorder %s175, %s177
    %p184 = scmp.eq.s32.totalorder %s31, 1
    %p185 = por %p183, %p184
    %p186 = scmp.ne.s32.totalorder %s177, %s178
    %p187 = scmp.eq.s32.totalorder %s31, 0
    %p188 = por %p186, %p187
    %p189 = scmp.ne.s32.totalorder %s177, %s178
    %p190 = scmp.eq.s32.totalorder %s32, 1
    %p191 = por %p189, %p190
    %p193 = scmp.ne.s32.totalorder %s178, %s192
    %p194 = scmp.eq.s32.totalorder %s32, 0
    %p195 = por %p193, %p194
    %s197 = sadd.s32 %s196, 1
    %p200 = scmp.eq.s32.totalorder %s26, 1
    %p201 = scmp.ne.s32.totalorder %s196, %s198
    %p202 = scmp.eq.s32.totalorder %s26, 0
    %p203 = por %p201, %p202
    %p204 = scmp.ne.s32.totalorder %s196, %s198
    %p205 = scmp.eq.s32.totalorder %s31, 1
    %p206 = por %p204, %p205
    %p207 = scmp.ne.s32.totalorder %s198, %s199
    %p208 = scmp.eq.s32.totalorder %s31, 0
    %p209 = por %p207, %p208
    %p210 = scmp.ne.s32.totalorder %s198, %s199
    %p211 = scmp.eq.s32.totalorder %s32, 1
    %p212 = por %p210, %p211
    %p214 = scmp.ne.s32.totalorder %s199, %s213
    %p215 = scmp.eq.s32.totalorder %s32, 0
    %p216 = por %p214, %p215
    %s218 = sadd.s32 %s217, 1
    %p221 = scmp.eq.s32.totalorder %s26, 1
    %p222 = scmp.ne.s32.totalorder %s217, %s219
    %p223 = scmp.eq.s32.totalorder %s26, 0
    %p224 = por %p222, %p223
    %p225 = scmp.ne.s32.totalorder %s217, %s219
    %p226 = scmp.eq.s32.totalorder %s31, 1
    %p227 = por %p225, %p226
    %p228 = scmp.ne.s32.totalorder %s219, %s220
    %p229 = scmp.eq.s32.totalorder %s31, 0
    %p230 = por %p228, %p229
    %p231 = scmp.ne.s32.totalorder %s219, %s220
    %p232 = scmp.eq.s32.totalorder %s32, 1
    %p233 = por %p231, %p232
    %p235 = scmp.ne.s32.totalorder %s220, %s234
    %p236 = scmp.eq.s32.totalorder %s32, 0
    %p237 = por %p235, %p236
    %s239 = sadd.s32 %s238, 1
    %p242 = scmp.eq.s32.totalorder %s26, 1
    %p243 = scmp.ne.s32.totalorder %s238, %s240
    %p244 = scmp.eq.s32.totalorder %s26, 0
    %p245 = por %p243, %p244
    %p246 = scmp.ne.s32.totalorder %s238, %s240
    %p247 = scmp.eq.s32.totalorder %s31, 1
    %p248 = por %p246, %p247
    %p249 = scmp.ne.s32.totalorder %s240, %s241
    %p250 = scmp.eq.s32.totalorder %s31, 0
    %p251 = por %p249, %p250
    %p252 = scmp.ne.s32.totalorder %s240, %s241
    %p253 = scmp.eq.s32.totalorder %s32, 1
    %p254 = por %p252, %p253
    %p256 = scmp.ne.s32.totalorder %s241, %s255
    %p257 = scmp.eq.s32.totalorder %s32, 0
    %p258 = por %p256, %p257
    %s260 = sadd.s32 %s259, 1
    %p263 = scmp.eq.s32.totalorder %s26, 1
    %p264 = scmp.ne.s32.totalorder %s259, %s261
    %p265 = scmp.eq.s32.totalorder %s26, 0
    %p266 = por %p264, %p265
    %p267 = scmp.ne.s32.totalorder %s259, %s261
    %p268 = scmp.eq.s32.totalorder %s31, 1
    %p269 = por %p267, %p268
    %p270 = scmp.ne.s32.totalorder %s261, %s262
    %p271 = scmp.eq.s32.totalorder %s31, 0
    %p272 = por %p270, %p271
    %p273 = scmp.ne.s32.totalorder %s261, %s262
    %p274 = scmp.eq.s32.totalorder %s32, 1
    %p275 = por %p273, %p274
    %p277 = scmp.ne.s32.totalorder %s262, %s276
    %p278 = scmp.eq.s32.totalorder %s32, 0
    %p279 = por %p277, %p278
    %s281 = sadd.s32 %s280, 1
    %p284 = scmp.eq.s32.totalorder %s26, 1
    %p285 = scmp.ne.s32.totalorder %s280, %s282
    %p286 = scmp.eq.s32.totalorder %s26, 0
    %p287 = por %p285, %p286
    %p288 = scmp.ne.s32.totalorder %s280, %s282
    %p289 = scmp.eq.s32.totalorder %s31, 1
    %p290 = por %p288, %p289
    %p291 = scmp.ne.s32.totalorder %s282, %s283
    %p292 = scmp.eq.s32.totalorder %s31, 0
    %p293 = por %p291, %p292
    %p294 = scmp.ne.s32.totalorder %s282, %s283
    %p295 = scmp.eq.s32.totalorder %s32, 1
    %p296 = por %p294, %p295
    %p298 = scmp.ne.s32.totalorder %s283, %s297
    %p299 = scmp.eq.s32.totalorder %s32, 0
    %p300 = por %p298, %p299
    %s302 = sadd.s32 %s301, 1
    %p305 = scmp.eq.s32.totalorder %s26, 1
    %p306 = scmp.ne.s32.totalorder %s301, %s303
    %p307 = scmp.eq.s32.totalorder %s26, 0
    %p308 = por %p306, %p307
    %p309 = scmp.ne.s32.totalorder %s301, %s303
    %p310 = scmp.eq.s32.totalorder %s31, 1
    %p311 = por %p309, %p310
    %p312 = scmp.ne.s32.totalorder %s303, %s304
    %p313 = scmp.eq.s32.totalorder %s31, 0
    %p314 = por %p312, %p313
    %p315 = scmp.ne.s32.totalorder %s303, %s304
    %p316 = scmp.eq.s32.totalorder %s32, 1
    %p317 = por %p315, %p316
    %p319 = scmp.ne.s32.totalorder %s304, %s318
    %p320 = scmp.eq.s32.totalorder %s32, 0
    %p321 = por %p319, %p320
    %s323 = sadd.s32 %s322, 1
    %p326 = scmp.eq.s32.totalorder %s26, 1
    %p327 = scmp.ne.s32.totalorder %s322, %s324
    %p328 = scmp.eq.s32.totalorder %s26, 0
    %p329 = por %p327, %p328
    %p330 = scmp.ne.s32.totalorder %s322, %s324
    %p331 = scmp.eq.s32.totalorder %s31, 1
    %p332 = por %p330, %p331
    %p333 = scmp.ne.s32.totalorder %s324, %s325
    %p334 = scmp.eq.s32.totalorder %s31, 0
    %p335 = por %p333, %p334
    %p336 = scmp.ne.s32.totalorder %s324, %s325
    %p337 = scmp.eq.s32.totalorder %s32, 1
    %p338 = por %p336, %p337
    %p340 = scmp.ne.s32.totalorder %s325, %s339
    %p341 = scmp.eq.s32.totalorder %s32, 0
    %p342 = por %p340, %p341
    %s344 = sadd.s32 %s343, 1
    %p347 = scmp.eq.s32.totalorder %s26, 1
    %p348 = scmp.ne.s32.totalorder %s343, %s345
    %p349 = scmp.eq.s32.totalorder %s26, 0
    %p350 = por %p348, %p349
    %p351 = scmp.ne.s32.totalorder %s343, %s345
    %p352 = scmp.eq.s32.totalorder %s31, 1
    %p353 = por %p351, %p352
    %p354 = scmp.ne.s32.totalorder %s345, %s346
    %p355 = scmp.eq.s32.totalorder %s31, 0
    %p356 = por %p354, %p355
    %p357 = scmp.ne.s32.totalorder %s345, %s346
    %p358 = scmp.eq.s32.totalorder %s32, 1
    %p359 = por %p357, %p358
    %p361 = scmp.ne.s32.totalorder %s346, %s360
    %p362 = scmp.eq.s32.totalorder %s32, 0
    %p363 = por %p361, %p362
    %s365 = sadd.s32 %s364, 1
    %p368 = scmp.eq.s32.totalorder %s26, 1
    %p369 = scmp.ne.s32.totalorder %s364, %s366
    %p370 = scmp.eq.s32.totalorder %s26, 0
    %p371 = por %p369, %p370
    %p372 = scmp.ne.s32.totalorder %s364, %s366
    %p373 = scmp.eq.s32.totalorder %s31, 1
    %p374 = por %p372, %p373
    %p375 = scmp.ne.s32.totalorder %s366, %s367
    %p376 = scmp.eq.s32.totalorder %s31, 0
    %p377 = por %p375, %p376
    %p378 = scmp.ne.s32.totalorder %s366, %s367
    %p379 = scmp.eq.s32.totalorder %s32, 1
    %p380 = por %p378, %p379
    %p382 = scmp.ne.s32.totalorder %s367, %s381
    %p383 = scmp.eq.s32.totalorder %s32, 0
    %p384 = por %p382, %p383
    %s386 = sadd.s32 %s385, 1
    %p389 = scmp.eq.s32.totalorder %s26, 1
    %p390 = scmp.ne.s32.totalorder %s385, %s387
    %p391 = scmp.eq.s32.totalorder %s26, 0
    %p392 = por %p390, %p391
    %p393 = scmp.ne.s32.totalorder %s385, %s387
    %p394 = scmp.eq.s32.totalorder %s31, 1
    %p395 = por %p393, %p394
    %p396 = scmp.ne.s32.totalorder %s387, %s388
    %p397 = scmp.eq.s32.totalorder %s31, 0
    %p398 = por %p396, %p397
    %p399 = scmp.ne.s32.totalorder %s387, %s388
    %p400 = scmp.eq.s32.totalorder %s32, 1
    %p401 = por %p399, %p400
    %p403 = scmp.ne.s32.totalorder %s388, %s402
    %p404 = scmp.eq.s32.totalorder %s32, 0
    %p405 = por %p403, %p404
    %s407 = sadd.s32 %s406, 1
    %p410 = scmp.eq.s32.totalorder %s26, 1
    %p411 = scmp.ne.s32.totalorder %s406, %s408
    %p412 = scmp.eq.s32.totalorder %s26, 0
    %p413 = por %p411, %p412
    %p414 = scmp.ne.s32.totalorder %s406, %s408
    %p415 = scmp.eq.s32.totalorder %s31, 1
    %p416 = por %p414, %p415
    %p417 = scmp.ne.s32.totalorder %s408, %s409
    %p418 = scmp.eq.s32.totalorder %s31, 0
    %p419 = por %p417, %p418
    %p420 = scmp.ne.s32.totalorder %s408, %s409
    %p421 = scmp.eq.s32.totalorder %s32, 1
    %p422 = por %p420, %p421
    %p424 = scmp.ne.s32.totalorder %s409, %s423
    %p425 = scmp.eq.s32.totalorder %s32, 0
    %p426 = por %p424, %p425
    %s427 = ssub.s32 %s26, %s33
    %p428 = scmp.eq.s32.totalorder %s427, 0
    %s430 = sadd.s32 %s429, 1
    %s431 = scalar_select %p428, %s429, %s430
    %p434 = pneg %p428
    %p435 = scmp.eq.s32.totalorder %s26, 1
    %p436 = por %p434, %p435
    %p437 = scmp.ne.s32.totalorder %s429, %s432
    %p438 = scmp.eq.s32.totalorder %s26, 0
    %p439 = por %p437, %p438
    %p440 = scmp.ne.s32.totalorder %s429, %s432
    %p441 = scmp.eq.s32.totalorder %s31, 1
    %p442 = por %p440, %p441
    %p443 = scmp.ne.s32.totalorder %s432, %s433
    %p444 = scmp.eq.s32.totalorder %s31, 0
    %p445 = por %p443, %p444
    %p446 = scmp.ne.s32.totalorder %s432, %s433
    %p447 = scmp.eq.s32.totalorder %s32, 1
    %p448 = por %p446, %p447
    %p450 = scmp.ne.s32.totalorder %s433, %s449
    %p451 = scmp.eq.s32.totalorder %s32, 0
    %p452 = por %p450, %p451
    %s453 = ssub.s32 %s26, %s33
    %p454 = scmp.eq.s32.totalorder %s453, 0
    %s456 = sadd.s32 %s455, 1
    %s457 = scalar_select %p454, %s455, %s456
    %p460 = pneg %p454
    %p461 = scmp.eq.s32.totalorder %s26, 1
    %p462 = por %p460, %p461
    %p463 = scmp.ne.s32.totalorder %s455, %s458
    %p464 = scmp.eq.s32.totalorder %s26, 0
    %p465 = por %p463, %p464
    %p466 = scmp.ne.s32.totalorder %s455, %s458
    %p467 = scmp.eq.s32.totalorder %s31, 1
    %p468 = por %p466, %p467
    %p469 = scmp.ne.s32.totalorder %s458, %s459
    %p470 = scmp.eq.s32.totalorder %s31, 0
    %p471 = por %p469, %p470
    %p472 = scmp.ne.s32.totalorder %s458, %s459
    %p473 = scmp.eq.s32.totalorder %s32, 1
    %p474 = por %p472, %p473
    %p476 = scmp.ne.s32.totalorder %s459, %s475
    %p477 = scmp.eq.s32.totalorder %s32, 0
    %p478 = por %p476, %p477
    %p479 = scmp.le.s32.totalorder 1, %s26
    %p480 = scmp.lt.s32.totalorder %s26, 3
    %p481 = pnand %p479, %p480
    %p482 = pneg %p481
    // Predicated region
    $region9: #{structure_module_forward.11} parent=5 // pred_check
      _
    $region10: #{structure_module_forward.11} parent=5 // pred_check_branch
      %484 = sbr.rel (%p481) target = $region12
    $region11: #{structure_module_forward.11} parent=5 // pred_region
      %s485 = ssub.s32 %s26, 1
      // Predicated region
      $region13: #{structure_module_forward.11} parent=11 // pred_check
        %p486 = pneg %p125
      $region14: #{structure_module_forward.11} parent=11 // pred_check_branch
        %488 = sbr.rel (%p486) target = $region16
      $region15: #{structure_module_forward.11} parent=11 // pred_region
        _
      $region16: #{structure_module_forward.11} parent=11 // pred_fallthru
        _
      // Predicated region
      $region17: #{structure_module_forward.11} parent=11 // pred_check
        %p489 = pneg %p146
      $region18: #{structure_module_forward.11} parent=11 // pred_check_branch
        %491 = sbr.rel (%p489) target = $region20
      $region19: #{structure_module_forward.11} parent=11 // pred_region
        _
      $region20: #{structure_module_forward.11} parent=11 // pred_fallthru
        _
      // Predicated region
      $region21: #{structure_module_forward.11} parent=11 // pred_check
        %p492 = pneg %p167
      $region22: #{structure_module_forward.11} parent=11 // pred_check_branch
        %494 = sbr.rel (%p492) target = $region24
      $region23: #{structure_module_forward.11} parent=11 // pred_region
        _
      $region24: #{structure_module_forward.11} parent=11 // pred_fallthru
        _
      // Predicated region
      $region25: #{structure_module_forward.11} parent=11 // pred_check
        %p495 = pneg %p188
      $region26: #{structure_module_forward.11} parent=11 // pred_check_branch
        %497 = sbr.rel (%p495) target = $region28
      $region27: #{structure_module_forward.11} parent=11 // pred_region
        _
      $region28: #{structure_module_forward.11} parent=11 // pred_fallthru
        _
      // Predicated region
      $region29: #{structure_module_forward.11} parent=11 // pred_check
        %p498 = pneg %p209
      $region30: #{structure_module_forward.11} parent=11 // pred_check_branch
        %500 = sbr.rel (%p498) target = $region32
      $region31: #{structure_module_forward.11} parent=11 // pred_region
        _
      $region32: #{structure_module_forward.11} parent=11 // pred_fallthru
        _
      // Predicated region
      $region33: #{structure_module_forward.11} parent=11 // pred_check
        %p501 = pneg %p230
      $region34: #{structure_module_forward.11} parent=11 // pred_check_branch
        %503 = sbr.rel (%p501) target = $region36
      $region35: #{structure_module_forward.11} parent=11 // pred_region
        _
      $region36: #{structure_module_forward.11} parent=11 // pred_fallthru
        _
      // Predicated region
      $region37: #{structure_module_forward.11} parent=11 // pred_check
        %p504 = pneg %p251
      $region38: #{structure_module_forward.11} parent=11 // pred_check_branch
        %506 = sbr.rel (%p504) target = $region40
      $region39: #{structure_module_forward.11} parent=11 // pred_region
        _
      $region40: #{structure_module_forward.11} parent=11 // pred_fallthru
        _
      // Predicated region
      $region41: #{structure_module_forward.11} parent=11 // pred_check
        %p507 = pneg %p272
      $region42: #{structure_module_forward.11} parent=11 // pred_check_branch
        %509 = sbr.rel (%p507) target = $region44
      $region43: #{structure_module_forward.11} parent=11 // pred_region
        _
      $region44: #{structure_module_forward.11} parent=11 // pred_fallthru
        _
      // Predicated region
      $region45: #{structure_module_forward.11} parent=11 // pred_check
        %p510 = pneg %p293
      $region46: #{structure_module_forward.11} parent=11 // pred_check_branch
        %512 = sbr.rel (%p510) target = $region48
      $region47: #{structure_module_forward.11} parent=11 // pred_region
        _
      $region48: #{structure_module_forward.11} parent=11 // pred_fallthru
        _
      // Predicated region
      $region49: #{structure_module_forward.11} parent=11 // pred_check
        %p513 = pneg %p314
      $region50: #{structure_module_forward.11} parent=11 // pred_check_branch
        %515 = sbr.rel (%p513) target = $region52
      $region51: #{structure_module_forward.11} parent=11 // pred_region
        _
      $region52: #{structure_module_forward.11} parent=11 // pred_fallthru
        _
      // Predicated region
      $region53: #{structure_module_forward.11} parent=11 // pred_check
        %p516 = pneg %p335
      $region54: #{structure_module_forward.11} parent=11 // pred_check_branch
        %518 = sbr.rel (%p516) target = $region56
      $region55: #{structure_module_forward.11} parent=11 // pred_region
        _
      $region56: #{structure_module_forward.11} parent=11 // pred_fallthru
        _
      // Predicated region
      $region57: #{structure_module_forward.11} parent=11 // pred_check
        %p519 = pneg %p356
      $region58: #{structure_module_forward.11} parent=11 // pred_check_branch
        %521 = sbr.rel (%p519) target = $region60
      $region59: #{structure_module_forward.11} parent=11 // pred_region
        _
      $region60: #{structure_module_forward.11} parent=11 // pred_fallthru
        _
      // Predicated region
      $region61: #{structure_module_forward.11} parent=11 // pred_check
        %p522 = pneg %p377
      $region62: #{structure_module_forward.11} parent=11 // pred_check_branch
        %524 = sbr.rel (%p522) target = $region64
      $region63: #{structure_module_forward.11} parent=11 // pred_region
        _
      $region64: #{structure_module_forward.11} parent=11 // pred_fallthru
        _
      // Predicated region
      $region65: #{structure_module_forward.11} parent=11 // pred_check
        %p525 = pneg %p398
      $region66: #{structure_module_forward.11} parent=11 // pred_check_branch
        %527 = sbr.rel (%p525) target = $region68
      $region67: #{structure_module_forward.11} parent=11 // pred_region
        _
      $region68: #{structure_module_forward.11} parent=11 // pred_fallthru
        _
      // Predicated region
      $region69: #{structure_module_forward.11} parent=11 // pred_check
        %p528 = pneg %p419
      $region70: #{structure_module_forward.11} parent=11 // pred_check_branch
        %530 = sbr.rel (%p528) target = $region72
      $region71: #{structure_module_forward.11} parent=11 // pred_region
        _
      $region72: #{structure_module_forward.11} parent=11 // pred_fallthru
        _
    $region12: #{structure_module_forward.11} parent=5 // pred_fallthru
      _
    %p531 = scmp.lt.s32.totalorder %s26, 2
    // Predicated region
    $region73: #{structure_module_forward.11} parent=5 // pred_check
      %p532 = pneg %p531
    $region74: #{structure_module_forward.11} parent=5 // pred_check_branch
      %534 = sbr.rel (%p532) target = $region76
    $region75: #{structure_module_forward.11} parent=5 // pred_region
      // Predicated region
      $region77: #{structure_module_forward.11} parent=75 // pred_check
        %p535 = pneg %p46
      $region78: #{structure_module_forward.11} parent=75 // pred_check_branch
        %537 = sbr.rel (%p535) target = $region80
      $region79: #{structure_module_forward.11} parent=75 // pred_region
        %p538 = scmp.lt.s32.totalorder %s26, 1
        %s539 = scalar_select %p538, %s26, 1
        %s540 = smul.addr %s539, 8
        %s541 = scalar_lea.vmem %s0, %s540
      $region80: #{structure_module_forward.11} parent=75 // pred_fallthru
        _
      // Predicated region
      $region81: #{structure_module_forward.11} parent=75 // pred_check
        %p542 = pneg %p72
      $region82: #{structure_module_forward.11} parent=75 // pred_check_branch
        %544 = sbr.rel (%p542) target = $region84
      $region83: #{structure_module_forward.11} parent=75 // pred_region
        %p545 = scmp.lt.s32.totalorder %s26, 1
        %s546 = scalar_select %p545, %s26, 1
        %s547 = smul.addr %s546, 2
        %s548 = smul.addr %s547, 8
        %s549 = scalar_lea.vmem %s1, %s548
      $region84: #{structure_module_forward.11} parent=75 // pred_fallthru
        _
      // Predicated region
      $region85: #{structure_module_forward.11} parent=75 // pred_check
        %p550 = pneg %p98
      $region86: #{structure_module_forward.11} parent=75 // pred_check_branch
        %552 = sbr.rel (%p550) target = $region88
      $region87: #{structure_module_forward.11} parent=75 // pred_region
        %p553 = scmp.lt.s32.totalorder %s26, 1
        %s554 = scalar_select %p553, %s26, 1
        %s555 = smul.addr %s554, 8
        %s556 = scalar_lea.vmem %s2, %s555
      $region88: #{structure_module_forward.11} parent=75 // pred_fallthru
        _
    $region76: #{structure_module_forward.11} parent=5 // pred_fallthru
      _
    %p557 = scmp.le.s32.totalorder 1, %s26
    %p558 = scmp.lt.s32.totalorder %s26, 3
    %p559 = pnand %p557, %p558
    %p560 = pneg %p559
    // Predicated region
    $region89: #{structure_module_forward.11} parent=5 // pred_check
      _
    $region90: #{structure_module_forward.11} parent=5 // pred_check_branch
      %562 = sbr.rel (%p559) target = $region92
    $region91: #{structure_module_forward.11} parent=5 // pred_region
      %s563 = ssub.s32 %s26, 1
      %p564 = scmp.lt.s32.totalorder %s31, 1
      %s565 = scalar_select %p564, %s31, 1
      %s566 = smul.addr %s565, 8
      %s567 = scalar_lea.vmem %s0, %s566
      %p568 = pneg %p52
      %p569 = pneg %p49
      %p570 = scmp.lt.s32.totalorder %s31, 1
      %s571 = scalar_select %p570, %s31, 1
      %s572 = smul.addr %s571, 2
      %s573 = smul.addr %s572, 8
      %s574 = scalar_lea.vmem %s1, %s573
      %p575 = pneg %p78
      %p576 = pneg %p75
      %p577 = scmp.lt.s32.totalorder %s31, 1
      %s578 = scalar_select %p577, %s31, 1
      %s579 = smul.addr %s578, 8
      %s580 = scalar_lea.vmem %s2, %s579
      %p581 = pneg %p104
      %p582 = pneg %p101
      %p583 = pneg %p125
      %p584 = pneg %p122
      %p585 = pneg %p146
      %p586 = pneg %p143
      %p587 = pneg %p167
      %p588 = pneg %p164
      %p589 = pneg %p188
      %p590 = pneg %p185
      %p591 = pneg %p209
      %p592 = pneg %p206
      %p593 = pneg %p230
      %p594 = pneg %p227
      %p595 = pneg %p251
      %p596 = pneg %p248
      %p597 = pneg %p272
      %p598 = pneg %p269
      %p599 = pneg %p293
      %p600 = pneg %p290
      %p601 = pneg %p314
      %p602 = pneg %p311
      %p603 = pneg %p335
      %p604 = pneg %p332
      %p605 = pneg %p356
      %p606 = pneg %p353
      %p607 = pneg %p377
      %p608 = pneg %p374
      %p609 = pneg %p398
      %p610 = pneg %p395
      %p611 = pneg %p419
      %p612 = pneg %p416
      %p613 = pneg %p445
      %p614 = pneg %p442
      %p615 = scmp.lt.s32.totalorder %s31, 1
      %s616 = scalar_select %p615, %s31, 1
      %s617 = smul.addr %s616, 8
      %s618 = scalar_lea.vmem %s18, %s617
      %p619 = pneg %p471
      %p620 = pneg %p468
      %p621 = scmp.lt.s32.totalorder %s31, 1
      %s622 = scalar_select %p621, %s31, 1
      %s623 = smul.addr %s622, 8
      %s624 = scalar_lea.vmem %s19, %s623
      %p625 = scmp.lt.s32.totalorder %s31, 1
      %s626 = scalar_select %p625, %s31, 1
      %s627 = smul.addr %s626, 8
      %s628 = scalar_lea.vmem %s0, %s627
      %p629 = scmp.lt.s32.totalorder %s31, 1
      %s630 = scalar_select %p629, %s31, 1
      %s631 = smul.addr %s630, 2
      %s632 = smul.addr %s631, 8
      %s633 = scalar_lea.vmem %s1, %s632
      %p634 = scmp.lt.s32.totalorder %s31, 1
      %s635 = scalar_select %p634, %s31, 1
      %s636 = smul.addr %s635, 8
      %s637 = scalar_lea.vmem %s2, %s636
      %p638 = scmp.lt.s32.totalorder %s31, 1
      %s639 = scalar_select %p638, %s31, 1
      %s640 = smul.addr %s639, 8
      %s641 = scalar_lea.vmem %s18, %s640
      %p642 = scmp.lt.s32.totalorder %s31, 1
      %s643 = scalar_select %p642, %s31, 1
      %s644 = smul.addr %s643, 8
      %s645 = scalar_lea.vmem %s19, %s644
      %v647 = vld [vmem:[%s628] sm:$0xff]
      %v648 = vld [vmem:[%s633] sm:$0xff]
      %v649 = vld [vmem:[%s633 + $0x8] sm:$0xff]
      %v650 = vpack.c.bf16 %v648, %v648
      %v651 = vpack.c.bf16 %v649, %v649
      %v652 = vld [vmem:[%s3] sm:$0xff]
      %v653 = vld [vmem:[%s3 + $0x8] sm:$0xff]
      %v654 = vld [vmem:[%s3 + $0x10] sm:$0xff]
      %v655 = vld [vmem:[%s3 + $0x18] sm:$0xff]
      %v656 = vld [vmem:[%s3 + $0x20] sm:$0xff]
      %v657 = vld [vmem:[%s3 + $0x28] sm:$0xff]
      %v658 = vld [vmem:[%s3 + $0x30] sm:$0xff]
      %v659 = vld [vmem:[%s3 + $0x38] sm:$0xff]
      %v660 = vld [vmem:[%s3 + $0x40] sm:$0xff]
      %v661 = vld [vmem:[%s3 + $0x48] sm:$0xff]
      %v662 = vld [vmem:[%s3 + $0x50] sm:$0xff]
      %v663 = vld [vmem:[%s3 + $0x58] sm:$0xff]
      %v664 = vld [vmem:[%s3 + $0x60] sm:$0xff]
      %v665 = vld [vmem:[%s3 + $0x68] sm:$0xff]
      %v666 = vld [vmem:[%s3 + $0x70] sm:$0xff]
      %v667 = vld [vmem:[%s3 + $0x78] sm:$0xff]
      %v668 = vld [vmem:[%s3 + $0x80] sm:$0xff]
      %v669 = vld [vmem:[%s3 + $0x88] sm:$0xff]
      %v670 = vld [vmem:[%s3 + $0x90] sm:$0xff]
      %v671 = vld [vmem:[%s3 + $0x98] sm:$0xff]
      %v672 = vpack.c.bf16 %v653, %v652
      %v673 = vpack.c.bf16 %v655, %v654
      %v674 = vpack.c.bf16 %v657, %v656
      %v675 = vpack.c.bf16 %v659, %v658
      %v676 = vpack.c.bf16 %v661, %v660
      %v677 = vpack.c.bf16 %v663, %v662
      %v678 = vpack.c.bf16 %v665, %v664
      %v679 = vpack.c.bf16 %v667, %v666
      %v680 = vpack.c.bf16 %v669, %v668
      %v681 = vpack.c.bf16 %v671, %v670
      %v682 = vld [vmem:[%s5] sm:$0x1]
      %v684 = vlaneseq
      %v685 = vshrl.u32 %v684, 7
      %v686 = vsub.s32 0, %v685
      %v687 = vrot.slane %v682, %v686
      %vm689 = vcmask 261120
      %v691 = vsel %vm689, %v651, 0
      %693 = vmatprep.subr.bf16.mxu0 0
      %694 = vmatpush1.bf16.msra.mxu0 %v672
      %695 = vmatprep.subr.bf16.mxu0 0
      %696 = vmatpush1.bf16.msra.mxu0 %v673
      %697 = vmatprep.subr.bf16.mxu0 0
      %698 = vmatpush1.bf16.msra.mxu0 %v674
      %699 = vmatprep.subr.bf16.mxu0 0
      %700 = vmatpush1.bf16.msra.mxu0 %v675
      %701 = vmatprep.subr.bf16.mxu0 0
      %702 = vmatpush1.bf16.msra.mxu0 %v676
      %703 = vmatprep.subr.bf16.mxu0 0
      %704 = vmatpush1.bf16.msra.mxu0 %v677
      %705 = vmatprep.subr.bf16.mxu0 0
      %706 = vmatpush1.bf16.msra.mxu0 %v678
      %707 = vmatprep.subr.bf16.mxu0 0
      %708 = vmatpush1.bf16.msra.mxu0 %v679
      %709 = vmatprep.subr.bf16.mxu0 0
      %710 = vmatpush1.bf16.msra.mxu0 %v680
      %711 = vmatprep.subr.bf16.mxu0 0
      %712 = vmatpush1.bf16.msra.mxu0 %v681
      %713 = vmatprep.subr.bf16.mxu0 0
      %714 = vmatpush1.bf16.msra.mxu0 0
      %715 = vmatprep.subr.bf16.mxu0 0
      %716 = vmatpush1.bf16.msra.mxu0 0
      %717 = vmatprep.subr.bf16.mxu0 0
      %718 = vmatpush1.bf16.msra.mxu0 0
      %719 = vmatprep.subr.bf16.mxu0 0
      %720 = vmatpush1.bf16.msra.mxu0 0
      %721 = vmatprep.subr.bf16.mxu0 0
      %722 = vmatpush1.bf16.msra.mxu0 0
      %723 = vmatprep.subr.bf16.mxu0 0
      %724 = vmatpush1.bf16.msra.mxu0 0
      %725 = vmatprep.mubr.bf16.mxu0 %v691
      %726 = vmatmul.mubr.bf16.gmra.mrb[0].mxu0 %v650
      %v727 = vpop.f32.mrb[0].mxu0
      %v728 = vadd.f32 %v687, %v727
      %v729 = vpop.f32.mrb[0].mxu0
      %v730 = vpop.f32.mrb[0].mxu0
      %v731 = vpop.f32.mrb[0].mxu0
      %732 = vdwg.mxu0
      %v733 = vadd.f32 %v647, %v728
      %v734 = vld [vmem:[%s637] sm:$0xff]
      %v735 = vpack.c.bf16 %v734, %v734
      %v736 = vld [vmem:[%s4] sm:$0xff]
      %v737 = vld [vmem:[%s4 + $0x8] sm:$0xff]
      %v738 = vld [vmem:[%s4 + $0x10] sm:$0xff]
      %v739 = vld [vmem:[%s4 + $0x18] sm:$0xff]
      %v740 = vld [vmem:[%s4 + $0x20] sm:$0xff]
      %v741 = vld [vmem:[%s4 + $0x28] sm:$0xff]
      %v742 = vld [vmem:[%s4 + $0x30] sm:$0xff]
      %v743 = vld [vmem:[%s4 + $0x38] sm:$0xff]
      %v744 = vpack.c.bf16 %v737, %v736
      %v745 = vpack.c.bf16 %v739, %v738
      %v746 = vpack.c.bf16 %v741, %v740
      %v747 = vpack.c.bf16 %v743, %v742
      %vm748 = vcmask 523264
      %v750 = vsel %vm748, %v735, 0
      %752 = vmatprep.subr.bf16.mxu0 0
      %753 = vmatpush1.bf16.msra.mxu0 %v744
      %754 = vmatprep.subr.bf16.mxu0 0
      %755 = vmatpush1.bf16.msra.mxu0 %v745
      %756 = vmatprep.subr.bf16.mxu0 0
      %757 = vmatpush1.bf16.msra.mxu0 %v746
      %758 = vmatprep.subr.bf16.mxu0 0
      %759 = vmatpush1.bf16.msra.mxu0 %v747
      %760 = vmatprep.subr.bf16.mxu0 0
      %761 = vmatpush1.bf16.msra.mxu0 0
      %762 = vmatprep.subr.bf16.mxu0 0
      %763 = vmatpush1.bf16.msra.mxu0 0
      %764 = vmatprep.subr.bf16.mxu0 0
      %765 = vmatpush1.bf16.msra.mxu0 0
      %766 = vmatprep.subr.bf16.mxu0 0
      %767 = vmatpush1.bf16.msra.mxu0 0
      %768 = vmatprep.subr.bf16.mxu0 0
      %769 = vmatpush1.bf16.msra.mxu0 0
      %770 = vmatprep.subr.bf16.mxu0 0
      %771 = vmatpush1.bf16.msra.mxu0 0
      %772 = vmatprep.subr.bf16.mxu0 0
      %773 = vmatpush1.bf16.msra.mxu0 0
      %774 = vmatprep.subr.bf16.mxu0 0
      %775 = vmatpush1.bf16.msra.mxu0 0
      %776 = vmatprep.subr.bf16.mxu0 0
      %777 = vmatpush1.bf16.msra.mxu0 0
      %778 = vmatprep.subr.bf16.mxu0 0
      %779 = vmatpush1.bf16.msra.mxu0 0
      %780 = vmatprep.subr.bf16.mxu0 0
      %781 = vmatpush1.bf16.msra.mxu0 0
      %782 = vmatprep.subr.bf16.mxu0 0
      %783 = vmatpush1.bf16.msra.mxu0 0
      %784 = vmatprep.mubr.bf16.mxu0 0
      %785 = vmatmul.mubr.bf16.gmra.mrb[0].mxu0 %v750
      %v786 = vpop.f32.mrb[0].mxu0
      %v787 = vadd.f32 0.0, %v786
      %v788 = vpop.f32.mrb[0].mxu0
      %v789 = vpop.f32.mrb[0].mxu0
      %v790 = vpop.f32.mrb[0].mxu0
      %791 = vdwg.mxu0
      %v792 = vadd.f32 %v733, %v787
      %v793 = vsel %vm689, %v792, 0.0
      %794 = vadd.xlane.f32.xlu0 %v793
      %v795 = vpop.xlane.xlu0 %794
      %v796 = vrcp.pop 32.0
      %v797 = vmul.f32 %v795, %v796
      %v798 = vsub.f32 %v792, %v797
      %v799 = vmul.f32 %v798, %v798
      %v800 = vsel %vm689, %v799, 0.0
      %801 = vadd.xlane.f32.xlu0 %v800
      %v802 = vpop.xlane.xlu0 %801
      %v803 = vmul.f32 %v802, %v796
      %v804 = vadd.f32 %v803, 1e-05
      %v805 = vrsqrt.pop %v804
      %v806 = vmul.f32 %v798, %v805
      %v807 = vld [vmem:[%s6] sm:$0x1]
      %v809 = vlaneseq
      %v810 = vshrl.u32 %v809, 7
      %v811 = vsub.s32 0, %v810
      %v812 = vrot.slane %v807, %v811
      %v814 = vmul.f32 %v806, %v812
      %v815 = vld [vmem:[%s7] sm:$0x1]
      %v817 = vlaneseq
      %v818 = vshrl.u32 %v817, 7
      %v819 = vsub.s32 0, %v818
      %v820 = vrot.slane %v815, %v819
      %v822 = vadd.f32 %v814, %v820
      %v823 = vpack.c.bf16 %v822, %v822
      %v824 = vld [vmem:[%s8] sm:$0xff]
      %v825 = vld [vmem:[%s8 + $0x8] sm:$0xff]
      %v826 = vld [vmem:[%s8 + $0x10] sm:$0xff]
      %v827 = vld [vmem:[%s8 + $0x18] sm:$0xff]
      %v828 = vpack.c.bf16 %v825, %v824
      %v829 = vpack.c.bf16 %v827, %v826
      %v830 = vld [vmem:[%s9] sm:$0x1]
      %v832 = vlaneseq
      %v833 = vshrl.u32 %v832, 7
      %v834 = vsub.s32 0, %v833
      %v835 = vrot.slane %v830, %v834
      %v838 = vsel %vm689, %v823, 0
      %840 = vmatprep.subr.bf16.mxu0 0
      %841 = vmatpush1.bf16.msra.mxu0 %v828
      %842 = vmatprep.subr.bf16.mxu0 0
      %843 = vmatpush1.bf16.msra.mxu0 %v829
      %844 = vmatprep.subr.bf16.mxu0 0
      %845 = vmatpush1.bf16.msra.mxu0 0
      %846 = vmatprep.subr.bf16.mxu0 0
      %847 = vmatpush1.bf16.msra.mxu0 0
      %848 = vmatprep.subr.bf16.mxu0 0
      %849 = vmatpush1.bf16.msra.mxu0 0
      %850 = vmatprep.subr.bf16.mxu0 0
      %851 = vmatpush1.bf16.msra.mxu0 0
      %852 = vmatprep.subr.bf16.mxu0 0
      %853 = vmatpush1.bf16.msra.mxu0 0
      %854 = vmatprep.subr.bf16.mxu0 0
      %855 = vmatpush1.bf16.msra.mxu0 0
      %856 = vmatprep.subr.bf16.mxu0 0
      %857 = vmatpush1.bf16.msra.mxu0 0
      %858 = vmatprep.subr.bf16.mxu0 0
      %859 = vmatpush1.bf16.msra.mxu0 0
      %860 = vmatprep.subr.bf16.mxu0 0
      %861 = vmatpush1.bf16.msra.mxu0 0
      %862 = vmatprep.subr.bf16.mxu0 0
      %863 = vmatpush1.bf16.msra.mxu0 0
      %864 = vmatprep.subr.bf16.mxu0 0
      %865 = vmatpush1.bf16.msra.mxu0 0
      %866 = vmatprep.subr.bf16.mxu0 0
      %867 = vmatpush1.bf16.msra.mxu0 0
      %868 = vmatprep.subr.bf16.mxu0 0
      %869 = vmatpush1.bf16.msra.mxu0 0
      %870 = vmatprep.subr.bf16.mxu0 0
      %871 = vmatpush1.bf16.msra.mxu0 0
      %872 = vmatprep.mubr.bf16.mxu0 0
      %873 = vmatmul.mubr.bf16.gmra.mrb[0].mxu0 %v838
      %v874 = vpop.f32.mrb[0].mxu0
      %v875 = vadd.f32 %v835, %v874
      %v876 = vpop.f32.mrb[0].mxu0
      %v877 = vpop.f32.mrb[0].mxu0
      %v878 = vpop.f32.mrb[0].mxu0
      %879 = vdwg.mxu0
      %v880 = vmax.f32 %v875, 0.0
      %v881 = vpack.c.bf16 %v880, %v880
      %v882 = vld [vmem:[%s10] sm:$0xff]
      %v883 = vld [vmem:[%s10 + $0x8] sm:$0xff]
      %v884 = vld [vmem:[%s10 + $0x10] sm:$0xff]
      %v885 = vld [vmem:[%s10 + $0x18] sm:$0xff]
      %v886 = vld [vmem:[%s10 + $0x20] sm:$0xff]
      %v887 = vld [vmem:[%s10 + $0x28] sm:$0xff]
      %v888 = vld [vmem:[%s10 + $0x30] sm:$0xff]
      %v889 = vld [vmem:[%s10 + $0x38] sm:$0xff]
      %v890 = vpack.c.bf16 %v883, %v882
      %v891 = vpack.c.bf16 %v885, %v884
      %v892 = vpack.c.bf16 %v887, %v886
      %v893 = vpack.c.bf16 %v889, %v888
      %v894 = vld [vmem:[%s11] sm:$0x1]
      %v896 = vlaneseq
      %v897 = vshrl.u32 %v896, 7
      %v898 = vsub.s32 0, %v897
      %v899 = vrot.slane %v894, %v898
      %v902 = vsel %vm748, %v881, 0
      %904 = vmatprep.subr.bf16.mxu0 0
      %905 = vmatpush1.bf16.msra.mxu0 %v890
      %906 = vmatprep.subr.bf16.mxu0 0
      %907 = vmatpush1.bf16.msra.mxu0 %v891
      %908 = vmatprep.subr.bf16.mxu0 0
      %909 = vmatpush1.bf16.msra.mxu0 %v892
      %910 = vmatprep.subr.bf16.mxu0 0
      %911 = vmatpush1.bf16.msra.mxu0 %v893
      %912 = vmatprep.subr.bf16.mxu0 0
      %913 = vmatpush1.bf16.msra.mxu0 0
      %914 = vmatprep.subr.bf16.mxu0 0
      %915 = vmatpush1.bf16.msra.mxu0 0
      %916 = vmatprep.subr.bf16.mxu0 0
      %917 = vmatpush1.bf16.msra.mxu0 0
      %918 = vmatprep.subr.bf16.mxu0 0
      %919 = vmatpush1.bf16.msra.mxu0 0
      %920 = vmatprep.subr.bf16.mxu0 0
      %921 = vmatpush1.bf16.msra.mxu0 0
      %922 = vmatprep.subr.bf16.mxu0 0
      %923 = vmatpush1.bf16.msra.mxu0 0
      %924 = vmatprep.subr.bf16.mxu0 0
      %925 = vmatpush1.bf16.msra.mxu0 0
      %926 = vmatprep.subr.bf16.mxu0 0
      %927 = vmatpush1.bf16.msra.mxu0 0
      %928 = vmatprep.subr.bf16.mxu0 0
      %929 = vmatpush1.bf16.msra.mxu0 0
      %930 = vmatprep.subr.bf16.mxu0 0
      %931 = vmatpush1.bf16.msra.mxu0 0
      %932 = vmatprep.subr.bf16.mxu0 0
      %933 = vmatpush1.bf16.msra.mxu0 0
      %934 = vmatprep.subr.bf16.mxu0 0
      %935 = vmatpush1.bf16.msra.mxu0 0
      %936 = vmatprep.mubr.bf16.mxu0 0
      %937 = vmatmul.mubr.bf16.gmra.mrb[0].mxu0 %v902
      %v938 = vpop.f32.mrb[0].mxu0
      %v939 = vadd.f32 %v899, %v938
      %v940 = vpop.f32.mrb[0].mxu0
      %v941 = vpop.f32.mrb[0].mxu0
      %v942 = vpop.f32.mrb[0].mxu0
      %943 = vdwg.mxu0
      %v944 = vmax.f32 %v939, 0.0
      %v945 = vpack.c.bf16 %v944, %v944
      %v946 = vld [vmem:[%s12] sm:$0xff]
      %v947 = vld [vmem:[%s12 + $0x8] sm:$0xff]
      %v948 = vld [vmem:[%s12 + $0x10] sm:$0xff]
      %v949 = vld [vmem:[%s12 + $0x18] sm:$0xff]
      %v950 = vld [vmem:[%s12 + $0x20] sm:$0xff]
      %v951 = vld [vmem:[%s12 + $0x28] sm:$0xff]
      %v952 = vld [vmem:[%s12 + $0x30] sm:$0xff]
      %v953 = vld [vmem:[%s12 + $0x38] sm:$0xff]
      %v954 = vpack.c.bf16 %v947, %v946
      %v955 = vpack.c.bf16 %v949, %v948
      %v956 = vpack.c.bf16 %v951, %v950
      %v957 = vpack.c.bf16 %v953, %v952
      %v958 = vld [vmem:[%s13] sm:$0x1]
      %v960 = vlaneseq
      %v961 = vshrl.u32 %v960, 7
      %v962 = vsub.s32 0, %v961
      %v963 = vrot.slane %v958, %v962
      %v966 = vsel %vm748, %v945, 0
      %968 = vmatprep.subr.bf16.mxu0 0
      %969 = vmatpush1.bf16.msra.mxu0 %v954
      %970 = vmatprep.subr.bf16.mxu0 0
      %971 = vmatpush1.bf16.msra.mxu0 %v955
      %972 = vmatprep.subr.bf16.mxu0 0
      %973 = vmatpush1.bf16.msra.mxu0 %v956
      %974 = vmatprep.subr.bf16.mxu0 0
      %975 = vmatpush1.bf16.msra.mxu0 %v957
      %976 = vmatprep.subr.bf16.mxu0 0
      %977 = vmatpush1.bf16.msra.mxu0 0
      %978 = vmatprep.subr.bf16.mxu0 0
      %979 = vmatpush1.bf16.msra.mxu0 0
      %980 = vmatprep.subr.bf16.mxu0 0
      %981 = vmatpush1.bf16.msra.mxu0 0
      %982 = vmatprep.subr.bf16.mxu0 0
      %983 = vmatpush1.bf16.msra.mxu0 0
      %984 = vmatprep.subr.bf16.mxu0 0
      %985 = vmatpush1.bf16.msra.mxu0 0
      %986 = vmatprep.subr.bf16.mxu0 0
      %987 = vmatpush1.bf16.msra.mxu0 0
      %988 = vmatprep.subr.bf16.mxu0 0
      %989 = vmatpush1.bf16.msra.mxu0 0
      %990 = vmatprep.subr.bf16.mxu0 0
      %991 = vmatpush1.bf16.msra.mxu0 0
      %992 = vmatprep.subr.bf16.mxu0 0
      %993 = vmatpush1.bf16.msra.mxu0 0
      %994 = vmatprep.subr.bf16.mxu0 0
      %995 = vmatpush1.bf16.msra.mxu0 0
      %996 = vmatprep.subr.bf16.mxu0 0
      %997 = vmatpush1.bf16.msra.mxu0 0
      %998 = vmatprep.subr.bf16.mxu0 0
      %999 = vmatpush1.bf16.msra.mxu0 0
      %1000 = vmatprep.mubr.bf16.mxu0 0
      %1001 = vmatmul.mubr.bf16.gmra.mrb[0].mxu0 %v966
      %v1002 = vpop.f32.mrb[0].mxu0
      %v1003 = vadd.f32 %v963, %v1002
      %v1004 = vpop.f32.mrb[0].mxu0
      %v1005 = vpop.f32.mrb[0].mxu0
      %v1006 = vpop.f32.mrb[0].mxu0
      %1007 = vdwg.mxu0
      %v1008 = vadd.f32 %v822, %v1003
      %v1009 = vsel %vm689, %v1008, 0.0
      %1010 = vadd.xlane.f32.xlu0 %v1009
      %v1011 = vpop.xlane.xlu0 %1010
      %v1012 = vmul.f32 %v1011, %v796
      %v1013 = vsub.f32 %v1008, %v1012
      %v1014 = vmul.f32 %v1013, %v1013
      %v1015 = vsel %vm689, %v1014, 0.0
      %1016 = vadd.xlane.f32.xlu0 %v1015
      %v1017 = vpop.xlane.xlu0 %1016
      %v1018 = vmul.f32 %v1017, %v796
      %v1019 = vadd.f32 %v1018, 1e-05
      %v1020 = vrsqrt.pop %v1019
      %v1021 = vmul.f32 %v1013, %v1020
      %v1022 = vld [vmem:[%s14] sm:$0x1]
      %v1024 = vlaneseq
      %v1025 = vshrl.u32 %v1024, 7
      %v1026 = vsub.s32 0, %v1025
      %v1027 = vrot.slane %v1022, %v1026
      %v1029 = vmul.f32 %v1021, %v1027
      %v1030 = vld [vmem:[%s15] sm:$0x1]
      %v1032 = vlaneseq
      %v1033 = vshrl.u32 %v1032, 7
      %v1034 = vsub.s32 0, %v1033
      %v1035 = vrot.slane %v1030, %v1034
      %v1037 = vadd.f32 %v1029, %v1035
      %1038 = vst.msk [vmem:[%s641] sm:$0xff] %vm689, %v1037
      %v1039 = vpack.c.bf16 %v1037, %v1037
      %v1040 = vld [vmem:[%s16] sm:$0xff]
      %v1041 = vld [vmem:[%s16 + $0x8] sm:$0xff]
      %v1042 = vld [vmem:[%s16 + $0x10] sm:$0xff]
      %v1043 = vld [vmem:[%s16 + $0x18] sm:$0xff]
      %v1044 = vpack.c.bf16 %v1041, %v1040
      %v1045 = vpack.c.bf16 %v1043, %v1042
      %v1046 = vld [vmem:[%s17] sm:$0x1]
      %v1048 = vlaneseq
      %v1049 = vshrl.u32 %v1048, 7
      %v1050 = vsub.s32 0, %v1049
      %v1051 = vrot.slane %v1046, %v1050
      %v1054 = vsel %vm689, %v1039, 0
      %1056 = vmatprep.subr.bf16.mxu0 0
      %1057 = vmatpush1.bf16.msra.mxu0 %v1044
      %1058 = vmatprep.subr.bf16.mxu0 0
      %1059 = vmatpush1.bf16.msra.mxu0 %v1045
      %1060 = vmatprep.subr.bf16.mxu0 0
      %1061 = vmatpush1.bf16.msra.mxu0 0
      %1062 = vmatprep.subr.bf16.mxu0 0
      %1063 = vmatpush1.bf16.msra.mxu0 0
      %1064 = vmatprep.subr.bf16.mxu0 0
      %1065 = vmatpush1.bf16.msra.mxu0 0
      %1066 = vmatprep.subr.bf16.mxu0 0
      %1067 = vmatpush1.bf16.msra.mxu0 0
      %1068 = vmatprep.subr.bf16.mxu0 0
      %1069 = vmatpush1.bf16.msra.mxu0 0
      %1070 = vmatprep.subr.bf16.mxu0 0
      %1071 = vmatpush1.bf16.msra.mxu0 0
      %1072 = vmatprep.subr.bf16.mxu0 0
      %1073 = vmatpush1.bf16.msra.mxu0 0
      %1074 = vmatprep.subr.bf16.mxu0 0
      %1075 = vmatpush1.bf16.msra.mxu0 0
      %1076 = vmatprep.subr.bf16.mxu0 0
      %1077 = vmatpush1.bf16.msra.mxu0 0
      %1078 = vmatprep.subr.bf16.mxu0 0
      %1079 = vmatpush1.bf16.msra.mxu0 0
      %1080 = vmatprep.subr.bf16.mxu0 0
      %1081 = vmatpush1.bf16.msra.mxu0 0
      %1082 = vmatprep.subr.bf16.mxu0 0
      %1083 = vmatpush1.bf16.msra.mxu0 0
      %1084 = vmatprep.subr.bf16.mxu0 0
      %1085 = vmatpush1.bf16.msra.mxu0 0
      %1086 = vmatprep.subr.bf16.mxu0 0
      %1087 = vmatpush1.bf16.msra.mxu0 0
      %1088 = vmatprep.mubr.bf16.mxu0 0
      %1089 = vmatmul.mubr.bf16.gmra.mrb[0].mxu0 %v1054
      %v1090 = vpop.f32.mrb[0].mxu0
      %v1091 = vadd.f32 %v1051, %v1090
      %v1092 = vpop.f32.mrb[0].mxu0
      %v1093 = vpop.f32.mrb[0].mxu0
      %v1094 = vpop.f32.mrb[0].mxu0
      %1095 = vdwg.mxu0
      %vm1096 = vcmask 48128
      %1097 = vst.msk [vmem:[%s645] sm:$0xff] %vm1096, %v1091
      %p1098 = scmp.lt.s32.totalorder %s31, 1
      %s1099 = scalar_select %p1098, %s31, 1
      %s1100 = smul.addr %s1099, 8
      %s1101 = scalar_lea.vmem %s18, %s1100
      %p1102 = scmp.lt.s32.totalorder %s31, 1
      %s1103 = scalar_select %p1102, %s31, 1
      %s1104 = smul.addr %s1103, 8
      %s1105 = scalar_lea.vmem %s19, %s1104
      // Predicated region
      $region93: #{structure_module_forward.11} parent=91 // pred_check
        %p1106 = pneg %p442
      $region94: #{structure_module_forward.11} parent=91 // pred_check_branch
        %1108 = sbr.rel (%p1106) target = $region96
      $region95: #{structure_module_forward.11} parent=91 // pred_region
        _
      $region96: #{structure_module_forward.11} parent=91 // pred_fallthru
        _
      // Predicated region
      $region97: #{structure_module_forward.11} parent=91 // pred_check
        %p1109 = pneg %p468
      $region98: #{structure_module_forward.11} parent=91 // pred_check_branch
        %1111 = sbr.rel (%p1109) target = $region100
      $region99: #{structure_module_forward.11} parent=91 // pred_region
        _
      $region100: #{structure_module_forward.11} parent=91 // pred_fallthru
        _
    $region92: #{structure_module_forward.11} parent=5 // pred_fallthru
      _
    %p1112 = scmp.le.s32.totalorder 2, %s26
    // Predicated region
    $region101: #{structure_module_forward.11} parent=5 // pred_check
      %p1113 = pneg %p1112
    $region102: #{structure_module_forward.11} parent=5 // pred_check_branch
      %1115 = sbr.rel (%p1113) target = $region104
    $region103: #{structure_module_forward.11} parent=5 // pred_region
      %s1116 = ssub.s32 %s26, 2
      // Predicated region
      $region105: #{structure_module_forward.11} parent=103 // pred_check
        %p1117 = pneg %p448
      $region106: #{structure_module_forward.11} parent=103 // pred_check_branch
        %1119 = sbr.rel (%p1117) target = $region108
      $region107: #{structure_module_forward.11} parent=103 // pred_region
        %p1120 = scmp.lt.s32.totalorder %s32, 1
        %s1121 = scalar_select %p1120, %s32, 1
        %s1122 = smul.addr %s1121, 8
        %s1123 = scalar_lea.vmem %s18, %s1122
      $region108: #{structure_module_forward.11} parent=103 // pred_fallthru
        _
      // Predicated region
      $region109: #{structure_module_forward.11} parent=103 // pred_check
        %p1124 = pneg %p474
      $region110: #{structure_module_forward.11} parent=103 // pred_check_branch
        %1126 = sbr.rel (%p1124) target = $region112
      $region111: #{structure_module_forward.11} parent=103 // pred_region
        %p1127 = scmp.lt.s32.totalorder %s32, 1
        %s1128 = scalar_select %p1127, %s32, 1
        %s1129 = smul.addr %s1128, 8
        %s1130 = scalar_lea.vmem %s19, %s1129
      $region112: #{structure_module_forward.11} parent=103 // pred_fallthru
        _
    $region104: #{structure_module_forward.11} parent=5 // pred_fallthru
      _
  $region6: #{structure_module_forward.11} parent=0 // loop_footer
    %s30 = sadd.s32 1, %s26
  $region7: #{structure_module_forward.11} parent=0 // loop_footer_branch
    %25 = sbr.rel target = $region3
  $region8: #{structure_module_forward.11} parent=0 // loop_exit
    _

// kernel: structure_module_forward.10
$region0: #{structure_module_forward.10}
  #allocation0 [shape = 'u32[]', space=smem, size = 0x4, offset = 0x4, fixed_abs, tag = 'smem constant byte address 0x4 - core index']
  #allocation1 [shape = 'u32[144,128]{1,0:T(1,128)}', space=vmem, size = 0x12000, scoped, tag = 'internal scratch']
  %s0 = inlined_call_operand.vmem [shape: bf16[16,31,16], index: 0, kind: input, shape index: {}]
  %s1 = inlined_call_operand.vmem [shape: f32[16,16], index: 1, kind: input, shape index: {}]
  %s2 = inlined_call_operand.vmem [shape: f32[4,16,8], index: 2, kind: input, shape index: {}]
  %s3 = inlined_call_operand.vmem [shape: f32[4,16,8], index: 3, kind: input, shape index: {}]
  %s4 = inlined_call_operand.vmem [shape: f32[4,16,8], index: 4, kind: input, shape index: {}]
  %s5 = inlined_call_operand.vmem [shape: f32[16,16,3], index: 5, kind: input, shape index: {}]
  %s6 = inlined_call_operand.vmem [shape: f32[16,16,3], index: 6, kind: input, shape index: {}]
  %s7 = inlined_call_operand.vmem [shape: f32[4,16,12], index: 7, kind: input, shape index: {}]
  %s8 = inlined_call_operand.vmem [shape: f32[4,31], index: 8, kind: input, shape index: {}]
  %s9 = inlined_call_operand.vmem [shape: f32[4,1,1], index: 9, kind: input, shape index: {}]
  %s10 = inlined_call_operand.vmem [shape: f32[4,1,1], index: 10, kind: input, shape index: {}]
  %s11 = inlined_call_operand.vmem [shape: f32[16,160], index: 11, kind: output, shape index: {0}]
  %s12 = inlined_call_operand.vmem [shape: f32[4,16,12], index: 12, kind: output, shape index: {1}]
  %13 = xla_tuple %s11, %s12
  %s14 = sld [smem:[#allocation0]]
  $region195: #{structure_module_forward.10} parent=0
    _
  %s16 = ssub.s32 1, %s14
  %s17 = scalar_select 0, %s16, %s14
  $region1: #{structure_module_forward.10} parent=0
    #allocation2 [shape = 'u8[32768]{0}', space=vmem, size = 0x8000, scoped, tag = 'input window, operand 2']
    #allocation3 [shape = 'u8[131072]{0}', space=vmem, size = 0x20000, scoped, tag = 'input window, operand 5']
    #allocation4 [shape = 'u8[32768]{0}', space=vmem, size = 0x8000, scoped, tag = 'output window, operand 1']
    loop: start=0, step=1, limit=4
    $region2: #{structure_module_forward.10} parent=1 // loop_pre_header
      _
    $region3: #{structure_module_forward.10} parent=1 // loop_header
      %s19 = sphi 0, %s23
      %p20 = scmp.ge.s32.totalorder %s19, 4
      %s29 = sphi 0, %s31
      %s32 = sphi 0, %s29
      %s33 = sphi 0, %s32
      %s49 = sphi 0, %s33
      %s55 = sphi 0, %s57
      %s58 = sphi 0, %s55
      %s59 = sphi 0, %s58
      %s75 = sphi 0, %s59
      %s81 = sphi 0, %s83
      %s84 = sphi 0, %s81
      %s85 = sphi 0, %s84
      %s101 = sphi 0, %s85
      %s105 = sphi 0, %s105
      %s107 = sphi 0, %s105
      %s108 = sphi 0, %s107
      %s122 = sphi 0, %s108
      %s126 = sphi 0, %s126
      %s128 = sphi 0, %s126
      %s129 = sphi 0, %s128
      %s143 = sphi 0, %s129
      %s149 = sphi 0, %s151
      %s152 = sphi 0, %s149
      %s153 = sphi 0, %s152
      %s169 = sphi 0, %s153
      %s173 = sphi 0, %s173
      %s175 = sphi 0, %s173
      %s176 = sphi 0, %s175
      %s190 = sphi 0, %s176
      %s194 = sphi 0, %s194
      %s196 = sphi 0, %s194
      %s197 = sphi 0, %s196
      %s211 = sphi 0, %s197
      %s215 = sphi 0, %s215
      %s217 = sphi 0, %s215
      %s218 = sphi 0, %s217
      %s232 = sphi 0, %s218
      %s236 = sphi 0, %s236
      %s238 = sphi 0, %s236
      %s239 = sphi 0, %s238
      %s253 = sphi 0, %s239
      %s257 = sphi 0, %s257
      %s259 = sphi 0, %s257
      %s260 = sphi 0, %s259
      %s274 = sphi 0, %s260
      %s280 = sphi 0, %s282
      %s283 = sphi 0, %s280
      %s284 = sphi 0, %s283
      %s300 = sphi 0, %s284
      %s306 = sphi 0, %s308
      %s309 = sphi 0, %s306
      %s310 = sphi 0, %s309
      %s326 = sphi 0, %s310
    $region4: #{structure_module_forward.10} parent=1 // loop_header_branch
      %22 = sbr.rel (%p20) target = $region8
    $region5: #{structure_module_forward.10} parent=1 // loop_body
      %s24 = ssub.s32 %s19, 1
      %s25 = ssub.s32 %s19, 2
      %s26 = sadd.s32 %s19, 1
      %s27 = ssub.s32 %s19, %s26
      %p28 = scmp.eq.s32.totalorder %s27, 0
      %s30 = sadd.s32 %s29, 1
      %s31 = scalar_select %p28, %s29, %s30
      %p34 = pneg %p28
      %p35 = scmp.eq.s32.totalorder %s19, 1
      %p36 = por %p34, %p35
      %p37 = scmp.ne.s32.totalorder %s29, %s32
      %p38 = scmp.eq.s32.totalorder %s19, 0
      %p39 = por %p37, %p38
      %p40 = scmp.ne.s32.totalorder %s29, %s32
      %p41 = scmp.eq.s32.totalorder %s24, 1
      %p42 = por %p40, %p41
      %p43 = scmp.ne.s32.totalorder %s32, %s33
      %p44 = scmp.eq.s32.totalorder %s24, 0
      %p45 = por %p43, %p44
      %p46 = scmp.ne.s32.totalorder %s32, %s33
      %p47 = scmp.eq.s32.totalorder %s25, 1
      %p48 = por %p46, %p47
      %p50 = scmp.ne.s32.totalorder %s33, %s49
      %p51 = scmp.eq.s32.totalorder %s25, 0
      %p52 = por %p50, %p51
      %s53 = ssub.s32 %s19, %s26
      %p54 = scmp.eq.s32.totalorder %s53, 0
      %s56 = sadd.s32 %s55, 1
      %s57 = scalar_select %p54, %s55, %s56
      %p60 = pneg %p54
      %p61 = scmp.eq.s32.totalorder %s19, 1
      %p62 = por %p60, %p61
      %p63 = scmp.ne.s32.totalorder %s55, %s58
      %p64 = scmp.eq.s32.totalorder %s19, 0
      %p65 = por %p63, %p64
      %p66 = scmp.ne.s32.totalorder %s55, %s58
      %p67 = scmp.eq.s32.totalorder %s24, 1
      %p68 = por %p66, %p67
      %p69 = scmp.ne.s32.totalorder %s58, %s59
      %p70 = scmp.eq.s32.totalorder %s24, 0
      %p71 = por %p69, %p70
      %p72 = scmp.ne.s32.totalorder %s58, %s59
      %p73 = scmp.eq.s32.totalorder %s25, 1
      %p74 = por %p72, %p73
      %p76 = scmp.ne.s32.totalorder %s59, %s75
      %p77 = scmp.eq.s32.totalorder %s25, 0
      %p78 = por %p76, %p77
      %s79 = ssub.s32 %s19, %s26
      %p80 = scmp.eq.s32.totalorder %s79, 0
      %s82 = sadd.s32 %s81, 1
      %s83 = scalar_select %p80, %s81, %s82
      %p86 = pneg %p80
      %p87 = scmp.eq.s32.totalorder %s19, 1
      %p88 = por %p86, %p87
      %p89 = scmp.ne.s32.totalorder %s81, %s84
      %p90 = scmp.eq.s32.totalorder %s19, 0
      %p91 = por %p89, %p90
      %p92 = scmp.ne.s32.totalorder %s81, %s84
      %p93 = scmp.eq.s32.totalorder %s24, 1
      %p94 = por %p92, %p93
      %p95 = scmp.ne.s32.totalorder %s84, %s85
      %p96 = scmp.eq.s32.totalorder %s24, 0
      %p97 = por %p95, %p96
      %p98 = scmp.ne.s32.totalorder %s84, %s85
      %p99 = scmp.eq.s32.totalorder %s25, 1
      %p100 = por %p98, %p99
      %p102 = scmp.ne.s32.totalorder %s85, %s101
      %p103 = scmp.eq.s32.totalorder %s25, 0
      %p104 = por %p102, %p103
      %s106 = sadd.s32 %s105, 1
      %p109 = scmp.eq.s32.totalorder %s19, 1
      %p110 = scmp.ne.s32.totalorder %s105, %s107
      %p111 = scmp.eq.s32.totalorder %s19, 0
      %p112 = por %p110, %p111
      %p113 = scmp.ne.s32.totalorder %s105, %s107
      %p114 = scmp.eq.s32.totalorder %s24, 1
      %p115 = por %p113, %p114
      %p116 = scmp.ne.s32.totalorder %s107, %s108
      %p117 = scmp.eq.s32.totalorder %s24, 0
      %p118 = por %p116, %p117
      %p119 = scmp.ne.s32.totalorder %s107, %s108
      %p120 = scmp.eq.s32.totalorder %s25, 1
      %p121 = por %p119, %p120
      %p123 = scmp.ne.s32.totalorder %s108, %s122
      %p124 = scmp.eq.s32.totalorder %s25, 0
      %p125 = por %p123, %p124
      %s127 = sadd.s32 %s126, 1
      %p130 = scmp.eq.s32.totalorder %s19, 1
      %p131 = scmp.ne.s32.totalorder %s126, %s128
      %p132 = scmp.eq.s32.totalorder %s19, 0
      %p133 = por %p131, %p132
      %p134 = scmp.ne.s32.totalorder %s126, %s128
      %p135 = scmp.eq.s32.totalorder %s24, 1
      %p136 = por %p134, %p135
      %p137 = scmp.ne.s32.totalorder %s128, %s129
      %p138 = scmp.eq.s32.totalorder %s24, 0
      %p139 = por %p137, %p138
      %p140 = scmp.ne.s32.totalorder %s128, %s129
      %p141 = scmp.eq.s32.totalorder %s25, 1
      %p142 = por %p140, %p141
      %p144 = scmp.ne.s32.totalorder %s129, %s143
      %p145 = scmp.eq.s32.totalorder %s25, 0
      %p146 = por %p144, %p145
      %s147 = ssub.s32 %s19, %s26
      %p148 = scmp.eq.s32.totalorder %s147, 0
      %s150 = sadd.s32 %s149, 1
      %s151 = scalar_select %p148, %s149, %s150
      %p154 = pneg %p148
      %p155 = scmp.eq.s32.totalorder %s19, 1
      %p156 = por %p154, %p155
      %p157 = scmp.ne.s32.totalorder %s149, %s152
      %p158 = scmp.eq.s32.totalorder %s19, 0
      %p159 = por %p157, %p158
      %p160 = scmp.ne.s32.totalorder %s149, %s152
      %p161 = scmp.eq.s32.totalorder %s24, 1
      %p162 = por %p160, %p161
      %p163 = scmp.ne.s32.totalorder %s152, %s153
      %p164 = scmp.eq.s32.totalorder %s24, 0
      %p165 = por %p163, %p164
      %p166 = scmp.ne.s32.totalorder %s152, %s153
      %p167 = scmp.eq.s32.totalorder %s25, 1
      %p168 = por %p166, %p167
      %p170 = scmp.ne.s32.totalorder %s153, %s169
      %p171 = scmp.eq.s32.totalorder %s25, 0
      %p172 = por %p170, %p171
      %s174 = sadd.s32 %s173, 1
      %p177 = scmp.eq.s32.totalorder %s19, 1
      %p178 = scmp.ne.s32.totalorder %s173, %s175
      %p179 = scmp.eq.s32.totalorder %s19, 0
      %p180 = por %p178, %p179
      %p181 = scmp.ne.s32.totalorder %s173, %s175
      %p182 = scmp.eq.s32.totalorder %s24, 1
      %p183 = por %p181, %p182
      %p184 = scmp.ne.s32.totalorder %s175, %s176
      %p185 = scmp.eq.s32.totalorder %s24, 0
      %p186 = por %p184, %p185
      %p187 = scmp.ne.s32.totalorder %s175, %s176
      %p188 = scmp.eq.s32.totalorder %s25, 1
      %p189 = por %p187, %p188
      %p191 = scmp.ne.s32.totalorder %s176, %s190
      %p192 = scmp.eq.s32.totalorder %s25, 0
      %p193 = por %p191, %p192
      %s195 = sadd.s32 %s194, 1
      %p198 = scmp.eq.s32.totalorder %s19, 1
      %p199 = scmp.ne.s32.totalorder %s194, %s196
      %p200 = scmp.eq.s32.totalorder %s19, 0
      %p201 = por %p199, %p200
      %p202 = scmp.ne.s32.totalorder %s194, %s196
      %p203 = scmp.eq.s32.totalorder %s24, 1
      %p204 = por %p202, %p203
      %p205 = scmp.ne.s32.totalorder %s196, %s197
      %p206 = scmp.eq.s32.totalorder %s24, 0
      %p207 = por %p205, %p206
      %p208 = scmp.ne.s32.totalorder %s196, %s197
      %p209 = scmp.eq.s32.totalorder %s25, 1
      %p210 = por %p208, %p209
      %p212 = scmp.ne.s32.totalorder %s197, %s211
      %p213 = scmp.eq.s32.totalorder %s25, 0
      %p214 = por %p212, %p213
      %s216 = sadd.s32 %s215, 1
      %p219 = scmp.eq.s32.totalorder %s19, 1
      %p220 = scmp.ne.s32.totalorder %s215, %s217
      %p221 = scmp.eq.s32.totalorder %s19, 0
      %p222 = por %p220, %p221
      %p223 = scmp.ne.s32.totalorder %s215, %s217
      %p224 = scmp.eq.s32.totalorder %s24, 1
      %p225 = por %p223, %p224
      %p226 = scmp.ne.s32.totalorder %s217, %s218
      %p227 = scmp.eq.s32.totalorder %s24, 0
      %p228 = por %p226, %p227
      %p229 = scmp.ne.s32.totalorder %s217, %s218
      %p230 = scmp.eq.s32.totalorder %s25, 1
      %p231 = por %p229, %p230
      %p233 = scmp.ne.s32.totalorder %s218, %s232
      %p234 = scmp.eq.s32.totalorder %s25, 0
      %p235 = por %p233, %p234
      %s237 = sadd.s32 %s236, 1
      %p240 = scmp.eq.s32.totalorder %s19, 1
      %p241 = scmp.ne.s32.totalorder %s236, %s238
      %p242 = scmp.eq.s32.totalorder %s19, 0
      %p243 = por %p241, %p242
      %p244 = scmp.ne.s32.totalorder %s236, %s238
      %p245 = scmp.eq.s32.totalorder %s24, 1
      %p246 = por %p244, %p245
      %p247 = scmp.ne.s32.totalorder %s238, %s239
      %p248 = scmp.eq.s32.totalorder %s24, 0
      %p249 = por %p247, %p248
      %p250 = scmp.ne.s32.totalorder %s238, %s239
      %p251 = scmp.eq.s32.totalorder %s25, 1
      %p252 = por %p250, %p251
      %p254 = scmp.ne.s32.totalorder %s239, %s253
      %p255 = scmp.eq.s32.totalorder %s25, 0
      %p256 = por %p254, %p255
      %s258 = sadd.s32 %s257, 1
      %p261 = scmp.eq.s32.totalorder %s19, 1
      %p262 = scmp.ne.s32.totalorder %s257, %s259
      %p263 = scmp.eq.s32.totalorder %s19, 0
      %p264 = por %p262, %p263
      %p265 = scmp.ne.s32.totalorder %s257, %s259
      %p266 = scmp.eq.s32.totalorder %s24, 1
      %p267 = por %p265, %p266
      %p268 = scmp.ne.s32.totalorder %s259, %s260
      %p269 = scmp.eq.s32.totalorder %s24, 0
      %p270 = por %p268, %p269
      %p271 = scmp.ne.s32.totalorder %s259, %s260
      %p272 = scmp.eq.s32.totalorder %s25, 1
      %p273 = por %p271, %p272
      %p275 = scmp.ne.s32.totalorder %s260, %s274
      %p276 = scmp.eq.s32.totalorder %s25, 0
      %p277 = por %p275, %p276
      %s278 = ssub.s32 %s19, %s26
      %p279 = scmp.eq.s32.totalorder %s278, 0
      %s281 = sadd.s32 %s280, 1
      %s282 = scalar_select %p279, %s280, %s281
      %p285 = pneg %p279
      %p286 = scmp.eq.s32.totalorder %s19, 1
      %p287 = por %p285, %p286
      %p288 = scmp.ne.s32.totalorder %s280, %s283
      %p289 = scmp.eq.s32.totalorder %s19, 0
      %p290 = por %p288, %p289
      %p291 = scmp.ne.s32.totalorder %s280, %s283
      %p292 = scmp.eq.s32.totalorder %s24, 1
      %p293 = por %p291, %p292
      %p294 = scmp.ne.s32.totalorder %s283, %s284
      %p295 = scmp.eq.s32.totalorder %s24, 0
      %p296 = por %p294, %p295
      %p297 = scmp.ne.s32.totalorder %s283, %s284
      %p298 = scmp.eq.s32.totalorder %s25, 1
      %p299 = por %p297, %p298
      %p301 = scmp.ne.s32.totalorder %s284, %s300
      %p302 = scmp.eq.s32.totalorder %s25, 0
      %p303 = por %p301, %p302
      %s304 = ssub.s32 %s19, %s26
      %p305 = scmp.eq.s32.totalorder %s304, 0
      %s307 = sadd.s32 %s306, 1
      %s308 = scalar_select %p305, %s306, %s307
      %p311 = pneg %p305
      %p312 = scmp.eq.s32.totalorder %s19, 1
      %p313 = por %p311, %p312
      %p314 = scmp.ne.s32.totalorder %s306, %s309
      %p315 = scmp.eq.s32.totalorder %s19, 0
      %p316 = por %p314, %p315
      %p317 = scmp.ne.s32.totalorder %s306, %s309
      %p318 = scmp.eq.s32.totalorder %s24, 1
      %p319 = por %p317, %p318
      %p320 = scmp.ne.s32.totalorder %s309, %s310
      %p321 = scmp.eq.s32.totalorder %s24, 0
      %p322 = por %p320, %p321
      %p323 = scmp.ne.s32.totalorder %s309, %s310
      %p324 = scmp.eq.s32.totalorder %s25, 1
      %p325 = por %p323, %p324
      %p327 = scmp.ne.s32.totalorder %s310, %s326
      %p328 = scmp.eq.s32.totalorder %s25, 0
      %p329 = por %p327, %p328
      %p330 = scmp.le.s32.totalorder 1, %s19
      %p331 = scmp.lt.s32.totalorder %s19, 3
      %p332 = pnand %p330, %p331
      %p333 = pneg %p332
      // Predicated region
      $region9: #{structure_module_forward.10} parent=5 // pred_check
        _
      $region10: #{structure_module_forward.10} parent=5 // pred_check_branch
        %335 = sbr.rel (%p332) target = $region12
      $region11: #{structure_module_forward.10} parent=5 // pred_region
        %s336 = ssub.s32 %s19, 1
        // Predicated region
        $region13: #{structure_module_forward.10} parent=11 // pred_check
          %p337 = pneg %p118
        $region14: #{structure_module_forward.10} parent=11 // pred_check_branch
          %339 = sbr.rel (%p337) target = $region16
        $region15: #{structure_module_forward.10} parent=11 // pred_region
          _
        $region16: #{structure_module_forward.10} parent=11 // pred_fallthru
          _
        // Predicated region
        $region17: #{structure_module_forward.10} parent=11 // pred_check
          %p340 = pneg %p139
        $region18: #{structure_module_forward.10} parent=11 // pred_check_branch
          %342 = sbr.rel (%p340) target = $region20
        $region19: #{structure_module_forward.10} parent=11 // pred_region
          _
        $region20: #{structure_module_forward.10} parent=11 // pred_fallthru
          _
        // Predicated region
        $region21: #{structure_module_forward.10} parent=11 // pred_check
          %p343 = pneg %p186
        $region22: #{structure_module_forward.10} parent=11 // pred_check_branch
          %345 = sbr.rel (%p343) target = $region24
        $region23: #{structure_module_forward.10} parent=11 // pred_region
          _
        $region24: #{structure_module_forward.10} parent=11 // pred_fallthru
          _
        // Predicated region
        $region25: #{structure_module_forward.10} parent=11 // pred_check
          %p346 = pneg %p207
        $region26: #{structure_module_forward.10} parent=11 // pred_check_branch
          %348 = sbr.rel (%p346) target = $region28
        $region27: #{structure_module_forward.10} parent=11 // pred_region
          _
        $region28: #{structure_module_forward.10} parent=11 // pred_fallthru
          _
        // Predicated region
        $region29: #{structure_module_forward.10} parent=11 // pred_check
          %p349 = pneg %p228
        $region30: #{structure_module_forward.10} parent=11 // pred_check_branch
          %351 = sbr.rel (%p349) target = $region32
        $region31: #{structure_module_forward.10} parent=11 // pred_region
          _
        $region32: #{structure_module_forward.10} parent=11 // pred_fallthru
          _
        // Predicated region
        $region33: #{structure_module_forward.10} parent=11 // pred_check
          %p352 = pneg %p249
        $region34: #{structure_module_forward.10} parent=11 // pred_check_branch
          %354 = sbr.rel (%p352) target = $region36
        $region35: #{structure_module_forward.10} parent=11 // pred_region
          _
        $region36: #{structure_module_forward.10} parent=11 // pred_fallthru
          _
        // Predicated region
        $region37: #{structure_module_forward.10} parent=11 // pred_check
          %p355 = pneg %p270
        $region38: #{structure_module_forward.10} parent=11 // pred_check_branch
          %357 = sbr.rel (%p355) target = $region40
        $region39: #{structure_module_forward.10} parent=11 // pred_region
          _
        $region40: #{structure_module_forward.10} parent=11 // pred_fallthru
          _
      $region12: #{structure_module_forward.10} parent=5 // pred_fallthru
        _
      %p358 = scmp.lt.s32.totalorder %s19, 2
      // Predicated region
      $region41: #{structure_module_forward.10} parent=5 // pred_check
        %p359 = pneg %p358
      $region42: #{structure_module_forward.10} parent=5 // pred_check_branch
        %361 = sbr.rel (%p359) target = $region44
      $region43: #{structure_module_forward.10} parent=5 // pred_region
        // Predicated region
        $region45: #{structure_module_forward.10} parent=43 // pred_check
          %p362 = pneg %p39
        $region46: #{structure_module_forward.10} parent=43 // pred_check_branch
          %364 = sbr.rel (%p362) target = $region48
        $region47: #{structure_module_forward.10} parent=43 // pred_region
          %s365 = smul.u32 8, %s19
          %p366 = scmp.lt.s32.totalorder %s365, 15
          %s367 = scalar_select %p366, %s365, 15
          %s368 = smul.addr %s367, 4
          %s369 = smul.addr %s368, 4
          %s370 = scalar_lea.vmem %s0, %s369
          %s371 = smul.u32 8, %s19
        $region48: #{structure_module_forward.10} parent=43 // pred_fallthru
          _
        // Predicated region
        $region49: #{structure_module_forward.10} parent=43 // pred_check
          %p372 = pneg %p65
        $region50: #{structure_module_forward.10} parent=43 // pred_check_branch
          %374 = sbr.rel (%p372) target = $region52
        $region51: #{structure_module_forward.10} parent=43 // pred_region
          %p375 = scmp.lt.s32.totalorder %s19, 1
          %s376 = scalar_select %p375, %s19, 1
          %s377 = smul.addr %s376, 8
          %s378 = scalar_lea.vmem %s1, %s377
        $region52: #{structure_module_forward.10} parent=43 // pred_fallthru
          _
        // Predicated region
        $region53: #{structure_module_forward.10} parent=43 // pred_check
          %p379 = pneg %p91
        $region54: #{structure_module_forward.10} parent=43 // pred_check_branch
          %381 = sbr.rel (%p379) target = $region56
        $region55: #{structure_module_forward.10} parent=43 // pred_region
          %s382 = sand.u32 %s81, 1
          %s383 = sand.u32 %s81, 1
          %s384 = smul.addr %s383, 32
          %s385 = scalar_lea.vmem [#allocation2], %s384
          %s386 = smul.addr %s19, 8
          %s387 = scalar_lea.vmem %s2, %s386
          // Predicated region
          $region57: #{structure_module_forward.10} parent=55 // pred_check
            _
          $region58: #{structure_module_forward.10} parent=55 // pred_check_branch
            %389 = sbr.rel (0) target = $region60
          $region59: #{structure_module_forward.10} parent=55 // pred_region
            // Predicated region
            $region61: #{structure_module_forward.10} parent=59 // pred_check
              _
            $region62: #{structure_module_forward.10} parent=59 // pred_check_branch
              %391 = sbr.rel (0) target = $region64
            $region63: #{structure_module_forward.10} parent=59 // pred_region
              // Predicated region
              $region76: #{structure_module_forward.10} parent=63 // pred_check
                _
              $region77: #{structure_module_forward.10} parent=63 // pred_check_branch
                %412 = sbr.rel (0) target = $region79
              $region78: #{structure_module_forward.10} parent=63 // pred_region
                loop: start=0, step=1, limit=1
                $region80: #{structure_module_forward.10} parent=78 // loop_pre_header
                  _
                $region81: #{structure_module_forward.10} parent=78 // loop_header
                  %s414 = sphi 0, %s418
                  %p415 = scmp.ge.s32.totalorder %s414, 1
                  %s419 = sphi %s387, %s387
                  %s420 = sphi %s385, %s385
                $region82: #{structure_module_forward.10} parent=78 // loop_header_branch
                  %417 = sbr.rel (%p415) target = $region86
                $region83: #{structure_module_forward.10} parent=78 // loop_body
                  %v421 = vld [vmem:[%s419] sm:$0xff]
                  %422 = vst [vmem:[%s420] sm:$0xff] %v421
                  %v423 = vld [vmem:[%s419 + $0x10] sm:$0xff]
                  %424 = vst [vmem:[%s420 + $0x8] sm:$0xff] %v423
                  %v425 = vld [vmem:[%s419 + $0x20] sm:$0xff]
                  %426 = vst [vmem:[%s420 + $0x10] sm:$0xff] %v425
                  %v427 = vld [vmem:[%s419 + $0x30] sm:$0xff]
                  %428 = vst [vmem:[%s420 + $0x18] sm:$0xff] %v427
                $region84: #{structure_module_forward.10} parent=78 // loop_footer
                  %s418 = sadd.s32 1, %s414
                $region85: #{structure_module_forward.10} parent=78 // loop_footer_branch
                  %413 = sbr.rel target = $region81
                $region86: #{structure_module_forward.10} parent=78 // loop_exit
                  _
              $region79: #{structure_module_forward.10} parent=63 // pred_fallthru
                _
              // Predicated region
              $region87: #{structure_module_forward.10} parent=63 // pred_check
                _
              $region88: #{structure_module_forward.10} parent=63 // pred_check_branch
                %430 = sbr.rel target = $region90
              $region89: #{structure_module_forward.10} parent=63 // pred_region
                _
              $region90: #{structure_module_forward.10} parent=63 // pred_fallthru
                _
            $region64: #{structure_module_forward.10} parent=59 // pred_fallthru
              _
            // Predicated region
            $region65: #{structure_module_forward.10} parent=59 // pred_check
              _
            $region66: #{structure_module_forward.10} parent=59 // pred_check_branch
              %393 = sbr.rel target = $region68
            $region67: #{structure_module_forward.10} parent=59 // pred_region
              loop: start=0, step=1, limit=1
              $region69: #{structure_module_forward.10} parent=67 // loop_pre_header
                _
              $region70: #{structure_module_forward.10} parent=67 // loop_header
                %s396 = sphi 0, %s400
                %p397 = scmp.ge.s32.totalorder %s396, 1
                %s401 = sphi %s387, %s387
                %s402 = sphi %s385, %s385
              $region71: #{structure_module_forward.10} parent=67 // loop_header_branch
                %399 = sbr.rel (%p397) target = $region75
              $region72: #{structure_module_forward.10} parent=67 // loop_body
                %v403 = vld [vmem:[%s401] sm:$0xff]
                %404 = vst [vmem:[%s402] sm:$0xff] %v403
                %v405 = vld [vmem:[%s401 + $0x10] sm:$0xff]
                %406 = vst [vmem:[%s402 + $0x8] sm:$0xff] %v405
                %v407 = vld [vmem:[%s401 + $0x20] sm:$0xff]
                %408 = vst [vmem:[%s402 + $0x10] sm:$0xff] %v407
                %v409 = vld [vmem:[%s401 + $0x30] sm:$0xff]
                %410 = vst [vmem:[%s402 + $0x18] sm:$0xff] %v409
              $region73: #{structure_module_forward.10} parent=67 // loop_footer
                %s400 = sadd.s32 1, %s396
              $region74: #{structure_module_forward.10} parent=67 // loop_footer_branch
                %395 = sbr.rel target = $region70
              $region75: #{structure_module_forward.10} parent=67 // loop_exit
                _
            $region68: #{structure_module_forward.10} parent=59 // pred_fallthru
              _
          $region60: #{structure_module_forward.10} parent=55 // pred_fallthru
            _
          %431 = vnop
        $region56: #{structure_module_forward.10} parent=43 // pred_fallthru
          _
        // Predicated region
        $region91: #{structure_module_forward.10} parent=43 // pred_check
          %p432 = pneg %p159
        $region92: #{structure_module_forward.10} parent=43 // pred_check_branch
          %434 = sbr.rel (%p432) target = $region94
        $region93: #{structure_module_forward.10} parent=43 // pred_region
          %s435 = sand.u32 %s149, 1
          %s436 = sand.u32 %s149, 1
          %s437 = smul.addr %s436, 128
          %s438 = scalar_lea.vmem [#allocation3], %s437
          %s439 = smul.addr %s19, 8
          %s440 = scalar_lea.vmem %s5, %s439
          // Predicated region
          $region95: #{structure_module_forward.10} parent=93 // pred_check
            _
          $region96: #{structure_module_forward.10} parent=93 // pred_check_branch
            %442 = sbr.rel (0) target = $region98
          $region97: #{structure_module_forward.10} parent=93 // pred_region
            // Predicated region
            $region99: #{structure_module_forward.10} parent=97 // pred_check
              _
            $region100: #{structure_module_forward.10} parent=97 // pred_check_branch
              %444 = sbr.rel (0) target = $region102
            $region101: #{structure_module_forward.10} parent=97 // pred_region
              // Predicated region
              $region114: #{structure_module_forward.10} parent=101 // pred_check
                _
              $region115: #{structure_module_forward.10} parent=101 // pred_check_branch
                %489 = sbr.rel (0) target = $region117
              $region116: #{structure_module_forward.10} parent=101 // pred_region
                loop: start=0, step=1, limit=1
                $region118: #{structure_module_forward.10} parent=116 // loop_pre_header
                  _
                $region119: #{structure_module_forward.10} parent=116 // loop_header
                  %s491 = sphi 0, %s495
                  %p492 = scmp.ge.s32.totalorder %s491, 1
                  %s496 = sphi %s440, %s440
                  %s497 = sphi %s438, %s438
                $region120: #{structure_module_forward.10} parent=116 // loop_header_branch
                  %494 = sbr.rel (%p492) target = $region124
                $region121: #{structure_module_forward.10} parent=116 // loop_body
                  %v498 = vld [vmem:[%s496] sm:$0xff]
                  %499 = vst [vmem:[%s497] sm:$0xff] %v498
                  %v500 = vld [vmem:[%s496 + $0x10] sm:$0xff]
                  %501 = vst [vmem:[%s497 + $0x8] sm:$0xff] %v500
                  %v502 = vld [vmem:[%s496 + $0x20] sm:$0xff]
                  %503 = vst [vmem:[%s497 + $0x10] sm:$0xff] %v502
                  %v504 = vld [vmem:[%s496 + $0x30] sm:$0xff]
                  %505 = vst [vmem:[%s497 + $0x18] sm:$0xff] %v504
                  %v506 = vld [vmem:[%s496 + $0x40] sm:$0xff]
                  %507 = vst [vmem:[%s497 + $0x20] sm:$0xff] %v506
                  %v508 = vld [vmem:[%s496 + $0x50] sm:$0xff]
                  %509 = vst [vmem:[%s497 + $0x28] sm:$0xff] %v508
                  %v510 = vld [vmem:[%s496 + $0x60] sm:$0xff]
                  %511 = vst [vmem:[%s497 + $0x30] sm:$0xff] %v510
                  %v512 = vld [vmem:[%s496 + $0x70] sm:$0xff]
                  %513 = vst [vmem:[%s497 + $0x38] sm:$0xff] %v512
                  %v514 = vld [vmem:[%s496 + $0x80] sm:$0xff]
                  %515 = vst [vmem:[%s497 + $0x40] sm:$0xff] %v514
                  %v516 = vld [vmem:[%s496 + $0x90] sm:$0xff]
                  %517 = vst [vmem:[%s497 + $0x48] sm:$0xff] %v516
                  %v518 = vld [vmem:[%s496 + $0xa0] sm:$0xff]
                  %519 = vst [vmem:[%s497 + $0x50] sm:$0xff] %v518
                  %v520 = vld [vmem:[%s496 + $0xb0] sm:$0xff]
                  %521 = vst [vmem:[%s497 + $0x58] sm:$0xff] %v520
                  %v522 = vld [vmem:[%s496 + $0xc0] sm:$0xff]
                  %523 = vst [vmem:[%s497 + $0x60] sm:$0xff] %v522
                  %v524 = vld [vmem:[%s496 + $0xd0] sm:$0xff]
                  %525 = vst [vmem:[%s497 + $0x68] sm:$0xff] %v524
                  %v526 = vld [vmem:[%s496 + $0xe0] sm:$0xff]
                  %527 = vst [vmem:[%s497 + $0x70] sm:$0xff] %v526
                  %v528 = vld [vmem:[%s496 + $0xf0] sm:$0xff]
                  %529 = vst [vmem:[%s497 + $0x78] sm:$0xff] %v528
                $region122: #{structure_module_forward.10} parent=116 // loop_footer
                  %s495 = sadd.s32 1, %s491
                $region123: #{structure_module_forward.10} parent=116 // loop_footer_branch
                  %490 = sbr.rel target = $region119
                $region124: #{structure_module_forward.10} parent=116 // loop_exit
                  _
              $region117: #{structure_module_forward.10} parent=101 // pred_fallthru
                _
              // Predicated region
              $region125: #{structure_module_forward.10} parent=101 // pred_check
                _
              $region126: #{structure_module_forward.10} parent=101 // pred_check_branch
                %531 = sbr.rel target = $region128
              $region127: #{structure_module_forward.10} parent=101 // pred_region
                _
              $region128: #{structure_module_forward.10} parent=101 // pred_fallthru
                _
            $region102: #{structure_module_forward.10} parent=97 // pred_fallthru
              _
            // Predicated region
            $region103: #{structure_module_forward.10} parent=97 // pred_check
              _
            $region104: #{structure_module_forward.10} parent=97 // pred_check_branch
              %446 = sbr.rel target = $region106
            $region105: #{structure_module_forward.10} parent=97 // pred_region
              loop: start=0, step=1, limit=1
              $region107: #{structure_module_forward.10} parent=105 // loop_pre_header
                _
              $region108: #{structure_module_forward.10} parent=105 // loop_header
                %s449 = sphi 0, %s453
                %p450 = scmp.ge.s32.totalorder %s449, 1
                %s454 = sphi %s440, %s440
                %s455 = sphi %s438, %s438
              $region109: #{structure_module_forward.10} parent=105 // loop_header_branch
                %452 = sbr.rel (%p450) target = $region113
              $region110: #{structure_module_forward.10} parent=105 // loop_body
                %v456 = vld [vmem:[%s454] sm:$0xff]
                %457 = vst [vmem:[%s455] sm:$0xff] %v456
                %v458 = vld [vmem:[%s454 + $0x10] sm:$0xff]
                %459 = vst [vmem:[%s455 + $0x8] sm:$0xff] %v458
                %v460 = vld [vmem:[%s454 + $0x20] sm:$0xff]
                %461 = vst [vmem:[%s455 + $0x10] sm:$0xff] %v460
                %v462 = vld [vmem:[%s454 + $0x30] sm:$0xff]
                %463 = vst [vmem:[%s455 + $0x18] sm:$0xff] %v462
                %v464 = vld [vmem:[%s454 + $0x40] sm:$0xff]
                %465 = vst [vmem:[%s455 + $0x20] sm:$0xff] %v464
                %v466 = vld [vmem:[%s454 + $0x50] sm:$0xff]
                %467 = vst [vmem:[%s455 + $0x28] sm:$0xff] %v466
                %v468 = vld [vmem:[%s454 + $0x60] sm:$0xff]
                %469 = vst [vmem:[%s455 + $0x30] sm:$0xff] %v468
                %v470 = vld [vmem:[%s454 + $0x70] sm:$0xff]
                %471 = vst [vmem:[%s455 + $0x38] sm:$0xff] %v470
                %v472 = vld [vmem:[%s454 + $0x80] sm:$0xff]
                %473 = vst [vmem:[%s455 + $0x40] sm:$0xff] %v472
                %v474 = vld [vmem:[%s454 + $0x90] sm:$0xff]
                %475 = vst [vmem:[%s455 + $0x48] sm:$0xff] %v474
                %v476 = vld [vmem:[%s454 + $0xa0] sm:$0xff]
                %477 = vst [vmem:[%s455 + $0x50] sm:$0xff] %v476
                %v478 = vld [vmem:[%s454 + $0xb0] sm:$0xff]
                %479 = vst [vmem:[%s455 + $0x58] sm:$0xff] %v478
                %v480 = vld [vmem:[%s454 + $0xc0] sm:$0xff]
                %481 = vst [vmem:[%s455 + $0x60] sm:$0xff] %v480
                %v482 = vld [vmem:[%s454 + $0xd0] sm:$0xff]
                %483 = vst [vmem:[%s455 + $0x68] sm:$0xff] %v482
                %v484 = vld [vmem:[%s454 + $0xe0] sm:$0xff]
                %485 = vst [vmem:[%s455 + $0x70] sm:$0xff] %v484
                %v486 = vld [vmem:[%s454 + $0xf0] sm:$0xff]
                %487 = vst [vmem:[%s455 + $0x78] sm:$0xff] %v486
              $region111: #{structure_module_forward.10} parent=105 // loop_footer
                %s453 = sadd.s32 1, %s449
              $region112: #{structure_module_forward.10} parent=105 // loop_footer_branch
                %448 = sbr.rel target = $region108
              $region113: #{structure_module_forward.10} parent=105 // loop_exit
                _
            $region106: #{structure_module_forward.10} parent=97 // pred_fallthru
              _
          $region98: #{structure_module_forward.10} parent=93 // pred_fallthru
            _
          %532 = vnop
        $region94: #{structure_module_forward.10} parent=43 // pred_fallthru
          _
      $region44: #{structure_module_forward.10} parent=5 // pred_fallthru
        _
      %p533 = scmp.le.s32.totalorder 1, %s19
      %p534 = scmp.lt.s32.totalorder %s19, 3
      %p535 = pnand %p533, %p534
      %p536 = pneg %p535
      // Predicated region
      $region129: #{structure_module_forward.10} parent=5 // pred_check
        _
      $region130: #{structure_module_forward.10} parent=5 // pred_check_branch
        %538 = sbr.rel (%p535) target = $region132
      $region131: #{structure_module_forward.10} parent=5 // pred_region
        %s539 = ssub.s32 %s19, 1
        %s540 = sand.u32 %s84, 1
        %s541 = sand.u32 %s84, 1
        %s542 = smul.addr %s541, 32
        %s543 = scalar_lea.vmem [#allocation2], %s542
        // Predicated region
        $region133: #{structure_module_forward.10} parent=131 // pred_check
          %p544 = pneg %p97
        $region134: #{structure_module_forward.10} parent=131 // pred_check_branch
          %546 = sbr.rel (%p544) target = $region136
        $region135: #{structure_module_forward.10} parent=131 // pred_region
          _
        $region136: #{structure_module_forward.10} parent=131 // pred_fallthru
          _
        %s547 = sand.u32 %s152, 1
        %s548 = sand.u32 %s152, 1
        %s549 = smul.addr %s548, 128
        %s550 = scalar_lea.vmem [#allocation3], %s549
        // Predicated region
        $region137: #{structure_module_forward.10} parent=131 // pred_check
          %p551 = pneg %p165
        $region138: #{structure_module_forward.10} parent=131 // pred_check_branch
          %553 = sbr.rel (%p551) target = $region140
        $region139: #{structure_module_forward.10} parent=131 // pred_region
          _
        $region140: #{structure_module_forward.10} parent=131 // pred_fallthru
          _
        %s554 = smul.u32 8, %s24
        %p555 = scmp.lt.s32.totalorder %s554, 15
        %s556 = scalar_select %p555, %s554, 15
        %s557 = smul.addr %s556, 4
        %s558 = smul.addr %s557, 4
        %s559 = scalar_lea.vmem %s0, %s558
        %p560 = pneg %p45
        %p561 = pneg %p42
        %p562 = scmp.lt.s32.totalorder %s24, 1
        %s563 = scalar_select %p562, %s24, 1
        %s564 = smul.addr %s563, 8
        %s565 = scalar_lea.vmem %s1, %s564
        %p566 = pneg %p71
        %p567 = pneg %p68
        %s568 = sand.u32 %s84, 1
        %s569 = sand.u32 %s84, 1
        %s570 = smul.addr %s569, 32
        %s571 = scalar_lea.vmem [#allocation2], %s570
        %p572 = pneg %p97
        %p573 = pneg %p94
        %p574 = pneg %p118
        %p575 = pneg %p115
        %p576 = pneg %p139
        %p577 = pneg %p136
        %s578 = sand.u32 %s152, 1
        %s579 = sand.u32 %s152, 1
        %s580 = smul.addr %s579, 128
        %s581 = scalar_lea.vmem [#allocation3], %s580
        %p582 = pneg %p165
        %p583 = pneg %p162
        %p584 = pneg %p186
        %p585 = pneg %p183
        %p586 = pneg %p207
        %p587 = pneg %p204
        %p588 = pneg %p228
        %p589 = pneg %p225
        %p590 = pneg %p249
        %p591 = pneg %p246
        %p592 = pneg %p270
        %p593 = pneg %p267
        %p594 = pneg %p296
        %p595 = pneg %p293
        %p596 = scmp.lt.s32.totalorder %s24, 1
        %s597 = scalar_select %p596, %s24, 1
        %s598 = smul.addr %s597, 2
        %s599 = smul.addr %s598, 8
        %s600 = scalar_lea.vmem %s11, %s599
        %p601 = pneg %p322
        %p602 = pneg %p319
        %s603 = sand.u32 %s309, 1
        %s604 = sand.u32 %s309, 1
        %s605 = smul.addr %s604, 32
        %s606 = scalar_lea.vmem [#allocation4], %s605
        %s607 = smul.u32 8, %s24
        %p608 = scmp.lt.s32.totalorder %s607, 15
        %s609 = scalar_select %p608, %s607, 15
        %s610 = smul.addr %s609, 4
        %s611 = smul.addr %s610, 4
        %s612 = scalar_lea.vmem %s0, %s611
        %s613 = smul.u32 8, %s24
        %p614 = scmp.lt.s32.totalorder %s24, 1
        %s615 = scalar_select %p614, %s24, 1
        %s616 = smul.addr %s615, 8
        %s617 = scalar_lea.vmem %s1, %s616
        %p618 = scmp.lt.s32.totalorder %s24, 1
        %s619 = scalar_select %p618, %s24, 1
        %s620 = smul.addr %s619, 2
        %s621 = smul.addr %s620, 8
        %s622 = scalar_lea.vmem %s11, %s621
        %v624 = vld [vmem:[%s612] sm:$0xf]
        %v625 = vld [vmem:[%s612 + $0x4] sm:$0xf]
        %v626 = vld [vmem:[%s612 + $0x8] sm:$0xf]
        %v627 = vld [vmem:[%s612 + $0xc] sm:$0xf]
        %v628 = vld [vmem:[%s612 + $0x10] sm:$0xf]
        %v629 = vld [vmem:[%s612 + $0x14] sm:$0xf]
        %v630 = vld [vmem:[%s612 + $0x18] sm:$0xf]
        %v631 = vld [vmem:[%s612 + $0x1c] sm:$0xf]
        %v632 = vld [vmem:[%s612 + $0x20] sm:$0xf]
        %v633 = vld [vmem:[%s612 + $0x24] sm:$0xf]
        %v634 = vld [vmem:[%s612 + $0x28] sm:$0xf]
        %v635 = vld [vmem:[%s612 + $0x2c] sm:$0xf]
        %v636 = vld [vmem:[%s612 + $0x30] sm:$0xf]
        %v637 = vld [vmem:[%s612 + $0x34] sm:$0xf]
        %v638 = vld [vmem:[%s612 + $0x38] sm:$0xf]
        %v639 = vld [vmem:[%s612 + $0x3c] sm:$0xf]
        %v640 = vld [vmem:[%s612 + $0x40] sm:$0xf]
        %v641 = vld [vmem:[%s612 + $0x44] sm:$0xf]
        %v642 = vld [vmem:[%s612 + $0x48] sm:$0xf]
        %v643 = vld [vmem:[%s612 + $0x4c] sm:$0xf]
        %v644 = vld [vmem:[%s612 + $0x50] sm:$0xf]
        %v645 = vld [vmem:[%s612 + $0x54] sm:$0xf]
        %v646 = vld [vmem:[%s612 + $0x58] sm:$0xf]
        %v647 = vld [vmem:[%s612 + $0x5c] sm:$0xf]
        %v648 = vld [vmem:[%s612 + $0x60] sm:$0xf]
        %v649 = vld [vmem:[%s612 + $0x64] sm:$0xf]
        %v650 = vld [vmem:[%s612 + $0x68] sm:$0xf]
        %v651 = vld [vmem:[%s612 + $0x6c] sm:$0xf]
        %v652 = vld [vmem:[%s612 + $0x70] sm:$0xf]
        %v653 = vld [vmem:[%s612 + $0x74] sm:$0xf]
        %v654 = vld [vmem:[%s612 + $0x78] sm:$0xf]
        %v655 = vld [vmem:[%s612 + $0x7c] sm:$0xf]
        %v656 = vld [vmem:[%s617] sm:$0xff]
        %v657 = vld [vmem:[%s543] sm:$0xff]
        %v658 = vld [vmem:[%s543 + $0x8] sm:$0xff]
        %v659 = vld [vmem:[%s543 + $0x10] sm:$0xff]
        %v660 = vld [vmem:[%s543 + $0x18] sm:$0xff]
        %v661 = vpack.c.bf16 %v657, %v657
        %v662 = vpack.c.bf16 %v658, %v658
        %v663 = vpack.c.bf16 %v659, %v659
        %v664 = vpack.c.bf16 %v660, %v660
        %v665 = vld [vmem:[%s3] sm:$0xff]
        %v666 = vld [vmem:[%s3 + $0x8] sm:$0xff]
        %v667 = vld [vmem:[%s3 + $0x10] sm:$0xff]
        %v668 = vld [vmem:[%s3 + $0x18] sm:$0xff]
        %v669 = vld [vmem:[%s3 + $0x20] sm:$0xff]
        %v670 = vld [vmem:[%s3 + $0x28] sm:$0xff]
        %v671 = vld [vmem:[%s3 + $0x30] sm:$0xff]
        %v672 = vld [vmem:[%s3 + $0x38] sm:$0xff]
        %v673 = vpack.c.bf16 %v666, %v665
        %v674 = vpack.c.bf16 %v668, %v667
        %v675 = vpack.c.bf16 %v670, %v669
        %v676 = vpack.c.bf16 %v672, %v671
        %vm677 = vcmask 64512
        %v679 = vsel %vm677, %v661, 0
        %v682 = vsel %vm677, %v673, 0
        %684 = vmatprep.subr.bf16.mxu0 0
        %685 = vmatpush1.bf16.xpose.msra.mxu0 %v682
        %686 = vmatprep.subr.bf16.mxu0 0
        %687 = vmatpush1.bf16.xpose.msra.mxu0 0
        %688 = vmatprep.subr.bf16.mxu0 0
        %689 = vmatpush1.bf16.xpose.msra.mxu0 0
        %690 = vmatprep.subr.bf16.mxu0 0
        %691 = vmatpush1.bf16.xpose.msra.mxu0 0
        %692 = vmatprep.subr.bf16.mxu0 0
        %693 = vmatpush1.bf16.xpose.msra.mxu0 0
        %694 = vmatprep.subr.bf16.mxu0 0
        %695 = vmatpush1.bf16.xpose.msra.mxu0 0
        %696 = vmatprep.subr.bf16.mxu0 0
        %697 = vmatpush1.bf16.xpose.msra.mxu0 0
        %698 = vmatprep.subr.bf16.mxu0 0
        %699 = vmatpush1.bf16.xpose.msra.mxu0 0
        %700 = vmatprep.subr.bf16.mxu0 0
        %701 = vmatpush1.bf16.xpose.msra.mxu0 0
        %702 = vmatprep.subr.bf16.mxu0 0
        %703 = vmatpush1.bf16.xpose.msra.mxu0 0
        %704 = vmatprep.subr.bf16.mxu0 0
        %705 = vmatpush1.bf16.xpose.msra.mxu0 0
        %706 = vmatprep.subr.bf16.mxu0 0
        %707 = vmatpush1.bf16.xpose.msra.mxu0 0
        %708 = vmatprep.subr.bf16.mxu0 0
        %709 = vmatpush1.bf16.xpose.msra.mxu0 0
        %710 = vmatprep.subr.bf16.mxu0 0
        %711 = vmatpush1.bf16.xpose.msra.mxu0 0
        %712 = vmatprep.subr.bf16.mxu0 0
        %713 = vmatpush1.bf16.xpose.msra.mxu0 0
        %714 = vmatprep.subr.bf16.mxu0 0
        %715 = vmatpush1.bf16.xpose.msra.mxu0 0
        %716 = vmatprep.mubr.bf16.mxu0 0
        %717 = vmatmul.mubr.bf16.gmra.mrb[0].mxu0 %v679
        %v718 = vpop.f32.mrb[0].mxu0
        %v719 = vadd.f32 0.0, %v718
        %v720 = vpop.f32.mrb[0].mxu0
        %v721 = vpop.f32.mrb[0].mxu0
        %v722 = vpop.f32.mrb[0].mxu0
        %723 = vdwg.mxu0
        %v725 = vsel %vm677, %v662, 0
        %v728 = vsel %vm677, %v674, 0
        %730 = vmatprep.subr.bf16.mxu0 0
        %731 = vmatpush1.bf16.xpose.msra.mxu0 %v728
        %732 = vmatprep.subr.bf16.mxu0 0
        %733 = vmatpush1.bf16.xpose.msra.mxu0 0
        %734 = vmatprep.subr.bf16.mxu0 0
        %735 = vmatpush1.bf16.xpose.msra.mxu0 0
        %736 = vmatprep.subr.bf16.mxu0 0
        %737 = vmatpush1.bf16.xpose.msra.mxu0 0
        %738 = vmatprep.subr.bf16.mxu0 0
        %739 = vmatpush1.bf16.xpose.msra.mxu0 0
        %740 = vmatprep.subr.bf16.mxu0 0
        %741 = vmatpush1.bf16.xpose.msra.mxu0 0
        %742 = vmatprep.subr.bf16.mxu0 0
        %743 = vmatpush1.bf16.xpose.msra.mxu0 0
        %744 = vmatprep.subr.bf16.mxu0 0
        %745 = vmatpush1.bf16.xpose.msra.mxu0 0
        %746 = vmatprep.subr.bf16.mxu0 0
        %747 = vmatpush1.bf16.xpose.msra.mxu0 0
        %748 = vmatprep.subr.bf16.mxu0 0
        %749 = vmatpush1.bf16.xpose.msra.mxu0 0
        %750 = vmatprep.subr.bf16.mxu0 0
        %751 = vmatpush1.bf16.xpose.msra.mxu0 0
        %752 = vmatprep.subr.bf16.mxu0 0
        %753 = vmatpush1.bf16.xpose.msra.mxu0 0
        %754 = vmatprep.subr.bf16.mxu0 0
        %755 = vmatpush1.bf16.xpose.msra.mxu0 0
        %756 = vmatprep.subr.bf16.mxu0 0
        %757 = vmatpush1.bf16.xpose.msra.mxu0 0
        %758 = vmatprep.subr.bf16.mxu0 0
        %759 = vmatpush1.bf16.xpose.msra.mxu0 0
        %760 = vmatprep.subr.bf16.mxu0 0
        %761 = vmatpush1.bf16.xpose.msra.mxu0 0
        %762 = vmatprep.mubr.bf16.mxu0 0
        %763 = vmatmul.mubr.bf16.gmra.mrb[0].mxu0 %v725
        %v764 = vpop.f32.mrb[0].mxu0
        %v765 = vadd.f32 0.0, %v764
        %v766 = vpop.f32.mrb[0].mxu0
        %v767 = vpop.f32.mrb[0].mxu0
        %v768 = vpop.f32.mrb[0].mxu0
        %769 = vdwg.mxu0
        %v771 = vsel %vm677, %v663, 0
        %v774 = vsel %vm677, %v675, 0
        %776 = vmatprep.subr.bf16.mxu0 0
        %777 = vmatpush1.bf16.xpose.msra.mxu0 %v774
        %778 = vmatprep.subr.bf16.mxu0 0
        %779 = vmatpush1.bf16.xpose.msra.mxu0 0
        %780 = vmatprep.subr.bf16.mxu0 0
        %781 = vmatpush1.bf16.xpose.msra.mxu0 0
        %782 = vmatprep.subr.bf16.mxu0 0
        %783 = vmatpush1.bf16.xpose.msra.mxu0 0
        %784 = vmatprep.subr.bf16.mxu0 0
        %785 = vmatpush1.bf16.xpose.msra.mxu0 0
        %786 = vmatprep.subr.bf16.mxu0 0
        %787 = vmatpush1.bf16.xpose.msra.mxu0 0
        %788 = vmatprep.subr.bf16.mxu0 0
        %789 = vmatpush1.bf16.xpose.msra.mxu0 0
        %790 = vmatprep.subr.bf16.mxu0 0
        %791 = vmatpush1.bf16.xpose.msra.mxu0 0
        %792 = vmatprep.subr.bf16.mxu0 0
        %793 = vmatpush1.bf16.xpose.msra.mxu0 0
        %794 = vmatprep.subr.bf16.mxu0 0
        %795 = vmatpush1.bf16.xpose.msra.mxu0 0
        %796 = vmatprep.subr.bf16.mxu0 0
        %797 = vmatpush1.bf16.xpose.msra.mxu0 0
        %798 = vmatprep.subr.bf16.mxu0 0
        %799 = vmatpush1.bf16.xpose.msra.mxu0 0
        %800 = vmatprep.subr.bf16.mxu0 0
        %801 = vmatpush1.bf16.xpose.msra.mxu0 0
        %802 = vmatprep.subr.bf16.mxu0 0
        %803 = vmatpush1.bf16.xpose.msra.mxu0 0
        %804 = vmatprep.subr.bf16.mxu0 0
        %805 = vmatpush1.bf16.xpose.msra.mxu0 0
        %806 = vmatprep.subr.bf16.mxu0 0
        %807 = vmatpush1.bf16.xpose.msra.mxu0 0
        %808 = vmatprep.mubr.bf16.mxu0 0
        %809 = vmatmul.mubr.bf16.gmra.mrb[0].mxu0 %v771
        %v810 = vpop.f32.mrb[0].mxu0
        %v811 = vadd.f32 0.0, %v810
        %v812 = vpop.f32.mrb[0].mxu0
        %v813 = vpop.f32.mrb[0].mxu0
        %v814 = vpop.f32.mrb[0].mxu0
        %815 = vdwg.mxu0
        %v817 = vsel %vm677, %v664, 0
        %v820 = vsel %vm677, %v676, 0
        %822 = vmatprep.subr.bf16.mxu0 0
        %823 = vmatpush1.bf16.xpose.msra.mxu0 %v820
        %824 = vmatprep.subr.bf16.mxu0 0
        %825 = vmatpush1.bf16.xpose.msra.mxu0 0
        %826 = vmatprep.subr.bf16.mxu0 0
        %827 = vmatpush1.bf16.xpose.msra.mxu0 0
        %828 = vmatprep.subr.bf16.mxu0 0
        %829 = vmatpush1.bf16.xpose.msra.mxu0 0
        %830 = vmatprep.subr.bf16.mxu0 0
        %831 = vmatpush1.bf16.xpose.msra.mxu0 0
        %832 = vmatprep.subr.bf16.mxu0 0
        %833 = vmatpush1.bf16.xpose.msra.mxu0 0
        %834 = vmatprep.subr.bf16.mxu0 0
        %835 = vmatpush1.bf16.xpose.msra.mxu0 0
        %836 = vmatprep.subr.bf16.mxu0 0
        %837 = vmatpush1.bf16.xpose.msra.mxu0 0
        %838 = vmatprep.subr.bf16.mxu0 0
        %839 = vmatpush1.bf16.xpose.msra.mxu0 0
        %840 = vmatprep.subr.bf16.mxu0 0
        %841 = vmatpush1.bf16.xpose.msra.mxu0 0
        %842 = vmatprep.subr.bf16.mxu0 0
        %843 = vmatpush1.bf16.xpose.msra.mxu0 0
        %844 = vmatprep.subr.bf16.mxu0 0
        %845 = vmatpush1.bf16.xpose.msra.mxu0 0
        %846 = vmatprep.subr.bf16.mxu0 0
        %847 = vmatpush1.bf16.xpose.msra.mxu0 0
        %848 = vmatprep.subr.bf16.mxu0 0
        %849 = vmatpush1.bf16.xpose.msra.mxu0 0
        %850 = vmatprep.subr.bf16.mxu0 0
        %851 = vmatpush1.bf16.xpose.msra.mxu0 0
        %852 = vmatprep.subr.bf16.mxu0 0
        %853 = vmatpush1.bf16.xpose.msra.mxu0 0
        %854 = vmatprep.mubr.bf16.mxu0 0
        %855 = vmatmul.mubr.bf16.gmra.mrb[0].mxu0 %v817
        %v856 = vpop.f32.mrb[0].mxu0
        %v857 = vadd.f32 0.0, %v856
        %v858 = vpop.f32.mrb[0].mxu0
        %v859 = vpop.f32.mrb[0].mxu0
        %v860 = vpop.f32.mrb[0].mxu0
        %861 = vdwg.mxu0
        %v862 = vmul.f32 %v719, 0.35355338
        %v863 = vmul.f32 %v765, 0.35355338
        %v864 = vmul.f32 %v811, 0.35355338
        %v865 = vmul.f32 %v857, 0.35355338
        %v866 = vld [vmem:[%s550] sm:$0xff]
        %v867 = vld [vmem:[%s550 + $0x8] sm:$0xff]
        %v868 = vld [vmem:[%s550 + $0x10] sm:$0xff]
        %v869 = vld [vmem:[%s550 + $0x18] sm:$0xff]
        %v870 = vld [vmem:[%s550 + $0x20] sm:$0xff]
        %v871 = vld [vmem:[%s550 + $0x28] sm:$0xff]
        %v872 = vld [vmem:[%s550 + $0x30] sm:$0xff]
        %v873 = vld [vmem:[%s550 + $0x38] sm:$0xff]
        %v874 = vld [vmem:[%s550 + $0x40] sm:$0xff]
        %v875 = vld [vmem:[%s550 + $0x48] sm:$0xff]
        %v876 = vld [vmem:[%s550 + $0x50] sm:$0xff]
        %v877 = vld [vmem:[%s550 + $0x58] sm:$0xff]
        %v878 = vld [vmem:[%s550 + $0x60] sm:$0xff]
        %v879 = vld [vmem:[%s550 + $0x68] sm:$0xff]
        %v880 = vld [vmem:[%s550 + $0x70] sm:$0xff]
        %v881 = vld [vmem:[%s550 + $0x78] sm:$0xff]
        %v882 = vld [vmem:[%s6] sm:$0xff]
        %v883 = vld [vmem:[%s6 + $0x8] sm:$0xff]
        %v884 = vld [vmem:[%s6 + $0x10] sm:$0xff]
        %v885 = vld [vmem:[%s6 + $0x18] sm:$0xff]
        %v886 = vld [vmem:[%s6 + $0x20] sm:$0xff]
        %v887 = vld [vmem:[%s6 + $0x28] sm:$0xff]
        %v888 = vld [vmem:[%s6 + $0x30] sm:$0xff]
        %v889 = vld [vmem:[%s6 + $0x38] sm:$0xff]
        %v890 = vld [vmem:[%s6 + $0x40] sm:$0xff]
        %v891 = vld [vmem:[%s6 + $0x48] sm:$0xff]
        %v892 = vld [vmem:[%s6 + $0x50] sm:$0xff]
        %v893 = vld [vmem:[%s6 + $0x58] sm:$0xff]
        %v894 = vld [vmem:[%s6 + $0x60] sm:$0xff]
        %v895 = vld [vmem:[%s6 + $0x68] sm:$0xff]
        %v896 = vld [vmem:[%s6 + $0x70] sm:$0xff]
        %v897 = vld [vmem:[%s6 + $0x78] sm:$0xff]
        %v898 = vld [vmem:[%s6 + $0x80] sm:$0xff]
        %v899 = vld [vmem:[%s6 + $0x88] sm:$0xff]
        %v900 = vld [vmem:[%s6 + $0x90] sm:$0xff]
        %v901 = vld [vmem:[%s6 + $0x98] sm:$0xff]
        %v902 = vld [vmem:[%s6 + $0xa0] sm:$0xff]
        %v903 = vld [vmem:[%s6 + $0xa8] sm:$0xff]
        %v904 = vld [vmem:[%s6 + $0xb0] sm:$0xff]
        %v905 = vld [vmem:[%s6 + $0xb8] sm:$0xff]
        %v906 = vld [vmem:[%s6 + $0xc0] sm:$0xff]
        %v907 = vld [vmem:[%s6 + $0xc8] sm:$0xff]
        %v908 = vld [vmem:[%s6 + $0xd0] sm:$0xff]
        %v909 = vld [vmem:[%s6 + $0xd8] sm:$0xff]
        %v910 = vld [vmem:[%s6 + $0xe0] sm:$0xff]
        %v911 = vld [vmem:[%s6 + $0xe8] sm:$0xff]
        %v912 = vld [vmem:[%s6 + $0xf0] sm:$0xff]
        %v913 = vld [vmem:[%s6 + $0xf8] sm:$0xff]
        %vm914 = vcmask 23552
        %v916 = vsel %vm914, %v866, 0
        %v919 = vsel %vm914, %v882, 0
        %v922 = vsel %vm914, %v883, 0
        %924 = vmatprep.subr.mxu0 0.0
        %925 = vmatpush1.xpose.msra.mxu0 %v919
        %926 = vmatprep.subr.mxu0 0.0
        %927 = vmatpush1.xpose.msra.mxu0 %v922
        %928 = vmatprep.subr.mxu0 0.0
        %929 = vmatpush1.xpose.msra.mxu0 0.0
        %930 = vmatprep.subr.mxu0 0.0
        %931 = vmatpush1.xpose.msra.mxu0 0.0
        %932 = vmatprep.subr.mxu0 0.0
        %933 = vmatpush1.xpose.msra.mxu0 0.0
        %934 = vmatprep.subr.mxu0 0.0
        %935 = vmatpush1.xpose.msra.mxu0 0.0
        %936 = vmatprep.subr.mxu0 0.0
        %937 = vmatpush1.xpose.msra.mxu0 0.0
        %938 = vmatprep.subr.mxu0 0.0
        %939 = vmatpush1.xpose.msra.mxu0 0.0
        %940 = vmatprep.subr.mxu0 0.0
        %941 = vmatpush1.xpose.msra.mxu0 0.0
        %942 = vmatprep.subr.mxu0 0.0
        %943 = vmatpush1.xpose.msra.mxu0 0.0
        %944 = vmatprep.subr.mxu0 0.0
        %945 = vmatpush1.xpose.msra.mxu0 0.0
        %946 = vmatprep.subr.mxu0 0.0
        %947 = vmatpush1.xpose.msra.mxu0 0.0
        %948 = vmatprep.subr.mxu0 0.0
        %949 = vmatpush1.xpose.msra.mxu0 0.0
        %950 = vmatprep.subr.mxu0 0.0
        %951 = vmatpush1.xpose.msra.mxu0 0.0
        %952 = vmatprep.subr.mxu0 0.0
        %953 = vmatpush1.xpose.msra.mxu0 0.0
        %954 = vmatprep.subr.mxu0 0.0
        %955 = vmatpush1.xpose.msra.mxu0 0.0
        %956 = vmatprep.subr.mxu0 0.0
        %957 = vmatpush1.xpose.msra.mxu0 0.0
        %958 = vmatprep.subr.mxu0 0.0
        %959 = vmatpush1.xpose.msra.mxu0 0.0
        %960 = vmatprep.subr.mxu0 0.0
        %961 = vmatpush1.xpose.msra.mxu0 0.0
        %962 = vmatprep.subr.mxu0 0.0
        %963 = vmatpush1.xpose.msra.mxu0 0.0
        %964 = vmatprep.subr.mxu0 0.0
        %965 = vmatpush1.xpose.msra.mxu0 0.0
        %966 = vmatprep.subr.mxu0 0.0
        %967 = vmatpush1.xpose.msra.mxu0 0.0
        %968 = vmatprep.subr.mxu0 0.0
        %969 = vmatpush1.xpose.msra.mxu0 0.0
        %970 = vmatprep.subr.mxu0 0.0
        %971 = vmatpush1.xpose.msra.mxu0 0.0
        %972 = vmatprep.subr.mxu0 0.0
        %973 = vmatpush1.xpose.msra.mxu0 0.0
        %974 = vmatprep.subr.mxu0 0.0
        %975 = vmatpush1.xpose.msra.mxu0 0.0
        %976 = vmatprep.subr.mxu0 0.0
        %977 = vmatpush1.xpose.msra.mxu0 0.0
        %978 = vmatprep.subr.mxu0 0.0
        %979 = vmatpush1.xpose.msra.mxu0 0.0
        %980 = vmatprep.subr.mxu0 0.0
        %981 = vmatpush1.xpose.msra.mxu0 0.0
        %982 = vmatprep.subr.mxu0 0.0
        %983 = vmatpush1.xpose.msra.mxu0 0.0
        %984 = vmatprep.subr.mxu0 0.0
        %985 = vmatpush1.xpose.msra.mxu0 0.0
        %986 = vmatprep.subr.mxu0 0.0
        %987 = vmatpush1.xpose.msra.mxu0 0.0
        %988 = vmatprep.mubr.f32.mxu0 0.0
        %989 = vmatmul.mubr.f32.gmra.mrb[0].mxu0 %v916
        %v990 = vpop.f32.mrb[0].mxu0
        %v991 = vadd.f32 0.0, %v990
        %v992 = vpop.f32.mrb[0].mxu0
        %993 = vdwg.mxu0
        %v995 = vsel %vm914, %v867, 0
        %v998 = vsel %vm914, %v884, 0
        %v1001 = vsel %vm914, %v885, 0
        %1003 = vmatprep.subr.mxu0 0.0
        %1004 = vmatpush1.xpose.msra.mxu0 %v998
        %1005 = vmatprep.subr.mxu0 0.0
        %1006 = vmatpush1.xpose.msra.mxu0 %v1001
        %1007 = vmatprep.subr.mxu0 0.0
        %1008 = vmatpush1.xpose.msra.mxu0 0.0
        %1009 = vmatprep.subr.mxu0 0.0
        %1010 = vmatpush1.xpose.msra.mxu0 0.0
        %1011 = vmatprep.subr.mxu0 0.0
        %1012 = vmatpush1.xpose.msra.mxu0 0.0
        %1013 = vmatprep.subr.mxu0 0.0
        %1014 = vmatpush1.xpose.msra.mxu0 0.0
        %1015 = vmatprep.subr.mxu0 0.0
        %1016 = vmatpush1.xpose.msra.mxu0 0.0
        %1017 = vmatprep.subr.mxu0 0.0
        %1018 = vmatpush1.xpose.msra.mxu0 0.0
        %1019 = vmatprep.subr.mxu0 0.0
        %1020 = vmatpush1.xpose.msra.mxu0 0.0
        %1021 = vmatprep.subr.mxu0 0.0
        %1022 = vmatpush1.xpose.msra.mxu0 0.0
        %1023 = vmatprep.subr.mxu0 0.0
        %1024 = vmatpush1.xpose.msra.mxu0 0.0
        %1025 = vmatprep.subr.mxu0 0.0
        %1026 = vmatpush1.xpose.msra.mxu0 0.0
        %1027 = vmatprep.subr.mxu0 0.0
        %1028 = vmatpush1.xpose.msra.mxu0 0.0
        %1029 = vmatprep.subr.mxu0 0.0
        %1030 = vmatpush1.xpose.msra.mxu0 0.0
        %1031 = vmatprep.subr.mxu0 0.0
        %1032 = vmatpush1.xpose.msra.mxu0 0.0
        %1033 = vmatprep.subr.mxu0 0.0
        %1034 = vmatpush1.xpose.msra.mxu0 0.0
        %1035 = vmatprep.subr.mxu0 0.0
        %1036 = vmatpush1.xpose.msra.mxu0 0.0
        %1037 = vmatprep.subr.mxu0 0.0
        %1038 = vmatpush1.xpose.msra.mxu0 0.0
        %1039 = vmatprep.subr.mxu0 0.0
        %1040 = vmatpush1.xpose.msra.mxu0 0.0
        %1041 = vmatprep.subr.mxu0 0.0
        %1042 = vmatpush1.xpose.msra.mxu0 0.0
        %1043 = vmatprep.subr.mxu0 0.0
        %1044 = vmatpush1.xpose.msra.mxu0 0.0
        %1045 = vmatprep.subr.mxu0 0.0
        %1046 = vmatpush1.xpose.msra.mxu0 0.0
        %1047 = vmatprep.subr.mxu0 0.0
        %1048 = vmatpush1.xpose.msra.mxu0 0.0
        %1049 = vmatprep.subr.mxu0 0.0
        %1050 = vmatpush1.xpose.msra.mxu0 0.0
        %1051 = vmatprep.subr.mxu0 0.0
        %1052 = vmatpush1.xpose.msra.mxu0 0.0
        %1053 = vmatprep.subr.mxu0 0.0
        %1054 = vmatpush1.xpose.msra.mxu0 0.0
        %1055 = vmatprep.subr.mxu0 0.0
        %1056 = vmatpush1.xpose.msra.mxu0 0.0
        %1057 = vmatprep.subr.mxu0 0.0
        %1058 = vmatpush1.xpose.msra.mxu0 0.0
        %1059 = vmatprep.subr.mxu0 0.0
        %1060 = vmatpush1.xpose.msra.mxu0 0.0
        %1061 = vmatprep.subr.mxu0 0.0
        %1062 = vmatpush1.xpose.msra.mxu0 0.0
        %1063 = vmatprep.subr.mxu0 0.0
        %1064 = vmatpush1.xpose.msra.mxu0 0.0
        %1065 = vmatprep.subr.mxu0 0.0
        %1066 = vmatpush1.xpose.msra.mxu0 0.0
        %1067 = vmatprep.mubr.f32.mxu0 0.0
        %1068 = vmatmul.mubr.f32.gmra.mrb[0].mxu0 %v995
        %v1069 = vpop.f32.mrb[0].mxu0
        %v1070 = vadd.f32 0.0, %v1069
        %v1071 = vpop.f32.mrb[0].mxu0
        %1072 = vdwg.mxu0
        %v1074 = vsel %vm914, %v868, 0
        %v1077 = vsel %vm914, %v886, 0
        %v1080 = vsel %vm914, %v887, 0
        %1082 = vmatprep.subr.mxu0 0.0
        %1083 = vmatpush1.xpose.msra.mxu0 %v1077
        %1084 = vmatprep.subr.mxu0 0.0
        %1085 = vmatpush1.xpose.msra.mxu0 %v1080
        %1086 = vmatprep.subr.mxu0 0.0
        %1087 = vmatpush1.xpose.msra.mxu0 0.0
        %1088 = vmatprep.subr.mxu0 0.0
        %1089 = vmatpush1.xpose.msra.mxu0 0.0
        %1090 = vmatprep.subr.mxu0 0.0
        %1091 = vmatpush1.xpose.msra.mxu0 0.0
        %1092 = vmatprep.subr.mxu0 0.0
        %1093 = vmatpush1.xpose.msra.mxu0 0.0
        %1094 = vmatprep.subr.mxu0 0.0
        %1095 = vmatpush1.xpose.msra.mxu0 0.0
        %1096 = vmatprep.subr.mxu0 0.0
        %1097 = vmatpush1.xpose.msra.mxu0 0.0
        %1098 = vmatprep.subr.mxu0 0.0
        %1099 = vmatpush1.xpose.msra.mxu0 0.0
        %1100 = vmatprep.subr.mxu0 0.0
        %1101 = vmatpush1.xpose.msra.mxu0 0.0
        %1102 = vmatprep.subr.mxu0 0.0
        %1103 = vmatpush1.xpose.msra.mxu0 0.0
        %1104 = vmatprep.subr.mxu0 0.0
        %1105 = vmatpush1.xpose.msra.mxu0 0.0
        %1106 = vmatprep.subr.mxu0 0.0
        %1107 = vmatpush1.xpose.msra.mxu0 0.0
        %1108 = vmatprep.subr.mxu0 0.0
        %1109 = vmatpush1.xpose.msra.mxu0 0.0
        %1110 = vmatprep.subr.mxu0 0.0
        %1111 = vmatpush1.xpose.msra.mxu0 0.0
        %1112 = vmatprep.subr.mxu0 0.0
        %1113 = vmatpush1.xpose.msra.mxu0 0.0
        %1114 = vmatprep.subr.mxu0 0.0
        %1115 = vmatpush1.xpose.msra.mxu0 0.0
        %1116 = vmatprep.subr.mxu0 0.0
        %1117 = vmatpush1.xpose.msra.mxu0 0.0
        %1118 = vmatprep.subr.mxu0 0.0
        %1119 = vmatpush1.xpose.msra.mxu0 0.0
        %1120 = vmatprep.subr.mxu0 0.0
        %1121 = vmatpush1.xpose.msra.mxu0 0.0
        %1122 = vmatprep.subr.mxu0 0.0
        %1123 = vmatpush1.xpose.msra.mxu0 0.0
        %1124 = vmatprep.subr.mxu0 0.0
        %1125 = vmatpush1.xpose.msra.mxu0 0.0
        %1126 = vmatprep.subr.mxu0 0.0
        %1127 = vmatpush1.xpose.msra.mxu0 0.0
        %1128 = vmatprep.subr.mxu0 0.0
        %1129 = vmatpush1.xpose.msra.mxu0 0.0
        %1130 = vmatprep.subr.mxu0 0.0
        %1131 = vmatpush1.xpose.msra.mxu0 0.0
        %1132 = vmatprep.subr.mxu0 0.0
        %1133 = vmatpush1.xpose.msra.mxu0 0.0
        %1134 = vmatprep.subr.mxu0 0.0
        %1135 = vmatpush1.xpose.msra.mxu0 0.0
        %1136 = vmatprep.subr.mxu0 0.0
        %1137 = vmatpush1.xpose.msra.mxu0 0.0
        %1138 = vmatprep.subr.mxu0 0.0
        %1139 = vmatpush1.xpose.msra.mxu0 0.0
        %1140 = vmatprep.subr.mxu0 0.0
        %1141 = vmatpush1.xpose.msra.mxu0 0.0
        %1142 = vmatprep.subr.mxu0 0.0
        %1143 = vmatpush1.xpose.msra.mxu0 0.0
        %1144 = vmatprep.subr.mxu0 0.0
        %1145 = vmatpush1.xpose.msra.mxu0 0.0
        %1146 = vmatprep.mubr.f32.mxu0 0.0
        %1147 = vmatmul.mubr.f32.gmra.mrb[0].mxu0 %v1074
        %v1148 = vpop.f32.mrb[0].mxu0
        %v1149 = vadd.f32 0.0, %v1148
        %v1150 = vpop.f32.mrb[0].mxu0
        %1151 = vdwg.mxu0
        %v1153 = vsel %vm914, %v869, 0
        %v1156 = vsel %vm914, %v888, 0
        %v1159 = vsel %vm914, %v889, 0
        %1161 = vmatprep.subr.mxu0 0.0
        %1162 = vmatpush1.xpose.msra.mxu0 %v1156
        %1163 = vmatprep.subr.mxu0 0.0
        %1164 = vmatpush1.xpose.msra.mxu0 %v1159
        %1165 = vmatprep.subr.mxu0 0.0
        %1166 = vmatpush1.xpose.msra.mxu0 0.0
        %1167 = vmatprep.subr.mxu0 0.0
        %1168 = vmatpush1.xpose.msra.mxu0 0.0
        %1169 = vmatprep.subr.mxu0 0.0
        %1170 = vmatpush1.xpose.msra.mxu0 0.0
        %1171 = vmatprep.subr.mxu0 0.0
        %1172 = vmatpush1.xpose.msra.mxu0 0.0
        %1173 = vmatprep.subr.mxu0 0.0
        %1174 = vmatpush1.xpose.msra.mxu0 0.0
        %1175 = vmatprep.subr.mxu0 0.0
        %1176 = vmatpush1.xpose.msra.mxu0 0.0
        %1177 = vmatprep.subr.mxu0 0.0
        %1178 = vmatpush1.xpose.msra.mxu0 0.0
        %1179 = vmatprep.subr.mxu0 0.0
        %1180 = vmatpush1.xpose.msra.mxu0 0.0
        %1181 = vmatprep.subr.mxu0 0.0
        %1182 = vmatpush1.xpose.msra.mxu0 0.0
        %1183 = vmatprep.subr.mxu0 0.0
        %1184 = vmatpush1.xpose.msra.mxu0 0.0
        %1185 = vmatprep.subr.mxu0 0.0
        %1186 = vmatpush1.xpose.msra.mxu0 0.0
        %1187 = vmatprep.subr.mxu0 0.0
        %1188 = vmatpush1.xpose.msra.mxu0 0.0
        %1189 = vmatprep.subr.mxu0 0.0
        %1190 = vmatpush1.xpose.msra.mxu0 0.0
        %1191 = vmatprep.subr.mxu0 0.0
        %1192 = vmatpush1.xpose.msra.mxu0 0.0
        %1193 = vmatprep.subr.mxu0 0.0
        %1194 = vmatpush1.xpose.msra.mxu0 0.0
        %1195 = vmatprep.subr.mxu0 0.0
        %1196 = vmatpush1.xpose.msra.mxu0 0.0
        %1197 = vmatprep.subr.mxu0 0.0
        %1198 = vmatpush1.xpose.msra.mxu0 0.0
        %1199 = vmatprep.subr.mxu0 0.0
        %1200 = vmatpush1.xpose.msra.mxu0 0.0
        %1201 = vmatprep.subr.mxu0 0.0
        %1202 = vmatpush1.xpose.msra.mxu0 0.0
        %1203 = vmatprep.subr.mxu0 0.0
        %1204 = vmatpush1.xpose.msra.mxu0 0.0
        %1205 = vmatprep.subr.mxu0 0.0
        %1206 = vmatpush1.xpose.msra.mxu0 0.0
        %1207 = vmatprep.subr.mxu0 0.0
        %1208 = vmatpush1.xpose.msra.mxu0 0.0
        %1209 = vmatprep.subr.mxu0 0.0
        %1210 = vmatpush1.xpose.msra.mxu0 0.0
        %1211 = vmatprep.subr.mxu0 0.0
        %1212 = vmatpush1.xpose.msra.mxu0 0.0
        %1213 = vmatprep.subr.mxu0 0.0
        %1214 = vmatpush1.xpose.msra.mxu0 0.0
        %1215 = vmatprep.subr.mxu0 0.0
        %1216 = vmatpush1.xpose.msra.mxu0 0.0
        %1217 = vmatprep.subr.mxu0 0.0
        %1218 = vmatpush1.xpose.msra.mxu0 0.0
        %1219 = vmatprep.subr.mxu0 0.0
        %1220 = vmatpush1.xpose.msra.mxu0 0.0
        %1221 = vmatprep.subr.mxu0 0.0
        %1222 = vmatpush1.xpose.msra.mxu0 0.0
        %1223 = vmatprep.subr.mxu0 0.0
        %1224 = vmatpush1.xpose.msra.mxu0 0.0
        %1225 = vmatprep.mubr.f32.mxu0 0.0
        %1226 = vmatmul.mubr.f32.gmra.mrb[0].mxu0 %v1153
        %v1227 = vpop.f32.mrb[0].mxu0
        %v1228 = vadd.f32 0.0, %v1227
        %v1229 = vpop.f32.mrb[0].mxu0
        %1230 = vdwg.mxu0
        %v1232 = vsel %vm914, %v870, 0
        %v1235 = vsel %vm914, %v890, 0
        %v1238 = vsel %vm914, %v891, 0
        %1240 = vmatprep.subr.mxu0 0.0
        %1241 = vmatpush1.xpose.msra.mxu0 %v1235
        %1242 = vmatprep.subr.mxu0 0.0
        %1243 = vmatpush1.xpose.msra.mxu0 %v1238
        %1244 = vmatprep.subr.mxu0 0.0
        %1245 = vmatpush1.xpose.msra.mxu0 0.0
        %1246 = vmatprep.subr.mxu0 0.0
        %1247 = vmatpush1.xpose.msra.mxu0 0.0
        %1248 = vmatprep.subr.mxu0 0.0
        %1249 = vmatpush1.xpose.msra.mxu0 0.0
        %1250 = vmatprep.subr.mxu0 0.0
        %1251 = vmatpush1.xpose.msra.mxu0 0.0
        %1252 = vmatprep.subr.mxu0 0.0
        %1253 = vmatpush1.xpose.msra.mxu0 0.0
        %1254 = vmatprep.subr.mxu0 0.0
        %1255 = vmatpush1.xpose.msra.mxu0 0.0
        %1256 = vmatprep.subr.mxu0 0.0
        %1257 = vmatpush1.xpose.msra.mxu0 0.0
        %1258 = vmatprep.subr.mxu0 0.0
        %1259 = vmatpush1.xpose.msra.mxu0 0.0
        %1260 = vmatprep.subr.mxu0 0.0
        %1261 = vmatpush1.xpose.msra.mxu0 0.0
        %1262 = vmatprep.subr.mxu0 0.0
        %1263 = vmatpush1.xpose.msra.mxu0 0.0
        %1264 = vmatprep.subr.mxu0 0.0
        %1265 = vmatpush1.xpose.msra.mxu0 0.0
        %1266 = vmatprep.subr.mxu0 0.0
        %1267 = vmatpush1.xpose.msra.mxu0 0.0
        %1268 = vmatprep.subr.mxu0 0.0
        %1269 = vmatpush1.xpose.msra.mxu0 0.0
        %1270 = vmatprep.subr.mxu0 0.0
        %1271 = vmatpush1.xpose.msra.mxu0 0.0
        %1272 = vmatprep.subr.mxu0 0.0
        %1273 = vmatpush1.xpose.msra.mxu0 0.0
        %1274 = vmatprep.subr.mxu0 0.0
        %1275 = vmatpush1.xpose.msra.mxu0 0.0
        %1276 = vmatprep.subr.mxu0 0.0
        %1277 = vmatpush1.xpose.msra.mxu0 0.0
        %1278 = vmatprep.subr.mxu0 0.0
        %1279 = vmatpush1.xpose.msra.mxu0 0.0
        %1280 = vmatprep.subr.mxu0 0.0
        %1281 = vmatpush1.xpose.msra.mxu0 0.0
        %1282 = vmatprep.subr.mxu0 0.0
        %1283 = vmatpush1.xpose.msra.mxu0 0.0
        %1284 = vmatprep.subr.mxu0 0.0
        %1285 = vmatpush1.xpose.msra.mxu0 0.0
        %1286 = vmatprep.subr.mxu0 0.0
        %1287 = vmatpush1.xpose.msra.mxu0 0.0
        %1288 = vmatprep.subr.mxu0 0.0
        %1289 = vmatpush1.xpose.msra.mxu0 0.0
        %1290 = vmatprep.subr.mxu0 0.0
        %1291 = vmatpush1.xpose.msra.mxu0 0.0
        %1292 = vmatprep.subr.mxu0 0.0
        %1293 = vmatpush1.xpose.msra.mxu0 0.0
        %1294 = vmatprep.subr.mxu0 0.0
        %1295 = vmatpush1.xpose.msra.mxu0 0.0
        %1296 = vmatprep.subr.mxu0 0.0
        %1297 = vmatpush1.xpose.msra.mxu0 0.0
        %1298 = vmatprep.subr.mxu0 0.0
        %1299 = vmatpush1.xpose.msra.mxu0 0.0
        %1300 = vmatprep.subr.mxu0 0.0
        %1301 = vmatpush1.xpose.msra.mxu0 0.0
        %1302 = vmatprep.subr.mxu0 0.0
        %1303 = vmatpush1.xpose.msra.mxu0 0.0
        %1304 = vmatprep.mubr.f32.mxu0 0.0
        %1305 = vmatmul.mubr.f32.gmra.mrb[0].mxu0 %v1232
        %v1306 = vpop.f32.mrb[0].mxu0
        %v1307 = vadd.f32 0.0, %v1306
        %v1308 = vpop.f32.mrb[0].mxu0
        %1309 = vdwg.mxu0
        %v1311 = vsel %vm914, %v871, 0
        %v1314 = vsel %vm914, %v892, 0
        %v1317 = vsel %vm914, %v893, 0
        %1319 = vmatprep.subr.mxu0 0.0
        %1320 = vmatpush1.xpose.msra.mxu0 %v1314
        %1321 = vmatprep.subr.mxu0 0.0
        %1322 = vmatpush1.xpose.msra.mxu0 %v1317
        %1323 = vmatprep.subr.mxu0 0.0
        %1324 = vmatpush1.xpose.msra.mxu0 0.0
        %1325 = vmatprep.subr.mxu0 0.0
        %1326 = vmatpush1.xpose.msra.mxu0 0.0
        %1327 = vmatprep.subr.mxu0 0.0
        %1328 = vmatpush1.xpose.msra.mxu0 0.0
        %1329 = vmatprep.subr.mxu0 0.0
        %1330 = vmatpush1.xpose.msra.mxu0 0.0
        %1331 = vmatprep.subr.mxu0 0.0
        %1332 = vmatpush1.xpose.msra.mxu0 0.0
        %1333 = vmatprep.subr.mxu0 0.0
        %1334 = vmatpush1.xpose.msra.mxu0 0.0
        %1335 = vmatprep.subr.mxu0 0.0
        %1336 = vmatpush1.xpose.msra.mxu0 0.0
        %1337 = vmatprep.subr.mxu0 0.0
        %1338 = vmatpush1.xpose.msra.mxu0 0.0
        %1339 = vmatprep.subr.mxu0 0.0
        %1340 = vmatpush1.xpose.msra.mxu0 0.0
        %1341 = vmatprep.subr.mxu0 0.0
        %1342 = vmatpush1.xpose.msra.mxu0 0.0
        %1343 = vmatprep.subr.mxu0 0.0
        %1344 = vmatpush1.xpose.msra.mxu0 0.0
        %1345 = vmatprep.subr.mxu0 0.0
        %1346 = vmatpush1.xpose.msra.mxu0 0.0
        %1347 = vmatprep.subr.mxu0 0.0
        %1348 = vmatpush1.xpose.msra.mxu0 0.0
        %1349 = vmatprep.subr.mxu0 0.0
        %1350 = vmatpush1.xpose.msra.mxu0 0.0
        %1351 = vmatprep.subr.mxu0 0.0
        %1352 = vmatpush1.xpose.msra.mxu0 0.0
        %1353 = vmatprep.subr.mxu0 0.0
        %1354 = vmatpush1.xpose.msra.mxu0 0.0
        %1355 = vmatprep.subr.mxu0 0.0
        %1356 = vmatpush1.xpose.msra.mxu0 0.0
        %1357 = vmatprep.subr.mxu0 0.0
        %1358 = vmatpush1.xpose.msra.mxu0 0.0
        %1359 = vmatprep.subr.mxu0 0.0
        %1360 = vmatpush1.xpose.msra.mxu0 0.0
        %1361 = vmatprep.subr.mxu0 0.0
        %1362 = vmatpush1.xpose.msra.mxu0 0.0
        %1363 = vmatprep.subr.mxu0 0.0
        %1364 = vmatpush1.xpose.msra.mxu0 0.0
        %1365 = vmatprep.subr.mxu0 0.0
        %1366 = vmatpush1.xpose.msra.mxu0 0.0
        %1367 = vmatprep.subr.mxu0 0.0
        %1368 = vmatpush1.xpose.msra.mxu0 0.0
        %1369 = vmatprep.subr.mxu0 0.0
        %1370 = vmatpush1.xpose.msra.mxu0 0.0
        %1371 = vmatprep.subr.mxu0 0.0
        %1372 = vmatpush1.xpose.msra.mxu0 0.0
        %1373 = vmatprep.subr.mxu0 0.0
        %1374 = vmatpush1.xpose.msra.mxu0 0.0
        %1375 = vmatprep.subr.mxu0 0.0
        %1376 = vmatpush1.xpose.msra.mxu0 0.0
        %1377 = vmatprep.subr.mxu0 0.0
        %1378 = vmatpush1.xpose.msra.mxu0 0.0
        %1379 = vmatprep.subr.mxu0 0.0
        %1380 = vmatpush1.xpose.msra.mxu0 0.0
        %1381 = vmatprep.subr.mxu0 0.0
        %1382 = vmatpush1.xpose.msra.mxu0 0.0
        %1383 = vmatprep.mubr.f32.mxu0 0.0
        %1384 = vmatmul.mubr.f32.gmra.mrb[0].mxu0 %v1311
        %v1385 = vpop.f32.mrb[0].mxu0
        %v1386 = vadd.f32 0.0, %v1385
        %v1387 = vpop.f32.mrb[0].mxu0
        %1388 = vdwg.mxu0
        %v1390 = vsel %vm914, %v872, 0
        %v1393 = vsel %vm914, %v894, 0
        %v1396 = vsel %vm914, %v895, 0
        %1398 = vmatprep.subr.mxu0 0.0
        %1399 = vmatpush1.xpose.msra.mxu0 %v1393
        %1400 = vmatprep.subr.mxu0 0.0
        %1401 = vmatpush1.xpose.msra.mxu0 %v1396
        %1402 = vmatprep.subr.mxu0 0.0
        %1403 = vmatpush1.xpose.msra.mxu0 0.0
        %1404 = vmatprep.subr.mxu0 0.0
        %1405 = vmatpush1.xpose.msra.mxu0 0.0
        %1406 = vmatprep.subr.mxu0 0.0
        %1407 = vmatpush1.xpose.msra.mxu0 0.0
        %1408 = vmatprep.subr.mxu0 0.0
        %1409 = vmatpush1.xpose.msra.mxu0 0.0
        %1410 = vmatprep.subr.mxu0 0.0
        %1411 = vmatpush1.xpose.msra.mxu0 0.0
        %1412 = vmatprep.subr.mxu0 0.0
        %1413 = vmatpush1.xpose.msra.mxu0 0.0
        %1414 = vmatprep.subr.mxu0 0.0
        %1415 = vmatpush1.xpose.msra.mxu0 0.0
        %1416 = vmatprep.subr.mxu0 0.0
        %1417 = vmatpush1.xpose.msra.mxu0 0.0
        %1418 = vmatprep.subr.mxu0 0.0
        %1419 = vmatpush1.xpose.msra.mxu0 0.0
        %1420 = vmatprep.subr.mxu0 0.0
        %1421 = vmatpush1.xpose.msra.mxu0 0.0
        %1422 = vmatprep.subr.mxu0 0.0
        %1423 = vmatpush1.xpose.msra.mxu0 0.0
        %1424 = vmatprep.subr.mxu0 0.0
        %1425 = vmatpush1.xpose.msra.mxu0 0.0
        %1426 = vmatprep.subr.mxu0 0.0
        %1427 = vmatpush1.xpose.msra.mxu0 0.0
        %1428 = vmatprep.subr.mxu0 0.0
        %1429 = vmatpush1.xpose.msra.mxu0 0.0
        %1430 = vmatprep.subr.mxu0 0.0
        %1431 = vmatpush1.xpose.msra.mxu0 0.0
        %1432 = vmatprep.subr.mxu0 0.0
        %1433 = vmatpush1.xpose.msra.mxu0 0.0
        %1434 = vmatprep.subr.mxu0 0.0
        %1435 = vmatpush1.xpose.msra.mxu0 0.0
        %1436 = vmatprep.subr.mxu0 0.0
        %1437 = vmatpush1.xpose.msra.mxu0 0.0
        %1438 = vmatprep.subr.mxu0 0.0
        %1439 = vmatpush1.xpose.msra.mxu0 0.0
        %1440 = vmatprep.subr.mxu0 0.0
        %1441 = vmatpush1.xpose.msra.mxu0 0.0
        %1442 = vmatprep.subr.mxu0 0.0
        %1443 = vmatpush1.xpose.msra.mxu0 0.0
        %1444 = vmatprep.subr.mxu0 0.0
        %1445 = vmatpush1.xpose.msra.mxu0 0.0
        %1446 = vmatprep.subr.mxu0 0.0
        %1447 = vmatpush1.xpose.msra.mxu0 0.0
        %1448 = vmatprep.subr.mxu0 0.0
        %1449 = vmatpush1.xpose.msra.mxu0 0.0
        %1450 = vmatprep.subr.mxu0 0.0
        %1451 = vmatpush1.xpose.msra.mxu0 0.0
        %1452 = vmatprep.subr.mxu0 0.0
        %1453 = vmatpush1.xpose.msra.mxu0 0.0
        %1454 = vmatprep.subr.mxu0 0.0
        %1455 = vmatpush1.xpose.msra.mxu0 0.0
        %1456 = vmatprep.subr.mxu0 0.0
        %1457 = vmatpush1.xpose.msra.mxu0 0.0
        %1458 = vmatprep.subr.mxu0 0.0
        %1459 = vmatpush1.xpose.msra.mxu0 0.0
        %1460 = vmatprep.subr.mxu0 0.0
        %1461 = vmatpush1.xpose.msra.mxu0 0.0
        %1462 = vmatprep.mubr.f32.mxu0 0.0
        %1463 = vmatmul.mubr.f32.gmra.mrb[0].mxu0 %v1390
        %v1464 = vpop.f32.mrb[0].mxu0
        %v1465 = vadd.f32 0.0, %v1464
        %v1466 = vpop.f32.mrb[0].mxu0
        %1467 = vdwg.mxu0
        %v1469 = vsel %vm914, %v873, 0
        %v1472 = vsel %vm914, %v896, 0
        %v1475 = vsel %vm914, %v897, 0
        %1477 = vmatprep.subr.mxu0 0.0
        %1478 = vmatpush1.xpose.msra.mxu0 %v1472
        %1479 = vmatprep.subr.mxu0 0.0
        %1480 = vmatpush1.xpose.msra.mxu0 %v1475
        %1481 = vmatprep.subr.mxu0 0.0
        %1482 = vmatpush1.xpose.msra.mxu0 0.0
        %1483 = vmatprep.subr.mxu0 0.0
        %1484 = vmatpush1.xpose.msra.mxu0 0.0
        %1485 = vmatprep.subr.mxu0 0.0
        %1486 = vmatpush1.xpose.msra.mxu0 0.0
        %1487 = vmatprep.subr.mxu0 0.0
        %1488 = vmatpush1.xpose.msra.mxu0 0.0
        %1489 = vmatprep.subr.mxu0 0.0
        %1490 = vmatpush1.xpose.msra.mxu0 0.0
        %1491 = vmatprep.subr.mxu0 0.0
        %1492 = vmatpush1.xpose.msra.mxu0 0.0
        %1493 = vmatprep.subr.mxu0 0.0
        %1494 = vmatpush1.xpose.msra.mxu0 0.0
        %1495 = vmatprep.subr.mxu0 0.0
        %1496 = vmatpush1.xpose.msra.mxu0 0.0
        %1497 = vmatprep.subr.mxu0 0.0
        %1498 = vmatpush1.xpose.msra.mxu0 0.0
        %1499 = vmatprep.subr.mxu0 0.0
        %1500 = vmatpush1.xpose.msra.mxu0 0.0
        %1501 = vmatprep.subr.mxu0 0.0
        %1502 = vmatpush1.xpose.msra.mxu0 0.0
        %1503 = vmatprep.subr.mxu0 0.0
        %1504 = vmatpush1.xpose.msra.mxu0 0.0
        %1505 = vmatprep.subr.mxu0 0.0
        %1506 = vmatpush1.xpose.msra.mxu0 0.0
        %1507 = vmatprep.subr.mxu0 0.0
        %1508 = vmatpush1.xpose.msra.mxu0 0.0
        %1509 = vmatprep.subr.mxu0 0.0
        %1510 = vmatpush1.xpose.msra.mxu0 0.0
        %1511 = vmatprep.subr.mxu0 0.0
        %1512 = vmatpush1.xpose.msra.mxu0 0.0
        %1513 = vmatprep.subr.mxu0 0.0
        %1514 = vmatpush1.xpose.msra.mxu0 0.0
        %1515 = vmatprep.subr.mxu0 0.0
        %1516 = vmatpush1.xpose.msra.mxu0 0.0
        %1517 = vmatprep.subr.mxu0 0.0
        %1518 = vmatpush1.xpose.msra.mxu0 0.0
        %1519 = vmatprep.subr.mxu0 0.0
        %1520 = vmatpush1.xpose.msra.mxu0 0.0
        %1521 = vmatprep.subr.mxu0 0.0
        %1522 = vmatpush1.xpose.msra.mxu0 0.0
        %1523 = vmatprep.subr.mxu0 0.0
        %1524 = vmatpush1.xpose.msra.mxu0 0.0
        %1525 = vmatprep.subr.mxu0 0.0
        %1526 = vmatpush1.xpose.msra.mxu0 0.0
        %1527 = vmatprep.subr.mxu0 0.0
        %1528 = vmatpush1.xpose.msra.mxu0 0.0
        %1529 = vmatprep.subr.mxu0 0.0
        %1530 = vmatpush1.xpose.msra.mxu0 0.0
        %1531 = vmatprep.subr.mxu0 0.0
        %1532 = vmatpush1.xpose.msra.mxu0 0.0
        %1533 = vmatprep.subr.mxu0 0.0
        %1534 = vmatpush1.xpose.msra.mxu0 0.0
        %1535 = vmatprep.subr.mxu0 0.0
        %1536 = vmatpush1.xpose.msra.mxu0 0.0
        %1537 = vmatprep.subr.mxu0 0.0
        %1538 = vmatpush1.xpose.msra.mxu0 0.0
        %1539 = vmatprep.subr.mxu0 0.0
        %1540 = vmatpush1.xpose.msra.mxu0 0.0
        %1541 = vmatprep.mubr.f32.mxu0 0.0
        %1542 = vmatmul.mubr.f32.gmra.mrb[0].mxu0 %v1469
        %v1543 = vpop.f32.mrb[0].mxu0
        %v1544 = vadd.f32 0.0, %v1543
        %v1545 = vpop.f32.mrb[0].mxu0
        %1546 = vdwg.mxu0
        %v1548 = vsel %vm914, %v874, 0
        %v1551 = vsel %vm914, %v898, 0
        %v1554 = vsel %vm914, %v899, 0
        %1556 = vmatprep.subr.mxu0 0.0
        %1557 = vmatpush1.xpose.msra.mxu0 %v1551
        %1558 = vmatprep.subr.mxu0 0.0
        %1559 = vmatpush1.xpose.msra.mxu0 %v1554
        %1560 = vmatprep.subr.mxu0 0.0
        %1561 = vmatpush1.xpose.msra.mxu0 0.0
        %1562 = vmatprep.subr.mxu0 0.0
        %1563 = vmatpush1.xpose.msra.mxu0 0.0
        %1564 = vmatprep.subr.mxu0 0.0
        %1565 = vmatpush1.xpose.msra.mxu0 0.0
        %1566 = vmatprep.subr.mxu0 0.0
        %1567 = vmatpush1.xpose.msra.mxu0 0.0
        %1568 = vmatprep.subr.mxu0 0.0
        %1569 = vmatpush1.xpose.msra.mxu0 0.0
        %1570 = vmatprep.subr.mxu0 0.0
        %1571 = vmatpush1.xpose.msra.mxu0 0.0
        %1572 = vmatprep.subr.mxu0 0.0
        %1573 = vmatpush1.xpose.msra.mxu0 0.0
        %1574 = vmatprep.subr.mxu0 0.0
        %1575 = vmatpush1.xpose.msra.mxu0 0.0
        %1576 = vmatprep.subr.mxu0 0.0
        %1577 = vmatpush1.xpose.msra.mxu0 0.0
        %1578 = vmatprep.subr.mxu0 0.0
        %1579 = vmatpush1.xpose.msra.mxu0 0.0
        %1580 = vmatprep.subr.mxu0 0.0
        %1581 = vmatpush1.xpose.msra.mxu0 0.0
        %1582 = vmatprep.subr.mxu0 0.0
        %1583 = vmatpush1.xpose.msra.mxu0 0.0
        %1584 = vmatprep.subr.mxu0 0.0
        %1585 = vmatpush1.xpose.msra.mxu0 0.0
        %1586 = vmatprep.subr.mxu0 0.0
        %1587 = vmatpush1.xpose.msra.mxu0 0.0
        %1588 = vmatprep.subr.mxu0 0.0
        %1589 = vmatpush1.xpose.msra.mxu0 0.0
        %1590 = vmatprep.subr.mxu0 0.0
        %1591 = vmatpush1.xpose.msra.mxu0 0.0
        %1592 = vmatprep.subr.mxu0 0.0
        %1593 = vmatpush1.xpose.msra.mxu0 0.0
        %1594 = vmatprep.subr.mxu0 0.0
        %1595 = vmatpush1.xpose.msra.mxu0 0.0
        %1596 = vmatprep.subr.mxu0 0.0
        %1597 = vmatpush1.xpose.msra.mxu0 0.0
        %1598 = vmatprep.subr.mxu0 0.0
        %1599 = vmatpush1.xpose.msra.mxu0 0.0
        %1600 = vmatprep.subr.mxu0 0.0
        %1601 = vmatpush1.xpose.msra.mxu0 0.0
        %1602 = vmatprep.subr.mxu0 0.0
        %1603 = vmatpush1.xpose.msra.mxu0 0.0
        %1604 = vmatprep.subr.mxu0 0.0
        %1605 = vmatpush1.xpose.msra.mxu0 0.0
        %1606 = vmatprep.subr.mxu0 0.0
        %1607 = vmatpush1.xpose.msra.mxu0 0.0
        %1608 = vmatprep.subr.mxu0 0.0
        %1609 = vmatpush1.xpose.msra.mxu0 0.0
        %1610 = vmatprep.subr.mxu0 0.0
        %1611 = vmatpush1.xpose.msra.mxu0 0.0
        %1612 = vmatprep.subr.mxu0 0.0
        %1613 = vmatpush1.xpose.msra.mxu0 0.0
        %1614 = vmatprep.subr.mxu0 0.0
        %1615 = vmatpush1.xpose.msra.mxu0 0.0
        %1616 = vmatprep.subr.mxu0 0.0
        %1617 = vmatpush1.xpose.msra.mxu0 0.0
        %1618 = vmatprep.subr.mxu0 0.0
        %1619 = vmatpush1.xpose.msra.mxu0 0.0
        %1620 = vmatprep.mubr.f32.mxu0 0.0
        %1621 = vmatmul.mubr.f32.gmra.mrb[0].mxu0 %v1548
        %v1622 = vpop.f32.mrb[0].mxu0
        %v1623 = vadd.f32 0.0, %v1622
        %v1624 = vpop.f32.mrb[0].mxu0
        %1625 = vdwg.mxu0
        %v1627 = vsel %vm914, %v875, 0
        %v1630 = vsel %vm914, %v900, 0
        %v1633 = vsel %vm914, %v901, 0
        %1635 = vmatprep.subr.mxu0 0.0
        %1636 = vmatpush1.xpose.msra.mxu0 %v1630
        %1637 = vmatprep.subr.mxu0 0.0
        %1638 = vmatpush1.xpose.msra.mxu0 %v1633
        %1639 = vmatprep.subr.mxu0 0.0
        %1640 = vmatpush1.xpose.msra.mxu0 0.0
        %1641 = vmatprep.subr.mxu0 0.0
        %1642 = vmatpush1.xpose.msra.mxu0 0.0
        %1643 = vmatprep.subr.mxu0 0.0
        %1644 = vmatpush1.xpose.msra.mxu0 0.0
        %1645 = vmatprep.subr.mxu0 0.0
        %1646 = vmatpush1.xpose.msra.mxu0 0.0
        %1647 = vmatprep.subr.mxu0 0.0
        %1648 = vmatpush1.xpose.msra.mxu0 0.0
        %1649 = vmatprep.subr.mxu0 0.0
        %1650 = vmatpush1.xpose.msra.mxu0 0.0
        %1651 = vmatprep.subr.mxu0 0.0
        %1652 = vmatpush1.xpose.msra.mxu0 0.0
        %1653 = vmatprep.subr.mxu0 0.0
        %1654 = vmatpush1.xpose.msra.mxu0 0.0
        %1655 = vmatprep.subr.mxu0 0.0
        %1656 = vmatpush1.xpose.msra.mxu0 0.0
        %1657 = vmatprep.subr.mxu0 0.0
        %1658 = vmatpush1.xpose.msra.mxu0 0.0
        %1659 = vmatprep.subr.mxu0 0.0
        %1660 = vmatpush1.xpose.msra.mxu0 0.0
        %1661 = vmatprep.subr.mxu0 0.0
        %1662 = vmatpush1.xpose.msra.mxu0 0.0
        %1663 = vmatprep.subr.mxu0 0.0
        %1664 = vmatpush1.xpose.msra.mxu0 0.0
        %1665 = vmatprep.subr.mxu0 0.0
        %1666 = vmatpush1.xpose.msra.mxu0 0.0
        %1667 = vmatprep.subr.mxu0 0.0
        %1668 = vmatpush1.xpose.msra.mxu0 0.0
        %1669 = vmatprep.subr.mxu0 0.0
        %1670 = vmatpush1.xpose.msra.mxu0 0.0
        %1671 = vmatprep.subr.mxu0 0.0
        %1672 = vmatpush1.xpose.msra.mxu0 0.0
        %1673 = vmatprep.subr.mxu0 0.0
        %1674 = vmatpush1.xpose.msra.mxu0 0.0
        %1675 = vmatprep.subr.mxu0 0.0
        %1676 = vmatpush1.xpose.msra.mxu0 0.0
        %1677 = vmatprep.subr.mxu0 0.0
        %1678 = vmatpush1.xpose.msra.mxu0 0.0
        %1679 = vmatprep.subr.mxu0 0.0
        %1680 = vmatpush1.xpose.msra.mxu0 0.0
        %1681 = vmatprep.subr.mxu0 0.0
        %1682 = vmatpush1.xpose.msra.mxu0 0.0
        %1683 = vmatprep.subr.mxu0 0.0
        %1684 = vmatpush1.xpose.msra.mxu0 0.0
        %1685 = vmatprep.subr.mxu0 0.0
        %1686 = vmatpush1.xpose.msra.mxu0 0.0
        %1687 = vmatprep.subr.mxu0 0.0
        %1688 = vmatpush1.xpose.msra.mxu0 0.0
        %1689 = vmatprep.subr.mxu0 0.0
        %1690 = vmatpush1.xpose.msra.mxu0 0.0
        %1691 = vmatprep.subr.mxu0 0.0
        %1692 = vmatpush1.xpose.msra.mxu0 0.0
        %1693 = vmatprep.subr.mxu0 0.0
        %1694 = vmatpush1.xpose.msra.mxu0 0.0
        %1695 = vmatprep.subr.mxu0 0.0
        %1696 = vmatpush1.xpose.msra.mxu0 0.0
        %1697 = vmatprep.subr.mxu0 0.0
        %1698 = vmatpush1.xpose.msra.mxu0 0.0
        %1699 = vmatprep.mubr.f32.mxu0 0.0
        %1700 = vmatmul.mubr.f32.gmra.mrb[0].mxu0 %v1627
        %v1701 = vpop.f32.mrb[0].mxu0
        %v1702 = vadd.f32 0.0, %v1701
        %v1703 = vpop.f32.mrb[0].mxu0
        %1704 = vdwg.mxu0
        %v1706 = vsel %vm914, %v876, 0
        %v1709 = vsel %vm914, %v902, 0
        %v1712 = vsel %vm914, %v903, 0
        %1714 = vmatprep.subr.mxu0 0.0
        %1715 = vmatpush1.xpose.msra.mxu0 %v1709
        %1716 = vmatprep.subr.mxu0 0.0
        %1717 = vmatpush1.xpose.msra.mxu0 %v1712
        %1718 = vmatprep.subr.mxu0 0.0
        %1719 = vmatpush1.xpose.msra.mxu0 0.0
        %1720 = vmatprep.subr.mxu0 0.0
        %1721 = vmatpush1.xpose.msra.mxu0 0.0
        %1722 = vmatprep.subr.mxu0 0.0
        %1723 = vmatpush1.xpose.msra.mxu0 0.0
        %1724 = vmatprep.subr.mxu0 0.0
        %1725 = vmatpush1.xpose.msra.mxu0 0.0
        %1726 = vmatprep.subr.mxu0 0.0
        %1727 = vmatpush1.xpose.msra.mxu0 0.0
        %1728 = vmatprep.subr.mxu0 0.0
        %1729 = vmatpush1.xpose.msra.mxu0 0.0
        %1730 = vmatprep.subr.mxu0 0.0
        %1731 = vmatpush1.xpose.msra.mxu0 0.0
        %1732 = vmatprep.subr.mxu0 0.0
        %1733 = vmatpush1.xpose.msra.mxu0 0.0
        %1734 = vmatprep.subr.mxu0 0.0
        %1735 = vmatpush1.xpose.msra.mxu0 0.0
        %1736 = vmatprep.subr.mxu0 0.0
        %1737 = vmatpush1.xpose.msra.mxu0 0.0
        %1738 = vmatprep.subr.mxu0 0.0
        %1739 = vmatpush1.xpose.msra.mxu0 0.0
        %1740 = vmatprep.subr.mxu0 0.0
        %1741 = vmatpush1.xpose.msra.mxu0 0.0
        %1742 = vmatprep.subr.mxu0 0.0
        %1743 = vmatpush1.xpose.msra.mxu0 0.0
        %1744 = vmatprep.subr.mxu0 0.0
        %1745 = vmatpush1.xpose.msra.mxu0 0.0
        %1746 = vmatprep.subr.mxu0 0.0
        %1747 = vmatpush1.xpose.msra.mxu0 0.0
        %1748 = vmatprep.subr.mxu0 0.0
        %1749 = vmatpush1.xpose.msra.mxu0 0.0
        %1750 = vmatprep.subr.mxu0 0.0
        %1751 = vmatpush1.xpose.msra.mxu0 0.0
        %1752 = vmatprep.subr.mxu0 0.0
        %1753 = vmatpush1.xpose.msra.mxu0 0.0
        %1754 = vmatprep.subr.mxu0 0.0
        %1755 = vmatpush1.xpose.msra.mxu0 0.0
        %1756 = vmatprep.subr.mxu0 0.0
        %1757 = vmatpush1.xpose.msra.mxu0 0.0
        %1758 = vmatprep.subr.mxu0 0.0
        %1759 = vmatpush1.xpose.msra.mxu0 0.0
        %1760 = vmatprep.subr.mxu0 0.0
        %1761 = vmatpush1.xpose.msra.mxu0 0.0
        %1762 = vmatprep.subr.mxu0 0.0
        %1763 = vmatpush1.xpose.msra.mxu0 0.0
        %1764 = vmatprep.subr.mxu0 0.0
        %1765 = vmatpush1.xpose.msra.mxu0 0.0
        %1766 = vmatprep.subr.mxu0 0.0
        %1767 = vmatpush1.xpose.msra.mxu0 0.0
        %1768 = vmatprep.subr.mxu0 0.0
        %1769 = vmatpush1.xpose.msra.mxu0 0.0
        %1770 = vmatprep.subr.mxu0 0.0
        %1771 = vmatpush1.xpose.msra.mxu0 0.0
        %1772 = vmatprep.subr.mxu0 0.0
        %1773 = vmatpush1.xpose.msra.mxu0 0.0
        %1774 = vmatprep.subr.mxu0 0.0
        %1775 = vmatpush1.xpose.msra.mxu0 0.0
        %1776 = vmatprep.subr.mxu0 0.0
        %1777 = vmatpush1.xpose.msra.mxu0 0.0
        %1778 = vmatprep.mubr.f32.mxu0 0.0
        %1779 = vmatmul.mubr.f32.gmra.mrb[0].mxu0 %v1706
        %v1780 = vpop.f32.mrb[0].mxu0
        %v1781 = vadd.f32 0.0, %v1780
        %v1782 = vpop.f32.mrb[0].mxu0
        %1783 = vdwg.mxu0
        %v1785 = vsel %vm914, %v877, 0
        %v1788 = vsel %vm914, %v904, 0
        %v1791 = vsel %vm914, %v905, 0
        %1793 = vmatprep.subr.mxu0 0.0
        %1794 = vmatpush1.xpose.msra.mxu0 %v1788
        %1795 = vmatprep.subr.mxu0 0.0
        %1796 = vmatpush1.xpose.msra.mxu0 %v1791
        %1797 = vmatprep.subr.mxu0 0.0
        %1798 = vmatpush1.xpose.msra.mxu0 0.0
        %1799 = vmatprep.subr.mxu0 0.0
        %1800 = vmatpush1.xpose.msra.mxu0 0.0
        %1801 = vmatprep.subr.mxu0 0.0
        %1802 = vmatpush1.xpose.msra.mxu0 0.0
        %1803 = vmatprep.subr.mxu0 0.0
        %1804 = vmatpush1.xpose.msra.mxu0 0.0
        %1805 = vmatprep.subr.mxu0 0.0
        %1806 = vmatpush1.xpose.msra.mxu0 0.0
        %1807 = vmatprep.subr.mxu0 0.0
        %1808 = vmatpush1.xpose.msra.mxu0 0.0
        %1809 = vmatprep.subr.mxu0 0.0
        %1810 = vmatpush1.xpose.msra.mxu0 0.0
        %1811 = vmatprep.subr.mxu0 0.0
        %1812 = vmatpush1.xpose.msra.mxu0 0.0
        %1813 = vmatprep.subr.mxu0 0.0
        %1814 = vmatpush1.xpose.msra.mxu0 0.0
        %1815 = vmatprep.subr.mxu0 0.0
        %1816 = vmatpush1.xpose.msra.mxu0 0.0
        %1817 = vmatprep.subr.mxu0 0.0
        %1818 = vmatpush1.xpose.msra.mxu0 0.0
        %1819 = vmatprep.subr.mxu0 0.0
        %1820 = vmatpush1.xpose.msra.mxu0 0.0
        %1821 = vmatprep.subr.mxu0 0.0
        %1822 = vmatpush1.xpose.msra.mxu0 0.0
        %1823 = vmatprep.subr.mxu0 0.0
        %1824 = vmatpush1.xpose.msra.mxu0 0.0
        %1825 = vmatprep.subr.mxu0 0.0
        %1826 = vmatpush1.xpose.msra.mxu0 0.0
        %1827 = vmatprep.subr.mxu0 0.0
        %1828 = vmatpush1.xpose.msra.mxu0 0.0
        %1829 = vmatprep.subr.mxu0 0.0
        %1830 = vmatpush1.xpose.msra.mxu0 0.0
        %1831 = vmatprep.subr.mxu0 0.0
        %1832 = vmatpush1.xpose.msra.mxu0 0.0
        %1833 = vmatprep.subr.mxu0 0.0
        %1834 = vmatpush1.xpose.msra.mxu0 0.0
        %1835 = vmatprep.subr.mxu0 0.0
        %1836 = vmatpush1.xpose.msra.mxu0 0.0
        %1837 = vmatprep.subr.mxu0 0.0
        %1838 = vmatpush1.xpose.msra.mxu0 0.0
        %1839 = vmatprep.subr.mxu0 0.0
        %1840 = vmatpush1.xpose.msra.mxu0 0.0
        %1841 = vmatprep.subr.mxu0 0.0
        %1842 = vmatpush1.xpose.msra.mxu0 0.0
        %1843 = vmatprep.subr.mxu0 0.0
        %1844 = vmatpush1.xpose.msra.mxu0 0.0
        %1845 = vmatprep.subr.mxu0 0.0
        %1846 = vmatpush1.xpose.msra.mxu0 0.0
        %1847 = vmatprep.subr.mxu0 0.0
        %1848 = vmatpush1.xpose.msra.mxu0 0.0
        %1849 = vmatprep.subr.mxu0 0.0
        %1850 = vmatpush1.xpose.msra.mxu0 0.0
        %1851 = vmatprep.subr.mxu0 0.0
        %1852 = vmatpush1.xpose.msra.mxu0 0.0
        %1853 = vmatprep.subr.mxu0 0.0
        %1854 = vmatpush1.xpose.msra.mxu0 0.0
        %1855 = vmatprep.subr.mxu0 0.0
        %1856 = vmatpush1.xpose.msra.mxu0 0.0
        %1857 = vmatprep.mubr.f32.mxu0 0.0
        %1858 = vmatmul.mubr.f32.gmra.mrb[0].mxu0 %v1785
        %v1859 = vpop.f32.mrb[0].mxu0
        %v1860 = vadd.f32 0.0, %v1859
        %v1861 = vpop.f32.mrb[0].mxu0
        %1862 = vdwg.mxu0
        %v1864 = vsel %vm914, %v878, 0
        %v1867 = vsel %vm914, %v906, 0
        %v1870 = vsel %vm914, %v907, 0
        %1872 = vmatprep.subr.mxu0 0.0
        %1873 = vmatpush1.xpose.msra.mxu0 %v1867
        %1874 = vmatprep.subr.mxu0 0.0
        %1875 = vmatpush1.xpose.msra.mxu0 %v1870
        %1876 = vmatprep.subr.mxu0 0.0
        %1877 = vmatpush1.xpose.msra.mxu0 0.0
        %1878 = vmatprep.subr.mxu0 0.0
        %1879 = vmatpush1.xpose.msra.mxu0 0.0
        %1880 = vmatprep.subr.mxu0 0.0
        %1881 = vmatpush1.xpose.msra.mxu0 0.0
        %1882 = vmatprep.subr.mxu0 0.0
        %1883 = vmatpush1.xpose.msra.mxu0 0.0
        %1884 = vmatprep.subr.mxu0 0.0
        %1885 = vmatpush1.xpose.msra.mxu0 0.0
        %1886 = vmatprep.subr.mxu0 0.0
        %1887 = vmatpush1.xpose.msra.mxu0 0.0
        %1888 = vmatprep.subr.mxu0 0.0
        %1889 = vmatpush1.xpose.msra.mxu0 0.0
        %1890 = vmatprep.subr.mxu0 0.0
        %1891 = vmatpush1.xpose.msra.mxu0 0.0
        %1892 = vmatprep.subr.mxu0 0.0
        %1893 = vmatpush1.xpose.msra.mxu0 0.0
        %1894 = vmatprep.subr.mxu0 0.0
        %1895 = vmatpush1.xpose.msra.mxu0 0.0
        %1896 = vmatprep.subr.mxu0 0.0
        %1897 = vmatpush1.xpose.msra.mxu0 0.0
        %1898 = vmatprep.subr.mxu0 0.0
        %1899 = vmatpush1.xpose.msra.mxu0 0.0
        %1900 = vmatprep.subr.mxu0 0.0
        %1901 = vmatpush1.xpose.msra.mxu0 0.0
        %1902 = vmatprep.subr.mxu0 0.0
        %1903 = vmatpush1.xpose.msra.mxu0 0.0
        %1904 = vmatprep.subr.mxu0 0.0
        %1905 = vmatpush1.xpose.msra.mxu0 0.0
        %1906 = vmatprep.subr.mxu0 0.0
        %1907 = vmatpush1.xpose.msra.mxu0 0.0
        %1908 = vmatprep.subr.mxu0 0.0
        %1909 = vmatpush1.xpose.msra.mxu0 0.0
        %1910 = vmatprep.subr.mxu0 0.0
        %1911 = vmatpush1.xpose.msra.mxu0 0.0
        %1912 = vmatprep.subr.mxu0 0.0
        %1913 = vmatpush1.xpose.msra.mxu0 0.0
        %1914 = vmatprep.subr.mxu0 0.0
        %1915 = vmatpush1.xpose.msra.mxu0 0.0
        %1916 = vmatprep.subr.mxu0 0.0
        %1917 = vmatpush1.xpose.msra.mxu0 0.0
        %1918 = vmatprep.subr.mxu0 0.0
        %1919 = vmatpush1.xpose.msra.mxu0 0.0
        %1920 = vmatprep.subr.mxu0 0.0
        %1921 = vmatpush1.xpose.msra.mxu0 0.0
        %1922 = vmatprep.subr.mxu0 0.0
        %1923 = vmatpush1.xpose.msra.mxu0 0.0
        %1924 = vmatprep.subr.mxu0 0.0
        %1925 = vmatpush1.xpose.msra.mxu0 0.0
        %1926 = vmatprep.subr.mxu0 0.0
        %1927 = vmatpush1.xpose.msra.mxu0 0.0
        %1928 = vmatprep.subr.mxu0 0.0
        %1929 = vmatpush1.xpose.msra.mxu0 0.0
        %1930 = vmatprep.subr.mxu0 0.0
        %1931 = vmatpush1.xpose.msra.mxu0 0.0
        %1932 = vmatprep.subr.mxu0 0.0
        %1933 = vmatpush1.xpose.msra.mxu0 0.0
        %1934 = vmatprep.subr.mxu0 0.0
        %1935 = vmatpush1.xpose.msra.mxu0 0.0
        %1936 = vmatprep.mubr.f32.mxu0 0.0
        %1937 = vmatmul.mubr.f32.gmra.mrb[0].mxu0 %v1864
        %v1938 = vpop.f32.mrb[0].mxu0
        %v1939 = vadd.f32 0.0, %v1938
        %v1940 = vpop.f32.mrb[0].mxu0
        %1941 = vdwg.mxu0
        %v1943 = vsel %vm914, %v879, 0
        %v1946 = vsel %vm914, %v908, 0
        %v1949 = vsel %vm914, %v909, 0
        %1951 = vmatprep.subr.mxu0 0.0
        %1952 = vmatpush1.xpose.msra.mxu0 %v1946
        %1953 = vmatprep.subr.mxu0 0.0
        %1954 = vmatpush1.xpose.msra.mxu0 %v1949
        %1955 = vmatprep.subr.mxu0 0.0
        %1956 = vmatpush1.xpose.msra.mxu0 0.0
        %1957 = vmatprep.subr.mxu0 0.0
        %1958 = vmatpush1.xpose.msra.mxu0 0.0
        %1959 = vmatprep.subr.mxu0 0.0
        %1960 = vmatpush1.xpose.msra.mxu0 0.0
        %1961 = vmatprep.subr.mxu0 0.0
        %1962 = vmatpush1.xpose.msra.mxu0 0.0
        %1963 = vmatprep.subr.mxu0 0.0
        %1964 = vmatpush1.xpose.msra.mxu0 0.0
        %1965 = vmatprep.subr.mxu0 0.0
        %1966 = vmatpush1.xpose.msra.mxu0 0.0
        %1967 = vmatprep.subr.mxu0 0.0
        %1968 = vmatpush1.xpose.msra.mxu0 0.0
        %1969 = vmatprep.subr.mxu0 0.0
        %1970 = vmatpush1.xpose.msra.mxu0 0.0
        %1971 = vmatprep.subr.mxu0 0.0
        %1972 = vmatpush1.xpose.msra.mxu0 0.0
        %1973 = vmatprep.subr.mxu0 0.0
        %1974 = vmatpush1.xpose.msra.mxu0 0.0
        %1975 = vmatprep.subr.mxu0 0.0
        %1976 = vmatpush1.xpose.msra.mxu0 0.0
        %1977 = vmatprep.subr.mxu0 0.0
        %1978 = vmatpush1.xpose.msra.mxu0 0.0
        %1979 = vmatprep.subr.mxu0 0.0
        %1980 = vmatpush1.xpose.msra.mxu0 0.0
        %1981 = vmatprep.subr.mxu0 0.0
        %1982 = vmatpush1.xpose.msra.mxu0 0.0
        %1983 = vmatprep.subr.mxu0 0.0
        %1984 = vmatpush1.xpose.msra.mxu0 0.0
        %1985 = vmatprep.subr.mxu0 0.0
        %1986 = vmatpush1.xpose.msra.mxu0 0.0
        %1987 = vmatprep.subr.mxu0 0.0
        %1988 = vmatpush1.xpose.msra.mxu0 0.0
        %1989 = vmatprep.subr.mxu0 0.0
        %1990 = vmatpush1.xpose.msra.mxu0 0.0
        %1991 = vmatprep.subr.mxu0 0.0
        %1992 = vmatpush1.xpose.msra.mxu0 0.0
        %1993 = vmatprep.subr.mxu0 0.0
        %1994 = vmatpush1.xpose.msra.mxu0 0.0
        %1995 = vmatprep.subr.mxu0 0.0
        %1996 = vmatpush1.xpose.msra.mxu0 0.0
        %1997 = vmatprep.subr.mxu0 0.0
        %1998 = vmatpush1.xpose.msra.mxu0 0.0
        %1999 = vmatprep.subr.mxu0 0.0
        %2000 = vmatpush1.xpose.msra.mxu0 0.0
        %2001 = vmatprep.subr.mxu0 0.0
        %2002 = vmatpush1.xpose.msra.mxu0 0.0
        %2003 = vmatprep.subr.mxu0 0.0
        %2004 = vmatpush1.xpose.msra.mxu0 0.0
        %2005 = vmatprep.subr.mxu0 0.0
        %2006 = vmatpush1.xpose.msra.mxu0 0.0
        %2007 = vmatprep.subr.mxu0 0.0
        %2008 = vmatpush1.xpose.msra.mxu0 0.0
        %2009 = vmatprep.subr.mxu0 0.0
        %2010 = vmatpush1.xpose.msra.mxu0 0.0
        %2011 = vmatprep.subr.mxu0 0.0
        %2012 = vmatpush1.xpose.msra.mxu0 0.0
        %2013 = vmatprep.subr.mxu0 0.0
        %2014 = vmatpush1.xpose.msra.mxu0 0.0
        %2015 = vmatprep.mubr.f32.mxu0 0.0
        %2016 = vmatmul.mubr.f32.gmra.mrb[0].mxu0 %v1943
        %v2017 = vpop.f32.mrb[0].mxu0
        %v2018 = vadd.f32 0.0, %v2017
        %v2019 = vpop.f32.mrb[0].mxu0
        %2020 = vdwg.mxu0
        %v2022 = vsel %vm914, %v880, 0
        %v2025 = vsel %vm914, %v910, 0
        %v2028 = vsel %vm914, %v911, 0
        %2030 = vmatprep.subr.mxu0 0.0
        %2031 = vmatpush1.xpose.msra.mxu0 %v2025
        %2032 = vmatprep.subr.mxu0 0.0
        %2033 = vmatpush1.xpose.msra.mxu0 %v2028
        %2034 = vmatprep.subr.mxu0 0.0
        %2035 = vmatpush1.xpose.msra.mxu0 0.0
        %2036 = vmatprep.subr.mxu0 0.0
        %2037 = vmatpush1.xpose.msra.mxu0 0.0
        %2038 = vmatprep.subr.mxu0 0.0
        %2039 = vmatpush1.xpose.msra.mxu0 0.0
        %2040 = vmatprep.subr.mxu0 0.0
        %2041 = vmatpush1.xpose.msra.mxu0 0.0
        %2042 = vmatprep.subr.mxu0 0.0
        %2043 = vmatpush1.xpose.msra.mxu0 0.0
        %2044 = vmatprep.subr.mxu0 0.0
        %2045 = vmatpush1.xpose.msra.mxu0 0.0
        %2046 = vmatprep.subr.mxu0 0.0
        %2047 = vmatpush1.xpose.msra.mxu0 0.0
        %2048 = vmatprep.subr.mxu0 0.0
        %2049 = vmatpush1.xpose.msra.mxu0 0.0
        %2050 = vmatprep.subr.mxu0 0.0
        %2051 = vmatpush1.xpose.msra.mxu0 0.0
        %2052 = vmatprep.subr.mxu0 0.0
        %2053 = vmatpush1.xpose.msra.mxu0 0.0
        %2054 = vmatprep.subr.mxu0 0.0
        %2055 = vmatpush1.xpose.msra.mxu0 0.0
        %2056 = vmatprep.subr.mxu0 0.0
        %2057 = vmatpush1.xpose.msra.mxu0 0.0
        %2058 = vmatprep.subr.mxu0 0.0
        %2059 = vmatpush1.xpose.msra.mxu0 0.0
        %2060 = vmatprep.subr.mxu0 0.0
        %2061 = vmatpush1.xpose.msra.mxu0 0.0
        %2062 = vmatprep.subr.mxu0 0.0
        %2063 = vmatpush1.xpose.msra.mxu0 0.0
        %2064 = vmatprep.subr.mxu0 0.0
        %2065 = vmatpush1.xpose.msra.mxu0 0.0
        %2066 = vmatprep.subr.mxu0 0.0
        %2067 = vmatpush1.xpose.msra.mxu0 0.0
        %2068 = vmatprep.subr.mxu0 0.0
        %2069 = vmatpush1.xpose.msra.mxu0 0.0
        %2070 = vmatprep.subr.mxu0 0.0
        %2071 = vmatpush1.xpose.msra.mxu0 0.0
        %2072 = vmatprep.subr.mxu0 0.0
        %2073 = vmatpush1.xpose.msra.mxu0 0.0
        %2074 = vmatprep.subr.mxu0 0.0
        %2075 = vmatpush1.xpose.msra.mxu0 0.0
        %2076 = vmatprep.subr.mxu0 0.0
        %2077 = vmatpush1.xpose.msra.mxu0 0.0
        %2078 = vmatprep.subr.mxu0 0.0
        %2079 = vmatpush1.xpose.msra.mxu0 0.0
        %2080 = vmatprep.subr.mxu0 0.0
        %2081 = vmatpush1.xpose.msra.mxu0 0.0
        %2082 = vmatprep.subr.mxu0 0.0
        %2083 = vmatpush1.xpose.msra.mxu0 0.0
        %2084 = vmatprep.subr.mxu0 0.0
        %2085 = vmatpush1.xpose.msra.mxu0 0.0
        %2086 = vmatprep.subr.mxu0 0.0
        %2087 = vmatpush1.xpose.msra.mxu0 0.0
        %2088 = vmatprep.subr.mxu0 0.0
        %2089 = vmatpush1.xpose.msra.mxu0 0.0
        %2090 = vmatprep.subr.mxu0 0.0
        %2091 = vmatpush1.xpose.msra.mxu0 0.0
        %2092 = vmatprep.subr.mxu0 0.0
        %2093 = vmatpush1.xpose.msra.mxu0 0.0
        %2094 = vmatprep.mubr.f32.mxu0 0.0
        %2095 = vmatmul.mubr.f32.gmra.mrb[0].mxu0 %v2022
        %v2096 = vpop.f32.mrb[0].mxu0
        %v2097 = vadd.f32 0.0, %v2096
        %v2098 = vpop.f32.mrb[0].mxu0
        %2099 = vdwg.mxu0
        %v2101 = vsel %vm914, %v881, 0
        %v2104 = vsel %vm914, %v912, 0
        %v2107 = vsel %vm914, %v913, 0
        %2109 = vmatprep.subr.mxu0 0.0
        %2110 = vmatpush1.xpose.msra.mxu0 %v2104
        %2111 = vmatprep.subr.mxu0 0.0
        %2112 = vmatpush1.xpose.msra.mxu0 %v2107
        %2113 = vmatprep.subr.mxu0 0.0
        %2114 = vmatpush1.xpose.msra.mxu0 0.0
        %2115 = vmatprep.subr.mxu0 0.0
        %2116 = vmatpush1.xpose.msra.mxu0 0.0
        %2117 = vmatprep.subr.mxu0 0.0
        %2118 = vmatpush1.xpose.msra.mxu0 0.0
        %2119 = vmatprep.subr.mxu0 0.0
        %2120 = vmatpush1.xpose.msra.mxu0 0.0
        %2121 = vmatprep.subr.mxu0 0.0
        %2122 = vmatpush1.xpose.msra.mxu0 0.0
        %2123 = vmatprep.subr.mxu0 0.0
        %2124 = vmatpush1.xpose.msra.mxu0 0.0
        %2125 = vmatprep.subr.mxu0 0.0
        %2126 = vmatpush1.xpose.msra.mxu0 0.0
        %2127 = vmatprep.subr.mxu0 0.0
        %2128 = vmatpush1.xpose.msra.mxu0 0.0
        %2129 = vmatprep.subr.mxu0 0.0
        %2130 = vmatpush1.xpose.msra.mxu0 0.0
        %2131 = vmatprep.subr.mxu0 0.0
        %2132 = vmatpush1.xpose.msra.mxu0 0.0
        %2133 = vmatprep.subr.mxu0 0.0
        %2134 = vmatpush1.xpose.msra.mxu0 0.0
        %2135 = vmatprep.subr.mxu0 0.0
        %2136 = vmatpush1.xpose.msra.mxu0 0.0
        %2137 = vmatprep.subr.mxu0 0.0
        %2138 = vmatpush1.xpose.msra.mxu0 0.0
        %2139 = vmatprep.subr.mxu0 0.0
        %2140 = vmatpush1.xpose.msra.mxu0 0.0
        %2141 = vmatprep.subr.mxu0 0.0
        %2142 = vmatpush1.xpose.msra.mxu0 0.0
        %2143 = vmatprep.subr.mxu0 0.0
        %2144 = vmatpush1.xpose.msra.mxu0 0.0
        %2145 = vmatprep.subr.mxu0 0.0
        %2146 = vmatpush1.xpose.msra.mxu0 0.0
        %2147 = vmatprep.subr.mxu0 0.0
        %2148 = vmatpush1.xpose.msra.mxu0 0.0
        %2149 = vmatprep.subr.mxu0 0.0
        %2150 = vmatpush1.xpose.msra.mxu0 0.0
        %2151 = vmatprep.subr.mxu0 0.0
        %2152 = vmatpush1.xpose.msra.mxu0 0.0
        %2153 = vmatprep.subr.mxu0 0.0
        %2154 = vmatpush1.xpose.msra.mxu0 0.0
        %2155 = vmatprep.subr.mxu0 0.0
        %2156 = vmatpush1.xpose.msra.mxu0 0.0
        %2157 = vmatprep.subr.mxu0 0.0
        %2158 = vmatpush1.xpose.msra.mxu0 0.0
        %2159 = vmatprep.subr.mxu0 0.0
        %2160 = vmatpush1.xpose.msra.mxu0 0.0
        %2161 = vmatprep.subr.mxu0 0.0
        %2162 = vmatpush1.xpose.msra.mxu0 0.0
        %2163 = vmatprep.subr.mxu0 0.0
        %2164 = vmatpush1.xpose.msra.mxu0 0.0
        %2165 = vmatprep.subr.mxu0 0.0
        %2166 = vmatpush1.xpose.msra.mxu0 0.0
        %2167 = vmatprep.subr.mxu0 0.0
        %2168 = vmatpush1.xpose.msra.mxu0 0.0
        %2169 = vmatprep.subr.mxu0 0.0
        %2170 = vmatpush1.xpose.msra.mxu0 0.0
        %2171 = vmatprep.subr.mxu0 0.0
        %2172 = vmatpush1.xpose.msra.mxu0 0.0
        %2173 = vmatprep.mubr.f32.mxu0 0.0
        %2174 = vmatmul.mubr.f32.gmra.mrb[0].mxu0 %v2101
        %v2175 = vpop.f32.mrb[0].mxu0
        %v2176 = vadd.f32 0.0, %v2175
        %v2177 = vpop.f32.mrb[0].mxu0
        %2178 = vdwg.mxu0
        %v2179 = vmul.f32 %v866, %v866
        %v2180 = vmul.f32 %v867, %v867
        %v2181 = vmul.f32 %v868, %v868
        %v2182 = vmul.f32 %v869, %v869
        %v2183 = vmul.f32 %v870, %v870
        %v2184 = vmul.f32 %v871, %v871
        %v2185 = vmul.f32 %v872, %v872
        %v2186 = vmul.f32 %v873, %v873
        %v2187 = vmul.f32 %v874, %v874
        %v2188 = vmul.f32 %v875, %v875
        %v2189 = vmul.f32 %v876, %v876
        %v2190 = vmul.f32 %v877, %v877
        %v2191 = vmul.f32 %v878, %v878
        %v2192 = vmul.f32 %v879, %v879
        %v2193 = vmul.f32 %v880, %v880
        %v2194 = vmul.f32 %v881, %v881
        %v2195 = vsel %vm914, %v2179, 0.0
        %2196 = vadd.xlane.f32.xlu0 %v2195
        %v2197 = vpop.xlane.xlu0 %2196
        %v2198 = vsel %vm914, %v2180, 0.0
        %2199 = vadd.xlane.f32.xlu0 %v2198
        %v2200 = vpop.xlane.xlu0 %2199
        %v2201 = vsel %vm914, %v2181, 0.0
        %2202 = vadd.xlane.f32.xlu0 %v2201
        %v2203 = vpop.xlane.xlu0 %2202
        %v2204 = vsel %vm914, %v2182, 0.0
        %2205 = vadd.xlane.f32.xlu0 %v2204
        %v2206 = vpop.xlane.xlu0 %2205
        %v2207 = vsel %vm914, %v2183, 0.0
        %2208 = vadd.xlane.f32.xlu0 %v2207
        %v2209 = vpop.xlane.xlu0 %2208
        %v2210 = vsel %vm914, %v2184, 0.0
        %2211 = vadd.xlane.f32.xlu0 %v2210
        %v2212 = vpop.xlane.xlu0 %2211
        %v2213 = vsel %vm914, %v2185, 0.0
        %2214 = vadd.xlane.f32.xlu0 %v2213
        %v2215 = vpop.xlane.xlu0 %2214
        %v2216 = vsel %vm914, %v2186, 0.0
        %2217 = vadd.xlane.f32.xlu0 %v2216
        %v2218 = vpop.xlane.xlu0 %2217
        %v2219 = vsel %vm914, %v2187, 0.0
        %2220 = vadd.xlane.f32.xlu0 %v2219
        %v2221 = vpop.xlane.xlu0 %2220
        %v2222 = vsel %vm914, %v2188, 0.0
        %2223 = vadd.xlane.f32.xlu0 %v2222
        %v2224 = vpop.xlane.xlu0 %2223
        %v2225 = vsel %vm914, %v2189, 0.0
        %2226 = vadd.xlane.f32.xlu0 %v2225
        %v2227 = vpop.xlane.xlu0 %2226
        %v2228 = vsel %vm914, %v2190, 0.0
        %2229 = vadd.xlane.f32.xlu0 %v2228
        %v2230 = vpop.xlane.xlu0 %2229
        %v2231 = vsel %vm914, %v2191, 0.0
        %2232 = vadd.xlane.f32.xlu0 %v2231
        %v2233 = vpop.xlane.xlu0 %2232
        %v2234 = vsel %vm914, %v2192, 0.0
        %2235 = vadd.xlane.f32.xlu0 %v2234
        %v2236 = vpop.xlane.xlu0 %2235
        %v2237 = vsel %vm914, %v2193, 0.0
        %2238 = vadd.xlane.f32.xlu0 %v2237
        %v2239 = vpop.xlane.xlu0 %2238
        %v2240 = vsel %vm914, %v2194, 0.0
        %2241 = vadd.xlane.f32.xlu0 %v2240
        %v2242 = vpop.xlane.xlu0 %2241
        %v2243 = vmul.f32 %v882, %v882
        %v2244 = vmul.f32 %v883, %v883
        %v2245 = vmul.f32 %v884, %v884
        %v2246 = vmul.f32 %v885, %v885
        %v2247 = vmul.f32 %v886, %v886
        %v2248 = vmul.f32 %v887, %v887
        %v2249 = vmul.f32 %v888, %v888
        %v2250 = vmul.f32 %v889, %v889
        %v2251 = vmul.f32 %v890, %v890
        %v2252 = vmul.f32 %v891, %v891
        %v2253 = vmul.f32 %v892, %v892
        %v2254 = vmul.f32 %v893, %v893
        %v2255 = vmul.f32 %v894, %v894
        %v2256 = vmul.f32 %v895, %v895
        %v2257 = vmul.f32 %v896, %v896
        %v2258 = vmul.f32 %v897, %v897
        %v2259 = vmul.f32 %v898, %v898
        %v2260 = vmul.f32 %v899, %v899
        %v2261 = vmul.f32 %v900, %v900
        %v2262 = vmul.f32 %v901, %v901
        %v2263 = vmul.f32 %v902, %v902
        %v2264 = vmul.f32 %v903, %v903
        %v2265 = vmul.f32 %v904, %v904
        %v2266 = vmul.f32 %v905, %v905
        %v2267 = vmul.f32 %v906, %v906
        %v2268 = vmul.f32 %v907, %v907
        %v2269 = vmul.f32 %v908, %v908
        %v2270 = vmul.f32 %v909, %v909
        %v2271 = vmul.f32 %v910, %v910
        %v2272 = vmul.f32 %v911, %v911
        %v2273 = vmul.f32 %v912, %v912
        %v2274 = vmul.f32 %v913, %v913
        %v2275 = vsel %vm914, %v2243, 0.0
        %2276 = vadd.xlane.f32.xlu0 %v2275
        %v2277 = vpop.xlane.xlu0 %2276
        %v2278 = vsel %vm914, %v2244, 0.0
        %2279 = vadd.xlane.f32.xlu0 %v2278
        %v2280 = vpop.xlane.xlu0 %2279
        %v2281 = vsel %vm914, %v2245, 0.0
        %2282 = vadd.xlane.f32.xlu0 %v2281
        %v2283 = vpop.xlane.xlu0 %2282
        %v2284 = vsel %vm914, %v2246, 0.0
        %2285 = vadd.xlane.f32.xlu0 %v2284
        %v2286 = vpop.xlane.xlu0 %2285
        %v2287 = vsel %vm914, %v2247, 0.0
        %2288 = vadd.xlane.f32.xlu0 %v2287
        %v2289 = vpop.xlane.xlu0 %2288
        %v2290 = vsel %vm914, %v2248, 0.0
        %2291 = vadd.xlane.f32.xlu0 %v2290
        %v2292 = vpop.xlane.xlu0 %2291
        %v2293 = vsel %vm914, %v2249, 0.0
        %2294 = vadd.xlane.f32.xlu0 %v2293
        %v2295 = vpop.xlane.xlu0 %2294
        %v2296 = vsel %vm914, %v2250, 0.0
        %2297 = vadd.xlane.f32.xlu0 %v2296
        %v2298 = vpop.xlane.xlu0 %2297
        %v2299 = vsel %vm914, %v2251, 0.0
        %2300 = vadd.xlane.f32.xlu0 %v2299
        %v2301 = vpop.xlane.xlu0 %2300
        %v2302 = vsel %vm914, %v2252, 0.0
        %2303 = vadd.xlane.f32.xlu0 %v2302
        %v2304 = vpop.xlane.xlu0 %2303
        %v2305 = vsel %vm914, %v2253, 0.0
        %2306 = vadd.xlane.f32.xlu0 %v2305
        %v2307 = vpop.xlane.xlu0 %2306
        %v2308 = vsel %vm914, %v2254, 0.0
        %2309 = vadd.xlane.f32.xlu0 %v2308
        %v2310 = vpop.xlane.xlu0 %2309
        %v2311 = vsel %vm914, %v2255, 0.0
        %2312 = vadd.xlane.f32.xlu0 %v2311
        %v2313 = vpop.xlane.xlu0 %2312
        %v2314 = vsel %vm914, %v2256, 0.0
        %2315 = vadd.xlane.f32.xlu0 %v2314
        %v2316 = vpop.xlane.xlu0 %2315
        %v2317 = vsel %vm914, %v2257, 0.0
        %2318 = vadd.xlane.f32.xlu0 %v2317
        %v2319 = vpop.xlane.xlu0 %2318
        %v2320 = vsel %vm914, %v2258, 0.0
        %2321 = vadd.xlane.f32.xlu0 %v2320
        %v2322 = vpop.xlane.xlu0 %2321
        %v2323 = vsel %vm914, %v2259, 0.0
        %2324 = vadd.xlane.f32.xlu0 %v2323
        %v2325 = vpop.xlane.xlu0 %2324
        %v2326 = vsel %vm914, %v2260, 0.0
        %2327 = vadd.xlane.f32.xlu0 %v2326
        %v2328 = vpop.xlane.xlu0 %2327
        %v2329 = vsel %vm914, %v2261, 0.0
        %2330 = vadd.xlane.f32.xlu0 %v2329
        %v2331 = vpop.xlane.xlu0 %2330
        %v2332 = vsel %vm914, %v2262, 0.0
        %2333 = vadd.xlane.f32.xlu0 %v2332
        %v2334 = vpop.xlane.xlu0 %2333
        %v2335 = vsel %vm914, %v2263, 0.0
        %2336 = vadd.xlane.f32.xlu0 %v2335
        %v2337 = vpop.xlane.xlu0 %2336
        %v2338 = vsel %vm914, %v2264, 0.0
        %2339 = vadd.xlane.f32.xlu0 %v2338
        %v2340 = vpop.xlane.xlu0 %2339
        %v2341 = vsel %vm914, %v2265, 0.0
        %2342 = vadd.xlane.f32.xlu0 %v2341
        %v2343 = vpop.xlane.xlu0 %2342
        %v2344 = vsel %vm914, %v2266, 0.0
        %2345 = vadd.xlane.f32.xlu0 %v2344
        %v2346 = vpop.xlane.xlu0 %2345
        %v2347 = vsel %vm914, %v2267, 0.0
        %2348 = vadd.xlane.f32.xlu0 %v2347
        %v2349 = vpop.xlane.xlu0 %2348
        %v2350 = vsel %vm914, %v2268, 0.0
        %2351 = vadd.xlane.f32.xlu0 %v2350
        %v2352 = vpop.xlane.xlu0 %2351
        %v2353 = vsel %vm914, %v2269, 0.0
        %2354 = vadd.xlane.f32.xlu0 %v2353
        %v2355 = vpop.xlane.xlu0 %2354
        %v2356 = vsel %vm914, %v2270, 0.0
        %2357 = vadd.xlane.f32.xlu0 %v2356
        %v2358 = vpop.xlane.xlu0 %2357
        %v2359 = vsel %vm914, %v2271, 0.0
        %2360 = vadd.xlane.f32.xlu0 %v2359
        %v2361 = vpop.xlane.xlu0 %2360
        %v2362 = vsel %vm914, %v2272, 0.0
        %2363 = vadd.xlane.f32.xlu0 %v2362
        %v2364 = vpop.xlane.xlu0 %2363
        %v2365 = vsel %vm914, %v2273, 0.0
        %2366 = vadd.xlane.f32.xlu0 %v2365
        %v2367 = vpop.xlane.xlu0 %2366
        %v2368 = vsel %vm914, %v2274, 0.0
        %2369 = vadd.xlane.f32.xlu0 %v2368
        %v2370 = vpop.xlane.xlu0 %2369
        %v2403 = vlaneseq
        %v2404 = vand.u32 %v2403, 127
        %v2405 = vlaneseq
        %v2406 = vshrl.u32 %v2405, 7
        %v2407 = vsub.s32 %v2404, %v2406
        %v2408 = vrot.slane %v2277, %v2407
        %v2409 = vadd.s32 %v2404, 4294967288
        %v2410 = vlaneseq
        %v2411 = vshrl.u32 %v2410, 7
        %v2412 = vsub.s32 %v2409, %v2411
        %v2413 = vrot.slane %v2280, %v2412
        %vm2414 = vcmask 130112
        %v2415 = vsel %vm2414, %v2413, %v2408
        %v2416 = vlaneseq
        %v2417 = vshrl.u32 %v2416, 7
        %v2418 = vsub.s32 %v2404, %v2417
        %v2419 = vrot.slane %v2283, %v2418
        %v2420 = vlaneseq
        %v2421 = vshrl.u32 %v2420, 7
        %v2422 = vsub.s32 %v2409, %v2421
        %v2423 = vrot.slane %v2286, %v2422
        %v2424 = vsel %vm2414, %v2423, %v2419
        %v2425 = vlaneseq
        %v2426 = vshrl.u32 %v2425, 7
        %v2427 = vsub.s32 %v2404, %v2426
        %v2428 = vrot.slane %v2289, %v2427
        %v2429 = vlaneseq
        %v2430 = vshrl.u32 %v2429, 7
        %v2431 = vsub.s32 %v2409, %v2430
        %v2432 = vrot.slane %v2292, %v2431
        %v2433 = vsel %vm2414, %v2432, %v2428
        %v2434 = vlaneseq
        %v2435 = vshrl.u32 %v2434, 7
        %v2436 = vsub.s32 %v2404, %v2435
        %v2437 = vrot.slane %v2295, %v2436
        %v2438 = vlaneseq
        %v2439 = vshrl.u32 %v2438, 7
        %v2440 = vsub.s32 %v2409, %v2439
        %v2441 = vrot.slane %v2298, %v2440
        %v2442 = vsel %vm2414, %v2441, %v2437
        %v2443 = vlaneseq
        %v2444 = vshrl.u32 %v2443, 7
        %v2445 = vsub.s32 %v2404, %v2444
        %v2446 = vrot.slane %v2301, %v2445
        %v2447 = vlaneseq
        %v2448 = vshrl.u32 %v2447, 7
        %v2449 = vsub.s32 %v2409, %v2448
        %v2450 = vrot.slane %v2304, %v2449
        %v2451 = vsel %vm2414, %v2450, %v2446
        %v2452 = vlaneseq
        %v2453 = vshrl.u32 %v2452, 7
        %v2454 = vsub.s32 %v2404, %v2453
        %v2455 = vrot.slane %v2307, %v2454
        %v2456 = vlaneseq
        %v2457 = vshrl.u32 %v2456, 7
        %v2458 = vsub.s32 %v2409, %v2457
        %v2459 = vrot.slane %v2310, %v2458
        %v2460 = vsel %vm2414, %v2459, %v2455
        %v2461 = vlaneseq
        %v2462 = vshrl.u32 %v2461, 7
        %v2463 = vsub.s32 %v2404, %v2462
        %v2464 = vrot.slane %v2313, %v2463
        %v2465 = vlaneseq
        %v2466 = vshrl.u32 %v2465, 7
        %v2467 = vsub.s32 %v2409, %v2466
        %v2468 = vrot.slane %v2316, %v2467
        %v2469 = vsel %vm2414, %v2468, %v2464
        %v2470 = vlaneseq
        %v2471 = vshrl.u32 %v2470, 7
        %v2472 = vsub.s32 %v2404, %v2471
        %v2473 = vrot.slane %v2319, %v2472
        %v2474 = vlaneseq
        %v2475 = vshrl.u32 %v2474, 7
        %v2476 = vsub.s32 %v2409, %v2475
        %v2477 = vrot.slane %v2322, %v2476
        %v2478 = vsel %vm2414, %v2477, %v2473
        %v2479 = vlaneseq
        %v2480 = vshrl.u32 %v2479, 7
        %v2481 = vsub.s32 %v2404, %v2480
        %v2482 = vrot.slane %v2325, %v2481
        %v2483 = vlaneseq
        %v2484 = vshrl.u32 %v2483, 7
        %v2485 = vsub.s32 %v2409, %v2484
        %v2486 = vrot.slane %v2328, %v2485
        %v2487 = vsel %vm2414, %v2486, %v2482
        %v2488 = vlaneseq
        %v2489 = vshrl.u32 %v2488, 7
        %v2490 = vsub.s32 %v2404, %v2489
        %v2491 = vrot.slane %v2331, %v2490
        %v2492 = vlaneseq
        %v2493 = vshrl.u32 %v2492, 7
        %v2494 = vsub.s32 %v2409, %v2493
        %v2495 = vrot.slane %v2334, %v2494
        %v2496 = vsel %vm2414, %v2495, %v2491
        %v2497 = vlaneseq
        %v2498 = vshrl.u32 %v2497, 7
        %v2499 = vsub.s32 %v2404, %v2498
        %v2500 = vrot.slane %v2337, %v2499
        %v2501 = vlaneseq
        %v2502 = vshrl.u32 %v2501, 7
        %v2503 = vsub.s32 %v2409, %v2502
        %v2504 = vrot.slane %v2340, %v2503
        %v2505 = vsel %vm2414, %v2504, %v2500
        %v2506 = vlaneseq
        %v2507 = vshrl.u32 %v2506, 7
        %v2508 = vsub.s32 %v2404, %v2507
        %v2509 = vrot.slane %v2343, %v2508
        %v2510 = vlaneseq
        %v2511 = vshrl.u32 %v2510, 7
        %v2512 = vsub.s32 %v2409, %v2511
        %v2513 = vrot.slane %v2346, %v2512
        %v2514 = vsel %vm2414, %v2513, %v2509
        %v2515 = vlaneseq
        %v2516 = vshrl.u32 %v2515, 7
        %v2517 = vsub.s32 %v2404, %v2516
        %v2518 = vrot.slane %v2349, %v2517
        %v2519 = vlaneseq
        %v2520 = vshrl.u32 %v2519, 7
        %v2521 = vsub.s32 %v2409, %v2520
        %v2522 = vrot.slane %v2352, %v2521
        %v2523 = vsel %vm2414, %v2522, %v2518
        %v2524 = vlaneseq
        %v2525 = vshrl.u32 %v2524, 7
        %v2526 = vsub.s32 %v2404, %v2525
        %v2527 = vrot.slane %v2355, %v2526
        %v2528 = vlaneseq
        %v2529 = vshrl.u32 %v2528, 7
        %v2530 = vsub.s32 %v2409, %v2529
        %v2531 = vrot.slane %v2358, %v2530
        %v2532 = vsel %vm2414, %v2531, %v2527
        %v2533 = vlaneseq
        %v2534 = vshrl.u32 %v2533, 7
        %v2535 = vsub.s32 %v2404, %v2534
        %v2536 = vrot.slane %v2361, %v2535
        %v2537 = vlaneseq
        %v2538 = vshrl.u32 %v2537, 7
        %v2539 = vsub.s32 %v2409, %v2538
        %v2540 = vrot.slane %v2364, %v2539
        %v2541 = vsel %vm2414, %v2540, %v2536
        %v2542 = vlaneseq
        %v2543 = vshrl.u32 %v2542, 7
        %v2544 = vsub.s32 %v2404, %v2543
        %v2545 = vrot.slane %v2367, %v2544
        %v2546 = vlaneseq
        %v2547 = vshrl.u32 %v2546, 7
        %v2548 = vsub.s32 %v2409, %v2547
        %v2549 = vrot.slane %v2370, %v2548
        %v2550 = vsel %vm2414, %v2549, %v2545
        %vm2551 = vcmask 1041409
        %vm2552 = vcmask 1042434
        %v2553 = vsel %vm2552, %v2415, %v2415
        %vm2554 = vcmask 1043459
        %v2555 = vsel %vm2554, %v2415, %v2553
        %vm2556 = vcmask 1044484
        %v2557 = vsel %vm2556, %v2415, %v2555
        %vm2558 = vcmask 1045509
        %v2559 = vsel %vm2558, %v2415, %v2557
        %vm2560 = vcmask 1046534
        %v2561 = vsel %vm2560, %v2415, %v2559
        %vm2562 = vcmask 1047559
        %v2563 = vsel %vm2562, %v2415, %v2561
        %v2564 = vsel %vm2552, %v2424, %v2424
        %v2565 = vsel %vm2554, %v2424, %v2564
        %v2566 = vsel %vm2556, %v2424, %v2565
        %v2567 = vsel %vm2558, %v2424, %v2566
        %v2568 = vsel %vm2560, %v2424, %v2567
        %v2569 = vsel %vm2562, %v2424, %v2568
        %v2570 = vsel %vm2552, %v2433, %v2433
        %v2571 = vsel %vm2554, %v2433, %v2570
        %v2572 = vsel %vm2556, %v2433, %v2571
        %v2573 = vsel %vm2558, %v2433, %v2572
        %v2574 = vsel %vm2560, %v2433, %v2573
        %v2575 = vsel %vm2562, %v2433, %v2574
        %v2576 = vsel %vm2552, %v2442, %v2442
        %v2577 = vsel %vm2554, %v2442, %v2576
        %v2578 = vsel %vm2556, %v2442, %v2577
        %v2579 = vsel %vm2558, %v2442, %v2578
        %v2580 = vsel %vm2560, %v2442, %v2579
        %v2581 = vsel %vm2562, %v2442, %v2580
        %v2582 = vsel %vm2552, %v2451, %v2451
        %v2583 = vsel %vm2554, %v2451, %v2582
        %v2584 = vsel %vm2556, %v2451, %v2583
        %v2585 = vsel %vm2558, %v2451, %v2584
        %v2586 = vsel %vm2560, %v2451, %v2585
        %v2587 = vsel %vm2562, %v2451, %v2586
        %v2588 = vsel %vm2552, %v2460, %v2460
        %v2589 = vsel %vm2554, %v2460, %v2588
        %v2590 = vsel %vm2556, %v2460, %v2589
        %v2591 = vsel %vm2558, %v2460, %v2590
        %v2592 = vsel %vm2560, %v2460, %v2591
        %v2593 = vsel %vm2562, %v2460, %v2592
        %v2594 = vsel %vm2552, %v2469, %v2469
        %v2595 = vsel %vm2554, %v2469, %v2594
        %v2596 = vsel %vm2556, %v2469, %v2595
        %v2597 = vsel %vm2558, %v2469, %v2596
        %v2598 = vsel %vm2560, %v2469, %v2597
        %v2599 = vsel %vm2562, %v2469, %v2598
        %v2600 = vsel %vm2552, %v2478, %v2478
        %v2601 = vsel %vm2554, %v2478, %v2600
        %v2602 = vsel %vm2556, %v2478, %v2601
        %v2603 = vsel %vm2558, %v2478, %v2602
        %v2604 = vsel %vm2560, %v2478, %v2603
        %v2605 = vsel %vm2562, %v2478, %v2604
        %v2606 = vsel %vm2552, %v2487, %v2487
        %v2607 = vsel %vm2554, %v2487, %v2606
        %v2608 = vsel %vm2556, %v2487, %v2607
        %v2609 = vsel %vm2558, %v2487, %v2608
        %v2610 = vsel %vm2560, %v2487, %v2609
        %v2611 = vsel %vm2562, %v2487, %v2610
        %v2612 = vsel %vm2552, %v2496, %v2496
        %v2613 = vsel %vm2554, %v2496, %v2612
        %v2614 = vsel %vm2556, %v2496, %v2613
        %v2615 = vsel %vm2558, %v2496, %v2614
        %v2616 = vsel %vm2560, %v2496, %v2615
        %v2617 = vsel %vm2562, %v2496, %v2616
        %v2618 = vsel %vm2552, %v2505, %v2505
        %v2619 = vsel %vm2554, %v2505, %v2618
        %v2620 = vsel %vm2556, %v2505, %v2619
        %v2621 = vsel %vm2558, %v2505, %v2620
        %v2622 = vsel %vm2560, %v2505, %v2621
        %v2623 = vsel %vm2562, %v2505, %v2622
        %v2624 = vsel %vm2552, %v2514, %v2514
        %v2625 = vsel %vm2554, %v2514, %v2624
        %v2626 = vsel %vm2556, %v2514, %v2625
        %v2627 = vsel %vm2558, %v2514, %v2626
        %v2628 = vsel %vm2560, %v2514, %v2627
        %v2629 = vsel %vm2562, %v2514, %v2628
        %v2630 = vsel %vm2552, %v2523, %v2523
        %v2631 = vsel %vm2554, %v2523, %v2630
        %v2632 = vsel %vm2556, %v2523, %v2631
        %v2633 = vsel %vm2558, %v2523, %v2632
        %v2634 = vsel %vm2560, %v2523, %v2633
        %v2635 = vsel %vm2562, %v2523, %v2634
        %v2636 = vsel %vm2552, %v2532, %v2532
        %v2637 = vsel %vm2554, %v2532, %v2636
        %v2638 = vsel %vm2556, %v2532, %v2637
        %v2639 = vsel %vm2558, %v2532, %v2638
        %v2640 = vsel %vm2560, %v2532, %v2639
        %v2641 = vsel %vm2562, %v2532, %v2640
        %v2642 = vsel %vm2552, %v2541, %v2541
        %v2643 = vsel %vm2554, %v2541, %v2642
        %v2644 = vsel %vm2556, %v2541, %v2643
        %v2645 = vsel %vm2558, %v2541, %v2644
        %v2646 = vsel %vm2560, %v2541, %v2645
        %v2647 = vsel %vm2562, %v2541, %v2646
        %v2648 = vsel %vm2552, %v2550, %v2550
        %v2649 = vsel %vm2554, %v2550, %v2648
        %v2650 = vsel %vm2556, %v2550, %v2649
        %v2651 = vsel %vm2558, %v2550, %v2650
        %v2652 = vsel %vm2560, %v2550, %v2651
        %v2653 = vsel %vm2562, %v2550, %v2652
        %v2670 = vadd.f32 %v2197, %v2563
        %v2671 = vadd.f32 %v2200, %v2569
        %v2672 = vadd.f32 %v2203, %v2575
        %v2673 = vadd.f32 %v2206, %v2581
        %v2674 = vadd.f32 %v2209, %v2587
        %v2675 = vadd.f32 %v2212, %v2593
        %v2676 = vadd.f32 %v2215, %v2599
        %v2677 = vadd.f32 %v2218, %v2605
        %v2678 = vadd.f32 %v2221, %v2611
        %v2679 = vadd.f32 %v2224, %v2617
        %v2680 = vadd.f32 %v2227, %v2623
        %v2681 = vadd.f32 %v2230, %v2629
        %v2682 = vadd.f32 %v2233, %v2635
        %v2683 = vadd.f32 %v2236, %v2641
        %v2684 = vadd.f32 %v2239, %v2647
        %v2685 = vadd.f32 %v2242, %v2653
        %v2686 = vmul.f32 %v991, 2.0
        %v2687 = vmul.f32 %v1070, 2.0
        %v2688 = vmul.f32 %v1149, 2.0
        %v2689 = vmul.f32 %v1228, 2.0
        %v2690 = vmul.f32 %v1307, 2.0
        %v2691 = vmul.f32 %v1386, 2.0
        %v2692 = vmul.f32 %v1465, 2.0
        %v2693 = vmul.f32 %v1544, 2.0
        %v2694 = vmul.f32 %v1623, 2.0
        %v2695 = vmul.f32 %v1702, 2.0
        %v2696 = vmul.f32 %v1781, 2.0
        %v2697 = vmul.f32 %v1860, 2.0
        %v2698 = vmul.f32 %v1939, 2.0
        %v2699 = vmul.f32 %v2018, 2.0
        %v2700 = vmul.f32 %v2097, 2.0
        %v2701 = vmul.f32 %v2176, 2.0
        %v2702 = vsub.f32 %v2670, %v2686
        %v2703 = vsub.f32 %v2671, %v2687
        %v2704 = vsub.f32 %v2672, %v2688
        %v2705 = vsub.f32 %v2673, %v2689
        %v2706 = vsub.f32 %v2674, %v2690
        %v2707 = vsub.f32 %v2675, %v2691
        %v2708 = vsub.f32 %v2676, %v2692
        %v2709 = vsub.f32 %v2677, %v2693
        %v2710 = vsub.f32 %v2678, %v2694
        %v2711 = vsub.f32 %v2679, %v2695
        %v2712 = vsub.f32 %v2680, %v2696
        %v2713 = vsub.f32 %v2681, %v2697
        %v2714 = vsub.f32 %v2682, %v2698
        %v2715 = vsub.f32 %v2683, %v2699
        %v2716 = vsub.f32 %v2684, %v2700
        %v2717 = vsub.f32 %v2685, %v2701
        %v2718 = vmax.f32 %v2702, 0.0
        %v2719 = vmax.f32 %v2703, 0.0
        %v2720 = vmax.f32 %v2704, 0.0
        %v2721 = vmax.f32 %v2705, 0.0
        %v2722 = vmax.f32 %v2706, 0.0
        %v2723 = vmax.f32 %v2707, 0.0
        %v2724 = vmax.f32 %v2708, 0.0
        %v2725 = vmax.f32 %v2709, 0.0
        %v2726 = vmax.f32 %v2710, 0.0
        %v2727 = vmax.f32 %v2711, 0.0
        %v2728 = vmax.f32 %v2712, 0.0
        %v2729 = vmax.f32 %v2713, 0.0
        %v2730 = vmax.f32 %v2714, 0.0
        %v2731 = vmax.f32 %v2715, 0.0
        %v2732 = vmax.f32 %v2716, 0.0
        %v2733 = vmax.f32 %v2717, 0.0
        %v2734 = vadd.f32 %v2718, 1e-08
        %v2735 = vadd.f32 %v2719, 1e-08
        %v2736 = vadd.f32 %v2720, 1e-08
        %v2737 = vadd.f32 %v2721, 1e-08
        %v2738 = vadd.f32 %v2722, 1e-08
        %v2739 = vadd.f32 %v2723, 1e-08
        %v2740 = vadd.f32 %v2724, 1e-08
        %v2741 = vadd.f32 %v2725, 1e-08
        %v2742 = vadd.f32 %v2726, 1e-08
        %v2743 = vadd.f32 %v2727, 1e-08
        %v2744 = vadd.f32 %v2728, 1e-08
        %v2745 = vadd.f32 %v2729, 1e-08
        %v2746 = vadd.f32 %v2730, 1e-08
        %v2747 = vadd.f32 %v2731, 1e-08
        %v2748 = vadd.f32 %v2732, 1e-08
        %v2749 = vadd.f32 %v2733, 1e-08
        %v2750 = vrsqrt.pop %v2734
        %v2751 = vmul.f32 %v2734, %v2750
        %vm2752 = vcmp.eq.f32.partialorder %v2734, inf
        %v2753 = vsel %vm2752, %v2734, %v2751
        %vm2754 = vcmp.eq.f32.partialorder %v2734, 0.0
        %v2755 = vand.u32 %v2734, 2147483648
        %v2756 = vsel %vm2754, %v2755, %v2753
        %v2757 = vrsqrt.pop %v2735
        %v2758 = vmul.f32 %v2735, %v2757
        %vm2759 = vcmp.eq.f32.partialorder %v2735, inf
        %v2760 = vsel %vm2759, %v2735, %v2758
        %vm2761 = vcmp.eq.f32.partialorder %v2735, 0.0
        %v2762 = vand.u32 %v2735, 2147483648
        %v2763 = vsel %vm2761, %v2762, %v2760
        %v2764 = vrsqrt.pop %v2736
        %v2765 = vmul.f32 %v2736, %v2764
        %vm2766 = vcmp.eq.f32.partialorder %v2736, inf
        %v2767 = vsel %vm2766, %v2736, %v2765
        %vm2768 = vcmp.eq.f32.partialorder %v2736, 0.0
        %v2769 = vand.u32 %v2736, 2147483648
        %v2770 = vsel %vm2768, %v2769, %v2767
        %v2771 = vrsqrt.pop %v2737
        %v2772 = vmul.f32 %v2737, %v2771
        %vm2773 = vcmp.eq.f32.partialorder %v2737, inf
        %v2774 = vsel %vm2773, %v2737, %v2772
        %vm2775 = vcmp.eq.f32.partialorder %v2737, 0.0
        %v2776 = vand.u32 %v2737, 2147483648
        %v2777 = vsel %vm2775, %v2776, %v2774
        %v2778 = vrsqrt.pop %v2738
        %v2779 = vmul.f32 %v2738, %v2778
        %vm2780 = vcmp.eq.f32.partialorder %v2738, inf
        %v2781 = vsel %vm2780, %v2738, %v2779
        %vm2782 = vcmp.eq.f32.partialorder %v2738, 0.0
        %v2783 = vand.u32 %v2738, 2147483648
        %v2784 = vsel %vm2782, %v2783, %v2781
        %v2785 = vrsqrt.pop %v2739
        %v2786 = vmul.f32 %v2739, %v2785
        %vm2787 = vcmp.eq.f32.partialorder %v2739, inf
        %v2788 = vsel %vm2787, %v2739, %v2786
        %vm2789 = vcmp.eq.f32.partialorder %v2739, 0.0
        %v2790 = vand.u32 %v2739, 2147483648
        %v2791 = vsel %vm2789, %v2790, %v2788
        %v2792 = vrsqrt.pop %v2740
        %v2793 = vmul.f32 %v2740, %v2792
        %vm2794 = vcmp.eq.f32.partialorder %v2740, inf
        %v2795 = vsel %vm2794, %v2740, %v2793
        %vm2796 = vcmp.eq.f32.partialorder %v2740, 0.0
        %v2797 = vand.u32 %v2740, 2147483648
        %v2798 = vsel %vm2796, %v2797, %v2795
        %v2799 = vrsqrt.pop %v2741
        %v2800 = vmul.f32 %v2741, %v2799
        %vm2801 = vcmp.eq.f32.partialorder %v2741, inf
        %v2802 = vsel %vm2801, %v2741, %v2800
        %vm2803 = vcmp.eq.f32.partialorder %v2741, 0.0
        %v2804 = vand.u32 %v2741, 2147483648
        %v2805 = vsel %vm2803, %v2804, %v2802
        %v2806 = vrsqrt.pop %v2742
        %v2807 = vmul.f32 %v2742, %v2806
        %vm2808 = vcmp.eq.f32.partialorder %v2742, inf
        %v2809 = vsel %vm2808, %v2742, %v2807
        %vm2810 = vcmp.eq.f32.partialorder %v2742, 0.0
        %v2811 = vand.u32 %v2742, 2147483648
        %v2812 = vsel %vm2810, %v2811, %v2809
        %v2813 = vrsqrt.pop %v2743
        %v2814 = vmul.f32 %v2743, %v2813
        %vm2815 = vcmp.eq.f32.partialorder %v2743, inf
        %v2816 = vsel %vm2815, %v2743, %v2814
        %vm2817 = vcmp.eq.f32.partialorder %v2743, 0.0
        %v2818 = vand.u32 %v2743, 2147483648
        %v2819 = vsel %vm2817, %v2818, %v2816
        %v2820 = vrsqrt.pop %v2744
        %v2821 = vmul.f32 %v2744, %v2820
        %vm2822 = vcmp.eq.f32.partialorder %v2744, inf
        %v2823 = vsel %vm2822, %v2744, %v2821
        %vm2824 = vcmp.eq.f32.partialorder %v2744, 0.0
        %v2825 = vand.u32 %v2744, 2147483648
        %v2826 = vsel %vm2824, %v2825, %v2823
        %v2827 = vrsqrt.pop %v2745
        %v2828 = vmul.f32 %v2745, %v2827
        %vm2829 = vcmp.eq.f32.partialorder %v2745, inf
        %v2830 = vsel %vm2829, %v2745, %v2828
        %vm2831 = vcmp.eq.f32.partialorder %v2745, 0.0
        %v2832 = vand.u32 %v2745, 2147483648
        %v2833 = vsel %vm2831, %v2832, %v2830
        %v2834 = vrsqrt.pop %v2746
        %v2835 = vmul.f32 %v2746, %v2834
        %vm2836 = vcmp.eq.f32.partialorder %v2746, inf
        %v2837 = vsel %vm2836, %v2746, %v2835
        %vm2838 = vcmp.eq.f32.partialorder %v2746, 0.0
        %v2839 = vand.u32 %v2746, 2147483648
        %v2840 = vsel %vm2838, %v2839, %v2837
        %v2841 = vrsqrt.pop %v2747
        %v2842 = vmul.f32 %v2747, %v2841
        %vm2843 = vcmp.eq.f32.partialorder %v2747, inf
        %v2844 = vsel %vm2843, %v2747, %v2842
        %vm2845 = vcmp.eq.f32.partialorder %v2747, 0.0
        %v2846 = vand.u32 %v2747, 2147483648
        %v2847 = vsel %vm2845, %v2846, %v2844
        %v2848 = vrsqrt.pop %v2748
        %v2849 = vmul.f32 %v2748, %v2848
        %vm2850 = vcmp.eq.f32.partialorder %v2748, inf
        %v2851 = vsel %vm2850, %v2748, %v2849
        %vm2852 = vcmp.eq.f32.partialorder %v2748, 0.0
        %v2853 = vand.u32 %v2748, 2147483648
        %v2854 = vsel %vm2852, %v2853, %v2851
        %v2855 = vrsqrt.pop %v2749
        %v2856 = vmul.f32 %v2749, %v2855
        %vm2857 = vcmp.eq.f32.partialorder %v2749, inf
        %v2858 = vsel %vm2857, %v2749, %v2856
        %vm2859 = vcmp.eq.f32.partialorder %v2749, 0.0
        %v2860 = vand.u32 %v2749, 2147483648
        %v2861 = vsel %vm2859, %v2860, %v2858
        %vm2862 = vcmask 130048
        %v2863 = vsel %vm2862, %v2756, 0.0
        %v2864 = vsel %vm2862, %v2763, 0.0
        %v2865 = vadd.f32 %v2863, %v2864
        %v2866 = vsel %vm2862, %v2770, 0.0
        %v2867 = vadd.f32 %v2865, %v2866
        %v2868 = vsel %vm2862, %v2777, 0.0
        %v2869 = vadd.f32 %v2867, %v2868
        %v2870 = vsel %vm2862, %v2784, 0.0
        %v2871 = vsel %vm2862, %v2791, 0.0
        %v2872 = vadd.f32 %v2870, %v2871
        %v2873 = vsel %vm2862, %v2798, 0.0
        %v2874 = vadd.f32 %v2872, %v2873
        %v2875 = vsel %vm2862, %v2805, 0.0
        %v2876 = vadd.f32 %v2874, %v2875
        %v2877 = vsel %vm2862, %v2812, 0.0
        %v2878 = vsel %vm2862, %v2819, 0.0
        %v2879 = vadd.f32 %v2877, %v2878
        %v2880 = vsel %vm2862, %v2826, 0.0
        %v2881 = vadd.f32 %v2879, %v2880
        %v2882 = vsel %vm2862, %v2833, 0.0
        %v2883 = vadd.f32 %v2881, %v2882
        %v2884 = vsel %vm2862, %v2840, 0.0
        %v2885 = vsel %vm2862, %v2847, 0.0
        %v2886 = vadd.f32 %v2884, %v2885
        %v2887 = vsel %vm2862, %v2854, 0.0
        %v2888 = vadd.f32 %v2886, %v2887
        %v2889 = vsel %vm2862, %v2861, 0.0
        %v2890 = vadd.f32 %v2888, %v2889
        %v2891 = vld [vmem:[%s8] sm:$0xf]
        %v2892 = vpack.c.bf16 %v2891, %v2891
        %v2897 = vunpack.c.l.b16 %v624
        %v2898 = vunpack.c.l.b16 %v625
        %v2899 = vunpack.c.l.b16 %v626
        %v2900 = vunpack.c.l.b16 %v627
        %v2901 = vpack.c.b16 %v2898, %v2897
        %v2902 = vpack.c.b16 %v2900, %v2899
        %vm2904 = vcmask 252928
        %v2906 = vsel %vm2904, %v2892, 0
        %vm2908 = vcmask 1046528
        %vm2909 = vcmask 1047552
        %v2910 = vsel %vm2908, 4294967295, 65535
        %v2911 = vsel %vm2909, %v2910, 0
        %v2913 = vand.u32 %v2902, %v2911
        %2915 = vmatprep.subr.bf16.mxu0 0
        %2916 = vmatpush1.bf16.msra.mxu0 %v2901
        %2917 = vmatprep.subr.bf16.mxu0 0
        %2918 = vmatpush1.bf16.msra.mxu0 %v2913
        %2919 = vmatprep.subr.bf16.mxu0 0
        %2920 = vmatpush1.bf16.msra.mxu0 0
        %2921 = vmatprep.subr.bf16.mxu0 0
        %2922 = vmatpush1.bf16.msra.mxu0 0
        %2923 = vmatprep.subr.bf16.mxu0 0
        %2924 = vmatpush1.bf16.msra.mxu0 0
        %2925 = vmatprep.subr.bf16.mxu0 0
        %2926 = vmatpush1.bf16.msra.mxu0 0
        %2927 = vmatprep.subr.bf16.mxu0 0
        %2928 = vmatpush1.bf16.msra.mxu0 0
        %2929 = vmatprep.subr.bf16.mxu0 0
        %2930 = vmatpush1.bf16.msra.mxu0 0
        %2931 = vmatprep.subr.bf16.mxu0 0
        %2932 = vmatpush1.bf16.msra.mxu0 0
        %2933 = vmatprep.subr.bf16.mxu0 0
        %2934 = vmatpush1.bf16.msra.mxu0 0
        %2935 = vmatprep.subr.bf16.mxu0 0
        %2936 = vmatpush1.bf16.msra.mxu0 0
        %2937 = vmatprep.subr.bf16.mxu0 0
        %2938 = vmatpush1.bf16.msra.mxu0 0
        %2939 = vmatprep.subr.bf16.mxu0 0
        %2940 = vmatpush1.bf16.msra.mxu0 0
        %2941 = vmatprep.subr.bf16.mxu0 0
        %2942 = vmatpush1.bf16.msra.mxu0 0
        %2943 = vmatprep.subr.bf16.mxu0 0
        %2944 = vmatpush1.bf16.msra.mxu0 0
        %2945 = vmatprep.subr.bf16.mxu0 0
        %2946 = vmatpush1.bf16.msra.mxu0 0
        %2947 = vmatprep.mubr.bf16.mxu0 0
        %2948 = vmatmul.mubr.bf16.gmra.mrb[0].mxu0 %v2906
        %v2949 = vpop.f32.mrb[0].mxu0
        %v2950 = vadd.f32 0.0, %v2949
        %v2951 = vpop.f32.mrb[0].mxu0
        %v2952 = vpop.f32.mrb[0].mxu0
        %v2953 = vpop.f32.mrb[0].mxu0
        %2954 = vdwg.mxu0
        %v2959 = vunpack.c.l.b16 %v628
        %v2960 = vunpack.c.l.b16 %v629
        %v2961 = vunpack.c.l.b16 %v630
        %v2962 = vunpack.c.l.b16 %v631
        %v2963 = vpack.c.b16 %v2960, %v2959
        %v2964 = vpack.c.b16 %v2962, %v2961
        %v2967 = vand.u32 %v2964, %v2911
        %2969 = vmatprep.subr.bf16.mxu0 0
        %2970 = vmatpush1.bf16.msra.mxu0 %v2963
        %2971 = vmatprep.subr.bf16.mxu0 0
        %2972 = vmatpush1.bf16.msra.mxu0 %v2967
        %2973 = vmatprep.subr.bf16.mxu0 0
        %2974 = vmatpush1.bf16.msra.mxu0 0
        %2975 = vmatprep.subr.bf16.mxu0 0
        %2976 = vmatpush1.bf16.msra.mxu0 0
        %2977 = vmatprep.subr.bf16.mxu0 0
        %2978 = vmatpush1.bf16.msra.mxu0 0
        %2979 = vmatprep.subr.bf16.mxu0 0
        %2980 = vmatpush1.bf16.msra.mxu0 0
        %2981 = vmatprep.subr.bf16.mxu0 0
        %2982 = vmatpush1.bf16.msra.mxu0 0
        %2983 = vmatprep.subr.bf16.mxu0 0
        %2984 = vmatpush1.bf16.msra.mxu0 0
        %2985 = vmatprep.subr.bf16.mxu0 0
        %2986 = vmatpush1.bf16.msra.mxu0 0
        %2987 = vmatprep.subr.bf16.mxu0 0
        %2988 = vmatpush1.bf16.msra.mxu0 0
        %2989 = vmatprep.subr.bf16.mxu0 0
        %2990 = vmatpush1.bf16.msra.mxu0 0
        %2991 = vmatprep.subr.bf16.mxu0 0
        %2992 = vmatpush1.bf16.msra.mxu0 0
        %2993 = vmatprep.subr.bf16.mxu0 0
        %2994 = vmatpush1.bf16.msra.mxu0 0
        %2995 = vmatprep.subr.bf16.mxu0 0
        %2996 = vmatpush1.bf16.msra.mxu0 0
        %2997 = vmatprep.subr.bf16.mxu0 0
        %2998 = vmatpush1.bf16.msra.mxu0 0
        %2999 = vmatprep.subr.bf16.mxu0 0
        %3000 = vmatpush1.bf16.msra.mxu0 0
        %3001 = vmatprep.mubr.bf16.mxu0 0
        %3002 = vmatmul.mubr.bf16.gmra.mrb[0].mxu0 %v2906
        %v3003 = vpop.f32.mrb[0].mxu0
        %v3004 = vadd.f32 0.0, %v3003
        %v3005 = vpop.f32.mrb[0].mxu0
        %v3006 = vpop.f32.mrb[0].mxu0
        %v3007 = vpop.f32.mrb[0].mxu0
        %3008 = vdwg.mxu0
        %v3013 = vunpack.c.l.b16 %v632
        %v3014 = vunpack.c.l.b16 %v633
        %v3015 = vunpack.c.l.b16 %v634
        %v3016 = vunpack.c.l.b16 %v635
        %v3017 = vpack.c.b16 %v3014, %v3013
        %v3018 = vpack.c.b16 %v3016, %v3015
        %v3021 = vand.u32 %v3018, %v2911
        %3023 = vmatprep.subr.bf16.mxu0 0
        %3024 = vmatpush1.bf16.msra.mxu0 %v3017
        %3025 = vmatprep.subr.bf16.mxu0 0
        %3026 = vmatpush1.bf16.msra.mxu0 %v3021
        %3027 = vmatprep.subr.bf16.mxu0 0
        %3028 = vmatpush1.bf16.msra.mxu0 0
        %3029 = vmatprep.subr.bf16.mxu0 0
        %3030 = vmatpush1.bf16.msra.mxu0 0
        %3031 = vmatprep.subr.bf16.mxu0 0
        %3032 = vmatpush1.bf16.msra.mxu0 0
        %3033 = vmatprep.subr.bf16.mxu0 0
        %3034 = vmatpush1.bf16.msra.mxu0 0
        %3035 = vmatprep.subr.bf16.mxu0 0
        %3036 = vmatpush1.bf16.msra.mxu0 0
        %3037 = vmatprep.subr.bf16.mxu0 0
        %3038 = vmatpush1.bf16.msra.mxu0 0
        %3039 = vmatprep.subr.bf16.mxu0 0
        %3040 = vmatpush1.bf16.msra.mxu0 0
        %3041 = vmatprep.subr.bf16.mxu0 0
        %3042 = vmatpush1.bf16.msra.mxu0 0
        %3043 = vmatprep.subr.bf16.mxu0 0
        %3044 = vmatpush1.bf16.msra.mxu0 0
        %3045 = vmatprep.subr.bf16.mxu0 0
        %3046 = vmatpush1.bf16.msra.mxu0 0
        %3047 = vmatprep.subr.bf16.mxu0 0
        %3048 = vmatpush1.bf16.msra.mxu0 0
        %3049 = vmatprep.subr.bf16.mxu0 0
        %3050 = vmatpush1.bf16.msra.mxu0 0
        %3051 = vmatprep.subr.bf16.mxu0 0
        %3052 = vmatpush1.bf16.msra.mxu0 0
        %3053 = vmatprep.subr.bf16.mxu0 0
        %3054 = vmatpush1.bf16.msra.mxu0 0
        %3055 = vmatprep.mubr.bf16.mxu0 0
        %3056 = vmatmul.mubr.bf16.gmra.mrb[0].mxu0 %v2906
        %v3057 = vpop.f32.mrb[0].mxu0
        %v3058 = vadd.f32 0.0, %v3057
        %v3059 = vpop.f32.mrb[0].mxu0
        %v3060 = vpop.f32.mrb[0].mxu0
        %v3061 = vpop.f32.mrb[0].mxu0
        %3062 = vdwg.mxu0
        %v3067 = vunpack.c.l.b16 %v636
        %v3068 = vunpack.c.l.b16 %v637
        %v3069 = vunpack.c.l.b16 %v638
        %v3070 = vunpack.c.l.b16 %v639
        %v3071 = vpack.c.b16 %v3068, %v3067
        %v3072 = vpack.c.b16 %v3070, %v3069
        %v3075 = vand.u32 %v3072, %v2911
        %3077 = vmatprep.subr.bf16.mxu0 0
        %3078 = vmatpush1.bf16.msra.mxu0 %v3071
        %3079 = vmatprep.subr.bf16.mxu0 0
        %3080 = vmatpush1.bf16.msra.mxu0 %v3075
        %3081 = vmatprep.subr.bf16.mxu0 0
        %3082 = vmatpush1.bf16.msra.mxu0 0
        %3083 = vmatprep.subr.bf16.mxu0 0
        %3084 = vmatpush1.bf16.msra.mxu0 0
        %3085 = vmatprep.subr.bf16.mxu0 0
        %3086 = vmatpush1.bf16.msra.mxu0 0
        %3087 = vmatprep.subr.bf16.mxu0 0
        %3088 = vmatpush1.bf16.msra.mxu0 0
        %3089 = vmatprep.subr.bf16.mxu0 0
        %3090 = vmatpush1.bf16.msra.mxu0 0
        %3091 = vmatprep.subr.bf16.mxu0 0
        %3092 = vmatpush1.bf16.msra.mxu0 0
        %3093 = vmatprep.subr.bf16.mxu0 0
        %3094 = vmatpush1.bf16.msra.mxu0 0
        %3095 = vmatprep.subr.bf16.mxu0 0
        %3096 = vmatpush1.bf16.msra.mxu0 0
        %3097 = vmatprep.subr.bf16.mxu0 0
        %3098 = vmatpush1.bf16.msra.mxu0 0
        %3099 = vmatprep.subr.bf16.mxu0 0
        %3100 = vmatpush1.bf16.msra.mxu0 0
        %3101 = vmatprep.subr.bf16.mxu0 0
        %3102 = vmatpush1.bf16.msra.mxu0 0
        %3103 = vmatprep.subr.bf16.mxu0 0
        %3104 = vmatpush1.bf16.msra.mxu0 0
        %3105 = vmatprep.subr.bf16.mxu0 0
        %3106 = vmatpush1.bf16.msra.mxu0 0
        %3107 = vmatprep.subr.bf16.mxu0 0
        %3108 = vmatpush1.bf16.msra.mxu0 0
        %3109 = vmatprep.mubr.bf16.mxu0 0
        %3110 = vmatmul.mubr.bf16.gmra.mrb[0].mxu0 %v2906
        %v3111 = vpop.f32.mrb[0].mxu0
        %v3112 = vadd.f32 0.0, %v3111
        %v3113 = vpop.f32.mrb[0].mxu0
        %v3114 = vpop.f32.mrb[0].mxu0
        %v3115 = vpop.f32.mrb[0].mxu0
        %3116 = vdwg.mxu0
        %v3121 = vunpack.c.l.b16 %v640
        %v3122 = vunpack.c.l.b16 %v641
        %v3123 = vunpack.c.l.b16 %v642
        %v3124 = vunpack.c.l.b16 %v643
        %v3125 = vpack.c.b16 %v3122, %v3121
        %v3126 = vpack.c.b16 %v3124, %v3123
        %v3129 = vand.u32 %v3126, %v2911
        %3131 = vmatprep.subr.bf16.mxu0 0
        %3132 = vmatpush1.bf16.msra.mxu0 %v3125
        %3133 = vmatprep.subr.bf16.mxu0 0
        %3134 = vmatpush1.bf16.msra.mxu0 %v3129
        %3135 = vmatprep.subr.bf16.mxu0 0
        %3136 = vmatpush1.bf16.msra.mxu0 0
        %3137 = vmatprep.subr.bf16.mxu0 0
        %3138 = vmatpush1.bf16.msra.mxu0 0
        %3139 = vmatprep.subr.bf16.mxu0 0
        %3140 = vmatpush1.bf16.msra.mxu0 0
        %3141 = vmatprep.subr.bf16.mxu0 0
        %3142 = vmatpush1.bf16.msra.mxu0 0
        %3143 = vmatprep.subr.bf16.mxu0 0
        %3144 = vmatpush1.bf16.msra.mxu0 0
        %3145 = vmatprep.subr.bf16.mxu0 0
        %3146 = vmatpush1.bf16.msra.mxu0 0
        %3147 = vmatprep.subr.bf16.mxu0 0
        %3148 = vmatpush1.bf16.msra.mxu0 0
        %3149 = vmatprep.subr.bf16.mxu0 0
        %3150 = vmatpush1.bf16.msra.mxu0 0
        %3151 = vmatprep.subr.bf16.mxu0 0
        %3152 = vmatpush1.bf16.msra.mxu0 0
        %3153 = vmatprep.subr.bf16.mxu0 0
        %3154 = vmatpush1.bf16.msra.mxu0 0
        %3155 = vmatprep.subr.bf16.mxu0 0
        %3156 = vmatpush1.bf16.msra.mxu0 0
        %3157 = vmatprep.subr.bf16.mxu0 0
        %3158 = vmatpush1.bf16.msra.mxu0 0
        %3159 = vmatprep.subr.bf16.mxu0 0
        %3160 = vmatpush1.bf16.msra.mxu0 0
        %3161 = vmatprep.subr.bf16.mxu0 0
        %3162 = vmatpush1.bf16.msra.mxu0 0
        %3163 = vmatprep.mubr.bf16.mxu0 0
        %3164 = vmatmul.mubr.bf16.gmra.mrb[0].mxu0 %v2906
        %v3165 = vpop.f32.mrb[0].mxu0
        %v3166 = vadd.f32 0.0, %v3165
        %v3167 = vpop.f32.mrb[0].mxu0
        %v3168 = vpop.f32.mrb[0].mxu0
        %v3169 = vpop.f32.mrb[0].mxu0
        %3170 = vdwg.mxu0
        %v3175 = vunpack.c.l.b16 %v644
        %v3176 = vunpack.c.l.b16 %v645
        %v3177 = vunpack.c.l.b16 %v646
        %v3178 = vunpack.c.l.b16 %v647
        %v3179 = vpack.c.b16 %v3176, %v3175
        %v3180 = vpack.c.b16 %v3178, %v3177
        %v3183 = vand.u32 %v3180, %v2911
        %3185 = vmatprep.subr.bf16.mxu0 0
        %3186 = vmatpush1.bf16.msra.mxu0 %v3179
        %3187 = vmatprep.subr.bf16.mxu0 0
        %3188 = vmatpush1.bf16.msra.mxu0 %v3183
        %3189 = vmatprep.subr.bf16.mxu0 0
        %3190 = vmatpush1.bf16.msra.mxu0 0
        %3191 = vmatprep.subr.bf16.mxu0 0
        %3192 = vmatpush1.bf16.msra.mxu0 0
        %3193 = vmatprep.subr.bf16.mxu0 0
        %3194 = vmatpush1.bf16.msra.mxu0 0
        %3195 = vmatprep.subr.bf16.mxu0 0
        %3196 = vmatpush1.bf16.msra.mxu0 0
        %3197 = vmatprep.subr.bf16.mxu0 0
        %3198 = vmatpush1.bf16.msra.mxu0 0
        %3199 = vmatprep.subr.bf16.mxu0 0
        %3200 = vmatpush1.bf16.msra.mxu0 0
        %3201 = vmatprep.subr.bf16.mxu0 0
        %3202 = vmatpush1.bf16.msra.mxu0 0
        %3203 = vmatprep.subr.bf16.mxu0 0
        %3204 = vmatpush1.bf16.msra.mxu0 0
        %3205 = vmatprep.subr.bf16.mxu0 0
        %3206 = vmatpush1.bf16.msra.mxu0 0
        %3207 = vmatprep.subr.bf16.mxu0 0
        %3208 = vmatpush1.bf16.msra.mxu0 0
        %3209 = vmatprep.subr.bf16.mxu0 0
        %3210 = vmatpush1.bf16.msra.mxu0 0
        %3211 = vmatprep.subr.bf16.mxu0 0
        %3212 = vmatpush1.bf16.msra.mxu0 0
        %3213 = vmatprep.subr.bf16.mxu0 0
        %3214 = vmatpush1.bf16.msra.mxu0 0
        %3215 = vmatprep.subr.bf16.mxu0 0
        %3216 = vmatpush1.bf16.msra.mxu0 0
        %3217 = vmatprep.mubr.bf16.mxu0 0
        %3218 = vmatmul.mubr.bf16.gmra.mrb[0].mxu0 %v2906
        %v3219 = vpop.f32.mrb[0].mxu0
        %v3220 = vadd.f32 0.0, %v3219
        %v3221 = vpop.f32.mrb[0].mxu0
        %v3222 = vpop.f32.mrb[0].mxu0
        %v3223 = vpop.f32.mrb[0].mxu0
        %3224 = vdwg.mxu0
        %v3229 = vunpack.c.l.b16 %v648
        %v3230 = vunpack.c.l.b16 %v649
        %v3231 = vunpack.c.l.b16 %v650
        %v3232 = vunpack.c.l.b16 %v651
        %v3233 = vpack.c.b16 %v3230, %v3229
        %v3234 = vpack.c.b16 %v3232, %v3231
        %v3237 = vand.u32 %v3234, %v2911
        %3239 = vmatprep.subr.bf16.mxu0 0
        %3240 = vmatpush1.bf16.msra.mxu0 %v3233
        %3241 = vmatprep.subr.bf16.mxu0 0
        %3242 = vmatpush1.bf16.msra.mxu0 %v3237
        %3243 = vmatprep.subr.bf16.mxu0 0
        %3244 = vmatpush1.bf16.msra.mxu0 0
        %3245 = vmatprep.subr.bf16.mxu0 0
        %3246 = vmatpush1.bf16.msra.mxu0 0
        %3247 = vmatprep.subr.bf16.mxu0 0
        %3248 = vmatpush1.bf16.msra.mxu0 0
        %3249 = vmatprep.subr.bf16.mxu0 0
        %3250 = vmatpush1.bf16.msra.mxu0 0
        %3251 = vmatprep.subr.bf16.mxu0 0
        %3252 = vmatpush1.bf16.msra.mxu0 0
        %3253 = vmatprep.subr.bf16.mxu0 0
        %3254 = vmatpush1.bf16.msra.mxu0 0
        %3255 = vmatprep.subr.bf16.mxu0 0
        %3256 = vmatpush1.bf16.msra.mxu0 0
        %3257 = vmatprep.subr.bf16.mxu0 0
        %3258 = vmatpush1.bf16.msra.mxu0 0
        %3259 = vmatprep.subr.bf16.mxu0 0
        %3260 = vmatpush1.bf16.msra.mxu0 0
        %3261 = vmatprep.subr.bf16.mxu0 0
        %3262 = vmatpush1.bf16.msra.mxu0 0
        %3263 = vmatprep.subr.bf16.mxu0 0
        %3264 = vmatpush1.bf16.msra.mxu0 0
        %3265 = vmatprep.subr.bf16.mxu0 0
        %3266 = vmatpush1.bf16.msra.mxu0 0
        %3267 = vmatprep.subr.bf16.mxu0 0
        %3268 = vmatpush1.bf16.msra.mxu0 0
        %3269 = vmatprep.subr.bf16.mxu0 0
        %3270 = vmatpush1.bf16.msra.mxu0 0
        %3271 = vmatprep.mubr.bf16.mxu0 0
        %3272 = vmatmul.mubr.bf16.gmra.mrb[0].mxu0 %v2906
        %v3273 = vpop.f32.mrb[0].mxu0
        %v3274 = vadd.f32 0.0, %v3273
        %v3275 = vpop.f32.mrb[0].mxu0
        %v3276 = vpop.f32.mrb[0].mxu0
        %v3277 = vpop.f32.mrb[0].mxu0
        %3278 = vdwg.mxu0
        %v3283 = vunpack.c.l.b16 %v652
        %v3284 = vunpack.c.l.b16 %v653
        %v3285 = vunpack.c.l.b16 %v654
        %v3286 = vunpack.c.l.b16 %v655
        %v3287 = vpack.c.b16 %v3284, %v3283
        %v3288 = vpack.c.b16 %v3286, %v3285
        %v3291 = vand.u32 %v3288, %v2911
        %3293 = vmatprep.subr.bf16.mxu0 0
        %3294 = vmatpush1.bf16.msra.mxu0 %v3287
        %3295 = vmatprep.subr.bf16.mxu0 0
        %3296 = vmatpush1.bf16.msra.mxu0 %v3291
        %3297 = vmatprep.subr.bf16.mxu0 0
        %3298 = vmatpush1.bf16.msra.mxu0 0
        %3299 = vmatprep.subr.bf16.mxu0 0
        %3300 = vmatpush1.bf16.msra.mxu0 0
        %3301 = vmatprep.subr.bf16.mxu0 0
        %3302 = vmatpush1.bf16.msra.mxu0 0
        %3303 = vmatprep.subr.bf16.mxu0 0
        %3304 = vmatpush1.bf16.msra.mxu0 0
        %3305 = vmatprep.subr.bf16.mxu0 0
        %3306 = vmatpush1.bf16.msra.mxu0 0
        %3307 = vmatprep.subr.bf16.mxu0 0
        %3308 = vmatpush1.bf16.msra.mxu0 0
        %3309 = vmatprep.subr.bf16.mxu0 0
        %3310 = vmatpush1.bf16.msra.mxu0 0
        %3311 = vmatprep.subr.bf16.mxu0 0
        %3312 = vmatpush1.bf16.msra.mxu0 0
        %3313 = vmatprep.subr.bf16.mxu0 0
        %3314 = vmatpush1.bf16.msra.mxu0 0
        %3315 = vmatprep.subr.bf16.mxu0 0
        %3316 = vmatpush1.bf16.msra.mxu0 0
        %3317 = vmatprep.subr.bf16.mxu0 0
        %3318 = vmatpush1.bf16.msra.mxu0 0
        %3319 = vmatprep.subr.bf16.mxu0 0
        %3320 = vmatpush1.bf16.msra.mxu0 0
        %3321 = vmatprep.subr.bf16.mxu0 0
        %3322 = vmatpush1.bf16.msra.mxu0 0
        %3323 = vmatprep.subr.bf16.mxu0 0
        %3324 = vmatpush1.bf16.msra.mxu0 0
        %3325 = vmatprep.mubr.bf16.mxu0 0
        %3326 = vmatmul.mubr.bf16.gmra.mrb[0].mxu0 %v2906
        %v3327 = vpop.f32.mrb[0].mxu0
        %v3328 = vadd.f32 0.0, %v3327
        %v3329 = vpop.f32.mrb[0].mxu0
        %v3330 = vpop.f32.mrb[0].mxu0
        %v3331 = vpop.f32.mrb[0].mxu0
        %3332 = vdwg.mxu0
        %v3333 = vcombine.low %v2950, %v3058
        %v3335 = vunpack.c.l.s4 1983009808
        %v3336 = vunpack.c.0.s8 %v3335
        %v3337 = vlaneseq
        %v3338 = vshrl.u32 %v3337, 7
        %v3339 = vsub.s32 %v3336, %v3338
        %v3340 = vrot.slane %v3333, %v3339
        %v3341 = vcombine.low %v3004, %v3112
        %v3343 = vunpack.c.l.s4 1983009808
        %v3344 = vunpack.c.0.s8 %v3343
        %v3345 = vlaneseq
        %v3346 = vshrl.u32 %v3345, 7
        %v3347 = vsub.s32 %v3344, %v3346
        %v3348 = vrot.slane %v3341, %v3347
        %v3349 = vcombine.low %v3166, %v3274
        %v3351 = vunpack.c.l.s4 1983009808
        %v3352 = vunpack.c.0.s8 %v3351
        %v3353 = vlaneseq
        %v3354 = vshrl.u32 %v3353, 7
        %v3355 = vsub.s32 %v3352, %v3354
        %v3356 = vrot.slane %v3349, %v3355
        %v3357 = vcombine.low %v3220, %v3328
        %v3359 = vunpack.c.l.s4 1983009808
        %v3360 = vunpack.c.0.s8 %v3359
        %v3361 = vlaneseq
        %v3362 = vshrl.u32 %v3361, 7
        %v3363 = vsub.s32 %v3360, %v3362
        %v3364 = vrot.slane %v3357, %v3363
        %v3365 = vcombine.low %v3340, %v3348
        %v3366 = vcombine.high %v3340, %v3348
        %v3368 = vunpack.c.l.s4 1934713408
        %v3369 = vunpack.c.0.s8 %v3368
        %v3370 = vlaneseq
        %v3371 = vshrl.u32 %v3370, 7
        %v3372 = vsub.s32 %v3369, %v3371
        %v3373 = vrot.slane %v3365, %v3372
        %v3375 = vunpack.c.l.s4 1934713408
        %v3376 = vunpack.c.0.s8 %v3375
        %v3377 = vlaneseq
        %v3378 = vshrl.u32 %v3377, 7
        %v3379 = vsub.s32 %v3376, %v3378
        %v3380 = vrot.slane %v3366, %v3379
        %v3381 = vcombine.low %v3356, %v3364
        %v3382 = vcombine.high %v3356, %v3364
        %v3384 = vunpack.c.l.s4 1934713408
        %v3385 = vunpack.c.0.s8 %v3384
        %v3386 = vlaneseq
        %v3387 = vshrl.u32 %v3386, 7
        %v3388 = vsub.s32 %v3385, %v3387
        %v3389 = vrot.slane %v3381, %v3388
        %v3391 = vunpack.c.l.s4 1934713408
        %v3392 = vunpack.c.0.s8 %v3391
        %v3393 = vlaneseq
        %v3394 = vshrl.u32 %v3393, 7
        %v3395 = vsub.s32 %v3392, %v3394
        %v3396 = vrot.slane %v3382, %v3395
        %v3397 = vcombine.low %v3373, %v3389
        %v3398 = vcombine.high %v3373, %v3389
        %v3399 = vcombine.low %v3380, %v3396
        %v3400 = vcombine.high %v3380, %v3396
        %v3401 = vld [vmem:[%s9] sm:$0x1]
        %v3402 = vld [vmem:[%s9 + $0x1] sm:$0x1]
        %v3403 = vld [vmem:[%s9 + $0x2] sm:$0x1]
        %v3404 = vld [vmem:[%s9 + $0x3] sm:$0x1]
        %v3409 = vlaneseq
        %v3410 = vshrl.u32 %v3409, 7
        %v3411 = vsub.s32 0, %v3410
        %v3412 = vrot.slane %v3401, %v3411
        %v3413 = vlaneseq
        %v3414 = vshrl.u32 %v3413, 7
        %v3415 = vsub.s32 0, %v3414
        %v3416 = vrot.slane %v3402, %v3415
        %v3417 = vlaneseq
        %v3418 = vshrl.u32 %v3417, 7
        %v3419 = vsub.s32 0, %v3418
        %v3420 = vrot.slane %v3403, %v3419
        %v3421 = vlaneseq
        %v3422 = vshrl.u32 %v3421, 7
        %v3423 = vsub.s32 0, %v3422
        %v3424 = vrot.slane %v3404, %v3423
        %3425 = vset.pattern.permute.xlu0 0
        %3426 = vperm.xlu0 %3425, %v3412
        %v3427 = vpop.permute.xlu0 %3426
        %3429 = vset.pattern.permute.xlu0 0
        %3430 = vperm.xlu0 %3429, %v3416
        %v3431 = vpop.permute.xlu0 %3430
        %3433 = vset.pattern.permute.xlu0 0
        %3434 = vperm.xlu0 %3433, %v3420
        %v3435 = vpop.permute.xlu0 %3434
        %3437 = vset.pattern.permute.xlu0 0
        %3438 = vperm.xlu0 %3437, %v3424
        %v3439 = vpop.permute.xlu0 %3438
        %v3441 = vmul.f32 %v3427, %v656
        %v3442 = vmul.f32 %v3431, %v656
        %v3443 = vmul.f32 %v3435, %v656
        %v3444 = vmul.f32 %v3439, %v656
        %v3445 = vadd.f32 %v3397, %v3441
        %v3446 = vadd.f32 %v3398, %v3442
        %v3447 = vadd.f32 %v3399, %v3443
        %v3448 = vadd.f32 %v3400, %v3444
        %v3449 = vadd.f32 %v862, %v3445
        %v3450 = vadd.f32 %v863, %v3446
        %v3451 = vadd.f32 %v864, %v3447
        %v3452 = vadd.f32 %v865, %v3448
        %v3453 = vmul.f32 %v3449, 0.57735026
        %v3454 = vmul.f32 %v3450, 0.57735026
        %v3455 = vmul.f32 %v3451, 0.57735026
        %v3456 = vmul.f32 %v3452, 0.57735026
        %v3457 = vld [vmem:[%s10] sm:$0x1]
        %v3458 = vld [vmem:[%s10 + $0x1] sm:$0x1]
        %v3459 = vld [vmem:[%s10 + $0x2] sm:$0x1]
        %v3460 = vld [vmem:[%s10 + $0x3] sm:$0x1]
        %v3465 = vlaneseq
        %v3466 = vshrl.u32 %v3465, 7
        %v3467 = vsub.s32 0, %v3466
        %v3468 = vrot.slane %v3457, %v3467
        %v3469 = vlaneseq
        %v3470 = vshrl.u32 %v3469, 7
        %v3471 = vsub.s32 0, %v3470
        %v3472 = vrot.slane %v3458, %v3471
        %v3473 = vlaneseq
        %v3474 = vshrl.u32 %v3473, 7
        %v3475 = vsub.s32 0, %v3474
        %v3476 = vrot.slane %v3459, %v3475
        %v3477 = vlaneseq
        %v3478 = vshrl.u32 %v3477, 7
        %v3479 = vsub.s32 0, %v3478
        %v3480 = vrot.slane %v3460, %v3479
        %3481 = vset.pattern.permute.xlu0 0
        %3482 = vperm.xlu0 %3481, %v3468
        %v3483 = vpop.permute.xlu0 %3482
        %3485 = vset.pattern.permute.xlu0 0
        %3486 = vperm.xlu0 %3485, %v3472
        %v3487 = vpop.permute.xlu0 %3486
        %3489 = vset.pattern.permute.xlu0 0
        %3490 = vperm.xlu0 %3489, %v3476
        %v3491 = vpop.permute.xlu0 %3490
        %3493 = vset.pattern.permute.xlu0 0
        %3494 = vperm.xlu0 %3493, %v3480
        %v3495 = vpop.permute.xlu0 %3494
        %v3497 = vmul.f32 %v3483, %v2869
        %v3498 = vmul.f32 %v3487, %v2876
        %v3499 = vmul.f32 %v3491, %v2883
        %v3500 = vmul.f32 %v3495, %v2890
        %v3501 = vsub.f32 %v3453, %v3497
        %v3502 = vsub.f32 %v3454, %v3498
        %v3503 = vsub.f32 %v3455, %v3499
        %v3504 = vsub.f32 %v3456, %v3500
        %v3505 = vsel %vm2862, %v3501, -inf
        %3506 = vmax.xlane.f32.xlu0 %v3505
        %v3507 = vpop.xlane.xlu0 %3506
        %v3508 = vsel %vm2862, %v3502, -inf
        %3509 = vmax.xlane.f32.xlu0 %v3508
        %v3510 = vpop.xlane.xlu0 %3509
        %v3511 = vsel %vm2862, %v3503, -inf
        %3512 = vmax.xlane.f32.xlu0 %v3511
        %v3513 = vpop.xlane.xlu0 %3512
        %v3514 = vsel %vm2862, %v3504, -inf
        %3515 = vmax.xlane.f32.xlu0 %v3514
        %v3516 = vpop.xlane.xlu0 %3515
        %v3517 = vsub.f32 %v3501, %v3507
        %v3518 = vsub.f32 %v3502, %v3510
        %v3519 = vsub.f32 %v3503, %v3513
        %v3520 = vsub.f32 %v3504, %v3516
        %v3521 = vmul.f32 %v3517, 1.442695
        %v3522 = vpow.pop %v3521
        %v3523 = vmul.f32 %v3518, 1.442695
        %v3524 = vpow.pop %v3523
        %v3525 = vmul.f32 %v3519, 1.442695
        %v3526 = vpow.pop %v3525
        %v3527 = vmul.f32 %v3520, 1.442695
        %v3528 = vpow.pop %v3527
        %v3529 = vsel %vm2862, %v3522, 0.0
        %3530 = vadd.xlane.f32.xlu0 %v3529
        %v3531 = vpop.xlane.xlu0 %3530
        %v3532 = vsel %vm2862, %v3524, 0.0
        %3533 = vadd.xlane.f32.xlu0 %v3532
        %v3534 = vpop.xlane.xlu0 %3533
        %v3535 = vsel %vm2862, %v3526, 0.0
        %3536 = vadd.xlane.f32.xlu0 %v3535
        %v3537 = vpop.xlane.xlu0 %3536
        %v3538 = vsel %vm2862, %v3528, 0.0
        %3539 = vadd.xlane.f32.xlu0 %v3538
        %v3540 = vpop.xlane.xlu0 %3539
        %v3541 = vrcp.pop %v3531
        %v3542 = vrcp.pop %v3534
        %v3543 = vrcp.pop %v3537
        %v3544 = vrcp.pop %v3540
        %v3545 = vmul.f32 %v3522, %v3541
        %v3546 = vmul.f32 %v3524, %v3542
        %v3547 = vmul.f32 %v3526, %v3543
        %v3548 = vmul.f32 %v3528, %v3544
        %v3549 = vpack.c.bf16 %v3545, %v3545
        %v3550 = vpack.c.bf16 %v3546, %v3546
        %v3551 = vpack.c.bf16 %v3547, %v3547
        %v3552 = vpack.c.bf16 %v3548, %v3548
        %v3553 = vld [vmem:[%s4] sm:$0xff]
        %v3554 = vld [vmem:[%s4 + $0x8] sm:$0xff]
        %v3555 = vld [vmem:[%s4 + $0x10] sm:$0xff]
        %v3556 = vld [vmem:[%s4 + $0x18] sm:$0xff]
        %v3557 = vld [vmem:[%s4 + $0x20] sm:$0xff]
        %v3558 = vld [vmem:[%s4 + $0x28] sm:$0xff]
        %v3559 = vld [vmem:[%s4 + $0x30] sm:$0xff]
        %v3560 = vld [vmem:[%s4 + $0x38] sm:$0xff]
        %v3561 = vpack.c.bf16 %v3554, %v3553
        %v3562 = vpack.c.bf16 %v3556, %v3555
        %v3563 = vpack.c.bf16 %v3558, %v3557
        %v3564 = vpack.c.bf16 %v3560, %v3559
        %v3566 = vsel %vm2862, %v3549, 0
        %3568 = vmatprep.subr.bf16.mxu0 0
        %3569 = vmatpush1.bf16.msra.mxu0 %v3561
        %3570 = vmatprep.subr.bf16.mxu0 0
        %3571 = vmatpush1.bf16.msra.mxu0 0
        %3572 = vmatprep.subr.bf16.mxu0 0
        %3573 = vmatpush1.bf16.msra.mxu0 0
        %3574 = vmatprep.subr.bf16.mxu0 0
        %3575 = vmatpush1.bf16.msra.mxu0 0
        %3576 = vmatprep.subr.bf16.mxu0 0
        %3577 = vmatpush1.bf16.msra.mxu0 0
        %3578 = vmatprep.subr.bf16.mxu0 0
        %3579 = vmatpush1.bf16.msra.mxu0 0
        %3580 = vmatprep.subr.bf16.mxu0 0
        %3581 = vmatpush1.bf16.msra.mxu0 0
        %3582 = vmatprep.subr.bf16.mxu0 0
        %3583 = vmatpush1.bf16.msra.mxu0 0
        %3584 = vmatprep.subr.bf16.mxu0 0
        %3585 = vmatpush1.bf16.msra.mxu0 0
        %3586 = vmatprep.subr.bf16.mxu0 0
        %3587 = vmatpush1.bf16.msra.mxu0 0
        %3588 = vmatprep.subr.bf16.mxu0 0
        %3589 = vmatpush1.bf16.msra.mxu0 0
        %3590 = vmatprep.subr.bf16.mxu0 0
        %3591 = vmatpush1.bf16.msra.mxu0 0
        %3592 = vmatprep.subr.bf16.mxu0 0
        %3593 = vmatpush1.bf16.msra.mxu0 0
        %3594 = vmatprep.subr.bf16.mxu0 0
        %3595 = vmatpush1.bf16.msra.mxu0 0
        %3596 = vmatprep.subr.bf16.mxu0 0
        %3597 = vmatpush1.bf16.msra.mxu0 0
        %3598 = vmatprep.subr.bf16.mxu0 0
        %3599 = vmatpush1.bf16.msra.mxu0 0
        %3600 = vmatprep.mubr.bf16.mxu0 0
        %3601 = vmatmul.mubr.bf16.gmra.mrb[0].mxu0 %v3566
        %v3602 = vpop.f32.mrb[0].mxu0
        %v3603 = vadd.f32 0.0, %v3602
        %v3604 = vpop.f32.mrb[0].mxu0
        %v3605 = vpop.f32.mrb[0].mxu0
        %v3606 = vpop.f32.mrb[0].mxu0
        %3607 = vdwg.mxu0
        %v3609 = vsel %vm2862, %v3550, 0
        %3611 = vmatprep.subr.bf16.mxu0 0
        %3612 = vmatpush1.bf16.msra.mxu0 %v3562
        %3613 = vmatprep.subr.bf16.mxu0 0
        %3614 = vmatpush1.bf16.msra.mxu0 0
        %3615 = vmatprep.subr.bf16.mxu0 0
        %3616 = vmatpush1.bf16.msra.mxu0 0
        %3617 = vmatprep.subr.bf16.mxu0 0
        %3618 = vmatpush1.bf16.msra.mxu0 0
        %3619 = vmatprep.subr.bf16.mxu0 0
        %3620 = vmatpush1.bf16.msra.mxu0 0
        %3621 = vmatprep.subr.bf16.mxu0 0
        %3622 = vmatpush1.bf16.msra.mxu0 0
        %3623 = vmatprep.subr.bf16.mxu0 0
        %3624 = vmatpush1.bf16.msra.mxu0 0
        %3625 = vmatprep.subr.bf16.mxu0 0
        %3626 = vmatpush1.bf16.msra.mxu0 0
        %3627 = vmatprep.subr.bf16.mxu0 0
        %3628 = vmatpush1.bf16.msra.mxu0 0
        %3629 = vmatprep.subr.bf16.mxu0 0
        %3630 = vmatpush1.bf16.msra.mxu0 0
        %3631 = vmatprep.subr.bf16.mxu0 0
        %3632 = vmatpush1.bf16.msra.mxu0 0
        %3633 = vmatprep.subr.bf16.mxu0 0
        %3634 = vmatpush1.bf16.msra.mxu0 0
        %3635 = vmatprep.subr.bf16.mxu0 0
        %3636 = vmatpush1.bf16.msra.mxu0 0
        %3637 = vmatprep.subr.bf16.mxu0 0
        %3638 = vmatpush1.bf16.msra.mxu0 0
        %3639 = vmatprep.subr.bf16.mxu0 0
        %3640 = vmatpush1.bf16.msra.mxu0 0
        %3641 = vmatprep.subr.bf16.mxu0 0
        %3642 = vmatpush1.bf16.msra.mxu0 0
        %3643 = vmatprep.mubr.bf16.mxu0 0
        %3644 = vmatmul.mubr.bf16.gmra.mrb[0].mxu0 %v3609
        %v3645 = vpop.f32.mrb[0].mxu0
        %v3646 = vadd.f32 0.0, %v3645
        %v3647 = vpop.f32.mrb[0].mxu0
        %v3648 = vpop.f32.mrb[0].mxu0
        %v3649 = vpop.f32.mrb[0].mxu0
        %3650 = vdwg.mxu0
        %v3652 = vsel %vm2862, %v3551, 0
        %3654 = vmatprep.subr.bf16.mxu0 0
        %3655 = vmatpush1.bf16.msra.mxu0 %v3563
        %3656 = vmatprep.subr.bf16.mxu0 0
        %3657 = vmatpush1.bf16.msra.mxu0 0
        %3658 = vmatprep.subr.bf16.mxu0 0
        %3659 = vmatpush1.bf16.msra.mxu0 0
        %3660 = vmatprep.subr.bf16.mxu0 0
        %3661 = vmatpush1.bf16.msra.mxu0 0
        %3662 = vmatprep.subr.bf16.mxu0 0
        %3663 = vmatpush1.bf16.msra.mxu0 0
        %3664 = vmatprep.subr.bf16.mxu0 0
        %3665 = vmatpush1.bf16.msra.mxu0 0
        %3666 = vmatprep.subr.bf16.mxu0 0
        %3667 = vmatpush1.bf16.msra.mxu0 0
        %3668 = vmatprep.subr.bf16.mxu0 0
        %3669 = vmatpush1.bf16.msra.mxu0 0
        %3670 = vmatprep.subr.bf16.mxu0 0
        %3671 = vmatpush1.bf16.msra.mxu0 0
        %3672 = vmatprep.subr.bf16.mxu0 0
        %3673 = vmatpush1.bf16.msra.mxu0 0
        %3674 = vmatprep.subr.bf16.mxu0 0
        %3675 = vmatpush1.bf16.msra.mxu0 0
        %3676 = vmatprep.subr.bf16.mxu0 0
        %3677 = vmatpush1.bf16.msra.mxu0 0
        %3678 = vmatprep.subr.bf16.mxu0 0
        %3679 = vmatpush1.bf16.msra.mxu0 0
        %3680 = vmatprep.subr.bf16.mxu0 0
        %3681 = vmatpush1.bf16.msra.mxu0 0
        %3682 = vmatprep.subr.bf16.mxu0 0
        %3683 = vmatpush1.bf16.msra.mxu0 0
        %3684 = vmatprep.subr.bf16.mxu0 0
        %3685 = vmatpush1.bf16.msra.mxu0 0
        %3686 = vmatprep.mubr.bf16.mxu0 0
        %3687 = vmatmul.mubr.bf16.gmra.mrb[0].mxu0 %v3652
        %v3688 = vpop.f32.mrb[0].mxu0
        %v3689 = vadd.f32 0.0, %v3688
        %v3690 = vpop.f32.mrb[0].mxu0
        %v3691 = vpop.f32.mrb[0].mxu0
        %v3692 = vpop.f32.mrb[0].mxu0
        %3693 = vdwg.mxu0
        %v3695 = vsel %vm2862, %v3552, 0
        %3697 = vmatprep.subr.bf16.mxu0 0
        %3698 = vmatpush1.bf16.msra.mxu0 %v3564
        %3699 = vmatprep.subr.bf16.mxu0 0
        %3700 = vmatpush1.bf16.msra.mxu0 0
        %3701 = vmatprep.subr.bf16.mxu0 0
        %3702 = vmatpush1.bf16.msra.mxu0 0
        %3703 = vmatprep.subr.bf16.mxu0 0
        %3704 = vmatpush1.bf16.msra.mxu0 0
        %3705 = vmatprep.subr.bf16.mxu0 0
        %3706 = vmatpush1.bf16.msra.mxu0 0
        %3707 = vmatprep.subr.bf16.mxu0 0
        %3708 = vmatpush1.bf16.msra.mxu0 0
        %3709 = vmatprep.subr.bf16.mxu0 0
        %3710 = vmatpush1.bf16.msra.mxu0 0
        %3711 = vmatprep.subr.bf16.mxu0 0
        %3712 = vmatpush1.bf16.msra.mxu0 0
        %3713 = vmatprep.subr.bf16.mxu0 0
        %3714 = vmatpush1.bf16.msra.mxu0 0
        %3715 = vmatprep.subr.bf16.mxu0 0
        %3716 = vmatpush1.bf16.msra.mxu0 0
        %3717 = vmatprep.subr.bf16.mxu0 0
        %3718 = vmatpush1.bf16.msra.mxu0 0
        %3719 = vmatprep.subr.bf16.mxu0 0
        %3720 = vmatpush1.bf16.msra.mxu0 0
        %3721 = vmatprep.subr.bf16.mxu0 0
        %3722 = vmatpush1.bf16.msra.mxu0 0
        %3723 = vmatprep.subr.bf16.mxu0 0
        %3724 = vmatpush1.bf16.msra.mxu0 0
        %3725 = vmatprep.subr.bf16.mxu0 0
        %3726 = vmatpush1.bf16.msra.mxu0 0
        %3727 = vmatprep.subr.bf16.mxu0 0
        %3728 = vmatpush1.bf16.msra.mxu0 0
        %3729 = vmatprep.mubr.bf16.mxu0 0
        %3730 = vmatmul.mubr.bf16.gmra.mrb[0].mxu0 %v3695
        %v3731 = vpop.f32.mrb[0].mxu0
        %v3732 = vadd.f32 0.0, %v3731
        %v3733 = vpop.f32.mrb[0].mxu0
        %v3734 = vpop.f32.mrb[0].mxu0
        %v3735 = vpop.f32.mrb[0].mxu0
        %3736 = vdwg.mxu0
        %v3737 = vld [vmem:[%s7] sm:$0xff]
        %v3738 = vld [vmem:[%s7 + $0x8] sm:$0xff]
        %v3739 = vld [vmem:[%s7 + $0x10] sm:$0xff]
        %v3740 = vld [vmem:[%s7 + $0x18] sm:$0xff]
        %v3741 = vld [vmem:[%s7 + $0x20] sm:$0xff]
        %v3742 = vld [vmem:[%s7 + $0x28] sm:$0xff]
        %v3743 = vld [vmem:[%s7 + $0x30] sm:$0xff]
        %v3744 = vld [vmem:[%s7 + $0x38] sm:$0xff]
        %v3745 = vpack.c.bf16 %v3738, %v3737
        %v3746 = vpack.c.bf16 %v3740, %v3739
        %v3747 = vpack.c.bf16 %v3742, %v3741
        %v3748 = vpack.c.bf16 %v3744, %v3743
        %3749 = vmatprep.subr.bf16.mxu0 0
        %3750 = vmatpush1.bf16.msra.mxu0 %v3745
        %3751 = vmatprep.subr.bf16.mxu0 0
        %3752 = vmatpush1.bf16.msra.mxu0 0
        %3753 = vmatprep.subr.bf16.mxu0 0
        %3754 = vmatpush1.bf16.msra.mxu0 0
        %3755 = vmatprep.subr.bf16.mxu0 0
        %3756 = vmatpush1.bf16.msra.mxu0 0
        %3757 = vmatprep.subr.bf16.mxu0 0
        %3758 = vmatpush1.bf16.msra.mxu0 0
        %3759 = vmatprep.subr.bf16.mxu0 0
        %3760 = vmatpush1.bf16.msra.mxu0 0
        %3761 = vmatprep.subr.bf16.mxu0 0
        %3762 = vmatpush1.bf16.msra.mxu0 0
        %3763 = vmatprep.subr.bf16.mxu0 0
        %3764 = vmatpush1.bf16.msra.mxu0 0
        %3765 = vmatprep.subr.bf16.mxu0 0
        %3766 = vmatpush1.bf16.msra.mxu0 0
        %3767 = vmatprep.subr.bf16.mxu0 0
        %3768 = vmatpush1.bf16.msra.mxu0 0
        %3769 = vmatprep.subr.bf16.mxu0 0
        %3770 = vmatpush1.bf16.msra.mxu0 0
        %3771 = vmatprep.subr.bf16.mxu0 0
        %3772 = vmatpush1.bf16.msra.mxu0 0
        %3773 = vmatprep.subr.bf16.mxu0 0
        %3774 = vmatpush1.bf16.msra.mxu0 0
        %3775 = vmatprep.subr.bf16.mxu0 0
        %3776 = vmatpush1.bf16.msra.mxu0 0
        %3777 = vmatprep.subr.bf16.mxu0 0
        %3778 = vmatpush1.bf16.msra.mxu0 0
        %3779 = vmatprep.subr.bf16.mxu0 0
        %3780 = vmatpush1.bf16.msra.mxu0 0
        %3781 = vmatprep.mubr.bf16.mxu0 0
        %3782 = vmatmul.mubr.bf16.gmra.mrb[0].mxu0 %v3566
        %v3783 = vpop.f32.mrb[0].mxu0
        %v3784 = vadd.f32 0.0, %v3783
        %v3785 = vpop.f32.mrb[0].mxu0
        %v3786 = vpop.f32.mrb[0].mxu0
        %v3787 = vpop.f32.mrb[0].mxu0
        %3788 = vdwg.mxu0
        %3789 = vmatprep.subr.bf16.mxu0 0
        %3790 = vmatpush1.bf16.msra.mxu0 %v3746
        %3791 = vmatprep.subr.bf16.mxu0 0
        %3792 = vmatpush1.bf16.msra.mxu0 0
        %3793 = vmatprep.subr.bf16.mxu0 0
        %3794 = vmatpush1.bf16.msra.mxu0 0
        %3795 = vmatprep.subr.bf16.mxu0 0
        %3796 = vmatpush1.bf16.msra.mxu0 0
        %3797 = vmatprep.subr.bf16.mxu0 0
        %3798 = vmatpush1.bf16.msra.mxu0 0
        %3799 = vmatprep.subr.bf16.mxu0 0
        %3800 = vmatpush1.bf16.msra.mxu0 0
        %3801 = vmatprep.subr.bf16.mxu0 0
        %3802 = vmatpush1.bf16.msra.mxu0 0
        %3803 = vmatprep.subr.bf16.mxu0 0
        %3804 = vmatpush1.bf16.msra.mxu0 0
        %3805 = vmatprep.subr.bf16.mxu0 0
        %3806 = vmatpush1.bf16.msra.mxu0 0
        %3807 = vmatprep.subr.bf16.mxu0 0
        %3808 = vmatpush1.bf16.msra.mxu0 0
        %3809 = vmatprep.subr.bf16.mxu0 0
        %3810 = vmatpush1.bf16.msra.mxu0 0
        %3811 = vmatprep.subr.bf16.mxu0 0
        %3812 = vmatpush1.bf16.msra.mxu0 0
        %3813 = vmatprep.subr.bf16.mxu0 0
        %3814 = vmatpush1.bf16.msra.mxu0 0
        %3815 = vmatprep.subr.bf16.mxu0 0
        %3816 = vmatpush1.bf16.msra.mxu0 0
        %3817 = vmatprep.subr.bf16.mxu0 0
        %3818 = vmatpush1.bf16.msra.mxu0 0
        %3819 = vmatprep.subr.bf16.mxu0 0
        %3820 = vmatpush1.bf16.msra.mxu0 0
        %3821 = vmatprep.mubr.bf16.mxu0 0
        %3822 = vmatmul.mubr.bf16.gmra.mrb[0].mxu0 %v3609
        %v3823 = vpop.f32.mrb[0].mxu0
        %v3824 = vadd.f32 0.0, %v3823
        %v3825 = vpop.f32.mrb[0].mxu0
        %v3826 = vpop.f32.mrb[0].mxu0
        %v3827 = vpop.f32.mrb[0].mxu0
        %3828 = vdwg.mxu0
        %3829 = vmatprep.subr.bf16.mxu0 0
        %3830 = vmatpush1.bf16.msra.mxu0 %v3747
        %3831 = vmatprep.subr.bf16.mxu0 0
        %3832 = vmatpush1.bf16.msra.mxu0 0
        %3833 = vmatprep.subr.bf16.mxu0 0
        %3834 = vmatpush1.bf16.msra.mxu0 0
        %3835 = vmatprep.subr.bf16.mxu0 0
        %3836 = vmatpush1.bf16.msra.mxu0 0
        %3837 = vmatprep.subr.bf16.mxu0 0
        %3838 = vmatpush1.bf16.msra.mxu0 0
        %3839 = vmatprep.subr.bf16.mxu0 0
        %3840 = vmatpush1.bf16.msra.mxu0 0
        %3841 = vmatprep.subr.bf16.mxu0 0
        %3842 = vmatpush1.bf16.msra.mxu0 0
        %3843 = vmatprep.subr.bf16.mxu0 0
        %3844 = vmatpush1.bf16.msra.mxu0 0
        %3845 = vmatprep.subr.bf16.mxu0 0
        %3846 = vmatpush1.bf16.msra.mxu0 0
        %3847 = vmatprep.subr.bf16.mxu0 0
        %3848 = vmatpush1.bf16.msra.mxu0 0
        %3849 = vmatprep.subr.bf16.mxu0 0
        %3850 = vmatpush1.bf16.msra.mxu0 0
        %3851 = vmatprep.subr.bf16.mxu0 0
        %3852 = vmatpush1.bf16.msra.mxu0 0
        %3853 = vmatprep.subr.bf16.mxu0 0
        %3854 = vmatpush1.bf16.msra.mxu0 0
        %3855 = vmatprep.subr.bf16.mxu0 0
        %3856 = vmatpush1.bf16.msra.mxu0 0
        %3857 = vmatprep.subr.bf16.mxu0 0
        %3858 = vmatpush1.bf16.msra.mxu0 0
        %3859 = vmatprep.subr.bf16.mxu0 0
        %3860 = vmatpush1.bf16.msra.mxu0 0
        %3861 = vmatprep.mubr.bf16.mxu0 0
        %3862 = vmatmul.mubr.bf16.gmra.mrb[0].mxu0 %v3652
        %v3863 = vpop.f32.mrb[0].mxu0
        %v3864 = vadd.f32 0.0, %v3863
        %v3865 = vpop.f32.mrb[0].mxu0
        %v3866 = vpop.f32.mrb[0].mxu0
        %v3867 = vpop.f32.mrb[0].mxu0
        %3868 = vdwg.mxu0
        %3869 = vmatprep.subr.bf16.mxu0 0
        %3870 = vmatpush1.bf16.msra.mxu0 %v3748
        %3871 = vmatprep.subr.bf16.mxu0 0
        %3872 = vmatpush1.bf16.msra.mxu0 0
        %3873 = vmatprep.subr.bf16.mxu0 0
        %3874 = vmatpush1.bf16.msra.mxu0 0
        %3875 = vmatprep.subr.bf16.mxu0 0
        %3876 = vmatpush1.bf16.msra.mxu0 0
        %3877 = vmatprep.subr.bf16.mxu0 0
        %3878 = vmatpush1.bf16.msra.mxu0 0
        %3879 = vmatprep.subr.bf16.mxu0 0
        %3880 = vmatpush1.bf16.msra.mxu0 0
        %3881 = vmatprep.subr.bf16.mxu0 0
        %3882 = vmatpush1.bf16.msra.mxu0 0
        %3883 = vmatprep.subr.bf16.mxu0 0
        %3884 = vmatpush1.bf16.msra.mxu0 0
        %3885 = vmatprep.subr.bf16.mxu0 0
        %3886 = vmatpush1.bf16.msra.mxu0 0
        %3887 = vmatprep.subr.bf16.mxu0 0
        %3888 = vmatpush1.bf16.msra.mxu0 0
        %3889 = vmatprep.subr.bf16.mxu0 0
        %3890 = vmatpush1.bf16.msra.mxu0 0
        %3891 = vmatprep.subr.bf16.mxu0 0
        %3892 = vmatpush1.bf16.msra.mxu0 0
        %3893 = vmatprep.subr.bf16.mxu0 0
        %3894 = vmatpush1.bf16.msra.mxu0 0
        %3895 = vmatprep.subr.bf16.mxu0 0
        %3896 = vmatpush1.bf16.msra.mxu0 0
        %3897 = vmatprep.subr.bf16.mxu0 0
        %3898 = vmatpush1.bf16.msra.mxu0 0
        %3899 = vmatprep.subr.bf16.mxu0 0
        %3900 = vmatpush1.bf16.msra.mxu0 0
        %3901 = vmatprep.mubr.bf16.mxu0 0
        %3902 = vmatmul.mubr.bf16.gmra.mrb[0].mxu0 %v3695
        %v3903 = vpop.f32.mrb[0].mxu0
        %v3904 = vadd.f32 0.0, %v3903
        %v3905 = vpop.f32.mrb[0].mxu0
        %v3906 = vpop.f32.mrb[0].mxu0
        %v3907 = vpop.f32.mrb[0].mxu0
        %3908 = vdwg.mxu0
        %v3909 = vcombine.low %v3545, %v3547
        %v3910 = vcombine.high %v3545, %v3547
        %v3912 = vunpack.c.l.s4 1983009808
        %v3913 = vunpack.c.0.s8 %v3912
        %v3914 = vlaneseq
        %v3915 = vshrl.u32 %v3914, 7
        %v3916 = vsub.s32 %v3913, %v3915
        %v3917 = vrot.slane %v3909, %v3916
        %v3919 = vunpack.c.l.s4 1983009808
        %v3920 = vunpack.c.0.s8 %v3919
        %v3921 = vlaneseq
        %v3922 = vshrl.u32 %v3921, 7
        %v3923 = vsub.s32 %v3920, %v3922
        %v3924 = vrot.slane %v3910, %v3923
        %v3925 = vcombine.low %v3546, %v3548
        %v3926 = vcombine.high %v3546, %v3548
        %v3928 = vunpack.c.l.s4 1983009808
        %v3929 = vunpack.c.0.s8 %v3928
        %v3930 = vlaneseq
        %v3931 = vshrl.u32 %v3930, 7
        %v3932 = vsub.s32 %v3929, %v3931
        %v3933 = vrot.slane %v3925, %v3932
        %v3935 = vunpack.c.l.s4 1983009808
        %v3936 = vunpack.c.0.s8 %v3935
        %v3937 = vlaneseq
        %v3938 = vshrl.u32 %v3937, 7
        %v3939 = vsub.s32 %v3936, %v3938
        %v3940 = vrot.slane %v3926, %v3939
        %v3941 = vcombine.low %v3917, %v3933
        %v3942 = vcombine.high %v3917, %v3933
        %v3944 = vunpack.c.l.s4 1934713408
        %v3945 = vunpack.c.0.s8 %v3944
        %v3946 = vlaneseq
        %v3947 = vshrl.u32 %v3946, 7
        %v3948 = vsub.s32 %v3945, %v3947
        %v3949 = vrot.slane %v3941, %v3948
        %v3951 = vunpack.c.l.s4 1934713408
        %v3952 = vunpack.c.0.s8 %v3951
        %v3953 = vlaneseq
        %v3954 = vshrl.u32 %v3953, 7
        %v3955 = vsub.s32 %v3952, %v3954
        %v3956 = vrot.slane %v3942, %v3955
        %v3957 = vcombine.low %v3924, %v3940
        %v3958 = vcombine.high %v3924, %v3940
        %v3960 = vunpack.c.l.s4 1934713408
        %v3961 = vunpack.c.0.s8 %v3960
        %v3962 = vlaneseq
        %v3963 = vshrl.u32 %v3962, 7
        %v3964 = vsub.s32 %v3961, %v3963
        %v3965 = vrot.slane %v3957, %v3964
        %v3967 = vunpack.c.l.s4 1934713408
        %v3968 = vunpack.c.0.s8 %v3967
        %v3969 = vlaneseq
        %v3970 = vshrl.u32 %v3969, 7
        %v3971 = vsub.s32 %v3968, %v3970
        %v3972 = vrot.slane %v3958, %v3971
        %v3973 = vcombine.high %v3949, 0.0
        %v3974 = vcombine.high %v3956, 0.0
        %v3975 = vcombine.high %v3965, 0.0
        %v3976 = vcombine.high %v3972, 0.0
        %v3977 = vpack.c.bf16 %v3949, %v3949
        %v3978 = vpack.c.bf16 %v3973, %v3973
        %v3979 = vpack.c.bf16 %v3956, %v3956
        %v3980 = vpack.c.bf16 %v3974, %v3974
        %v3981 = vpack.c.bf16 %v3965, %v3965
        %v3982 = vpack.c.bf16 %v3975, %v3975
        %v3983 = vpack.c.bf16 %v3972, %v3972
        %v3984 = vpack.c.bf16 %v3976, %v3976
        %v3986 = vsel %vm2862, %v3977, 0
        %v3989 = vsel %vm2862, %v2901, 0
        %v3991 = vsel %vm2862, %v2902, 0
        %3993 = vmatprep.subr.bf16.mxu0 0
        %3994 = vmatpush1.bf16.xpose.msra.mxu0 %v3989
        %3995 = vmatprep.subr.bf16.mxu0 0
        %3996 = vmatpush1.bf16.xpose.msra.mxu0 %v3991
        %3997 = vmatprep.subr.bf16.mxu0 0
        %3998 = vmatpush1.bf16.xpose.msra.mxu0 0
        %3999 = vmatprep.subr.bf16.mxu0 0
        %4000 = vmatpush1.bf16.xpose.msra.mxu0 0
        %4001 = vmatprep.subr.bf16.mxu0 0
        %4002 = vmatpush1.bf16.xpose.msra.mxu0 0
        %4003 = vmatprep.subr.bf16.mxu0 0
        %4004 = vmatpush1.bf16.xpose.msra.mxu0 0
        %4005 = vmatprep.subr.bf16.mxu0 0
        %4006 = vmatpush1.bf16.xpose.msra.mxu0 0
        %4007 = vmatprep.subr.bf16.mxu0 0
        %4008 = vmatpush1.bf16.xpose.msra.mxu0 0
        %4009 = vmatprep.subr.bf16.mxu0 0
        %4010 = vmatpush1.bf16.xpose.msra.mxu0 0
        %4011 = vmatprep.subr.bf16.mxu0 0
        %4012 = vmatpush1.bf16.xpose.msra.mxu0 0
        %4013 = vmatprep.subr.bf16.mxu0 0
        %4014 = vmatpush1.bf16.xpose.msra.mxu0 0
        %4015 = vmatprep.subr.bf16.mxu0 0
        %4016 = vmatpush1.bf16.xpose.msra.mxu0 0
        %4017 = vmatprep.subr.bf16.mxu0 0
        %4018 = vmatpush1.bf16.xpose.msra.mxu0 0
        %4019 = vmatprep.subr.bf16.mxu0 0
        %4020 = vmatpush1.bf16.xpose.msra.mxu0 0
        %4021 = vmatprep.subr.bf16.mxu0 0
        %4022 = vmatpush1.bf16.xpose.msra.mxu0 0
        %4023 = vmatprep.subr.bf16.mxu0 0
        %4024 = vmatpush1.bf16.xpose.msra.mxu0 0
        %4025 = vmatprep.mubr.bf16.mxu0 0
        %4026 = vmatmul.mubr.bf16.gmra.mrb[0].mxu0 %v3986
        %v4027 = vpop.f32.mrb[0].mxu0
        %v4028 = vadd.f32 0.0, %v4027
        %v4029 = vpop.f32.mrb[0].mxu0
        %v4030 = vpop.f32.mrb[0].mxu0
        %v4031 = vpop.f32.mrb[0].mxu0
        %4032 = vdwg.mxu0
        %v4034 = vsel %vm2862, %v3978, 0
        %v4037 = vsel %vm2862, %v2963, 0
        %v4039 = vsel %vm2862, %v2964, 0
        %4041 = vmatprep.subr.bf16.mxu0 0
        %4042 = vmatpush1.bf16.xpose.msra.mxu0 %v4037
        %4043 = vmatprep.subr.bf16.mxu0 0
        %4044 = vmatpush1.bf16.xpose.msra.mxu0 %v4039
        %4045 = vmatprep.subr.bf16.mxu0 0
        %4046 = vmatpush1.bf16.xpose.msra.mxu0 0
        %4047 = vmatprep.subr.bf16.mxu0 0
        %4048 = vmatpush1.bf16.xpose.msra.mxu0 0
        %4049 = vmatprep.subr.bf16.mxu0 0
        %4050 = vmatpush1.bf16.xpose.msra.mxu0 0
        %4051 = vmatprep.subr.bf16.mxu0 0
        %4052 = vmatpush1.bf16.xpose.msra.mxu0 0
        %4053 = vmatprep.subr.bf16.mxu0 0
        %4054 = vmatpush1.bf16.xpose.msra.mxu0 0
        %4055 = vmatprep.subr.bf16.mxu0 0
        %4056 = vmatpush1.bf16.xpose.msra.mxu0 0
        %4057 = vmatprep.subr.bf16.mxu0 0
        %4058 = vmatpush1.bf16.xpose.msra.mxu0 0
        %4059 = vmatprep.subr.bf16.mxu0 0
        %4060 = vmatpush1.bf16.xpose.msra.mxu0 0
        %4061 = vmatprep.subr.bf16.mxu0 0
        %4062 = vmatpush1.bf16.xpose.msra.mxu0 0
        %4063 = vmatprep.subr.bf16.mxu0 0
        %4064 = vmatpush1.bf16.xpose.msra.mxu0 0
        %4065 = vmatprep.subr.bf16.mxu0 0
        %4066 = vmatpush1.bf16.xpose.msra.mxu0 0
        %4067 = vmatprep.subr.bf16.mxu0 0
        %4068 = vmatpush1.bf16.xpose.msra.mxu0 0
        %4069 = vmatprep.subr.bf16.mxu0 0
        %4070 = vmatpush1.bf16.xpose.msra.mxu0 0
        %4071 = vmatprep.subr.bf16.mxu0 0
        %4072 = vmatpush1.bf16.xpose.msra.mxu0 0
        %4073 = vmatprep.mubr.bf16.mxu0 0
        %4074 = vmatmul.mubr.bf16.gmra.mrb[0].mxu0 %v4034
        %v4075 = vpop.f32.mrb[0].mxu0
        %v4076 = vadd.f32 0.0, %v4075
        %v4077 = vpop.f32.mrb[0].mxu0
        %v4078 = vpop.f32.mrb[0].mxu0
        %v4079 = vpop.f32.mrb[0].mxu0
        %4080 = vdwg.mxu0
        %v4082 = vsel %vm2862, %v3979, 0
        %v4085 = vsel %vm2862, %v3017, 0
        %v4087 = vsel %vm2862, %v3018, 0
        %4089 = vmatprep.subr.bf16.mxu0 0
        %4090 = vmatpush1.bf16.xpose.msra.mxu0 %v4085
        %4091 = vmatprep.subr.bf16.mxu0 0
        %4092 = vmatpush1.bf16.xpose.msra.mxu0 %v4087
        %4093 = vmatprep.subr.bf16.mxu0 0
        %4094 = vmatpush1.bf16.xpose.msra.mxu0 0
        %4095 = vmatprep.subr.bf16.mxu0 0
        %4096 = vmatpush1.bf16.xpose.msra.mxu0 0
        %4097 = vmatprep.subr.bf16.mxu0 0
        %4098 = vmatpush1.bf16.xpose.msra.mxu0 0
        %4099 = vmatprep.subr.bf16.mxu0 0
        %4100 = vmatpush1.bf16.xpose.msra.mxu0 0
        %4101 = vmatprep.subr.bf16.mxu0 0
        %4102 = vmatpush1.bf16.xpose.msra.mxu0 0
        %4103 = vmatprep.subr.bf16.mxu0 0
        %4104 = vmatpush1.bf16.xpose.msra.mxu0 0
        %4105 = vmatprep.subr.bf16.mxu0 0
        %4106 = vmatpush1.bf16.xpose.msra.mxu0 0
        %4107 = vmatprep.subr.bf16.mxu0 0
        %4108 = vmatpush1.bf16.xpose.msra.mxu0 0
        %4109 = vmatprep.subr.bf16.mxu0 0
        %4110 = vmatpush1.bf16.xpose.msra.mxu0 0
        %4111 = vmatprep.subr.bf16.mxu0 0
        %4112 = vmatpush1.bf16.xpose.msra.mxu0 0
        %4113 = vmatprep.subr.bf16.mxu0 0
        %4114 = vmatpush1.bf16.xpose.msra.mxu0 0
        %4115 = vmatprep.subr.bf16.mxu0 0
        %4116 = vmatpush1.bf16.xpose.msra.mxu0 0
        %4117 = vmatprep.subr.bf16.mxu0 0
        %4118 = vmatpush1.bf16.xpose.msra.mxu0 0
        %4119 = vmatprep.subr.bf16.mxu0 0
        %4120 = vmatpush1.bf16.xpose.msra.mxu0 0
        %4121 = vmatprep.mubr.bf16.mxu0 0
        %4122 = vmatmul.mubr.bf16.gmra.mrb[0].mxu0 %v4082
        %v4123 = vpop.f32.mrb[0].mxu0
        %v4124 = vadd.f32 0.0, %v4123
        %v4125 = vpop.f32.mrb[0].mxu0
        %v4126 = vpop.f32.mrb[0].mxu0
        %v4127 = vpop.f32.mrb[0].mxu0
        %4128 = vdwg.mxu0
        %v4130 = vsel %vm2862, %v3980, 0
        %v4133 = vsel %vm2862, %v3071, 0
        %v4135 = vsel %vm2862, %v3072, 0
        %4137 = vmatprep.subr.bf16.mxu0 0
        %4138 = vmatpush1.bf16.xpose.msra.mxu0 %v4133
        %4139 = vmatprep.subr.bf16.mxu0 0
        %4140 = vmatpush1.bf16.xpose.msra.mxu0 %v4135
        %4141 = vmatprep.subr.bf16.mxu0 0
        %4142 = vmatpush1.bf16.xpose.msra.mxu0 0
        %4143 = vmatprep.subr.bf16.mxu0 0
        %4144 = vmatpush1.bf16.xpose.msra.mxu0 0
        %4145 = vmatprep.subr.bf16.mxu0 0
        %4146 = vmatpush1.bf16.xpose.msra.mxu0 0
        %4147 = vmatprep.subr.bf16.mxu0 0
        %4148 = vmatpush1.bf16.xpose.msra.mxu0 0
        %4149 = vmatprep.subr.bf16.mxu0 0
        %4150 = vmatpush1.bf16.xpose.msra.mxu0 0
        %4151 = vmatprep.subr.bf16.mxu0 0
        %4152 = vmatpush1.bf16.xpose.msra.mxu0 0
        %4153 = vmatprep.subr.bf16.mxu0 0
        %4154 = vmatpush1.bf16.xpose.msra.mxu0 0
        %4155 = vmatprep.subr.bf16.mxu0 0
        %4156 = vmatpush1.bf16.xpose.msra.mxu0 0
        %4157 = vmatprep.subr.bf16.mxu0 0
        %4158 = vmatpush1.bf16.xpose.msra.mxu0 0
        %4159 = vmatprep.subr.bf16.mxu0 0
        %4160 = vmatpush1.bf16.xpose.msra.mxu0 0
        %4161 = vmatprep.subr.bf16.mxu0 0
        %4162 = vmatpush1.bf16.xpose.msra.mxu0 0
        %4163 = vmatprep.subr.bf16.mxu0 0
        %4164 = vmatpush1.bf16.xpose.msra.mxu0 0
        %4165 = vmatprep.subr.bf16.mxu0 0
        %4166 = vmatpush1.bf16.xpose.msra.mxu0 0
        %4167 = vmatprep.subr.bf16.mxu0 0
        %4168 = vmatpush1.bf16.xpose.msra.mxu0 0
        %4169 = vmatprep.mubr.bf16.mxu0 0
        %4170 = vmatmul.mubr.bf16.gmra.mrb[0].mxu0 %v4130
        %v4171 = vpop.f32.mrb[0].mxu0
        %v4172 = vadd.f32 0.0, %v4171
        %v4173 = vpop.f32.mrb[0].mxu0
        %v4174 = vpop.f32.mrb[0].mxu0
        %v4175 = vpop.f32.mrb[0].mxu0
        %4176 = vdwg.mxu0
        %v4178 = vsel %vm2862, %v3981, 0
        %v4181 = vsel %vm2862, %v3125, 0
        %v4183 = vsel %vm2862, %v3126, 0
        %4185 = vmatprep.subr.bf16.mxu0 0
        %4186 = vmatpush1.bf16.xpose.msra.mxu0 %v4181
        %4187 = vmatprep.subr.bf16.mxu0 0
        %4188 = vmatpush1.bf16.xpose.msra.mxu0 %v4183
        %4189 = vmatprep.subr.bf16.mxu0 0
        %4190 = vmatpush1.bf16.xpose.msra.mxu0 0
        %4191 = vmatprep.subr.bf16.mxu0 0
        %4192 = vmatpush1.bf16.xpose.msra.mxu0 0
        %4193 = vmatprep.subr.bf16.mxu0 0
        %4194 = vmatpush1.bf16.xpose.msra.mxu0 0
        %4195 = vmatprep.subr.bf16.mxu0 0
        %4196 = vmatpush1.bf16.xpose.msra.mxu0 0
        %4197 = vmatprep.subr.bf16.mxu0 0
        %4198 = vmatpush1.bf16.xpose.msra.mxu0 0
        %4199 = vmatprep.subr.bf16.mxu0 0
        %4200 = vmatpush1.bf16.xpose.msra.mxu0 0
        %4201 = vmatprep.subr.bf16.mxu0 0
        %4202 = vmatpush1.bf16.xpose.msra.mxu0 0
        %4203 = vmatprep.subr.bf16.mxu0 0
        %4204 = vmatpush1.bf16.xpose.msra.mxu0 0
        %4205 = vmatprep.subr.bf16.mxu0 0
        %4206 = vmatpush1.bf16.xpose.msra.mxu0 0
        %4207 = vmatprep.subr.bf16.mxu0 0
        %4208 = vmatpush1.bf16.xpose.msra.mxu0 0
        %4209 = vmatprep.subr.bf16.mxu0 0
        %4210 = vmatpush1.bf16.xpose.msra.mxu0 0
        %4211 = vmatprep.subr.bf16.mxu0 0
        %4212 = vmatpush1.bf16.xpose.msra.mxu0 0
        %4213 = vmatprep.subr.bf16.mxu0 0
        %4214 = vmatpush1.bf16.xpose.msra.mxu0 0
        %4215 = vmatprep.subr.bf16.mxu0 0
        %4216 = vmatpush1.bf16.xpose.msra.mxu0 0
        %4217 = vmatprep.mubr.bf16.mxu0 0
        %4218 = vmatmul.mubr.bf16.gmra.mrb[0].mxu0 %v4178
        %v4219 = vpop.f32.mrb[0].mxu0
        %v4220 = vadd.f32 0.0, %v4219
        %v4221 = vpop.f32.mrb[0].mxu0
        %v4222 = vpop.f32.mrb[0].mxu0
        %v4223 = vpop.f32.mrb[0].mxu0
        %4224 = vdwg.mxu0
        %v4226 = vsel %vm2862, %v3982, 0
        %v4229 = vsel %vm2862, %v3179, 0
        %v4231 = vsel %vm2862, %v3180, 0
        %4233 = vmatprep.subr.bf16.mxu0 0
        %4234 = vmatpush1.bf16.xpose.msra.mxu0 %v4229
        %4235 = vmatprep.subr.bf16.mxu0 0
        %4236 = vmatpush1.bf16.xpose.msra.mxu0 %v4231
        %4237 = vmatprep.subr.bf16.mxu0 0
        %4238 = vmatpush1.bf16.xpose.msra.mxu0 0
        %4239 = vmatprep.subr.bf16.mxu0 0
        %4240 = vmatpush1.bf16.xpose.msra.mxu0 0
        %4241 = vmatprep.subr.bf16.mxu0 0
        %4242 = vmatpush1.bf16.xpose.msra.mxu0 0
        %4243 = vmatprep.subr.bf16.mxu0 0
        %4244 = vmatpush1.bf16.xpose.msra.mxu0 0
        %4245 = vmatprep.subr.bf16.mxu0 0
        %4246 = vmatpush1.bf16.xpose.msra.mxu0 0
        %4247 = vmatprep.subr.bf16.mxu0 0
        %4248 = vmatpush1.bf16.xpose.msra.mxu0 0
        %4249 = vmatprep.subr.bf16.mxu0 0
        %4250 = vmatpush1.bf16.xpose.msra.mxu0 0
        %4251 = vmatprep.subr.bf16.mxu0 0
        %4252 = vmatpush1.bf16.xpose.msra.mxu0 0
        %4253 = vmatprep.subr.bf16.mxu0 0
        %4254 = vmatpush1.bf16.xpose.msra.mxu0 0
        %4255 = vmatprep.subr.bf16.mxu0 0
        %4256 = vmatpush1.bf16.xpose.msra.mxu0 0
        %4257 = vmatprep.subr.bf16.mxu0 0
        %4258 = vmatpush1.bf16.xpose.msra.mxu0 0
        %4259 = vmatprep.subr.bf16.mxu0 0
        %4260 = vmatpush1.bf16.xpose.msra.mxu0 0
        %4261 = vmatprep.subr.bf16.mxu0 0
        %4262 = vmatpush1.bf16.xpose.msra.mxu0 0
        %4263 = vmatprep.subr.bf16.mxu0 0
        %4264 = vmatpush1.bf16.xpose.msra.mxu0 0
        %4265 = vmatprep.mubr.bf16.mxu0 0
        %4266 = vmatmul.mubr.bf16.gmra.mrb[0].mxu0 %v4226
        %v4267 = vpop.f32.mrb[0].mxu0
        %v4268 = vadd.f32 0.0, %v4267
        %v4269 = vpop.f32.mrb[0].mxu0
        %v4270 = vpop.f32.mrb[0].mxu0
        %v4271 = vpop.f32.mrb[0].mxu0
        %4272 = vdwg.mxu0
        %v4274 = vsel %vm2862, %v3983, 0
        %v4277 = vsel %vm2862, %v3233, 0
        %v4279 = vsel %vm2862, %v3234, 0
        %4281 = vmatprep.subr.bf16.mxu0 0
        %4282 = vmatpush1.bf16.xpose.msra.mxu0 %v4277
        %4283 = vmatprep.subr.bf16.mxu0 0
        %4284 = vmatpush1.bf16.xpose.msra.mxu0 %v4279
        %4285 = vmatprep.subr.bf16.mxu0 0
        %4286 = vmatpush1.bf16.xpose.msra.mxu0 0
        %4287 = vmatprep.subr.bf16.mxu0 0
        %4288 = vmatpush1.bf16.xpose.msra.mxu0 0
        %4289 = vmatprep.subr.bf16.mxu0 0
        %4290 = vmatpush1.bf16.xpose.msra.mxu0 0
        %4291 = vmatprep.subr.bf16.mxu0 0
        %4292 = vmatpush1.bf16.xpose.msra.mxu0 0
        %4293 = vmatprep.subr.bf16.mxu0 0
        %4294 = vmatpush1.bf16.xpose.msra.mxu0 0
        %4295 = vmatprep.subr.bf16.mxu0 0
        %4296 = vmatpush1.bf16.xpose.msra.mxu0 0
        %4297 = vmatprep.subr.bf16.mxu0 0
        %4298 = vmatpush1.bf16.xpose.msra.mxu0 0
        %4299 = vmatprep.subr.bf16.mxu0 0
        %4300 = vmatpush1.bf16.xpose.msra.mxu0 0
        %4301 = vmatprep.subr.bf16.mxu0 0
        %4302 = vmatpush1.bf16.xpose.msra.mxu0 0
        %4303 = vmatprep.subr.bf16.mxu0 0
        %4304 = vmatpush1.bf16.xpose.msra.mxu0 0
        %4305 = vmatprep.subr.bf16.mxu0 0
        %4306 = vmatpush1.bf16.xpose.msra.mxu0 0
        %4307 = vmatprep.subr.bf16.mxu0 0
        %4308 = vmatpush1.bf16.xpose.msra.mxu0 0
        %4309 = vmatprep.subr.bf16.mxu0 0
        %4310 = vmatpush1.bf16.xpose.msra.mxu0 0
        %4311 = vmatprep.subr.bf16.mxu0 0
        %4312 = vmatpush1.bf16.xpose.msra.mxu0 0
        %4313 = vmatprep.mubr.bf16.mxu0 0
        %4314 = vmatmul.mubr.bf16.gmra.mrb[0].mxu0 %v4274
        %v4315 = vpop.f32.mrb[0].mxu0
        %v4316 = vadd.f32 0.0, %v4315
        %v4317 = vpop.f32.mrb[0].mxu0
        %v4318 = vpop.f32.mrb[0].mxu0
        %v4319 = vpop.f32.mrb[0].mxu0
        %4320 = vdwg.mxu0
        %v4322 = vsel %vm2862, %v3984, 0
        %v4325 = vsel %vm2862, %v3287, 0
        %v4327 = vsel %vm2862, %v3288, 0
        %4329 = vmatprep.subr.bf16.mxu0 0
        %4330 = vmatpush1.bf16.xpose.msra.mxu0 %v4325
        %4331 = vmatprep.subr.bf16.mxu0 0
        %4332 = vmatpush1.bf16.xpose.msra.mxu0 %v4327
        %4333 = vmatprep.subr.bf16.mxu0 0
        %4334 = vmatpush1.bf16.xpose.msra.mxu0 0
        %4335 = vmatprep.subr.bf16.mxu0 0
        %4336 = vmatpush1.bf16.xpose.msra.mxu0 0
        %4337 = vmatprep.subr.bf16.mxu0 0
        %4338 = vmatpush1.bf16.xpose.msra.mxu0 0
        %4339 = vmatprep.subr.bf16.mxu0 0
        %4340 = vmatpush1.bf16.xpose.msra.mxu0 0
        %4341 = vmatprep.subr.bf16.mxu0 0
        %4342 = vmatpush1.bf16.xpose.msra.mxu0 0
        %4343 = vmatprep.subr.bf16.mxu0 0
        %4344 = vmatpush1.bf16.xpose.msra.mxu0 0
        %4345 = vmatprep.subr.bf16.mxu0 0
        %4346 = vmatpush1.bf16.xpose.msra.mxu0 0
        %4347 = vmatprep.subr.bf16.mxu0 0
        %4348 = vmatpush1.bf16.xpose.msra.mxu0 0
        %4349 = vmatprep.subr.bf16.mxu0 0
        %4350 = vmatpush1.bf16.xpose.msra.mxu0 0
        %4351 = vmatprep.subr.bf16.mxu0 0
        %4352 = vmatpush1.bf16.xpose.msra.mxu0 0
        %4353 = vmatprep.subr.bf16.mxu0 0
        %4354 = vmatpush1.bf16.xpose.msra.mxu0 0
        %4355 = vmatprep.subr.bf16.mxu0 0
        %4356 = vmatpush1.bf16.xpose.msra.mxu0 0
        %4357 = vmatprep.subr.bf16.mxu0 0
        %4358 = vmatpush1.bf16.xpose.msra.mxu0 0
        %4359 = vmatprep.subr.bf16.mxu0 0
        %4360 = vmatpush1.bf16.xpose.msra.mxu0 0
        %4361 = vmatprep.mubr.bf16.mxu0 0
        %4362 = vmatmul.mubr.bf16.gmra.mrb[0].mxu0 %v4322
        %v4363 = vpop.f32.mrb[0].mxu0
        %v4364 = vadd.f32 0.0, %v4363
        %v4365 = vpop.f32.mrb[0].mxu0
        %v4366 = vpop.f32.mrb[0].mxu0
        %v4367 = vpop.f32.mrb[0].mxu0
        %4368 = vdwg.mxu0
        %v4369 = vmul.f32 %v3545, %v656
        %v4370 = vmul.f32 %v3546, %v656
        %v4371 = vmul.f32 %v3547, %v656
        %v4372 = vmul.f32 %v3548, %v656
        %v4373 = vsel %vm2862, %v4369, 0.0
        %4374 = vadd.xlane.f32.xlu0 %v4373
        %v4375 = vpop.xlane.xlu0 %4374
        %v4376 = vsel %vm2862, %v4370, 0.0
        %4377 = vadd.xlane.f32.xlu0 %v4376
        %v4378 = vpop.xlane.xlu0 %4377
        %v4379 = vsel %vm2862, %v4371, 0.0
        %4380 = vadd.xlane.f32.xlu0 %v4379
        %v4381 = vpop.xlane.xlu0 %4380
        %v4382 = vsel %vm2862, %v4372, 0.0
        %4383 = vadd.xlane.f32.xlu0 %v4382
        %v4384 = vpop.xlane.xlu0 %4383
        %vm4385 = vcmask 7168
        %4386 = vst.msk [vmem:[%s622] sm:$0xff] %vm4385, %v4375
        %v4395 = vrot.slane %v4076, 7
        %v4396 = vsel %vm2551, %v4395, %v4028
        %v4397 = vrot.slane %v4124, 6
        %v4398 = vsel %vm2552, %v4397, %v4396
        %v4399 = vrot.slane %v4172, 5
        %v4400 = vsel %vm2554, %v4399, %v4398
        %v4401 = vrot.slane %v4220, 4
        %v4402 = vsel %vm2556, %v4401, %v4400
        %v4403 = vrot.slane %v4268, 3
        %v4404 = vsel %vm2558, %v4403, %v4402
        %v4405 = vrot.slane %v4316, 2
        %v4406 = vsel %vm2560, %v4405, %v4404
        %v4407 = vrot.slane %v4364, 1
        %v4408 = vsel %vm2562, %v4407, %v4406
        %4409 = vrot.lane.b32.xlu0 %v4408, 1
        %v4410 = vpop.permute.xlu0 %4409
        %vm4412 = vcmask 261128
        %4413 = vst.msk [vmem:[%s622] sm:$0xff] %vm4412, %v4410
        %4414 = vst.msk [vmem:[%s622 + $0x8] sm:$0xff] %vm677, %v3603
        %vm4415 = vcmask 269568
        %4416 = vst.msk [vmem:[%s622] sm:$0xff] %vm4415, %v4378
        %v4417 = vrot.slane %v4028, 1
        %v4418 = vsel %vm2551, %v4076, %v4417
        %v4419 = vrot.slane %v4124, 7
        %v4420 = vsel %vm2552, %v4419, %v4418
        %v4421 = vrot.slane %v4172, 6
        %v4422 = vsel %vm2554, %v4421, %v4420
        %v4423 = vrot.slane %v4220, 5
        %v4424 = vsel %vm2556, %v4423, %v4422
        %v4425 = vrot.slane %v4268, 4
        %v4426 = vsel %vm2558, %v4425, %v4424
        %v4427 = vrot.slane %v4316, 3
        %v4428 = vsel %vm2560, %v4427, %v4426
        %v4429 = vrot.slane %v4364, 2
        %v4430 = vsel %vm2562, %v4429, %v4428
        %4431 = vrot.lane.b32.xlu0 %v4430, 33
        %v4432 = vpop.permute.xlu0 %4431
        %vm4434 = vcmask 523528
        %4435 = vst.msk [vmem:[%s622] sm:$0xff] %vm4434, %v4432
        %4437 = vrot.lane.b32.xlu0 %v3646, 8
        %v4438 = vpop.permute.xlu0 %4437
        %4440 = vst.msk [vmem:[%s622 + $0x8] sm:$0xff] %vm2414, %v4438
        %vm4441 = vcmask 531968
        %4442 = vst.msk [vmem:[%s622] sm:$0xff] %vm4441, %v4381
        %v4443 = vrot.slane %v4028, 2
        %v4444 = vrot.slane %v4076, 1
        %v4445 = vsel %vm2551, %v4444, %v4443
        %v4446 = vsel %vm2552, %v4124, %v4445
        %v4447 = vrot.slane %v4172, 7
        %v4448 = vsel %vm2554, %v4447, %v4446
        %v4449 = vrot.slane %v4220, 6
        %v4450 = vsel %vm2556, %v4449, %v4448
        %v4451 = vrot.slane %v4268, 5
        %v4452 = vsel %vm2558, %v4451, %v4450
        %v4453 = vrot.slane %v4316, 4
        %v4454 = vsel %vm2560, %v4453, %v4452
        %v4455 = vrot.slane %v4364, 3
        %v4456 = vsel %vm2562, %v4455, %v4454
        %4457 = vrot.lane.b32.xlu0 %v4456, 65
        %v4458 = vpop.permute.xlu0 %4457
        %vm4460 = vcmask 785928
        %4461 = vst.msk [vmem:[%s622] sm:$0xff] %vm4460, %v4458
        %4463 = vrot.lane.b32.xlu0 %v3689, 16
        %v4464 = vpop.permute.xlu0 %4463
        %vm4466 = vcmask 195712
        %4467 = vst.msk [vmem:[%s622 + $0x8] sm:$0xff] %vm4466, %v4464
        %vm4468 = vcmask 794368
        %4469 = vst.msk [vmem:[%s622] sm:$0xff] %vm4468, %v4384
        %v4470 = vrot.slane %v4028, 3
        %v4471 = vrot.slane %v4076, 2
        %v4472 = vsel %vm2551, %v4471, %v4470
        %v4473 = vrot.slane %v4124, 1
        %v4474 = vsel %vm2552, %v4473, %v4472
        %v4475 = vsel %vm2554, %v4172, %v4474
        %v4476 = vrot.slane %v4220, 7
        %v4477 = vsel %vm2556, %v4476, %v4475
        %v4478 = vrot.slane %v4268, 6
        %v4479 = vsel %vm2558, %v4478, %v4477
        %v4480 = vrot.slane %v4316, 5
        %v4481 = vsel %vm2560, %v4480, %v4479
        %v4482 = vrot.slane %v4364, 4
        %v4483 = vsel %vm2562, %v4482, %v4481
        %4484 = vrot.lane.b32.xlu0 %v4483, 97
        %v4485 = vpop.permute.xlu0 %4484
        %vm4487 = vcmask 1048328
        %4488 = vst.msk [vmem:[%s622] sm:$0xff] %vm4487, %v4485
        %4490 = vrot.lane.b32.xlu0 %v3732, 24
        %v4491 = vpop.permute.xlu0 %4490
        %vm4493 = vcmask 261312
        %4494 = vst.msk [vmem:[%s622 + $0x8] sm:$0xff] %vm4493, %v4491
        %vm4495 = vcmask 97280
        %4496 = vst.msk [vmem:[%s606] sm:$0xff] %vm4495, %v3784
        %4497 = vst.msk [vmem:[%s606 + $0x8] sm:$0xff] %vm4495, %v3824
        %4498 = vst.msk [vmem:[%s606 + $0x10] sm:$0xff] %vm4495, %v3864
        %4499 = vst.msk [vmem:[%s606 + $0x18] sm:$0xff] %vm4495, %v3904
        %p4500 = scmp.lt.s32.totalorder %s24, 1
        %s4501 = scalar_select %p4500, %s24, 1
        %s4502 = smul.addr %s4501, 2
        %s4503 = smul.addr %s4502, 8
        %s4504 = scalar_lea.vmem %s11, %s4503
        %s4505 = sand.u32 %s309, 1
        %s4506 = sand.u32 %s309, 1
        %s4507 = smul.addr %s4506, 32
        %s4508 = scalar_lea.vmem [#allocation4], %s4507
        // Predicated region
        $region141: #{structure_module_forward.10} parent=131 // pred_check
          %p4509 = pneg %p293
        $region142: #{structure_module_forward.10} parent=131 // pred_check_branch
          %4511 = sbr.rel (%p4509) target = $region144
        $region143: #{structure_module_forward.10} parent=131 // pred_region
          _
        $region144: #{structure_module_forward.10} parent=131 // pred_fallthru
          _
        // Predicated region
        $region145: #{structure_module_forward.10} parent=131 // pred_check
          %p4512 = pneg %p319
        $region146: #{structure_module_forward.10} parent=131 // pred_check_branch
          %4514 = sbr.rel (%p4512) target = $region148
        $region147: #{structure_module_forward.10} parent=131 // pred_region
          %s4515 = smul.addr %s24, 8
          %s4516 = scalar_lea.vmem %s12, %s4515
          // Predicated region
          $region149: #{structure_module_forward.10} parent=147 // pred_check
            _
          $region150: #{structure_module_forward.10} parent=147 // pred_check_branch
            %4518 = sbr.rel (0) target = $region152
          $region151: #{structure_module_forward.10} parent=147 // pred_region
            // Predicated region
            $region153: #{structure_module_forward.10} parent=151 // pred_check
              _
            $region154: #{structure_module_forward.10} parent=151 // pred_check_branch
              %4520 = sbr.rel (0) target = $region156
            $region155: #{structure_module_forward.10} parent=151 // pred_region
              // Predicated region
              $region168: #{structure_module_forward.10} parent=155 // pred_check
                _
              $region169: #{structure_module_forward.10} parent=155 // pred_check_branch
                %4541 = sbr.rel (0) target = $region171
              $region170: #{structure_module_forward.10} parent=155 // pred_region
                loop: start=0, step=1, limit=1
                $region172: #{structure_module_forward.10} parent=170 // loop_pre_header
                  _
                $region173: #{structure_module_forward.10} parent=170 // loop_header
                  %s4543 = sphi 0, %s4547
                  %p4544 = scmp.ge.s32.totalorder %s4543, 1
                  %s4548 = sphi %s4508, %s4508
                  %s4549 = sphi %s4516, %s4516
                $region174: #{structure_module_forward.10} parent=170 // loop_header_branch
                  %4546 = sbr.rel (%p4544) target = $region178
                $region175: #{structure_module_forward.10} parent=170 // loop_body
                  %v4550 = vld [vmem:[%s4548] sm:$0xff]
                  %4551 = vst [vmem:[%s4549] sm:$0xff] %v4550
                  %v4552 = vld [vmem:[%s4548 + $0x8] sm:$0xff]
                  %4553 = vst [vmem:[%s4549 + $0x10] sm:$0xff] %v4552
                  %v4554 = vld [vmem:[%s4548 + $0x10] sm:$0xff]
                  %4555 = vst [vmem:[%s4549 + $0x20] sm:$0xff] %v4554
                  %v4556 = vld [vmem:[%s4548 + $0x18] sm:$0xff]
                  %4557 = vst [vmem:[%s4549 + $0x30] sm:$0xff] %v4556
                $region176: #{structure_module_forward.10} parent=170 // loop_footer
                  %s4547 = sadd.s32 1, %s4543
                $region177: #{structure_module_forward.10} parent=170 // loop_footer_branch
                  %4542 = sbr.rel target = $region173
                $region178: #{structure_module_forward.10} parent=170 // loop_exit
                  _
              $region171: #{structure_module_forward.10} parent=155 // pred_fallthru
                _
              // Predicated region
              $region179: #{structure_module_forward.10} parent=155 // pred_check
                _
              $region180: #{structure_module_forward.10} parent=155 // pred_check_branch
                %4559 = sbr.rel target = $region182
              $region181: #{structure_module_forward.10} parent=155 // pred_region
                _
              $region182: #{structure_module_forward.10} parent=155 // pred_fallthru
                _
            $region156: #{structure_module_forward.10} parent=151 // pred_fallthru
              _
            // Predicated region
            $region157: #{structure_module_forward.10} parent=151 // pred_check
              _
            $region158: #{structure_module_forward.10} parent=151 // pred_check_branch
              %4522 = sbr.rel target = $region160
            $region159: #{structure_module_forward.10} parent=151 // pred_region
              loop: start=0, step=1, limit=1
              $region161: #{structure_module_forward.10} parent=159 // loop_pre_header
                _
              $region162: #{structure_module_forward.10} parent=159 // loop_header
                %s4525 = sphi 0, %s4529
                %p4526 = scmp.ge.s32.totalorder %s4525, 1
                %s4530 = sphi %s4508, %s4508
                %s4531 = sphi %s4516, %s4516
              $region163: #{structure_module_forward.10} parent=159 // loop_header_branch
                %4528 = sbr.rel (%p4526) target = $region167
              $region164: #{structure_module_forward.10} parent=159 // loop_body
                %v4532 = vld [vmem:[%s4530] sm:$0xff]
                %4533 = vst [vmem:[%s4531] sm:$0xff] %v4532
                %v4534 = vld [vmem:[%s4530 + $0x8] sm:$0xff]
                %4535 = vst [vmem:[%s4531 + $0x10] sm:$0xff] %v4534
                %v4536 = vld [vmem:[%s4530 + $0x10] sm:$0xff]
                %4537 = vst [vmem:[%s4531 + $0x20] sm:$0xff] %v4536
                %v4538 = vld [vmem:[%s4530 + $0x18] sm:$0xff]
                %4539 = vst [vmem:[%s4531 + $0x30] sm:$0xff] %v4538
              $region165: #{structure_module_forward.10} parent=159 // loop_footer
                %s4529 = sadd.s32 1, %s4525
              $region166: #{structure_module_forward.10} parent=159 // loop_footer_branch
                %4524 = sbr.rel target = $region162
              $region167: #{structure_module_forward.10} parent=159 // loop_exit
                _
            $region160: #{structure_module_forward.10} parent=151 // pred_fallthru
              _
          $region152: #{structure_module_forward.10} parent=147 // pred_fallthru
            _
          %4560 = vnop
        $region148: #{structure_module_forward.10} parent=131 // pred_fallthru
          _
      $region132: #{structure_module_forward.10} parent=5 // pred_fallthru
        _
      %p4561 = scmp.le.s32.totalorder 2, %s19
      // Predicated region
      $region183: #{structure_module_forward.10} parent=5 // pred_check
        %p4562 = pneg %p4561
      $region184: #{structure_module_forward.10} parent=5 // pred_check_branch
        %4564 = sbr.rel (%p4562) target = $region186
      $region185: #{structure_module_forward.10} parent=5 // pred_region
        %s4565 = ssub.s32 %s19, 2
        // Predicated region
        $region187: #{structure_module_forward.10} parent=185 // pred_check
          %p4566 = pneg %p299
        $region188: #{structure_module_forward.10} parent=185 // pred_check_branch
          %4568 = sbr.rel (%p4566) target = $region190
        $region189: #{structure_module_forward.10} parent=185 // pred_region
          %p4569 = scmp.lt.s32.totalorder %s25, 1
          %s4570 = scalar_select %p4569, %s25, 1
          %s4571 = smul.addr %s4570, 2
          %s4572 = smul.addr %s4571, 8
          %s4573 = scalar_lea.vmem %s11, %s4572
        $region190: #{structure_module_forward.10} parent=185 // pred_fallthru
          _
        // Predicated region
        $region191: #{structure_module_forward.10} parent=185 // pred_check
          %p4574 = pneg %p325
        $region192: #{structure_module_forward.10} parent=185 // pred_check_branch
          %4576 = sbr.rel (%p4574) target = $region194
        $region193: #{structure_module_forward.10} parent=185 // pred_region
          %s4577 = sand.u32 %s310, 1
          %s4578 = sand.u32 %s310, 1
          %s4579 = smul.addr %s4578, 32
          %s4580 = scalar_lea.vmem [#allocation4], %s4579
        $region194: #{structure_module_forward.10} parent=185 // pred_fallthru
          _
      $region186: #{structure_module_forward.10} parent=5 // pred_fallthru
        _
    $region6: #{structure_module_forward.10} parent=1 // loop_footer
      %s23 = sadd.s32 1, %s19
    $region7: #{structure_module_forward.10} parent=1 // loop_footer_branch
      %18 = sbr.rel target = $region3
    $region8: #{structure_module_forward.10} parent=1 // loop_exit
      _

// kernel: structure_module_forward.15
$region0: #{structure_module_forward.15}
  #allocation0 [shape = 'u32[]', space=smem, size = 0x4, offset = 0x4, fixed_abs, tag = 'smem constant byte address 0x4 - core index']
  #allocation1 [shape = 'u32[144,128]{1,0:T(1,128)}', space=vmem, size = 0x12000, scoped, tag = 'internal scratch']
  %s0 = inlined_call_operand.vmem [shape: f32[16,64], index: 0, kind: input, shape index: {}]
  %s1 = inlined_call_operand.vmem [shape: f32[64,64], index: 1, kind: input, shape index: {}]
  %s2 = inlined_call_operand.vmem [shape: f32[1,64], index: 2, kind: input, shape index: {}]
  %s3 = inlined_call_operand.vmem [shape: f32[64,64], index: 3, kind: input, shape index: {}]
  %s4 = inlined_call_operand.vmem [shape: f32[1,64], index: 4, kind: input, shape index: {}]
  %s5 = inlined_call_operand.vmem [shape: f32[64,64], index: 5, kind: input, shape index: {}]
  %s6 = inlined_call_operand.vmem [shape: f32[1,64], index: 6, kind: input, shape index: {}]
  %s7 = inlined_call_operand.vmem [shape: f32[64,64], index: 7, kind: input, shape index: {}]
  %s8 = inlined_call_operand.vmem [shape: f32[1,64], index: 8, kind: input, shape index: {}]
  %s9 = inlined_call_operand.vmem [shape: f32[64,64], index: 9, kind: input, shape index: {}]
  %s10 = inlined_call_operand.vmem [shape: f32[1,64], index: 10, kind: input, shape index: {}]
  %s11 = inlined_call_operand.vmem [shape: f32[64,64], index: 11, kind: input, shape index: {}]
  %s12 = inlined_call_operand.vmem [shape: f32[1,64], index: 12, kind: input, shape index: {}]
  %s13 = inlined_call_operand.vmem [shape: f32[64,10], index: 13, kind: input, shape index: {}]
  %s14 = inlined_call_operand.vmem [shape: f32[1,10], index: 14, kind: input, shape index: {}]
  %s15 = inlined_call_operand.vmem [shape: f32[16,10], index: 15, kind: output, shape index: {}]
  %s16 = sld [smem:[#allocation0]]
  $region93: #{structure_module_forward.15} parent=0
    _
  %s18 = ssub.s32 1, %s16
  %s19 = scalar_select 0, %s18, %s16
  loop: start=0, step=1, limit=4
  $region2: #{structure_module_forward.15} parent=0 // loop_pre_header
    _
  $region3: #{structure_module_forward.15} parent=0 // loop_header
    %s21 = sphi 0, %s25
    %p22 = scmp.ge.s32.totalorder %s21, 4
    %s31 = sphi 0, %s33
    %s34 = sphi 0, %s31
    %s35 = sphi 0, %s34
    %s51 = sphi 0, %s35
    %s55 = sphi 0, %s55
    %s57 = sphi 0, %s55
    %s58 = sphi 0, %s57
    %s72 = sphi 0, %s58
    %s76 = sphi 0, %s76
    %s78 = sphi 0, %s76
    %s79 = sphi 0, %s78
    %s93 = sphi 0, %s79
    %s97 = sphi 0, %s97
    %s99 = sphi 0, %s97
    %s100 = sphi 0, %s99
    %s114 = sphi 0, %s100
    %s118 = sphi 0, %s118
    %s120 = sphi 0, %s118
    %s121 = sphi 0, %s120
    %s135 = sphi 0, %s121
    %s139 = sphi 0, %s139
    %s141 = sphi 0, %s139
    %s142 = sphi 0, %s141
    %s156 = sphi 0, %s142
    %s160 = sphi 0, %s160
    %s162 = sphi 0, %s160
    %s163 = sphi 0, %s162
    %s177 = sphi 0, %s163
    %s181 = sphi 0, %s181
    %s183 = sphi 0, %s181
    %s184 = sphi 0, %s183
    %s198 = sphi 0, %s184
    %s202 = sphi 0, %s202
    %s204 = sphi 0, %s202
    %s205 = sphi 0, %s204
    %s219 = sphi 0, %s205
    %s223 = sphi 0, %s223
    %s225 = sphi 0, %s223
    %s226 = sphi 0, %s225
    %s240 = sphi 0, %s226
    %s244 = sphi 0, %s244
    %s246 = sphi 0, %s244
    %s247 = sphi 0, %s246
    %s261 = sphi 0, %s247
    %s265 = sphi 0, %s265
    %s267 = sphi 0, %s265
    %s268 = sphi 0, %s267
    %s282 = sphi 0, %s268
    %s286 = sphi 0, %s286
    %s288 = sphi 0, %s286
    %s289 = sphi 0, %s288
    %s303 = sphi 0, %s289
    %s307 = sphi 0, %s307
    %s309 = sphi 0, %s307
    %s310 = sphi 0, %s309
    %s324 = sphi 0, %s310
    %s328 = sphi 0, %s328
    %s330 = sphi 0, %s328
    %s331 = sphi 0, %s330
    %s345 = sphi 0, %s331
    %s351 = sphi 0, %s353
    %s354 = sphi 0, %s351
    %s355 = sphi 0, %s354
    %s371 = sphi 0, %s355
  $region4: #{structure_module_forward.15} parent=0 // loop_header_branch
    %24 = sbr.rel (%p22) target = $region8
  $region5: #{structure_module_forward.15} parent=0 // loop_body
    %s26 = ssub.s32 %s21, 1
    %s27 = ssub.s32 %s21, 2
    %s28 = sadd.s32 %s21, 1
    %s29 = ssub.s32 %s21, %s28
    %p30 = scmp.eq.s32.totalorder %s29, 0
    %s32 = sadd.s32 %s31, 1
    %s33 = scalar_select %p30, %s31, %s32
    %p36 = pneg %p30
    %p37 = scmp.eq.s32.totalorder %s21, 1
    %p38 = por %p36, %p37
    %p39 = scmp.ne.s32.totalorder %s31, %s34
    %p40 = scmp.eq.s32.totalorder %s21, 0
    %p41 = por %p39, %p40
    %p42 = scmp.ne.s32.totalorder %s31, %s34
    %p43 = scmp.eq.s32.totalorder %s26, 1
    %p44 = por %p42, %p43
    %p45 = scmp.ne.s32.totalorder %s34, %s35
    %p46 = scmp.eq.s32.totalorder %s26, 0
    %p47 = por %p45, %p46
    %p48 = scmp.ne.s32.totalorder %s34, %s35
    %p49 = scmp.eq.s32.totalorder %s27, 1
    %p50 = por %p48, %p49
    %p52 = scmp.ne.s32.totalorder %s35, %s51
    %p53 = scmp.eq.s32.totalorder %s27, 0
    %p54 = por %p52, %p53
    %s56 = sadd.s32 %s55, 1
    %p59 = scmp.eq.s32.totalorder %s21, 1
    %p60 = scmp.ne.s32.totalorder %s55, %s57
    %p61 = scmp.eq.s32.totalorder %s21, 0
    %p62 = por %p60, %p61
    %p63 = scmp.ne.s32.totalorder %s55, %s57
    %p64 = scmp.eq.s32.totalorder %s26, 1
    %p65 = por %p63, %p64
    %p66 = scmp.ne.s32.totalorder %s57, %s58
    %p67 = scmp.eq.s32.totalorder %s26, 0
    %p68 = por %p66, %p67
    %p69 = scmp.ne.s32.totalorder %s57, %s58
    %p70 = scmp.eq.s32.totalorder %s27, 1
    %p71 = por %p69, %p70
    %p73 = scmp.ne.s32.totalorder %s58, %s72
    %p74 = scmp.eq.s32.totalorder %s27, 0
    %p75 = por %p73, %p74
    %s77 = sadd.s32 %s76, 1
    %p80 = scmp.eq.s32.totalorder %s21, 1
    %p81 = scmp.ne.s32.totalorder %s76, %s78
    %p82 = scmp.eq.s32.totalorder %s21, 0
    %p83 = por %p81, %p82
    %p84 = scmp.ne.s32.totalorder %s76, %s78
    %p85 = scmp.eq.s32.totalorder %s26, 1
    %p86 = por %p84, %p85
    %p87 = scmp.ne.s32.totalorder %s78, %s79
    %p88 = scmp.eq.s32.totalorder %s26, 0
    %p89 = por %p87, %p88
    %p90 = scmp.ne.s32.totalorder %s78, %s79
    %p91 = scmp.eq.s32.totalorder %s27, 1
    %p92 = por %p90, %p91
    %p94 = scmp.ne.s32.totalorder %s79, %s93
    %p95 = scmp.eq.s32.totalorder %s27, 0
    %p96 = por %p94, %p95
    %s98 = sadd.s32 %s97, 1
    %p101 = scmp.eq.s32.totalorder %s21, 1
    %p102 = scmp.ne.s32.totalorder %s97, %s99
    %p103 = scmp.eq.s32.totalorder %s21, 0
    %p104 = por %p102, %p103
    %p105 = scmp.ne.s32.totalorder %s97, %s99
    %p106 = scmp.eq.s32.totalorder %s26, 1
    %p107 = por %p105, %p106
    %p108 = scmp.ne.s32.totalorder %s99, %s100
    %p109 = scmp.eq.s32.totalorder %s26, 0
    %p110 = por %p108, %p109
    %p111 = scmp.ne.s32.totalorder %s99, %s100
    %p112 = scmp.eq.s32.totalorder %s27, 1
    %p113 = por %p111, %p112
    %p115 = scmp.ne.s32.totalorder %s100, %s114
    %p116 = scmp.eq.s32.totalorder %s27, 0
    %p117 = por %p115, %p116
    %s119 = sadd.s32 %s118, 1
    %p122 = scmp.eq.s32.totalorder %s21, 1
    %p123 = scmp.ne.s32.totalorder %s118, %s120
    %p124 = scmp.eq.s32.totalorder %s21, 0
    %p125 = por %p123, %p124
    %p126 = scmp.ne.s32.totalorder %s118, %s120
    %p127 = scmp.eq.s32.totalorder %s26, 1
    %p128 = por %p126, %p127
    %p129 = scmp.ne.s32.totalorder %s120, %s121
    %p130 = scmp.eq.s32.totalorder %s26, 0
    %p131 = por %p129, %p130
    %p132 = scmp.ne.s32.totalorder %s120, %s121
    %p133 = scmp.eq.s32.totalorder %s27, 1
    %p134 = por %p132, %p133
    %p136 = scmp.ne.s32.totalorder %s121, %s135
    %p137 = scmp.eq.s32.totalorder %s27, 0
    %p138 = por %p136, %p137
    %s140 = sadd.s32 %s139, 1
    %p143 = scmp.eq.s32.totalorder %s21, 1
    %p144 = scmp.ne.s32.totalorder %s139, %s141
    %p145 = scmp.eq.s32.totalorder %s21, 0
    %p146 = por %p144, %p145
    %p147 = scmp.ne.s32.totalorder %s139, %s141
    %p148 = scmp.eq.s32.totalorder %s26, 1
    %p149 = por %p147, %p148
    %p150 = scmp.ne.s32.totalorder %s141, %s142
    %p151 = scmp.eq.s32.totalorder %s26, 0
    %p152 = por %p150, %p151
    %p153 = scmp.ne.s32.totalorder %s141, %s142
    %p154 = scmp.eq.s32.totalorder %s27, 1
    %p155 = por %p153, %p154
    %p157 = scmp.ne.s32.totalorder %s142, %s156
    %p158 = scmp.eq.s32.totalorder %s27, 0
    %p159 = por %p157, %p158
    %s161 = sadd.s32 %s160, 1
    %p164 = scmp.eq.s32.totalorder %s21, 1
    %p165 = scmp.ne.s32.totalorder %s160, %s162
    %p166 = scmp.eq.s32.totalorder %s21, 0
    %p167 = por %p165, %p166
    %p168 = scmp.ne.s32.totalorder %s160, %s162
    %p169 = scmp.eq.s32.totalorder %s26, 1
    %p170 = por %p168, %p169
    %p171 = scmp.ne.s32.totalorder %s162, %s163
    %p172 = scmp.eq.s32.totalorder %s26, 0
    %p173 = por %p171, %p172
    %p174 = scmp.ne.s32.totalorder %s162, %s163
    %p175 = scmp.eq.s32.totalorder %s27, 1
    %p176 = por %p174, %p175
    %p178 = scmp.ne.s32.totalorder %s163, %s177
    %p179 = scmp.eq.s32.totalorder %s27, 0
    %p180 = por %p178, %p179
    %s182 = sadd.s32 %s181, 1
    %p185 = scmp.eq.s32.totalorder %s21, 1
    %p186 = scmp.ne.s32.totalorder %s181, %s183
    %p187 = scmp.eq.s32.totalorder %s21, 0
    %p188 = por %p186, %p187
    %p189 = scmp.ne.s32.totalorder %s181, %s183
    %p190 = scmp.eq.s32.totalorder %s26, 1
    %p191 = por %p189, %p190
    %p192 = scmp.ne.s32.totalorder %s183, %s184
    %p193 = scmp.eq.s32.totalorder %s26, 0
    %p194 = por %p192, %p193
    %p195 = scmp.ne.s32.totalorder %s183, %s184
    %p196 = scmp.eq.s32.totalorder %s27, 1
    %p197 = por %p195, %p196
    %p199 = scmp.ne.s32.totalorder %s184, %s198
    %p200 = scmp.eq.s32.totalorder %s27, 0
    %p201 = por %p199, %p200
    %s203 = sadd.s32 %s202, 1
    %p206 = scmp.eq.s32.totalorder %s21, 1
    %p207 = scmp.ne.s32.totalorder %s202, %s204
    %p208 = scmp.eq.s32.totalorder %s21, 0
    %p209 = por %p207, %p208
    %p210 = scmp.ne.s32.totalorder %s202, %s204
    %p211 = scmp.eq.s32.totalorder %s26, 1
    %p212 = por %p210, %p211
    %p213 = scmp.ne.s32.totalorder %s204, %s205
    %p214 = scmp.eq.s32.totalorder %s26, 0
    %p215 = por %p213, %p214
    %p216 = scmp.ne.s32.totalorder %s204, %s205
    %p217 = scmp.eq.s32.totalorder %s27, 1
    %p218 = por %p216, %p217
    %p220 = scmp.ne.s32.totalorder %s205, %s219
    %p221 = scmp.eq.s32.totalorder %s27, 0
    %p222 = por %p220, %p221
    %s224 = sadd.s32 %s223, 1
    %p227 = scmp.eq.s32.totalorder %s21, 1
    %p228 = scmp.ne.s32.totalorder %s223, %s225
    %p229 = scmp.eq.s32.totalorder %s21, 0
    %p230 = por %p228, %p229
    %p231 = scmp.ne.s32.totalorder %s223, %s225
    %p232 = scmp.eq.s32.totalorder %s26, 1
    %p233 = por %p231, %p232
    %p234 = scmp.ne.s32.totalorder %s225, %s226
    %p235 = scmp.eq.s32.totalorder %s26, 0
    %p236 = por %p234, %p235
    %p237 = scmp.ne.s32.totalorder %s225, %s226
    %p238 = scmp.eq.s32.totalorder %s27, 1
    %p239 = por %p237, %p238
    %p241 = scmp.ne.s32.totalorder %s226, %s240
    %p242 = scmp.eq.s32.totalorder %s27, 0
    %p243 = por %p241, %p242
    %s245 = sadd.s32 %s244, 1
    %p248 = scmp.eq.s32.totalorder %s21, 1
    %p249 = scmp.ne.s32.totalorder %s244, %s246
    %p250 = scmp.eq.s32.totalorder %s21, 0
    %p251 = por %p249, %p250
    %p252 = scmp.ne.s32.totalorder %s244, %s246
    %p253 = scmp.eq.s32.totalorder %s26, 1
    %p254 = por %p252, %p253
    %p255 = scmp.ne.s32.totalorder %s246, %s247
    %p256 = scmp.eq.s32.totalorder %s26, 0
    %p257 = por %p255, %p256
    %p258 = scmp.ne.s32.totalorder %s246, %s247
    %p259 = scmp.eq.s32.totalorder %s27, 1
    %p260 = por %p258, %p259
    %p262 = scmp.ne.s32.totalorder %s247, %s261
    %p263 = scmp.eq.s32.totalorder %s27, 0
    %p264 = por %p262, %p263
    %s266 = sadd.s32 %s265, 1
    %p269 = scmp.eq.s32.totalorder %s21, 1
    %p270 = scmp.ne.s32.totalorder %s265, %s267
    %p271 = scmp.eq.s32.totalorder %s21, 0
    %p272 = por %p270, %p271
    %p273 = scmp.ne.s32.totalorder %s265, %s267
    %p274 = scmp.eq.s32.totalorder %s26, 1
    %p275 = por %p273, %p274
    %p276 = scmp.ne.s32.totalorder %s267, %s268
    %p277 = scmp.eq.s32.totalorder %s26, 0
    %p278 = por %p276, %p277
    %p279 = scmp.ne.s32.totalorder %s267, %s268
    %p280 = scmp.eq.s32.totalorder %s27, 1
    %p281 = por %p279, %p280
    %p283 = scmp.ne.s32.totalorder %s268, %s282
    %p284 = scmp.eq.s32.totalorder %s27, 0
    %p285 = por %p283, %p284
    %s287 = sadd.s32 %s286, 1
    %p290 = scmp.eq.s32.totalorder %s21, 1
    %p291 = scmp.ne.s32.totalorder %s286, %s288
    %p292 = scmp.eq.s32.totalorder %s21, 0
    %p293 = por %p291, %p292
    %p294 = scmp.ne.s32.totalorder %s286, %s288
    %p295 = scmp.eq.s32.totalorder %s26, 1
    %p296 = por %p294, %p295
    %p297 = scmp.ne.s32.totalorder %s288, %s289
    %p298 = scmp.eq.s32.totalorder %s26, 0
    %p299 = por %p297, %p298
    %p300 = scmp.ne.s32.totalorder %s288, %s289
    %p301 = scmp.eq.s32.totalorder %s27, 1
    %p302 = por %p300, %p301
    %p304 = scmp.ne.s32.totalorder %s289, %s303
    %p305 = scmp.eq.s32.totalorder %s27, 0
    %p306 = por %p304, %p305
    %s308 = sadd.s32 %s307, 1
    %p311 = scmp.eq.s32.totalorder %s21, 1
    %p312 = scmp.ne.s32.totalorder %s307, %s309
    %p313 = scmp.eq.s32.totalorder %s21, 0
    %p314 = por %p312, %p313
    %p315 = scmp.ne.s32.totalorder %s307, %s309
    %p316 = scmp.eq.s32.totalorder %s26, 1
    %p317 = por %p315, %p316
    %p318 = scmp.ne.s32.totalorder %s309, %s310
    %p319 = scmp.eq.s32.totalorder %s26, 0
    %p320 = por %p318, %p319
    %p321 = scmp.ne.s32.totalorder %s309, %s310
    %p322 = scmp.eq.s32.totalorder %s27, 1
    %p323 = por %p321, %p322
    %p325 = scmp.ne.s32.totalorder %s310, %s324
    %p326 = scmp.eq.s32.totalorder %s27, 0
    %p327 = por %p325, %p326
    %s329 = sadd.s32 %s328, 1
    %p332 = scmp.eq.s32.totalorder %s21, 1
    %p333 = scmp.ne.s32.totalorder %s328, %s330
    %p334 = scmp.eq.s32.totalorder %s21, 0
    %p335 = por %p333, %p334
    %p336 = scmp.ne.s32.totalorder %s328, %s330
    %p337 = scmp.eq.s32.totalorder %s26, 1
    %p338 = por %p336, %p337
    %p339 = scmp.ne.s32.totalorder %s330, %s331
    %p340 = scmp.eq.s32.totalorder %s26, 0
    %p341 = por %p339, %p340
    %p342 = scmp.ne.s32.totalorder %s330, %s331
    %p343 = scmp.eq.s32.totalorder %s27, 1
    %p344 = por %p342, %p343
    %p346 = scmp.ne.s32.totalorder %s331, %s345
    %p347 = scmp.eq.s32.totalorder %s27, 0
    %p348 = por %p346, %p347
    %s349 = ssub.s32 %s21, %s28
    %p350 = scmp.eq.s32.totalorder %s349, 0
    %s352 = sadd.s32 %s351, 1
    %s353 = scalar_select %p350, %s351, %s352
    %p356 = pneg %p350
    %p357 = scmp.eq.s32.totalorder %s21, 1
    %p358 = por %p356, %p357
    %p359 = scmp.ne.s32.totalorder %s351, %s354
    %p360 = scmp.eq.s32.totalorder %s21, 0
    %p361 = por %p359, %p360
    %p362 = scmp.ne.s32.totalorder %s351, %s354
    %p363 = scmp.eq.s32.totalorder %s26, 1
    %p364 = por %p362, %p363
    %p365 = scmp.ne.s32.totalorder %s354, %s355
    %p366 = scmp.eq.s32.totalorder %s26, 0
    %p367 = por %p365, %p366
    %p368 = scmp.ne.s32.totalorder %s354, %s355
    %p369 = scmp.eq.s32.totalorder %s27, 1
    %p370 = por %p368, %p369
    %p372 = scmp.ne.s32.totalorder %s355, %s371
    %p373 = scmp.eq.s32.totalorder %s27, 0
    %p374 = por %p372, %p373
    %p375 = scmp.le.s32.totalorder 1, %s21
    %p376 = scmp.lt.s32.totalorder %s21, 3
    %p377 = pnand %p375, %p376
    %p378 = pneg %p377
    // Predicated region
    $region9: #{structure_module_forward.15} parent=5 // pred_check
      _
    $region10: #{structure_module_forward.15} parent=5 // pred_check_branch
      %380 = sbr.rel (%p377) target = $region12
    $region11: #{structure_module_forward.15} parent=5 // pred_region
      %s381 = ssub.s32 %s21, 1
      // Predicated region
      $region13: #{structure_module_forward.15} parent=11 // pred_check
        %p382 = pneg %p68
      $region14: #{structure_module_forward.15} parent=11 // pred_check_branch
        %384 = sbr.rel (%p382) target = $region16
      $region15: #{structure_module_forward.15} parent=11 // pred_region
        _
      $region16: #{structure_module_forward.15} parent=11 // pred_fallthru
        _
      // Predicated region
      $region17: #{structure_module_forward.15} parent=11 // pred_check
        %p385 = pneg %p89
      $region18: #{structure_module_forward.15} parent=11 // pred_check_branch
        %387 = sbr.rel (%p385) target = $region20
      $region19: #{structure_module_forward.15} parent=11 // pred_region
        _
      $region20: #{structure_module_forward.15} parent=11 // pred_fallthru
        _
      // Predicated region
      $region21: #{structure_module_forward.15} parent=11 // pred_check
        %p388 = pneg %p110
      $region22: #{structure_module_forward.15} parent=11 // pred_check_branch
        %390 = sbr.rel (%p388) target = $region24
      $region23: #{structure_module_forward.15} parent=11 // pred_region
        _
      $region24: #{structure_module_forward.15} parent=11 // pred_fallthru
        _
      // Predicated region
      $region25: #{structure_module_forward.15} parent=11 // pred_check
        %p391 = pneg %p131
      $region26: #{structure_module_forward.15} parent=11 // pred_check_branch
        %393 = sbr.rel (%p391) target = $region28
      $region27: #{structure_module_forward.15} parent=11 // pred_region
        _
      $region28: #{structure_module_forward.15} parent=11 // pred_fallthru
        _
      // Predicated region
      $region29: #{structure_module_forward.15} parent=11 // pred_check
        %p394 = pneg %p152
      $region30: #{structure_module_forward.15} parent=11 // pred_check_branch
        %396 = sbr.rel (%p394) target = $region32
      $region31: #{structure_module_forward.15} parent=11 // pred_region
        _
      $region32: #{structure_module_forward.15} parent=11 // pred_fallthru
        _
      // Predicated region
      $region33: #{structure_module_forward.15} parent=11 // pred_check
        %p397 = pneg %p173
      $region34: #{structure_module_forward.15} parent=11 // pred_check_branch
        %399 = sbr.rel (%p397) target = $region36
      $region35: #{structure_module_forward.15} parent=11 // pred_region
        _
      $region36: #{structure_module_forward.15} parent=11 // pred_fallthru
        _
      // Predicated region
      $region37: #{structure_module_forward.15} parent=11 // pred_check
        %p400 = pneg %p194
      $region38: #{structure_module_forward.15} parent=11 // pred_check_branch
        %402 = sbr.rel (%p400) target = $region40
      $region39: #{structure_module_forward.15} parent=11 // pred_region
        _
      $region40: #{structure_module_forward.15} parent=11 // pred_fallthru
        _
      // Predicated region
      $region41: #{structure_module_forward.15} parent=11 // pred_check
        %p403 = pneg %p215
      $region42: #{structure_module_forward.15} parent=11 // pred_check_branch
        %405 = sbr.rel (%p403) target = $region44
      $region43: #{structure_module_forward.15} parent=11 // pred_region
        _
      $region44: #{structure_module_forward.15} parent=11 // pred_fallthru
        _
      // Predicated region
      $region45: #{structure_module_forward.15} parent=11 // pred_check
        %p406 = pneg %p236
      $region46: #{structure_module_forward.15} parent=11 // pred_check_branch
        %408 = sbr.rel (%p406) target = $region48
      $region47: #{structure_module_forward.15} parent=11 // pred_region
        _
      $region48: #{structure_module_forward.15} parent=11 // pred_fallthru
        _
      // Predicated region
      $region49: #{structure_module_forward.15} parent=11 // pred_check
        %p409 = pneg %p257
      $region50: #{structure_module_forward.15} parent=11 // pred_check_branch
        %411 = sbr.rel (%p409) target = $region52
      $region51: #{structure_module_forward.15} parent=11 // pred_region
        _
      $region52: #{structure_module_forward.15} parent=11 // pred_fallthru
        _
      // Predicated region
      $region53: #{structure_module_forward.15} parent=11 // pred_check
        %p412 = pneg %p278
      $region54: #{structure_module_forward.15} parent=11 // pred_check_branch
        %414 = sbr.rel (%p412) target = $region56
      $region55: #{structure_module_forward.15} parent=11 // pred_region
        _
      $region56: #{structure_module_forward.15} parent=11 // pred_fallthru
        _
      // Predicated region
      $region57: #{structure_module_forward.15} parent=11 // pred_check
        %p415 = pneg %p299
      $region58: #{structure_module_forward.15} parent=11 // pred_check_branch
        %417 = sbr.rel (%p415) target = $region60
      $region59: #{structure_module_forward.15} parent=11 // pred_region
        _
      $region60: #{structure_module_forward.15} parent=11 // pred_fallthru
        _
      // Predicated region
      $region61: #{structure_module_forward.15} parent=11 // pred_check
        %p418 = pneg %p320
      $region62: #{structure_module_forward.15} parent=11 // pred_check_branch
        %420 = sbr.rel (%p418) target = $region64
      $region63: #{structure_module_forward.15} parent=11 // pred_region
        _
      $region64: #{structure_module_forward.15} parent=11 // pred_fallthru
        _
      // Predicated region
      $region65: #{structure_module_forward.15} parent=11 // pred_check
        %p421 = pneg %p341
      $region66: #{structure_module_forward.15} parent=11 // pred_check_branch
        %423 = sbr.rel (%p421) target = $region68
      $region67: #{structure_module_forward.15} parent=11 // pred_region
        _
      $region68: #{structure_module_forward.15} parent=11 // pred_fallthru
        _
    $region12: #{structure_module_forward.15} parent=5 // pred_fallthru
      _
    %p424 = scmp.lt.s32.totalorder %s21, 2
    // Predicated region
    $region69: #{structure_module_forward.15} parent=5 // pred_check
      %p425 = pneg %p424
    $region70: #{structure_module_forward.15} parent=5 // pred_check_branch
      %427 = sbr.rel (%p425) target = $region72
    $region71: #{structure_module_forward.15} parent=5 // pred_region
      // Predicated region
      $region73: #{structure_module_forward.15} parent=71 // pred_check
        %p428 = pneg %p41
      $region74: #{structure_module_forward.15} parent=71 // pred_check_branch
        %430 = sbr.rel (%p428) target = $region76
      $region75: #{structure_module_forward.15} parent=71 // pred_region
        %p431 = scmp.lt.s32.totalorder %s21, 1
        %s432 = scalar_select %p431, %s21, 1
        %s433 = smul.addr %s432, 8
        %s434 = scalar_lea.vmem %s0, %s433
      $region76: #{structure_module_forward.15} parent=71 // pred_fallthru
        _
    $region72: #{structure_module_forward.15} parent=5 // pred_fallthru
      _
    %p435 = scmp.le.s32.totalorder 1, %s21
    %p436 = scmp.lt.s32.totalorder %s21, 3
    %p437 = pnand %p435, %p436
    %p438 = pneg %p437
    // Predicated region
    $region77: #{structure_module_forward.15} parent=5 // pred_check
      _
    $region78: #{structure_module_forward.15} parent=5 // pred_check_branch
      %440 = sbr.rel (%p437) target = $region80
    $region79: #{structure_module_forward.15} parent=5 // pred_region
      %s441 = ssub.s32 %s21, 1
      %p442 = scmp.lt.s32.totalorder %s26, 1
      %s443 = scalar_select %p442, %s26, 1
      %s444 = smul.addr %s443, 8
      %s445 = scalar_lea.vmem %s0, %s444
      %p446 = pneg %p47
      %p447 = pneg %p44
      %p448 = pneg %p68
      %p449 = pneg %p65
      %p450 = pneg %p89
      %p451 = pneg %p86
      %p452 = pneg %p110
      %p453 = pneg %p107
      %p454 = pneg %p131
      %p455 = pneg %p128
      %p456 = pneg %p152
      %p457 = pneg %p149
      %p458 = pneg %p173
      %p459 = pneg %p170
      %p460 = pneg %p194
      %p461 = pneg %p191
      %p462 = pneg %p215
      %p463 = pneg %p212
      %p464 = pneg %p236
      %p465 = pneg %p233
      %p466 = pneg %p257
      %p467 = pneg %p254
      %p468 = pneg %p278
      %p469 = pneg %p275
      %p470 = pneg %p299
      %p471 = pneg %p296
      %p472 = pneg %p320
      %p473 = pneg %p317
      %p474 = pneg %p341
      %p475 = pneg %p338
      %p476 = pneg %p367
      %p477 = pneg %p364
      %p478 = scmp.lt.s32.totalorder %s26, 1
      %s479 = scalar_select %p478, %s26, 1
      %s480 = smul.addr %s479, 8
      %s481 = scalar_lea.vmem %s15, %s480
      %p482 = scmp.lt.s32.totalorder %s26, 1
      %s483 = scalar_select %p482, %s26, 1
      %s484 = smul.addr %s483, 8
      %s485 = scalar_lea.vmem %s0, %s484
      %p486 = scmp.lt.s32.totalorder %s26, 1
      %s487 = scalar_select %p486, %s26, 1
      %s488 = smul.addr %s487, 8
      %s489 = scalar_lea.vmem %s15, %s488
      %v491 = vld [vmem:[%s485] sm:$0xff]
      %v492 = vpack.c.bf16 %v491, %v491
      %v493 = vld [vmem:[%s1] sm:$0xff]
      %v494 = vld [vmem:[%s1 + $0x8] sm:$0xff]
      %v495 = vld [vmem:[%s1 + $0x10] sm:$0xff]
      %v496 = vld [vmem:[%s1 + $0x18] sm:$0xff]
      %v497 = vld [vmem:[%s1 + $0x20] sm:$0xff]
      %v498 = vld [vmem:[%s1 + $0x28] sm:$0xff]
      %v499 = vld [vmem:[%s1 + $0x30] sm:$0xff]
      %v500 = vld [vmem:[%s1 + $0x38] sm:$0xff]
      %v501 = vpack.c.bf16 %v494, %v493
      %v502 = vpack.c.bf16 %v496, %v495
      %v503 = vpack.c.bf16 %v498, %v497
      %v504 = vpack.c.bf16 %v500, %v499
      %v505 = vld [vmem:[%s2] sm:$0x1]
      %v507 = vlaneseq
      %v508 = vshrl.u32 %v507, 7
      %v509 = vsub.s32 0, %v508
      %v510 = vrot.slane %v505, %v509
      %vm512 = vcmask 523264
      %v514 = vsel %vm512, %v492, 0
      %516 = vmatprep.subr.bf16.mxu0 0
      %517 = vmatpush1.bf16.msra.mxu0 %v501
      %518 = vmatprep.subr.bf16.mxu0 0
      %519 = vmatpush1.bf16.msra.mxu0 %v502
      %520 = vmatprep.subr.bf16.mxu0 0
      %521 = vmatpush1.bf16.msra.mxu0 %v503
      %522 = vmatprep.subr.bf16.mxu0 0
      %523 = vmatpush1.bf16.msra.mxu0 %v504
      %524 = vmatprep.subr.bf16.mxu0 0
      %525 = vmatpush1.bf16.msra.mxu0 0
      %526 = vmatprep.subr.bf16.mxu0 0
      %527 = vmatpush1.bf16.msra.mxu0 0
      %528 = vmatprep.subr.bf16.mxu0 0
      %529 = vmatpush1.bf16.msra.mxu0 0
      %530 = vmatprep.subr.bf16.mxu0 0
      %531 = vmatpush1.bf16.msra.mxu0 0
      %532 = vmatprep.subr.bf16.mxu0 0
      %533 = vmatpush1.bf16.msra.mxu0 0
      %534 = vmatprep.subr.bf16.mxu0 0
      %535 = vmatpush1.bf16.msra.mxu0 0
      %536 = vmatprep.subr.bf16.mxu0 0
      %537 = vmatpush1.bf16.msra.mxu0 0
      %538 = vmatprep.subr.bf16.mxu0 0
      %539 = vmatpush1.bf16.msra.mxu0 0
      %540 = vmatprep.subr.bf16.mxu0 0
      %541 = vmatpush1.bf16.msra.mxu0 0
      %542 = vmatprep.subr.bf16.mxu0 0
      %543 = vmatpush1.bf16.msra.mxu0 0
      %544 = vmatprep.subr.bf16.mxu0 0
      %545 = vmatpush1.bf16.msra.mxu0 0
      %546 = vmatprep.subr.bf16.mxu0 0
      %547 = vmatpush1.bf16.msra.mxu0 0
      %548 = vmatprep.mubr.bf16.mxu0 0
      %549 = vmatmul.mubr.bf16.gmra.mrb[0].mxu0 %v514
      %v550 = vpop.f32.mrb[0].mxu0
      %v551 = vadd.f32 %v510, %v550
      %v552 = vpop.f32.mrb[0].mxu0
      %v553 = vpop.f32.mrb[0].mxu0
      %v554 = vpop.f32.mrb[0].mxu0
      %555 = vdwg.mxu0
      %v556 = vmax.f32 %v551, 0.0
      %v557 = vpack.c.bf16 %v556, %v556
      %v558 = vld [vmem:[%s3] sm:$0xff]
      %v559 = vld [vmem:[%s3 + $0x8] sm:$0xff]
      %v560 = vld [vmem:[%s3 + $0x10] sm:$0xff]
      %v561 = vld [vmem:[%s3 + $0x18] sm:$0xff]
      %v562 = vld [vmem:[%s3 + $0x20] sm:$0xff]
      %v563 = vld [vmem:[%s3 + $0x28] sm:$0xff]
      %v564 = vld [vmem:[%s3 + $0x30] sm:$0xff]
      %v565 = vld [vmem:[%s3 + $0x38] sm:$0xff]
      %v566 = vpack.c.bf16 %v559, %v558
      %v567 = vpack.c.bf16 %v561, %v560
      %v568 = vpack.c.bf16 %v563, %v562
      %v569 = vpack.c.bf16 %v565, %v564
      %v570 = vld [vmem:[%s4] sm:$0x1]
      %v572 = vlaneseq
      %v573 = vshrl.u32 %v572, 7
      %v574 = vsub.s32 0, %v573
      %v575 = vrot.slane %v570, %v574
      %v578 = vsel %vm512, %v557, 0
      %580 = vmatprep.subr.bf16.mxu0 0
      %581 = vmatpush1.bf16.msra.mxu0 %v566
      %582 = vmatprep.subr.bf16.mxu0 0
      %583 = vmatpush1.bf16.msra.mxu0 %v567
      %584 = vmatprep.subr.bf16.mxu0 0
      %585 = vmatpush1.bf16.msra.mxu0 %v568
      %586 = vmatprep.subr.bf16.mxu0 0
      %587 = vmatpush1.bf16.msra.mxu0 %v569
      %588 = vmatprep.subr.bf16.mxu0 0
      %589 = vmatpush1.bf16.msra.mxu0 0
      %590 = vmatprep.subr.bf16.mxu0 0
      %591 = vmatpush1.bf16.msra.mxu0 0
      %592 = vmatprep.subr.bf16.mxu0 0
      %593 = vmatpush1.bf16.msra.mxu0 0
      %594 = vmatprep.subr.bf16.mxu0 0
      %595 = vmatpush1.bf16.msra.mxu0 0
      %596 = vmatprep.subr.bf16.mxu0 0
      %597 = vmatpush1.bf16.msra.mxu0 0
      %598 = vmatprep.subr.bf16.mxu0 0
      %599 = vmatpush1.bf16.msra.mxu0 0
      %600 = vmatprep.subr.bf16.mxu0 0
      %601 = vmatpush1.bf16.msra.mxu0 0
      %602 = vmatprep.subr.bf16.mxu0 0
      %603 = vmatpush1.bf16.msra.mxu0 0
      %604 = vmatprep.subr.bf16.mxu0 0
      %605 = vmatpush1.bf16.msra.mxu0 0
      %606 = vmatprep.subr.bf16.mxu0 0
      %607 = vmatpush1.bf16.msra.mxu0 0
      %608 = vmatprep.subr.bf16.mxu0 0
      %609 = vmatpush1.bf16.msra.mxu0 0
      %610 = vmatprep.subr.bf16.mxu0 0
      %611 = vmatpush1.bf16.msra.mxu0 0
      %612 = vmatprep.mubr.bf16.mxu0 0
      %613 = vmatmul.mubr.bf16.gmra.mrb[0].mxu0 %v578
      %v614 = vpop.f32.mrb[0].mxu0
      %v615 = vadd.f32 %v575, %v614
      %v616 = vpop.f32.mrb[0].mxu0
      %v617 = vpop.f32.mrb[0].mxu0
      %v618 = vpop.f32.mrb[0].mxu0
      %619 = vdwg.mxu0
      %v620 = vmax.f32 %v615, 0.0
      %v621 = vpack.c.bf16 %v620, %v620
      %v622 = vld [vmem:[%s5] sm:$0xff]
      %v623 = vld [vmem:[%s5 + $0x8] sm:$0xff]
      %v624 = vld [vmem:[%s5 + $0x10] sm:$0xff]
      %v625 = vld [vmem:[%s5 + $0x18] sm:$0xff]
      %v626 = vld [vmem:[%s5 + $0x20] sm:$0xff]
      %v627 = vld [vmem:[%s5 + $0x28] sm:$0xff]
      %v628 = vld [vmem:[%s5 + $0x30] sm:$0xff]
      %v629 = vld [vmem:[%s5 + $0x38] sm:$0xff]
      %v630 = vpack.c.bf16 %v623, %v622
      %v631 = vpack.c.bf16 %v625, %v624
      %v632 = vpack.c.bf16 %v627, %v626
      %v633 = vpack.c.bf16 %v629, %v628
      %v634 = vld [vmem:[%s6] sm:$0x1]
      %v636 = vlaneseq
      %v637 = vshrl.u32 %v636, 7
      %v638 = vsub.s32 0, %v637
      %v639 = vrot.slane %v634, %v638
      %v642 = vsel %vm512, %v621, 0
      %644 = vmatprep.subr.bf16.mxu0 0
      %645 = vmatpush1.bf16.msra.mxu0 %v630
      %646 = vmatprep.subr.bf16.mxu0 0
      %647 = vmatpush1.bf16.msra.mxu0 %v631
      %648 = vmatprep.subr.bf16.mxu0 0
      %649 = vmatpush1.bf16.msra.mxu0 %v632
      %650 = vmatprep.subr.bf16.mxu0 0
      %651 = vmatpush1.bf16.msra.mxu0 %v633
      %652 = vmatprep.subr.bf16.mxu0 0
      %653 = vmatpush1.bf16.msra.mxu0 0
      %654 = vmatprep.subr.bf16.mxu0 0
      %655 = vmatpush1.bf16.msra.mxu0 0
      %656 = vmatprep.subr.bf16.mxu0 0
      %657 = vmatpush1.bf16.msra.mxu0 0
      %658 = vmatprep.subr.bf16.mxu0 0
      %659 = vmatpush1.bf16.msra.mxu0 0
      %660 = vmatprep.subr.bf16.mxu0 0
      %661 = vmatpush1.bf16.msra.mxu0 0
      %662 = vmatprep.subr.bf16.mxu0 0
      %663 = vmatpush1.bf16.msra.mxu0 0
      %664 = vmatprep.subr.bf16.mxu0 0
      %665 = vmatpush1.bf16.msra.mxu0 0
      %666 = vmatprep.subr.bf16.mxu0 0
      %667 = vmatpush1.bf16.msra.mxu0 0
      %668 = vmatprep.subr.bf16.mxu0 0
      %669 = vmatpush1.bf16.msra.mxu0 0
      %670 = vmatprep.subr.bf16.mxu0 0
      %671 = vmatpush1.bf16.msra.mxu0 0
      %672 = vmatprep.subr.bf16.mxu0 0
      %673 = vmatpush1.bf16.msra.mxu0 0
      %674 = vmatprep.subr.bf16.mxu0 0
      %675 = vmatpush1.bf16.msra.mxu0 0
      %676 = vmatprep.mubr.bf16.mxu0 0
      %677 = vmatmul.mubr.bf16.gmra.mrb[0].mxu0 %v642
      %v678 = vpop.f32.mrb[0].mxu0
      %v679 = vadd.f32 %v639, %v678
      %v680 = vpop.f32.mrb[0].mxu0
      %v681 = vpop.f32.mrb[0].mxu0
      %v682 = vpop.f32.mrb[0].mxu0
      %683 = vdwg.mxu0
      %v684 = vadd.f32 %v491, %v679
      %v685 = vpack.c.bf16 %v684, %v684
      %v686 = vld [vmem:[%s7] sm:$0xff]
      %v687 = vld [vmem:[%s7 + $0x8] sm:$0xff]
      %v688 = vld [vmem:[%s7 + $0x10] sm:$0xff]
      %v689 = vld [vmem:[%s7 + $0x18] sm:$0xff]
      %v690 = vld [vmem:[%s7 + $0x20] sm:$0xff]
      %v691 = vld [vmem:[%s7 + $0x28] sm:$0xff]
      %v692 = vld [vmem:[%s7 + $0x30] sm:$0xff]
      %v693 = vld [vmem:[%s7 + $0x38] sm:$0xff]
      %v694 = vpack.c.bf16 %v687, %v686
      %v695 = vpack.c.bf16 %v689, %v688
      %v696 = vpack.c.bf16 %v691, %v690
      %v697 = vpack.c.bf16 %v693, %v692
      %v698 = vld [vmem:[%s8] sm:$0x1]
      %v700 = vlaneseq
      %v701 = vshrl.u32 %v700, 7
      %v702 = vsub.s32 0, %v701
      %v703 = vrot.slane %v698, %v702
      %v706 = vsel %vm512, %v685, 0
      %708 = vmatprep.subr.bf16.mxu0 0
      %709 = vmatpush1.bf16.msra.mxu0 %v694
      %710 = vmatprep.subr.bf16.mxu0 0
      %711 = vmatpush1.bf16.msra.mxu0 %v695
      %712 = vmatprep.subr.bf16.mxu0 0
      %713 = vmatpush1.bf16.msra.mxu0 %v696
      %714 = vmatprep.subr.bf16.mxu0 0
      %715 = vmatpush1.bf16.msra.mxu0 %v697
      %716 = vmatprep.subr.bf16.mxu0 0
      %717 = vmatpush1.bf16.msra.mxu0 0
      %718 = vmatprep.subr.bf16.mxu0 0
      %719 = vmatpush1.bf16.msra.mxu0 0
      %720 = vmatprep.subr.bf16.mxu0 0
      %721 = vmatpush1.bf16.msra.mxu0 0
      %722 = vmatprep.subr.bf16.mxu0 0
      %723 = vmatpush1.bf16.msra.mxu0 0
      %724 = vmatprep.subr.bf16.mxu0 0
      %725 = vmatpush1.bf16.msra.mxu0 0
      %726 = vmatprep.subr.bf16.mxu0 0
      %727 = vmatpush1.bf16.msra.mxu0 0
      %728 = vmatprep.subr.bf16.mxu0 0
      %729 = vmatpush1.bf16.msra.mxu0 0
      %730 = vmatprep.subr.bf16.mxu0 0
      %731 = vmatpush1.bf16.msra.mxu0 0
      %732 = vmatprep.subr.bf16.mxu0 0
      %733 = vmatpush1.bf16.msra.mxu0 0
      %734 = vmatprep.subr.bf16.mxu0 0
      %735 = vmatpush1.bf16.msra.mxu0 0
      %736 = vmatprep.subr.bf16.mxu0 0
      %737 = vmatpush1.bf16.msra.mxu0 0
      %738 = vmatprep.subr.bf16.mxu0 0
      %739 = vmatpush1.bf16.msra.mxu0 0
      %740 = vmatprep.mubr.bf16.mxu0 0
      %741 = vmatmul.mubr.bf16.gmra.mrb[0].mxu0 %v706
      %v742 = vpop.f32.mrb[0].mxu0
      %v743 = vadd.f32 %v703, %v742
      %v744 = vpop.f32.mrb[0].mxu0
      %v745 = vpop.f32.mrb[0].mxu0
      %v746 = vpop.f32.mrb[0].mxu0
      %747 = vdwg.mxu0
      %v748 = vmax.f32 %v743, 0.0
      %v749 = vpack.c.bf16 %v748, %v748
      %v750 = vld [vmem:[%s9] sm:$0xff]
      %v751 = vld [vmem:[%s9 + $0x8] sm:$0xff]
      %v752 = vld [vmem:[%s9 + $0x10] sm:$0xff]
      %v753 = vld [vmem:[%s9 + $0x18] sm:$0xff]
      %v754 = vld [vmem:[%s9 + $0x20] sm:$0xff]
      %v755 = vld [vmem:[%s9 + $0x28] sm:$0xff]
      %v756 = vld [vmem:[%s9 + $0x30] sm:$0xff]
      %v757 = vld [vmem:[%s9 + $0x38] sm:$0xff]
      %v758 = vpack.c.bf16 %v751, %v750
      %v759 = vpack.c.bf16 %v753, %v752
      %v760 = vpack.c.bf16 %v755, %v754
      %v761 = vpack.c.bf16 %v757, %v756
      %v762 = vld [vmem:[%s10] sm:$0x1]
      %v764 = vlaneseq
      %v765 = vshrl.u32 %v764, 7
      %v766 = vsub.s32 0, %v765
      %v767 = vrot.slane %v762, %v766
      %v770 = vsel %vm512, %v749, 0
      %772 = vmatprep.subr.bf16.mxu0 0
      %773 = vmatpush1.bf16.msra.mxu0 %v758
      %774 = vmatprep.subr.bf16.mxu0 0
      %775 = vmatpush1.bf16.msra.mxu0 %v759
      %776 = vmatprep.subr.bf16.mxu0 0
      %777 = vmatpush1.bf16.msra.mxu0 %v760
      %778 = vmatprep.subr.bf16.mxu0 0
      %779 = vmatpush1.bf16.msra.mxu0 %v761
      %780 = vmatprep.subr.bf16.mxu0 0
      %781 = vmatpush1.bf16.msra.mxu0 0
      %782 = vmatprep.subr.bf16.mxu0 0
      %783 = vmatpush1.bf16.msra.mxu0 0
      %784 = vmatprep.subr.bf16.mxu0 0
      %785 = vmatpush1.bf16.msra.mxu0 0
      %786 = vmatprep.subr.bf16.mxu0 0
      %787 = vmatpush1.bf16.msra.mxu0 0
      %788 = vmatprep.subr.bf16.mxu0 0
      %789 = vmatpush1.bf16.msra.mxu0 0
      %790 = vmatprep.subr.bf16.mxu0 0
      %791 = vmatpush1.bf16.msra.mxu0 0
      %792 = vmatprep.subr.bf16.mxu0 0
      %793 = vmatpush1.bf16.msra.mxu0 0
      %794 = vmatprep.subr.bf16.mxu0 0
      %795 = vmatpush1.bf16.msra.mxu0 0
      %796 = vmatprep.subr.bf16.mxu0 0
      %797 = vmatpush1.bf16.msra.mxu0 0
      %798 = vmatprep.subr.bf16.mxu0 0
      %799 = vmatpush1.bf16.msra.mxu0 0
      %800 = vmatprep.subr.bf16.mxu0 0
      %801 = vmatpush1.bf16.msra.mxu0 0
      %802 = vmatprep.subr.bf16.mxu0 0
      %803 = vmatpush1.bf16.msra.mxu0 0
      %804 = vmatprep.mubr.bf16.mxu0 0
      %805 = vmatmul.mubr.bf16.gmra.mrb[0].mxu0 %v770
      %v806 = vpop.f32.mrb[0].mxu0
      %v807 = vadd.f32 %v767, %v806
      %v808 = vpop.f32.mrb[0].mxu0
      %v809 = vpop.f32.mrb[0].mxu0
      %v810 = vpop.f32.mrb[0].mxu0
      %811 = vdwg.mxu0
      %v812 = vmax.f32 %v807, 0.0
      %v813 = vpack.c.bf16 %v812, %v812
      %v814 = vld [vmem:[%s11] sm:$0xff]
      %v815 = vld [vmem:[%s11 + $0x8] sm:$0xff]
      %v816 = vld [vmem:[%s11 + $0x10] sm:$0xff]
      %v817 = vld [vmem:[%s11 + $0x18] sm:$0xff]
      %v818 = vld [vmem:[%s11 + $0x20] sm:$0xff]
      %v819 = vld [vmem:[%s11 + $0x28] sm:$0xff]
      %v820 = vld [vmem:[%s11 + $0x30] sm:$0xff]
      %v821 = vld [vmem:[%s11 + $0x38] sm:$0xff]
      %v822 = vpack.c.bf16 %v815, %v814
      %v823 = vpack.c.bf16 %v817, %v816
      %v824 = vpack.c.bf16 %v819, %v818
      %v825 = vpack.c.bf16 %v821, %v820
      %v826 = vld [vmem:[%s12] sm:$0x1]
      %v828 = vlaneseq
      %v829 = vshrl.u32 %v828, 7
      %v830 = vsub.s32 0, %v829
      %v831 = vrot.slane %v826, %v830
      %v834 = vsel %vm512, %v813, 0
      %836 = vmatprep.subr.bf16.mxu0 0
      %837 = vmatpush1.bf16.msra.mxu0 %v822
      %838 = vmatprep.subr.bf16.mxu0 0
      %839 = vmatpush1.bf16.msra.mxu0 %v823
      %840 = vmatprep.subr.bf16.mxu0 0
      %841 = vmatpush1.bf16.msra.mxu0 %v824
      %842 = vmatprep.subr.bf16.mxu0 0
      %843 = vmatpush1.bf16.msra.mxu0 %v825
      %844 = vmatprep.subr.bf16.mxu0 0
      %845 = vmatpush1.bf16.msra.mxu0 0
      %846 = vmatprep.subr.bf16.mxu0 0
      %847 = vmatpush1.bf16.msra.mxu0 0
      %848 = vmatprep.subr.bf16.mxu0 0
      %849 = vmatpush1.bf16.msra.mxu0 0
      %850 = vmatprep.subr.bf16.mxu0 0
      %851 = vmatpush1.bf16.msra.mxu0 0
      %852 = vmatprep.subr.bf16.mxu0 0
      %853 = vmatpush1.bf16.msra.mxu0 0
      %854 = vmatprep.subr.bf16.mxu0 0
      %855 = vmatpush1.bf16.msra.mxu0 0
      %856 = vmatprep.subr.bf16.mxu0 0
      %857 = vmatpush1.bf16.msra.mxu0 0
      %858 = vmatprep.subr.bf16.mxu0 0
      %859 = vmatpush1.bf16.msra.mxu0 0
      %860 = vmatprep.subr.bf16.mxu0 0
      %861 = vmatpush1.bf16.msra.mxu0 0
      %862 = vmatprep.subr.bf16.mxu0 0
      %863 = vmatpush1.bf16.msra.mxu0 0
      %864 = vmatprep.subr.bf16.mxu0 0
      %865 = vmatpush1.bf16.msra.mxu0 0
      %866 = vmatprep.subr.bf16.mxu0 0
      %867 = vmatpush1.bf16.msra.mxu0 0
      %868 = vmatprep.mubr.bf16.mxu0 0
      %869 = vmatmul.mubr.bf16.gmra.mrb[0].mxu0 %v834
      %v870 = vpop.f32.mrb[0].mxu0
      %v871 = vadd.f32 %v831, %v870
      %v872 = vpop.f32.mrb[0].mxu0
      %v873 = vpop.f32.mrb[0].mxu0
      %v874 = vpop.f32.mrb[0].mxu0
      %875 = vdwg.mxu0
      %v876 = vadd.f32 %v684, %v871
      %v877 = vmax.f32 %v876, 0.0
      %v878 = vpack.c.bf16 %v877, %v877
      %v879 = vld [vmem:[%s13] sm:$0xff]
      %v880 = vld [vmem:[%s13 + $0x8] sm:$0xff]
      %v881 = vld [vmem:[%s13 + $0x10] sm:$0xff]
      %v882 = vld [vmem:[%s13 + $0x18] sm:$0xff]
      %v883 = vld [vmem:[%s13 + $0x20] sm:$0xff]
      %v884 = vld [vmem:[%s13 + $0x28] sm:$0xff]
      %v885 = vld [vmem:[%s13 + $0x30] sm:$0xff]
      %v886 = vld [vmem:[%s13 + $0x38] sm:$0xff]
      %v887 = vpack.c.bf16 %v880, %v879
      %v888 = vpack.c.bf16 %v882, %v881
      %v889 = vpack.c.bf16 %v884, %v883
      %v890 = vpack.c.bf16 %v886, %v885
      %v891 = vld [vmem:[%s14] sm:$0x1]
      %v893 = vlaneseq
      %v894 = vshrl.u32 %v893, 7
      %v895 = vsub.s32 0, %v894
      %v896 = vrot.slane %v891, %v895
      %v899 = vsel %vm512, %v878, 0
      %901 = vmatprep.subr.bf16.mxu0 0
      %902 = vmatpush1.bf16.msra.mxu0 %v887
      %903 = vmatprep.subr.bf16.mxu0 0
      %904 = vmatpush1.bf16.msra.mxu0 %v888
      %905 = vmatprep.subr.bf16.mxu0 0
      %906 = vmatpush1.bf16.msra.mxu0 %v889
      %907 = vmatprep.subr.bf16.mxu0 0
      %908 = vmatpush1.bf16.msra.mxu0 %v890
      %909 = vmatprep.subr.bf16.mxu0 0
      %910 = vmatpush1.bf16.msra.mxu0 0
      %911 = vmatprep.subr.bf16.mxu0 0
      %912 = vmatpush1.bf16.msra.mxu0 0
      %913 = vmatprep.subr.bf16.mxu0 0
      %914 = vmatpush1.bf16.msra.mxu0 0
      %915 = vmatprep.subr.bf16.mxu0 0
      %916 = vmatpush1.bf16.msra.mxu0 0
      %917 = vmatprep.subr.bf16.mxu0 0
      %918 = vmatpush1.bf16.msra.mxu0 0
      %919 = vmatprep.subr.bf16.mxu0 0
      %920 = vmatpush1.bf16.msra.mxu0 0
      %921 = vmatprep.subr.bf16.mxu0 0
      %922 = vmatpush1.bf16.msra.mxu0 0
      %923 = vmatprep.subr.bf16.mxu0 0
      %924 = vmatpush1.bf16.msra.mxu0 0
      %925 = vmatprep.subr.bf16.mxu0 0
      %926 = vmatpush1.bf16.msra.mxu0 0
      %927 = vmatprep.subr.bf16.mxu0 0
      %928 = vmatpush1.bf16.msra.mxu0 0
      %929 = vmatprep.subr.bf16.mxu0 0
      %930 = vmatpush1.bf16.msra.mxu0 0
      %931 = vmatprep.subr.bf16.mxu0 0
      %932 = vmatpush1.bf16.msra.mxu0 0
      %933 = vmatprep.mubr.bf16.mxu0 0
      %934 = vmatmul.mubr.bf16.gmra.mrb[0].mxu0 %v899
      %v935 = vpop.f32.mrb[0].mxu0
      %v936 = vadd.f32 %v896, %v935
      %v937 = vpop.f32.mrb[0].mxu0
      %v938 = vpop.f32.mrb[0].mxu0
      %v939 = vpop.f32.mrb[0].mxu0
      %940 = vdwg.mxu0
      %vm941 = vcmask 80896
      %942 = vst.msk [vmem:[%s489] sm:$0xff] %vm941, %v936
      %p943 = scmp.lt.s32.totalorder %s26, 1
      %s944 = scalar_select %p943, %s26, 1
      %s945 = smul.addr %s944, 8
      %s946 = scalar_lea.vmem %s15, %s945
      // Predicated region
      $region81: #{structure_module_forward.15} parent=79 // pred_check
        %p947 = pneg %p364
      $region82: #{structure_module_forward.15} parent=79 // pred_check_branch
        %949 = sbr.rel (%p947) target = $region84
      $region83: #{structure_module_forward.15} parent=79 // pred_region
        _
      $region84: #{structure_module_forward.15} parent=79 // pred_fallthru
        _
    $region80: #{structure_module_forward.15} parent=5 // pred_fallthru
      _
    %p950 = scmp.le.s32.totalorder 2, %s21
    // Predicated region
    $region85: #{structure_module_forward.15} parent=5 // pred_check
      %p951 = pneg %p950
    $region86: #{structure_module_forward.15} parent=5 // pred_check_branch
      %953 = sbr.rel (%p951) target = $region88
    $region87: #{structure_module_forward.15} parent=5 // pred_region
      %s954 = ssub.s32 %s21, 2
      // Predicated region
      $region89: #{structure_module_forward.15} parent=87 // pred_check
        %p955 = pneg %p370
      $region90: #{structure_module_forward.15} parent=87 // pred_check_branch
        %957 = sbr.rel (%p955) target = $region92
      $region91: #{structure_module_forward.15} parent=87 // pred_region
        %p958 = scmp.lt.s32.totalorder %s27, 1
        %s959 = scalar_select %p958, %s27, 1
        %s960 = smul.addr %s959, 8
        %s961 = scalar_lea.vmem %s15, %s960
      $region92: #{structure_module_forward.15} parent=87 // pred_fallthru
        _
    $region88: #{structure_module_forward.15} parent=5 // pred_fallthru
      _
  $region6: #{structure_module_forward.15} parent=0 // loop_footer
    %s25 = sadd.s32 1, %s21
  $region7: #{structure_module_forward.15} parent=0 // loop_footer_branch
    %20 = sbr.rel target = $region3
  $region8: #{structure_module_forward.15} parent=0 // loop_exit
    _

</llo_original>
